<compile_context>
chip_gen: v6e
topology: v6e:2x2x1
jax: 0.10.0
libtpu: 0.0.40
codegen_flags: <defaults>
</compile_context>

<pallas_src>
import numpy as np
import jax
import jax.numpy as jnp
from jax.experimental import pallas as pl
from jax.experimental.pallas import tpu as pltpu


# ------------------------- parameter preprocessing --------------------------
# (plain JAX, runs ONCE outside the jitted forward)


def _expand_conv_weight_folded(w, wo):
    """PyTorch conv weight (O, Cin, kh, kw) -> folded-K matmul weight.

    Returns (kh*kw*wo*Cin, wo*O): the kh*kw per-tap block-diagonal weights
    (I_wo ⊗ w[:, :, i, j].T) stacked along the contraction dimension, so a
    single 2D matmul against the im2col operand (Ho, kh*kw*wo*Cin) produces
    the conv output plane (Ho, wo*O) with fused layout col = w*O + o.
    """
    o, cin, kh, kw = w.shape
    wt = jnp.transpose(w, (2, 3, 1, 0)).reshape(kh * kw, cin, o)   # (T, Cin, O)
    eye = jnp.eye(wo, dtype=w.dtype)
    exp = jnp.einsum("wv,tco->twcvo", eye, wt)                     # (T, wo, Cin, wo, O)
    return exp.reshape(kh * kw * wo * cin, wo * o)


def _pool_matrices(h, w, c):
    """Matrices implementing a 2x2 stride-2 average pool on a (h, w*c) plane."""
    ph = 0.5 * jnp.kron(jnp.eye(h // 2, dtype=jnp.float32),
                        jnp.ones((1, 2), jnp.float32))             # (h/2, h)
    pw = 0.5 * jnp.kron(jnp.kron(jnp.eye(w // 2, dtype=jnp.float32),
                                 jnp.ones((2, 1), jnp.float32)),
                        jnp.eye(c, dtype=jnp.float32))             # (w*c, (w/2)*c)
    return ph, pw


def prepare_params(params):
    """One-time expansion of PyTorch-layout weights into bf16 kernel matmul
    weights.  Hoisted out of the per-call forward path."""
    ph1, pw1 = _pool_matrices(28, 28, 6)
    ph2, pw2 = _pool_matrices(10, 10, 16)
    prep = dict(
        w1=_expand_conv_weight_folded(params["conv1"], 28),     # (700, 168)
        w11=_expand_conv_weight_folded(params["conv1_1"], 28),  # (1512, 168)
        w12=_expand_conv_weight_folded(params["conv1_2"], 28),  # (1512, 168)
        w3=_expand_conv_weight_folded(params["conv3"], 10),     # (1500, 160)
        w5=jnp.transpose(params["conv5"], (2, 3, 1, 0)).reshape(400, 120),
        ph1=ph1, pw1=pw1, ph2=ph2, pw2=pw2,
        wfc6=params["fc6"].T,                                    # (120, 84)
        wout=params["out"].T,                                    # (84, 10)
    )
    return jax.tree.map(lambda a: a.astype(jnp.bfloat16), prep)


# ------------------------------ fused kernel --------------------------------


def _im2col_taps(plane, col_ref, hin, win, cin, k, pad, ho, wo):
    """Scatter the k*k shifted tap slices of `plane` ((hin, win*cin)) into
    `col_ref` ((ho, k*k*wo*cin)), folding zero padding of 'same' convs.
    All offsets are static Python ints."""
    if pad:
        col_ref[...] = jnp.zeros_like(col_ref)
    for i in range(k):
        for j in range(k):
            t = i * k + j
            # Source rows/cols of this tap, in UNPADDED plane coordinates.
            r0p, r1p = i - pad, i - pad + ho
            c0p, c1p = (j - pad) * cin, (j - pad) * cin + wo * cin
            r0, r1 = max(r0p, 0), min(r1p, hin)
            c0, c1 = max(c0p, 0), min(c1p, win * cin)
            dr, dc = r0 - r0p, c0 - c0p
            base = t * wo * cin
            col_ref[dr:dr + (r1 - r0), base + dc:base + dc + (c1 - c0)] = (
                plane[r0:r1, c0:c1].astype(col_ref.dtype))


def _lenet_kernel(x_ref, w1_ref, w11_ref, w12_ref, w3_ref, w5_ref,
                  ph1_ref, pw1_ref, ph2_ref, pw2_ref, wfc6_ref, wout_ref,
                  out_ref, col1, col2, col3, col5):
    bf16 = jnp.bfloat16

    def dot(a, b):
        return jnp.dot(a, b, preferred_element_type=jnp.float32)

    def col_dot(col_ref, w_ref):
        return dot(col_ref[...].astype(bf16), w_ref[...])

    x = x_ref[0]                                               # (32, 32), C=1

    # conv1: 5x5 valid, 1 -> 6                                 -> (28, 168)
    _im2col_taps(x, col1, 32, 32, 1, 5, 0, 28, 28)
    a1 = col_dot(col1, w1_ref)

    # conv1_1: 3x3 same, 6 -> 6                                -> (28, 168)
    _im2col_taps(a1, col2, 28, 28, 6, 3, 1, 28, 28)
    a2 = col_dot(col2, w11_ref)

    # conv1_2: 3x3 same, 6 -> 6, relu                          -> (28, 168)
    _im2col_taps(a2, col2, 28, 28, 6, 3, 1, 28, 28)
    a3 = jnp.maximum(col_dot(col2, w12_ref), 0.0)

    # 2x2 average pool                                         -> (14, 84)
    p1 = dot(ph1_ref[...], dot(a3.astype(bf16), pw1_ref[...]).astype(bf16))

    # conv3: 5x5 valid, 6 -> 16, relu                          -> (10, 160)
    _im2col_taps(p1, col3, 14, 14, 6, 5, 0, 10, 10)
    a4 = jnp.maximum(col_dot(col3, w3_ref), 0.0)

    # 2x2 average pool                                         -> (5, 80)
    p2 = dot(ph2_ref[...], dot(a4.astype(bf16), pw2_ref[...]).astype(bf16))

    # conv5 output is 1x1: flatten (5, 80) -> (1, 400), one dense matmul.
    for h in range(5):
        col5[0:1, h * 80:(h + 1) * 80] = p2[h:h + 1, :]
    a5 = jnp.maximum(col_dot(col5, w5_ref), 0.0)               # (1, 120)
    # Global spatial mean over a 1x1 map is the identity.

    f6 = jnp.maximum(dot(a5.astype(bf16), wfc6_ref[...]), 0.0)  # (1, 84)
    out_ref[0] = dot(f6.astype(bf16), wout_ref[...])            # (1, 10)


@jax.jit
def lenet5_repeat_forward(prepared, x):
    """prepared: output of prepare_params;  x: (N, 1, 32, 32) f32 -> (N, 10)."""
    n = x.shape[0]
    x2 = x[:, 0, :, :]                                          # (N, 32, 32), C=1 fused on lanes
    weights = (prepared["w1"], prepared["w11"], prepared["w12"], prepared["w3"],
               prepared["w5"], prepared["ph1"], prepared["pw1"], prepared["ph2"],
               prepared["pw2"], prepared["wfc6"], prepared["wout"])

    out = pl.pallas_call(
        _lenet_kernel,
        out_shape=jax.ShapeDtypeStruct((n, 1, 10), jnp.float32),
        grid_spec=pltpu.PrefetchScalarGridSpec(
            num_scalar_prefetch=0,
            grid=(n,),
            in_specs=[pl.BlockSpec((1, 32, 32), lambda b: (b, 0, 0))]
                     + [pl.BlockSpec(w.shape, lambda b: (0, 0)) for w in weights],
            out_specs=pl.BlockSpec((1, 1, 10), lambda b: (b, 0, 0)),
            scratch_shapes=[
                pltpu.VMEM((28, 25 * 28), jnp.float32),   # conv1 im2col   (28, 700)
                pltpu.VMEM((28, 9 * 168), jnp.float32),   # conv1_1/_2 im2col (28, 1512)
                pltpu.VMEM((10, 25 * 60), jnp.float32),   # conv3 im2col   (10, 1500)
                pltpu.VMEM((1, 400), jnp.float32),        # conv5 flatten
            ]),
        compiler_params=pltpu.CompilerParams(
            dimension_semantics=("parallel",)),
    )(x2, *weights)
    return out.reshape(n, 10)


# ------------------------------ init & reference ----------------------------


def init_params(key):
    ks = jax.random.split(key, 7)

    def w(k, shape, fan_in):
        return jax.random.normal(k, shape, jnp.float32) / np.sqrt(fan_in)

    return {
        "conv1":   w(ks[0], (6, 1, 5, 5), 1 * 5 * 5),
        "conv1_1": w(ks[1], (6, 6, 3, 3), 6 * 3 * 3),
        "conv1_2": w(ks[2], (6, 6, 3, 3), 6 * 3 * 3),
        "conv3":   w(ks[3], (16, 6, 5, 5), 6 * 5 * 5),
        "conv5":   w(ks[4], (120, 16, 5, 5), 16 * 5 * 5),
        "fc6":     w(ks[5], (84, 120), 120),
        "out":     w(ks[6], (10, 84), 84),
    }


def lenet5_repeat_reference(params, x):
    """Pure-JAX reference matching the PyTorch LeNet5Repeat.forward semantics."""
    dn = ("NCHW", "OIHW", "NCHW")

    def conv(x, w, pad):
        return jax.lax.conv_general_dilated(
            x, w, window_strides=(1, 1), padding=pad,
            dimension_numbers=dn, precision=jax.lax.Precision.HIGHEST)

    def pool(x):
        n, c, h, w = x.shape
        return x.reshape(n, c, h // 2, 2, w // 2, 2).mean(axis=(3, 5))

    x = conv(x, params["conv1"], "VALID")
    x = conv(x, params["conv1_1"], ((1, 1), (1, 1)))
    x = conv(x, params["conv1_2"], ((1, 1), (1, 1)))
    x = jax.nn.relu(x)
    x = pool(x)
    x = jax.nn.relu(conv(x, params["conv3"], "VALID"))
    x = pool(x)
    x = jax.nn.relu(conv(x, params["conv5"], "VALID"))
    x = x.mean(axis=(-1, -2))
    x = jax.nn.relu(x @ params["fc6"].T)
    return x @ params["out"].T


if __name__ == "__main__":
    key = jax.random.PRNGKey(0)
    k_x, k_p = jax.random.split(key)
    # LeNet5 geometry requires 32x32 single-channel input.
    x = jax.random.normal(k_x, (2, 1, 32, 32), jnp.float32)
    params = init_params(k_p)

    prepared = prepare_params(params)          # one-time weight expansion
    out = jax.block_until_ready(lenet5_repeat_forward(prepared, x))
    assert out.shape == (2, 10), out.shape

    ref = jax.block_until_ready(lenet5_repeat_reference(params, x))
    np.testing.assert_allclose(np.asarray(out), np.asarray(ref),
                               rtol=5e-2, atol=5e-2)
    print("KERNEL_OK")
</pallas_src>

<mosaic_0001>
module attributes {stable_mosaic.version = 11 : i64} {
  func.func @_lenet_kernel(%arg0: i32, %arg1: memref<1x32x32xf32, #tpu.memory_space<vmem>>, %arg2: memref<700x168xbf16, #tpu.memory_space<vmem>>, %arg3: memref<1512x168xbf16, #tpu.memory_space<vmem>>, %arg4: memref<1512x168xbf16, #tpu.memory_space<vmem>>, %arg5: memref<1500x160xbf16, #tpu.memory_space<vmem>>, %arg6: memref<400x120xbf16, #tpu.memory_space<vmem>>, %arg7: memref<14x28xbf16, #tpu.memory_space<vmem>>, %arg8: memref<168x84xbf16, #tpu.memory_space<vmem>>, %arg9: memref<5x10xbf16, #tpu.memory_space<vmem>>, %arg10: memref<160x80xbf16, #tpu.memory_space<vmem>>, %arg11: memref<120x84xbf16, #tpu.memory_space<vmem>>, %arg12: memref<84x10xbf16, #tpu.memory_space<vmem>>, %arg13: memref<1x1x10xf32, #tpu.memory_space<vmem>>, %arg14: memref<28x700xf32, #tpu.memory_space<vmem>>, %arg15: memref<28x1512xf32, #tpu.memory_space<vmem>>, %arg16: memref<10x1500xf32, #tpu.memory_space<vmem>>, %arg17: memref<1x400xf32, #tpu.memory_space<vmem>>) attributes {dimension_semantics = [#tpu.dimension_semantics<parallel>], iteration_bounds = array<i64: 2>, scalar_prefetch = 0 : i64, scratch_operands = 4 : i64, tpu.core_type = #tpu.core_type<tc>, window_params = [{transform_indices = @transform_0, window_bounds = array<i64: 1, 32, 32>}, {pipeline_mode = #tpu.pipeline_mode<synchronous>, transform_indices = @transform_1, window_bounds = array<i64: 700, 168>}, {pipeline_mode = #tpu.pipeline_mode<synchronous>, transform_indices = @transform_2, window_bounds = array<i64: 1512, 168>}, {pipeline_mode = #tpu.pipeline_mode<synchronous>, transform_indices = @transform_3, window_bounds = array<i64: 1512, 168>}, {pipeline_mode = #tpu.pipeline_mode<synchronous>, transform_indices = @transform_4, window_bounds = array<i64: 1500, 160>}, {pipeline_mode = #tpu.pipeline_mode<synchronous>, transform_indices = @transform_5, window_bounds = array<i64: 400, 120>}, {pipeline_mode = #tpu.pipeline_mode<synchronous>, transform_indices = @transform_6, window_bounds = array<i64: 14, 28>}, {pipeline_mode = #tpu.pipeline_mode<synchronous>, transform_indices = @transform_7, window_bounds = array<i64: 168, 84>}, {pipeline_mode = #tpu.pipeline_mode<synchronous>, transform_indices = @transform_8, window_bounds = array<i64: 5, 10>}, {pipeline_mode = #tpu.pipeline_mode<synchronous>, transform_indices = @transform_9, window_bounds = array<i64: 160, 80>}, {pipeline_mode = #tpu.pipeline_mode<synchronous>, transform_indices = @transform_10, window_bounds = array<i64: 120, 84>}, {pipeline_mode = #tpu.pipeline_mode<synchronous>, transform_indices = @transform_11, window_bounds = array<i64: 84, 10>}, {transform_indices = @transform_12, window_bounds = array<i64: 1, 1, 10>}]} {
    %c0 = arith.constant 0 : index
    %c0_0 = arith.constant 0 : index
    %c0_1 = arith.constant 0 : index
    %0 = vector.load %arg1[%c0, %c0_0, %c0_1] : memref<1x32x32xf32, #tpu.memory_space<vmem>>, vector<1x32x32xf32>
    %1 = vector.shape_cast %0 : vector<1x32x32xf32> to vector<32x32xf32>
    %2 = vector.extract_strided_slice %1 {offsets = [0, 0], sizes = [28, 28], strides = [1, 1]} : vector<32x32xf32> to vector<28x28xf32>
    %c0_2 = arith.constant 0 : index
    %c0_3 = arith.constant 0 : index
    %3 = vector.load %arg14[%c0_2, %c0_3] : memref<28x700xf32, #tpu.memory_space<vmem>>, vector<28x28xf32>
    tpu.vector_store %arg14[%c0_2, %c0_3], %2 {strides = array<i32>} : memref<28x700xf32, #tpu.memory_space<vmem>>, vector<28x28xf32>,
    %4 = vector.extract_strided_slice %1 {offsets = [0, 1], sizes = [28, 28], strides = [1, 1]} : vector<32x32xf32> to vector<28x28xf32>
    %c0_4 = arith.constant 0 : index
    %c28 = arith.constant 28 : index
    %5 = vector.load %arg14[%c0_4, %c28] : memref<28x700xf32, #tpu.memory_space<vmem>>, vector<28x28xf32>
    tpu.vector_store %arg14[%c0_4, %c28], %4 {strides = array<i32>} : memref<28x700xf32, #tpu.memory_space<vmem>>, vector<28x28xf32>,
    %6 = vector.extract_strided_slice %1 {offsets = [0, 2], sizes = [28, 28], strides = [1, 1]} : vector<32x32xf32> to vector<28x28xf32>
    %c0_5 = arith.constant 0 : index
    %c56 = arith.constant 56 : index
    %7 = vector.load %arg14[%c0_5, %c56] : memref<28x700xf32, #tpu.memory_space<vmem>>, vector<28x28xf32>
    tpu.vector_store %arg14[%c0_5, %c56], %6 {strides = array<i32>} : memref<28x700xf32, #tpu.memory_space<vmem>>, vector<28x28xf32>,
    %8 = vector.extract_strided_slice %1 {offsets = [0, 3], sizes = [28, 28], strides = [1, 1]} : vector<32x32xf32> to vector<28x28xf32>
    %c0_6 = arith.constant 0 : index
    %c84 = arith.constant 84 : index
    %9 = vector.load %arg14[%c0_6, %c84] : memref<28x700xf32, #tpu.memory_space<vmem>>, vector<28x28xf32>
    tpu.vector_store %arg14[%c0_6, %c84], %8 {strides = array<i32>} : memref<28x700xf32, #tpu.memory_space<vmem>>, vector<28x28xf32>,
    %10 = vector.extract_strided_slice %1 {offsets = [0, 4], sizes = [28, 28], strides = [1, 1]} : vector<32x32xf32> to vector<28x28xf32>
    %c0_7 = arith.constant 0 : index
    %c112 = arith.constant 112 : index
    %11 = vector.load %arg14[%c0_7, %c112] : memref<28x700xf32, #tpu.memory_space<vmem>>, vector<28x28xf32>
    tpu.vector_store %arg14[%c0_7, %c112], %10 {strides = array<i32>} : memref<28x700xf32, #tpu.memory_space<vmem>>, vector<28x28xf32>,
    %12 = vector.extract_strided_slice %1 {offsets = [1, 0], sizes = [28, 28], strides = [1, 1]} : vector<32x32xf32> to vector<28x28xf32>
    %c0_8 = arith.constant 0 : index
    %c140 = arith.constant 140 : index
    %13 = vector.load %arg14[%c0_8, %c140] : memref<28x700xf32, #tpu.memory_space<vmem>>, vector<28x28xf32>
    tpu.vector_store %arg14[%c0_8, %c140], %12 {strides = array<i32>} : memref<28x700xf32, #tpu.memory_space<vmem>>, vector<28x28xf32>,
    %14 = vector.extract_strided_slice %1 {offsets = [1, 1], sizes = [28, 28], strides = [1, 1]} : vector<32x32xf32> to vector<28x28xf32>
    %c0_9 = arith.constant 0 : index
    %c168 = arith.constant 168 : index
    %15 = vector.load %arg14[%c0_9, %c168] : memref<28x700xf32, #tpu.memory_space<vmem>>, vector<28x28xf32>
    tpu.vector_store %arg14[%c0_9, %c168], %14 {strides = array<i32>} : memref<28x700xf32, #tpu.memory_space<vmem>>, vector<28x28xf32>,
    %16 = vector.extract_strided_slice %1 {offsets = [1, 2], sizes = [28, 28], strides = [1, 1]} : vector<32x32xf32> to vector<28x28xf32>
    %c0_10 = arith.constant 0 : index
    %c196 = arith.constant 196 : index
    %17 = vector.load %arg14[%c0_10, %c196] : memref<28x700xf32, #tpu.memory_space<vmem>>, vector<28x28xf32>
    tpu.vector_store %arg14[%c0_10, %c196], %16 {strides = array<i32>} : memref<28x700xf32, #tpu.memory_space<vmem>>, vector<28x28xf32>,
    %18 = vector.extract_strided_slice %1 {offsets = [1, 3], sizes = [28, 28], strides = [1, 1]} : vector<32x32xf32> to vector<28x28xf32>
    %c0_11 = arith.constant 0 : index
    %c224 = arith.constant 224 : index
    %19 = vector.load %arg14[%c0_11, %c224] : memref<28x700xf32, #tpu.memory_space<vmem>>, vector<28x28xf32>
    tpu.vector_store %arg14[%c0_11, %c224], %18 {strides = array<i32>} : memref<28x700xf32, #tpu.memory_space<vmem>>, vector<28x28xf32>,
    %20 = vector.extract_strided_slice %1 {offsets = [1, 4], sizes = [28, 28], strides = [1, 1]} : vector<32x32xf32> to vector<28x28xf32>
    %c0_12 = arith.constant 0 : index
    %c252 = arith.constant 252 : index
    %21 = vector.load %arg14[%c0_12, %c252] : memref<28x700xf32, #tpu.memory_space<vmem>>, vector<28x28xf32>
    tpu.vector_store %arg14[%c0_12, %c252], %20 {strides = array<i32>} : memref<28x700xf32, #tpu.memory_space<vmem>>, vector<28x28xf32>,
    %22 = vector.extract_strided_slice %1 {offsets = [2, 0], sizes = [28, 28], strides = [1, 1]} : vector<32x32xf32> to vector<28x28xf32>
    %c0_13 = arith.constant 0 : index
    %c280 = arith.constant 280 : index
    %23 = vector.load %arg14[%c0_13, %c280] : memref<28x700xf32, #tpu.memory_space<vmem>>, vector<28x28xf32>
    tpu.vector_store %arg14[%c0_13, %c280], %22 {strides = array<i32>} : memref<28x700xf32, #tpu.memory_space<vmem>>, vector<28x28xf32>,
    %24 = vector.extract_strided_slice %1 {offsets = [2, 1], sizes = [28, 28], strides = [1, 1]} : vector<32x32xf32> to vector<28x28xf32>
    %c0_14 = arith.constant 0 : index
    %c308 = arith.constant 308 : index
    %25 = vector.load %arg14[%c0_14, %c308] : memref<28x700xf32, #tpu.memory_space<vmem>>, vector<28x28xf32>
    tpu.vector_store %arg14[%c0_14, %c308], %24 {strides = array<i32>} : memref<28x700xf32, #tpu.memory_space<vmem>>, vector<28x28xf32>,
    %26 = vector.extract_strided_slice %1 {offsets = [2, 2], sizes = [28, 28], strides = [1, 1]} : vector<32x32xf32> to vector<28x28xf32>
    %c0_15 = arith.constant 0 : index
    %c336 = arith.constant 336 : index
    %27 = vector.load %arg14[%c0_15, %c336] : memref<28x700xf32, #tpu.memory_space<vmem>>, vector<28x28xf32>
    tpu.vector_store %arg14[%c0_15, %c336], %26 {strides = array<i32>} : memref<28x700xf32, #tpu.memory_space<vmem>>, vector<28x28xf32>,
    %28 = vector.extract_strided_slice %1 {offsets = [2, 3], sizes = [28, 28], strides = [1, 1]} : vector<32x32xf32> to vector<28x28xf32>
    %c0_16 = arith.constant 0 : index
    %c364 = arith.constant 364 : index
    %29 = vector.load %arg14[%c0_16, %c364] : memref<28x700xf32, #tpu.memory_space<vmem>>, vector<28x28xf32>
    tpu.vector_store %arg14[%c0_16, %c364], %28 {strides = array<i32>} : memref<28x700xf32, #tpu.memory_space<vmem>>, vector<28x28xf32>,
    %30 = vector.extract_strided_slice %1 {offsets = [2, 4], sizes = [28, 28], strides = [1, 1]} : vector<32x32xf32> to vector<28x28xf32>
    %c0_17 = arith.constant 0 : index
    %c392 = arith.constant 392 : index
    %31 = vector.load %arg14[%c0_17, %c392] : memref<28x700xf32, #tpu.memory_space<vmem>>, vector<28x28xf32>
    tpu.vector_store %arg14[%c0_17, %c392], %30 {strides = array<i32>} : memref<28x700xf32, #tpu.memory_space<vmem>>, vector<28x28xf32>,
    %32 = vector.extract_strided_slice %1 {offsets = [3, 0], sizes = [28, 28], strides = [1, 1]} : vector<32x32xf32> to vector<28x28xf32>
    %c0_18 = arith.constant 0 : index
    %c420 = arith.constant 420 : index
    %33 = vector.load %arg14[%c0_18, %c420] : memref<28x700xf32, #tpu.memory_space<vmem>>, vector<28x28xf32>
    tpu.vector_store %arg14[%c0_18, %c420], %32 {strides = array<i32>} : memref<28x700xf32, #tpu.memory_space<vmem>>, vector<28x28xf32>,
    %34 = vector.extract_strided_slice %1 {offsets = [3, 1], sizes = [28, 28], strides = [1, 1]} : vector<32x32xf32> to vector<28x28xf32>
    %c0_19 = arith.constant 0 : index
    %c448 = arith.constant 448 : index
    %35 = vector.load %arg14[%c0_19, %c448] : memref<28x700xf32, #tpu.memory_space<vmem>>, vector<28x28xf32>
    tpu.vector_store %arg14[%c0_19, %c448], %34 {strides = array<i32>} : memref<28x700xf32, #tpu.memory_space<vmem>>, vector<28x28xf32>,
    %36 = vector.extract_strided_slice %1 {offsets = [3, 2], sizes = [28, 28], strides = [1, 1]} : vector<32x32xf32> to vector<28x28xf32>
    %c0_20 = arith.constant 0 : index
    %c476 = arith.constant 476 : index
    %37 = vector.load %arg14[%c0_20, %c476] : memref<28x700xf32, #tpu.memory_space<vmem>>, vector<28x28xf32>
    tpu.vector_store %arg14[%c0_20, %c476], %36 {strides = array<i32>} : memref<28x700xf32, #tpu.memory_space<vmem>>, vector<28x28xf32>,
    %38 = vector.extract_strided_slice %1 {offsets = [3, 3], sizes = [28, 28], strides = [1, 1]} : vector<32x32xf32> to vector<28x28xf32>
    %c0_21 = arith.constant 0 : index
    %c504 = arith.constant 504 : index
    %39 = vector.load %arg14[%c0_21, %c504] : memref<28x700xf32, #tpu.memory_space<vmem>>, vector<28x28xf32>
    tpu.vector_store %arg14[%c0_21, %c504], %38 {strides = array<i32>} : memref<28x700xf32, #tpu.memory_space<vmem>>, vector<28x28xf32>,
    %40 = vector.extract_strided_slice %1 {offsets = [3, 4], sizes = [28, 28], strides = [1, 1]} : vector<32x32xf32> to vector<28x28xf32>
    %c0_22 = arith.constant 0 : index
    %c532 = arith.constant 532 : index
    %41 = vector.load %arg14[%c0_22, %c532] : memref<28x700xf32, #tpu.memory_space<vmem>>, vector<28x28xf32>
    tpu.vector_store %arg14[%c0_22, %c532], %40 {strides = array<i32>} : memref<28x700xf32, #tpu.memory_space<vmem>>, vector<28x28xf32>,
    %42 = vector.extract_strided_slice %1 {offsets = [4, 0], sizes = [28, 28], strides = [1, 1]} : vector<32x32xf32> to vector<28x28xf32>
    %c0_23 = arith.constant 0 : index
    %c560 = arith.constant 560 : index
    %43 = vector.load %arg14[%c0_23, %c560] : memref<28x700xf32, #tpu.memory_space<vmem>>, vector<28x28xf32>
    tpu.vector_store %arg14[%c0_23, %c560], %42 {strides = array<i32>} : memref<28x700xf32, #tpu.memory_space<vmem>>, vector<28x28xf32>,
    %44 = vector.extract_strided_slice %1 {offsets = [4, 1], sizes = [28, 28], strides = [1, 1]} : vector<32x32xf32> to vector<28x28xf32>
    %c0_24 = arith.constant 0 : index
    %c588 = arith.constant 588 : index
    %45 = vector.load %arg14[%c0_24, %c588] : memref<28x700xf32, #tpu.memory_space<vmem>>, vector<28x28xf32>
    tpu.vector_store %arg14[%c0_24, %c588], %44 {strides = array<i32>} : memref<28x700xf32, #tpu.memory_space<vmem>>, vector<28x28xf32>,
    %46 = vector.extract_strided_slice %1 {offsets = [4, 2], sizes = [28, 28], strides = [1, 1]} : vector<32x32xf32> to vector<28x28xf32>
    %c0_25 = arith.constant 0 : index
    %c616 = arith.constant 616 : index
    %47 = vector.load %arg14[%c0_25, %c616] : memref<28x700xf32, #tpu.memory_space<vmem>>, vector<28x28xf32>
    tpu.vector_store %arg14[%c0_25, %c616], %46 {strides = array<i32>} : memref<28x700xf32, #tpu.memory_space<vmem>>, vector<28x28xf32>,
    %48 = vector.extract_strided_slice %1 {offsets = [4, 3], sizes = [28, 28], strides = [1, 1]} : vector<32x32xf32> to vector<28x28xf32>
    %c0_26 = arith.constant 0 : index
    %c644 = arith.constant 644 : index
    %49 = vector.load %arg14[%c0_26, %c644] : memref<28x700xf32, #tpu.memory_space<vmem>>, vector<28x28xf32>
    tpu.vector_store %arg14[%c0_26, %c644], %48 {strides = array<i32>} : memref<28x700xf32, #tpu.memory_space<vmem>>, vector<28x28xf32>,
    %50 = vector.extract_strided_slice %1 {offsets = [4, 4], sizes = [28, 28], strides = [1, 1]} : vector<32x32xf32> to vector<28x28xf32>
    %c0_27 = arith.constant 0 : index
    %c672 = arith.constant 672 : index
    %51 = vector.load %arg14[%c0_27, %c672] : memref<28x700xf32, #tpu.memory_space<vmem>>, vector<28x28xf32>
    tpu.vector_store %arg14[%c0_27, %c672], %50 {strides = array<i32>} : memref<28x700xf32, #tpu.memory_space<vmem>>, vector<28x28xf32>,
    %c0_28 = arith.constant 0 : index
    %c0_29 = arith.constant 0 : index
    %52 = vector.load %arg14[%c0_28, %c0_29] : memref<28x700xf32, #tpu.memory_space<vmem>>, vector<28x700xf32>
    %53 = arith.truncf %52 : vector<28x700xf32> to vector<28x700xbf16>
    %c0_30 = arith.constant 0 : index
    %c0_31 = arith.constant 0 : index
    %54 = vector.load %arg2[%c0_30, %c0_31] : memref<700x168xbf16, #tpu.memory_space<vmem>>, vector<700x168xbf16>
    %cst = arith.constant dense<0.000000e+00> : vector<28x168xf32>
    %55 = tpu.matmul %53, %54, %cst {dimension_numbers = #tpu.dot_dimension_numbers<[1], [0], [0], [1], [0, 0, 1, 1], [], []>} : vector<28x700xbf16>, vector<700x168xbf16>, vector<28x168xf32> -> vector<28x168xf32>
    %cst_32 = arith.constant 0.000000e+00 : f32
    %56 = vector.broadcast %cst_32 : f32 to vector<28x1512xf32>
    %c0_33 = arith.constant 0 : index
    %c0_34 = arith.constant 0 : index
    %57 = vector.load %arg15[%c0_33, %c0_34] : memref<28x1512xf32, #tpu.memory_space<vmem>>, vector<28x1512xf32>
    tpu.vector_store %arg15[%c0_33, %c0_34], %56 {strides = array<i32>} : memref<28x1512xf32, #tpu.memory_space<vmem>>, vector<28x1512xf32>,
    %58 = vector.extract_strided_slice %55 {offsets = [0, 0], sizes = [27, 162], strides = [1, 1]} : vector<28x168xf32> to vector<27x162xf32>
    %c1 = arith.constant 1 : index
    %c6 = arith.constant 6 : index
    %59 = vector.load %arg15[%c1, %c6] : memref<28x1512xf32, #tpu.memory_space<vmem>>, vector<27x162xf32>
    tpu.vector_store %arg15[%c1, %c6], %58 {strides = array<i32>} : memref<28x1512xf32, #tpu.memory_space<vmem>>, vector<27x162xf32>,
    %60 = vector.extract_strided_slice %55 {offsets = [0, 0], sizes = [27, 168], strides = [1, 1]} : vector<28x168xf32> to vector<27x168xf32>
    %c1_35 = arith.constant 1 : index
    %c168_36 = arith.constant 168 : index
    %61 = vector.load %arg15[%c1_35, %c168_36] : memref<28x1512xf32, #tpu.memory_space<vmem>>, vector<27x168xf32>
    tpu.vector_store %arg15[%c1_35, %c168_36], %60 {strides = array<i32>} : memref<28x1512xf32, #tpu.memory_space<vmem>>, vector<27x168xf32>,
    %62 = vector.extract_strided_slice %55 {offsets = [0, 6], sizes = [27, 162], strides = [1, 1]} : vector<28x168xf32> to vector<27x162xf32>
    %c1_37 = arith.constant 1 : index
    %c336_38 = arith.constant 336 : index
    %63 = vector.load %arg15[%c1_37, %c336_38] : memref<28x1512xf32, #tpu.memory_space<vmem>>, vector<27x162xf32>
    tpu.vector_store %arg15[%c1_37, %c336_38], %62 {strides = array<i32>} : memref<28x1512xf32, #tpu.memory_space<vmem>>, vector<27x162xf32>,
    %64 = vector.extract_strided_slice %55 {offsets = [0, 0], sizes = [28, 162], strides = [1, 1]} : vector<28x168xf32> to vector<28x162xf32>
    %c0_39 = arith.constant 0 : index
    %c510 = arith.constant 510 : index
    %65 = vector.load %arg15[%c0_39, %c510] : memref<28x1512xf32, #tpu.memory_space<vmem>>, vector<28x162xf32>
    tpu.vector_store %arg15[%c0_39, %c510], %64 {strides = array<i32>} : memref<28x1512xf32, #tpu.memory_space<vmem>>, vector<28x162xf32>,
    %c0_40 = arith.constant 0 : index
    %c672_41 = arith.constant 672 : index
    %66 = vector.load %arg15[%c0_40, %c672_41] : memref<28x1512xf32, #tpu.memory_space<vmem>>, vector<28x168xf32>
    tpu.vector_store %arg15[%c0_40, %c672_41], %55 {strides = array<i32>} : memref<28x1512xf32, #tpu.memory_space<vmem>>, vector<28x168xf32>,
    %67 = vector.extract_strided_slice %55 {offsets = [0, 6], sizes = [28, 162], strides = [1, 1]} : vector<28x168xf32> to vector<28x162xf32>
    %c0_42 = arith.constant 0 : index
    %c840 = arith.constant 840 : index
    %68 = vector.load %arg15[%c0_42, %c840] : memref<28x1512xf32, #tpu.memory_space<vmem>>, vector<28x162xf32>
    tpu.vector_store %arg15[%c0_42, %c840], %67 {strides = array<i32>} : memref<28x1512xf32, #tpu.memory_space<vmem>>, vector<28x162xf32>,
    %69 = vector.extract_strided_slice %55 {offsets = [1, 0], sizes = [27, 162], strides = [1, 1]} : vector<28x168xf32> to vector<27x162xf32>
    %c0_43 = arith.constant 0 : index
    %c1014 = arith.constant 1014 : index
    %70 = vector.load %arg15[%c0_43, %c1014] : memref<28x1512xf32, #tpu.memory_space<vmem>>, vector<27x162xf32>
    tpu.vector_store %arg15[%c0_43, %c1014], %69 {strides = array<i32>} : memref<28x1512xf32, #tpu.memory_space<vmem>>, vector<27x162xf32>,
    %71 = vector.extract_strided_slice %55 {offsets = [1, 0], sizes = [27, 168], strides = [1, 1]} : vector<28x168xf32> to vector<27x168xf32>
    %c0_44 = arith.constant 0 : index
    %c1176 = arith.constant 1176 : index
    %72 = vector.load %arg15[%c0_44, %c1176] : memref<28x1512xf32, #tpu.memory_space<vmem>>, vector<27x168xf32>
    tpu.vector_store %arg15[%c0_44, %c1176], %71 {strides = array<i32>} : memref<28x1512xf32, #tpu.memory_space<vmem>>, vector<27x168xf32>,
    %73 = vector.extract_strided_slice %55 {offsets = [1, 6], sizes = [27, 162], strides = [1, 1]} : vector<28x168xf32> to vector<27x162xf32>
    %c0_45 = arith.constant 0 : index
    %c1344 = arith.constant 1344 : index
    %74 = vector.load %arg15[%c0_45, %c1344] : memref<28x1512xf32, #tpu.memory_space<vmem>>, vector<27x162xf32>
    tpu.vector_store %arg15[%c0_45, %c1344], %73 {strides = array<i32>} : memref<28x1512xf32, #tpu.memory_space<vmem>>, vector<27x162xf32>,
    %c0_46 = arith.constant 0 : index
    %c0_47 = arith.constant 0 : index
    %75 = vector.load %arg15[%c0_46, %c0_47] : memref<28x1512xf32, #tpu.memory_space<vmem>>, vector<28x1512xf32>
    %76 = arith.truncf %75 : vector<28x1512xf32> to vector<28x1512xbf16>
    %c0_48 = arith.constant 0 : index
    %c0_49 = arith.constant 0 : index
    %77 = vector.load %arg3[%c0_48, %c0_49] : memref<1512x168xbf16, #tpu.memory_space<vmem>>, vector<1512x168xbf16>
    %cst_50 = arith.constant dense<0.000000e+00> : vector<28x168xf32>
    %78 = tpu.matmul %76, %77, %cst_50 {dimension_numbers = #tpu.dot_dimension_numbers<[1], [0], [0], [1], [0, 0, 1, 1], [], []>} : vector<28x1512xbf16>, vector<1512x168xbf16>, vector<28x168xf32> -> vector<28x168xf32>
    %cst_51 = arith.constant 0.000000e+00 : f32
    %79 = vector.broadcast %cst_51 : f32 to vector<28x1512xf32>
    %c0_52 = arith.constant 0 : index
    %c0_53 = arith.constant 0 : index
    %80 = vector.load %arg15[%c0_52, %c0_53] : memref<28x1512xf32, #tpu.memory_space<vmem>>, vector<28x1512xf32>
    tpu.vector_store %arg15[%c0_52, %c0_53], %79 {strides = array<i32>} : memref<28x1512xf32, #tpu.memory_space<vmem>>, vector<28x1512xf32>,
    %81 = vector.extract_strided_slice %78 {offsets = [0, 0], sizes = [27, 162], strides = [1, 1]} : vector<28x168xf32> to vector<27x162xf32>
    %c1_54 = arith.constant 1 : index
    %c6_55 = arith.constant 6 : index
    %82 = vector.load %arg15[%c1_54, %c6_55] : memref<28x1512xf32, #tpu.memory_space<vmem>>, vector<27x162xf32>
    tpu.vector_store %arg15[%c1_54, %c6_55], %81 {strides = array<i32>} : memref<28x1512xf32, #tpu.memory_space<vmem>>, vector<27x162xf32>,
    %83 = vector.extract_strided_slice %78 {offsets = [0, 0], sizes = [27, 168], strides = [1, 1]} : vector<28x168xf32> to vector<27x168xf32>
    %c1_56 = arith.constant 1 : index
    %c168_57 = arith.constant 168 : index
    %84 = vector.load %arg15[%c1_56, %c168_57] : memref<28x1512xf32, #tpu.memory_space<vmem>>, vector<27x168xf32>
    tpu.vector_store %arg15[%c1_56, %c168_57], %83 {strides = array<i32>} : memref<28x1512xf32, #tpu.memory_space<vmem>>, vector<27x168xf32>,
    %85 = vector.extract_strided_slice %78 {offsets = [0, 6], sizes = [27, 162], strides = [1, 1]} : vector<28x168xf32> to vector<27x162xf32>
    %c1_58 = arith.constant 1 : index
    %c336_59 = arith.constant 336 : index
    %86 = vector.load %arg15[%c1_58, %c336_59] : memref<28x1512xf32, #tpu.memory_space<vmem>>, vector<27x162xf32>
    tpu.vector_store %arg15[%c1_58, %c336_59], %85 {strides = array<i32>} : memref<28x1512xf32, #tpu.memory_space<vmem>>, vector<27x162xf32>,
    %87 = vector.extract_strided_slice %78 {offsets = [0, 0], sizes = [28, 162], strides = [1, 1]} : vector<28x168xf32> to vector<28x162xf32>
    %c0_60 = arith.constant 0 : index
    %c510_61 = arith.constant 510 : index
    %88 = vector.load %arg15[%c0_60, %c510_61] : memref<28x1512xf32, #tpu.memory_space<vmem>>, vector<28x162xf32>
    tpu.vector_store %arg15[%c0_60, %c510_61], %87 {strides = array<i32>} : memref<28x1512xf32, #tpu.memory_space<vmem>>, vector<28x162xf32>,
    %c0_62 = arith.constant 0 : index
    %c672_63 = arith.constant 672 : index
    %89 = vector.load %arg15[%c0_62, %c672_63] : memref<28x1512xf32, #tpu.memory_space<vmem>>, vector<28x168xf32>
    tpu.vector_store %arg15[%c0_62, %c672_63], %78 {strides = array<i32>} : memref<28x1512xf32, #tpu.memory_space<vmem>>, vector<28x168xf32>,
    %90 = vector.extract_strided_slice %78 {offsets = [0, 6], sizes = [28, 162], strides = [1, 1]} : vector<28x168xf32> to vector<28x162xf32>
    %c0_64 = arith.constant 0 : index
    %c840_65 = arith.constant 840 : index
    %91 = vector.load %arg15[%c0_64, %c840_65] : memref<28x1512xf32, #tpu.memory_space<vmem>>, vector<28x162xf32>
    tpu.vector_store %arg15[%c0_64, %c840_65], %90 {strides = array<i32>} : memref<28x1512xf32, #tpu.memory_space<vmem>>, vector<28x162xf32>,
    %92 = vector.extract_strided_slice %78 {offsets = [1, 0], sizes = [27, 162], strides = [1, 1]} : vector<28x168xf32> to vector<27x162xf32>
    %c0_66 = arith.constant 0 : index
    %c1014_67 = arith.constant 1014 : index
    %93 = vector.load %arg15[%c0_66, %c1014_67] : memref<28x1512xf32, #tpu.memory_space<vmem>>, vector<27x162xf32>
    tpu.vector_store %arg15[%c0_66, %c1014_67], %92 {strides = array<i32>} : memref<28x1512xf32, #tpu.memory_space<vmem>>, vector<27x162xf32>,
    %94 = vector.extract_strided_slice %78 {offsets = [1, 0], sizes = [27, 168], strides = [1, 1]} : vector<28x168xf32> to vector<27x168xf32>
    %c0_68 = arith.constant 0 : index
    %c1176_69 = arith.constant 1176 : index
    %95 = vector.load %arg15[%c0_68, %c1176_69] : memref<28x1512xf32, #tpu.memory_space<vmem>>, vector<27x168xf32>
    tpu.vector_store %arg15[%c0_68, %c1176_69], %94 {strides = array<i32>} : memref<28x1512xf32, #tpu.memory_space<vmem>>, vector<27x168xf32>,
    %96 = vector.extract_strided_slice %78 {offsets = [1, 6], sizes = [27, 162], strides = [1, 1]} : vector<28x168xf32> to vector<27x162xf32>
    %c0_70 = arith.constant 0 : index
    %c1344_71 = arith.constant 1344 : index
    %97 = vector.load %arg15[%c0_70, %c1344_71] : memref<28x1512xf32, #tpu.memory_space<vmem>>, vector<27x162xf32>
    tpu.vector_store %arg15[%c0_70, %c1344_71], %96 {strides = array<i32>} : memref<28x1512xf32, #tpu.memory_space<vmem>>, vector<27x162xf32>,
    %c0_72 = arith.constant 0 : index
    %c0_73 = arith.constant 0 : index
    %98 = vector.load %arg15[%c0_72, %c0_73] : memref<28x1512xf32, #tpu.memory_space<vmem>>, vector<28x1512xf32>
    %99 = arith.truncf %98 : vector<28x1512xf32> to vector<28x1512xbf16>
    %c0_74 = arith.constant 0 : index
    %c0_75 = arith.constant 0 : index
    %100 = vector.load %arg4[%c0_74, %c0_75] : memref<1512x168xbf16, #tpu.memory_space<vmem>>, vector<1512x168xbf16>
    %cst_76 = arith.constant dense<0.000000e+00> : vector<28x168xf32>
    %101 = tpu.matmul %99, %100, %cst_76 {dimension_numbers = #tpu.dot_dimension_numbers<[1], [0], [0], [1], [0, 0, 1, 1], [], []>} : vector<28x1512xbf16>, vector<1512x168xbf16>, vector<28x168xf32> -> vector<28x168xf32>
    %cst_77 = arith.constant 0.000000e+00 : f32
    %102 = vector.broadcast %cst_77 : f32 to vector<28x168xf32>
    %103 = arith.maximumf %101, %102 : vector<28x168xf32>
    %c0_78 = arith.constant 0 : index
    %c0_79 = arith.constant 0 : index
    %104 = vector.load %arg7[%c0_78, %c0_79] : memref<14x28xbf16, #tpu.memory_space<vmem>>, vector<14x28xbf16>
    %105 = arith.truncf %103 : vector<28x168xf32> to vector<28x168xbf16>
    %c0_80 = arith.constant 0 : index
    %c0_81 = arith.constant 0 : index
    %106 = vector.load %arg8[%c0_80, %c0_81] : memref<168x84xbf16, #tpu.memory_space<vmem>>, vector<168x84xbf16>
    %cst_82 = arith.constant dense<0.000000e+00> : vector<28x84xf32>
    %107 = tpu.matmul %105, %106, %cst_82 {dimension_numbers = #tpu.dot_dimension_numbers<[1], [0], [0], [1], [0, 0, 1, 1], [], []>} : vector<28x168xbf16>, vector<168x84xbf16>, vector<28x84xf32> -> vector<28x84xf32>
    %108 = arith.truncf %107 : vector<28x84xf32> to vector<28x84xbf16>
    %cst_83 = arith.constant dense<0.000000e+00> : vector<14x84xf32>
    %109 = tpu.matmul %104, %108, %cst_83 {dimension_numbers = #tpu.dot_dimension_numbers<[1], [0], [0], [1], [0, 0, 1, 1], [], []>} : vector<14x28xbf16>, vector<28x84xbf16>, vector<14x84xf32> -> vector<14x84xf32>
    %110 = vector.extract_strided_slice %109 {offsets = [0, 0], sizes = [10, 60], strides = [1, 1]} : vector<14x84xf32> to vector<10x60xf32>
    %c0_84 = arith.constant 0 : index
    %c0_85 = arith.constant 0 : index
    %111 = vector.load %arg16[%c0_84, %c0_85] : memref<10x1500xf32, #tpu.memory_space<vmem>>, vector<10x60xf32>
    tpu.vector_store %arg16[%c0_84, %c0_85], %110 {strides = array<i32>} : memref<10x1500xf32, #tpu.memory_space<vmem>>, vector<10x60xf32>,
    %112 = vector.extract_strided_slice %109 {offsets = [0, 6], sizes = [10, 60], strides = [1, 1]} : vector<14x84xf32> to vector<10x60xf32>
    %c0_86 = arith.constant 0 : index
    %c60 = arith.constant 60 : index
    %113 = vector.load %arg16[%c0_86, %c60] : memref<10x1500xf32, #tpu.memory_space<vmem>>, vector<10x60xf32>
    tpu.vector_store %arg16[%c0_86, %c60], %112 {strides = array<i32>} : memref<10x1500xf32, #tpu.memory_space<vmem>>, vector<10x60xf32>,
    %114 = vector.extract_strided_slice %109 {offsets = [0, 12], sizes = [10, 60], strides = [1, 1]} : vector<14x84xf32> to vector<10x60xf32>
    %c0_87 = arith.constant 0 : index
    %c120 = arith.constant 120 : index
    %115 = vector.load %arg16[%c0_87, %c120] : memref<10x1500xf32, #tpu.memory_space<vmem>>, vector<10x60xf32>
    tpu.vector_store %arg16[%c0_87, %c120], %114 {strides = array<i32>} : memref<10x1500xf32, #tpu.memory_space<vmem>>, vector<10x60xf32>,
    %116 = vector.extract_strided_slice %109 {offsets = [0, 18], sizes = [10, 60], strides = [1, 1]} : vector<14x84xf32> to vector<10x60xf32>
    %c0_88 = arith.constant 0 : index
    %c180 = arith.constant 180 : index
    %117 = vector.load %arg16[%c0_88, %c180] : memref<10x1500xf32, #tpu.memory_space<vmem>>, vector<10x60xf32>
    tpu.vector_store %arg16[%c0_88, %c180], %116 {strides = array<i32>} : memref<10x1500xf32, #tpu.memory_space<vmem>>, vector<10x60xf32>,
    %118 = vector.extract_strided_slice %109 {offsets = [0, 24], sizes = [10, 60], strides = [1, 1]} : vector<14x84xf32> to vector<10x60xf32>
    %c0_89 = arith.constant 0 : index
    %c240 = arith.constant 240 : index
    %119 = vector.load %arg16[%c0_89, %c240] : memref<10x1500xf32, #tpu.memory_space<vmem>>, vector<10x60xf32>
    tpu.vector_store %arg16[%c0_89, %c240], %118 {strides = array<i32>} : memref<10x1500xf32, #tpu.memory_space<vmem>>, vector<10x60xf32>,
    %120 = vector.extract_strided_slice %109 {offsets = [1, 0], sizes = [10, 60], strides = [1, 1]} : vector<14x84xf32> to vector<10x60xf32>
    %c0_90 = arith.constant 0 : index
    %c300 = arith.constant 300 : index
    %121 = vector.load %arg16[%c0_90, %c300] : memref<10x1500xf32, #tpu.memory_space<vmem>>, vector<10x60xf32>
    tpu.vector_store %arg16[%c0_90, %c300], %120 {strides = array<i32>} : memref<10x1500xf32, #tpu.memory_space<vmem>>, vector<10x60xf32>,
    %122 = vector.extract_strided_slice %109 {offsets = [1, 6], sizes = [10, 60], strides = [1, 1]} : vector<14x84xf32> to vector<10x60xf32>
    %c0_91 = arith.constant 0 : index
    %c360 = arith.constant 360 : index
    %123 = vector.load %arg16[%c0_91, %c360] : memref<10x1500xf32, #tpu.memory_space<vmem>>, vector<10x60xf32>
    tpu.vector_store %arg16[%c0_91, %c360], %122 {strides = array<i32>} : memref<10x1500xf32, #tpu.memory_space<vmem>>, vector<10x60xf32>,
    %124 = vector.extract_strided_slice %109 {offsets = [1, 12], sizes = [10, 60], strides = [1, 1]} : vector<14x84xf32> to vector<10x60xf32>
    %c0_92 = arith.constant 0 : index
    %c420_93 = arith.constant 420 : index
    %125 = vector.load %arg16[%c0_92, %c420_93] : memref<10x1500xf32, #tpu.memory_space<vmem>>, vector<10x60xf32>
    tpu.vector_store %arg16[%c0_92, %c420_93], %124 {strides = array<i32>} : memref<10x1500xf32, #tpu.memory_space<vmem>>, vector<10x60xf32>,
    %126 = vector.extract_strided_slice %109 {offsets = [1, 18], sizes = [10, 60], strides = [1, 1]} : vector<14x84xf32> to vector<10x60xf32>
    %c0_94 = arith.constant 0 : index
    %c480 = arith.constant 480 : index
    %127 = vector.load %arg16[%c0_94, %c480] : memref<10x1500xf32, #tpu.memory_space<vmem>>, vector<10x60xf32>
    tpu.vector_store %arg16[%c0_94, %c480], %126 {strides = array<i32>} : memref<10x1500xf32, #tpu.memory_space<vmem>>, vector<10x60xf32>,
    %128 = vector.extract_strided_slice %109 {offsets = [1, 24], sizes = [10, 60], strides = [1, 1]} : vector<14x84xf32> to vector<10x60xf32>
    %c0_95 = arith.constant 0 : index
    %c540 = arith.constant 540 : index
    %129 = vector.load %arg16[%c0_95, %c540] : memref<10x1500xf32, #tpu.memory_space<vmem>>, vector<10x60xf32>
    tpu.vector_store %arg16[%c0_95, %c540], %128 {strides = array<i32>} : memref<10x1500xf32, #tpu.memory_space<vmem>>, vector<10x60xf32>,
    %130 = vector.extract_strided_slice %109 {offsets = [2, 0], sizes = [10, 60], strides = [1, 1]} : vector<14x84xf32> to vector<10x60xf32>
    %c0_96 = arith.constant 0 : index
    %c600 = arith.constant 600 : index
    %131 = vector.load %arg16[%c0_96, %c600] : memref<10x1500xf32, #tpu.memory_space<vmem>>, vector<10x60xf32>
    tpu.vector_store %arg16[%c0_96, %c600], %130 {strides = array<i32>} : memref<10x1500xf32, #tpu.memory_space<vmem>>, vector<10x60xf32>,
    %132 = vector.extract_strided_slice %109 {offsets = [2, 6], sizes = [10, 60], strides = [1, 1]} : vector<14x84xf32> to vector<10x60xf32>
    %c0_97 = arith.constant 0 : index
    %c660 = arith.constant 660 : index
    %133 = vector.load %arg16[%c0_97, %c660] : memref<10x1500xf32, #tpu.memory_space<vmem>>, vector<10x60xf32>
    tpu.vector_store %arg16[%c0_97, %c660], %132 {strides = array<i32>} : memref<10x1500xf32, #tpu.memory_space<vmem>>, vector<10x60xf32>,
    %134 = vector.extract_strided_slice %109 {offsets = [2, 12], sizes = [10, 60], strides = [1, 1]} : vector<14x84xf32> to vector<10x60xf32>
    %c0_98 = arith.constant 0 : index
    %c720 = arith.constant 720 : index
    %135 = vector.load %arg16[%c0_98, %c720] : memref<10x1500xf32, #tpu.memory_space<vmem>>, vector<10x60xf32>
    tpu.vector_store %arg16[%c0_98, %c720], %134 {strides = array<i32>} : memref<10x1500xf32, #tpu.memory_space<vmem>>, vector<10x60xf32>,
    %136 = vector.extract_strided_slice %109 {offsets = [2, 18], sizes = [10, 60], strides = [1, 1]} : vector<14x84xf32> to vector<10x60xf32>
    %c0_99 = arith.constant 0 : index
    %c780 = arith.constant 780 : index
    %137 = vector.load %arg16[%c0_99, %c780] : memref<10x1500xf32, #tpu.memory_space<vmem>>, vector<10x60xf32>
    tpu.vector_store %arg16[%c0_99, %c780], %136 {strides = array<i32>} : memref<10x1500xf32, #tpu.memory_space<vmem>>, vector<10x60xf32>,
    %138 = vector.extract_strided_slice %109 {offsets = [2, 24], sizes = [10, 60], strides = [1, 1]} : vector<14x84xf32> to vector<10x60xf32>
    %c0_100 = arith.constant 0 : index
    %c840_101 = arith.constant 840 : index
    %139 = vector.load %arg16[%c0_100, %c840_101] : memref<10x1500xf32, #tpu.memory_space<vmem>>, vector<10x60xf32>
    tpu.vector_store %arg16[%c0_100, %c840_101], %138 {strides = array<i32>} : memref<10x1500xf32, #tpu.memory_space<vmem>>, vector<10x60xf32>,
    %140 = vector.extract_strided_slice %109 {offsets = [3, 0], sizes = [10, 60], strides = [1, 1]} : vector<14x84xf32> to vector<10x60xf32>
    %c0_102 = arith.constant 0 : index
    %c900 = arith.constant 900 : index
    %141 = vector.load %arg16[%c0_102, %c900] : memref<10x1500xf32, #tpu.memory_space<vmem>>, vector<10x60xf32>
    tpu.vector_store %arg16[%c0_102, %c900], %140 {strides = array<i32>} : memref<10x1500xf32, #tpu.memory_space<vmem>>, vector<10x60xf32>,
    %142 = vector.extract_strided_slice %109 {offsets = [3, 6], sizes = [10, 60], strides = [1, 1]} : vector<14x84xf32> to vector<10x60xf32>
    %c0_103 = arith.constant 0 : index
    %c960 = arith.constant 960 : index
    %143 = vector.load %arg16[%c0_103, %c960] : memref<10x1500xf32, #tpu.memory_space<vmem>>, vector<10x60xf32>
    tpu.vector_store %arg16[%c0_103, %c960], %142 {strides = array<i32>} : memref<10x1500xf32, #tpu.memory_space<vmem>>, vector<10x60xf32>,
    %144 = vector.extract_strided_slice %109 {offsets = [3, 12], sizes = [10, 60], strides = [1, 1]} : vector<14x84xf32> to vector<10x60xf32>
    %c0_104 = arith.constant 0 : index
    %c1020 = arith.constant 1020 : index
    %145 = vector.load %arg16[%c0_104, %c1020] : memref<10x1500xf32, #tpu.memory_space<vmem>>, vector<10x60xf32>
    tpu.vector_store %arg16[%c0_104, %c1020], %144 {strides = array<i32>} : memref<10x1500xf32, #tpu.memory_space<vmem>>, vector<10x60xf32>,
    %146 = vector.extract_strided_slice %109 {offsets = [3, 18], sizes = [10, 60], strides = [1, 1]} : vector<14x84xf32> to vector<10x60xf32>
    %c0_105 = arith.constant 0 : index
    %c1080 = arith.constant 1080 : index
    %147 = vector.load %arg16[%c0_105, %c1080] : memref<10x1500xf32, #tpu.memory_space<vmem>>, vector<10x60xf32>
    tpu.vector_store %arg16[%c0_105, %c1080], %146 {strides = array<i32>} : memref<10x1500xf32, #tpu.memory_space<vmem>>, vector<10x60xf32>,
    %148 = vector.extract_strided_slice %109 {offsets = [3, 24], sizes = [10, 60], strides = [1, 1]} : vector<14x84xf32> to vector<10x60xf32>
    %c0_106 = arith.constant 0 : index
    %c1140 = arith.constant 1140 : index
    %149 = vector.load %arg16[%c0_106, %c1140] : memref<10x1500xf32, #tpu.memory_space<vmem>>, vector<10x60xf32>
    tpu.vector_store %arg16[%c0_106, %c1140], %148 {strides = array<i32>} : memref<10x1500xf32, #tpu.memory_space<vmem>>, vector<10x60xf32>,
    %150 = vector.extract_strided_slice %109 {offsets = [4, 0], sizes = [10, 60], strides = [1, 1]} : vector<14x84xf32> to vector<10x60xf32>
    %c0_107 = arith.constant 0 : index
    %c1200 = arith.constant 1200 : index
    %151 = vector.load %arg16[%c0_107, %c1200] : memref<10x1500xf32, #tpu.memory_space<vmem>>, vector<10x60xf32>
    tpu.vector_store %arg16[%c0_107, %c1200], %150 {strides = array<i32>} : memref<10x1500xf32, #tpu.memory_space<vmem>>, vector<10x60xf32>,
    %152 = vector.extract_strided_slice %109 {offsets = [4, 6], sizes = [10, 60], strides = [1, 1]} : vector<14x84xf32> to vector<10x60xf32>
    %c0_108 = arith.constant 0 : index
    %c1260 = arith.constant 1260 : index
    %153 = vector.load %arg16[%c0_108, %c1260] : memref<10x1500xf32, #tpu.memory_space<vmem>>, vector<10x60xf32>
    tpu.vector_store %arg16[%c0_108, %c1260], %152 {strides = array<i32>} : memref<10x1500xf32, #tpu.memory_space<vmem>>, vector<10x60xf32>,
    %154 = vector.extract_strided_slice %109 {offsets = [4, 12], sizes = [10, 60], strides = [1, 1]} : vector<14x84xf32> to vector<10x60xf32>
    %c0_109 = arith.constant 0 : index
    %c1320 = arith.constant 1320 : index
    %155 = vector.load %arg16[%c0_109, %c1320] : memref<10x1500xf32, #tpu.memory_space<vmem>>, vector<10x60xf32>
    tpu.vector_store %arg16[%c0_109, %c1320], %154 {strides = array<i32>} : memref<10x1500xf32, #tpu.memory_space<vmem>>, vector<10x60xf32>,
    %156 = vector.extract_strided_slice %109 {offsets = [4, 18], sizes = [10, 60], strides = [1, 1]} : vector<14x84xf32> to vector<10x60xf32>
    %c0_110 = arith.constant 0 : index
    %c1380 = arith.constant 1380 : index
    %157 = vector.load %arg16[%c0_110, %c1380] : memref<10x1500xf32, #tpu.memory_space<vmem>>, vector<10x60xf32>
    tpu.vector_store %arg16[%c0_110, %c1380], %156 {strides = array<i32>} : memref<10x1500xf32, #tpu.memory_space<vmem>>, vector<10x60xf32>,
    %158 = vector.extract_strided_slice %109 {offsets = [4, 24], sizes = [10, 60], strides = [1, 1]} : vector<14x84xf32> to vector<10x60xf32>
    %c0_111 = arith.constant 0 : index
    %c1440 = arith.constant 1440 : index
    %159 = vector.load %arg16[%c0_111, %c1440] : memref<10x1500xf32, #tpu.memory_space<vmem>>, vector<10x60xf32>
    tpu.vector_store %arg16[%c0_111, %c1440], %158 {strides = array<i32>} : memref<10x1500xf32, #tpu.memory_space<vmem>>, vector<10x60xf32>,
    %c0_112 = arith.constant 0 : index
    %c0_113 = arith.constant 0 : index
    %160 = vector.load %arg16[%c0_112, %c0_113] : memref<10x1500xf32, #tpu.memory_space<vmem>>, vector<10x1500xf32>
    %161 = arith.truncf %160 : vector<10x1500xf32> to vector<10x1500xbf16>
    %c0_114 = arith.constant 0 : index
    %c0_115 = arith.constant 0 : index
    %162 = vector.load %arg5[%c0_114, %c0_115] : memref<1500x160xbf16, #tpu.memory_space<vmem>>, vector<1500x160xbf16>
    %cst_116 = arith.constant dense<0.000000e+00> : vector<10x160xf32>
    %163 = tpu.matmul %161, %162, %cst_116 {dimension_numbers = #tpu.dot_dimension_numbers<[1], [0], [0], [1], [0, 0, 1, 1], [], []>} : vector<10x1500xbf16>, vector<1500x160xbf16>, vector<10x160xf32> -> vector<10x160xf32>
    %cst_117 = arith.constant 0.000000e+00 : f32
    %164 = vector.broadcast %cst_117 : f32 to vector<10x160xf32>
    %165 = arith.maximumf %163, %164 : vector<10x160xf32>
    %c0_118 = arith.constant 0 : index
    %c0_119 = arith.constant 0 : index
    %166 = vector.load %arg9[%c0_118, %c0_119] : memref<5x10xbf16, #tpu.memory_space<vmem>>, vector<5x10xbf16>
    %167 = arith.truncf %165 : vector<10x160xf32> to vector<10x160xbf16>
    %c0_120 = arith.constant 0 : index
    %c0_121 = arith.constant 0 : index
    %168 = vector.load %arg10[%c0_120, %c0_121] : memref<160x80xbf16, #tpu.memory_space<vmem>>, vector<160x80xbf16>
    %cst_122 = arith.constant dense<0.000000e+00> : vector<10x80xf32>
    %169 = tpu.matmul %167, %168, %cst_122 {dimension_numbers = #tpu.dot_dimension_numbers<[1], [0], [0], [1], [0, 0, 1, 1], [], []>} : vector<10x160xbf16>, vector<160x80xbf16>, vector<10x80xf32> -> vector<10x80xf32>
    %170 = arith.truncf %169 : vector<10x80xf32> to vector<10x80xbf16>
    %cst_123 = arith.constant dense<0.000000e+00> : vector<5x80xf32>
    %171 = tpu.matmul %166, %170, %cst_123 {dimension_numbers = #tpu.dot_dimension_numbers<[1], [0], [0], [1], [0, 0, 1, 1], [], []>} : vector<5x10xbf16>, vector<10x80xbf16>, vector<5x80xf32> -> vector<5x80xf32>
    %172 = vector.extract_strided_slice %171 {offsets = [0, 0], sizes = [1, 80], strides = [1, 1]} : vector<5x80xf32> to vector<1x80xf32>
    %c0_124 = arith.constant 0 : index
    %c0_125 = arith.constant 0 : index
    %173 = vector.load %arg17[%c0_124, %c0_125] : memref<1x400xf32, #tpu.memory_space<vmem>>, vector<1x80xf32>
    tpu.vector_store %arg17[%c0_124, %c0_125], %172 {strides = array<i32>} : memref<1x400xf32, #tpu.memory_space<vmem>>, vector<1x80xf32>,
    %174 = vector.extract_strided_slice %171 {offsets = [1, 0], sizes = [1, 80], strides = [1, 1]} : vector<5x80xf32> to vector<1x80xf32>
    %c0_126 = arith.constant 0 : index
    %c80 = arith.constant 80 : index
    %175 = vector.load %arg17[%c0_126, %c80] : memref<1x400xf32, #tpu.memory_space<vmem>>, vector<1x80xf32>
    tpu.vector_store %arg17[%c0_126, %c80], %174 {strides = array<i32>} : memref<1x400xf32, #tpu.memory_space<vmem>>, vector<1x80xf32>,
    %176 = vector.extract_strided_slice %171 {offsets = [2, 0], sizes = [1, 80], strides = [1, 1]} : vector<5x80xf32> to vector<1x80xf32>
    %c0_127 = arith.constant 0 : index
    %c160 = arith.constant 160 : index
    %177 = vector.load %arg17[%c0_127, %c160] : memref<1x400xf32, #tpu.memory_space<vmem>>, vector<1x80xf32>
    tpu.vector_store %arg17[%c0_127, %c160], %176 {strides = array<i32>} : memref<1x400xf32, #tpu.memory_space<vmem>>, vector<1x80xf32>,
    %178 = vector.extract_strided_slice %171 {offsets = [3, 0], sizes = [1, 80], strides = [1, 1]} : vector<5x80xf32> to vector<1x80xf32>
    %c0_128 = arith.constant 0 : index
    %c240_129 = arith.constant 240 : index
    %179 = vector.load %arg17[%c0_128, %c240_129] : memref<1x400xf32, #tpu.memory_space<vmem>>, vector<1x80xf32>
    tpu.vector_store %arg17[%c0_128, %c240_129], %178 {strides = array<i32>} : memref<1x400xf32, #tpu.memory_space<vmem>>, vector<1x80xf32>,
    %180 = vector.extract_strided_slice %171 {offsets = [4, 0], sizes = [1, 80], strides = [1, 1]} : vector<5x80xf32> to vector<1x80xf32>
    %c0_130 = arith.constant 0 : index
    %c320 = arith.constant 320 : index
    %181 = vector.load %arg17[%c0_130, %c320] : memref<1x400xf32, #tpu.memory_space<vmem>>, vector<1x80xf32>
    tpu.vector_store %arg17[%c0_130, %c320], %180 {strides = array<i32>} : memref<1x400xf32, #tpu.memory_space<vmem>>, vector<1x80xf32>,
    %c0_131 = arith.constant 0 : index
    %c0_132 = arith.constant 0 : index
    %182 = vector.load %arg17[%c0_131, %c0_132] : memref<1x400xf32, #tpu.memory_space<vmem>>, vector<1x400xf32>
    %183 = arith.truncf %182 : vector<1x400xf32> to vector<1x400xbf16>
    %c0_133 = arith.constant 0 : index
    %c0_134 = arith.constant 0 : index
    %184 = vector.load %arg6[%c0_133, %c0_134] : memref<400x120xbf16, #tpu.memory_space<vmem>>, vector<400x120xbf16>
    %cst_135 = arith.constant dense<0.000000e+00> : vector<1x120xf32>
    %185 = tpu.matmul %183, %184, %cst_135 {dimension_numbers = #tpu.dot_dimension_numbers<[1], [0], [0], [1], [0, 0, 1, 1], [], []>} : vector<1x400xbf16>, vector<400x120xbf16>, vector<1x120xf32> -> vector<1x120xf32>
    %cst_136 = arith.constant 0.000000e+00 : f32
    %186 = vector.broadcast %cst_136 : f32 to vector<1x120xf32>
    %187 = arith.maximumf %185, %186 : vector<1x120xf32>
    %188 = arith.truncf %187 : vector<1x120xf32> to vector<1x120xbf16>
    %c0_137 = arith.constant 0 : index
    %c0_138 = arith.constant 0 : index
    %189 = vector.load %arg11[%c0_137, %c0_138] : memref<120x84xbf16, #tpu.memory_space<vmem>>, vector<120x84xbf16>
    %cst_139 = arith.constant dense<0.000000e+00> : vector<1x84xf32>
    %190 = tpu.matmul %188, %189, %cst_139 {dimension_numbers = #tpu.dot_dimension_numbers<[1], [0], [0], [1], [0, 0, 1, 1], [], []>} : vector<1x120xbf16>, vector<120x84xbf16>, vector<1x84xf32> -> vector<1x84xf32>
    %cst_140 = arith.constant 0.000000e+00 : f32
    %191 = vector.broadcast %cst_140 : f32 to vector<1x84xf32>
    %192 = arith.maximumf %190, %191 : vector<1x84xf32>
    %193 = arith.truncf %192 : vector<1x84xf32> to vector<1x84xbf16>
    %c0_141 = arith.constant 0 : index
    %c0_142 = arith.constant 0 : index
    %194 = vector.load %arg12[%c0_141, %c0_142] : memref<84x10xbf16, #tpu.memory_space<vmem>>, vector<84x10xbf16>
    %cst_143 = arith.constant dense<0.000000e+00> : vector<1x10xf32>
    %195 = tpu.matmul %193, %194, %cst_143 {dimension_numbers = #tpu.dot_dimension_numbers<[1], [0], [0], [1], [0, 0, 1, 1], [], []>} : vector<1x84xbf16>, vector<84x10xbf16>, vector<1x10xf32> -> vector<1x10xf32>
    %c0_144 = arith.constant 0 : index
    %c0_145 = arith.constant 0 : index
    %c0_146 = arith.constant 0 : index
    %196 = vector.load %arg13[%c0_144, %c0_145, %c0_146] : memref<1x1x10xf32, #tpu.memory_space<vmem>>, vector<1x1x10xf32>
    %197 = vector.shape_cast %196 : vector<1x1x10xf32> to vector<1x10xf32>
    %198 = vector.shape_cast %195 : vector<1x10xf32> to vector<1x1x10xf32>
    tpu.vector_store %arg13[%c0_144, %c0_145, %c0_146], %198 {strides = array<i32>} : memref<1x1x10xf32, #tpu.memory_space<vmem>>, vector<1x1x10xf32>,
    return
  }
  func.func @transform_0(%arg0: i32) -> (i32, i32, i32) {
    %c0_i32 = arith.constant 0 : i32
    %c0_i32_0 = arith.constant 0 : i32
    %c0_i32_1 = arith.constant 0 : i32
    return %arg0, %c0_i32, %c0_i32_0 : i32, i32, i32
  }
  func.func @transform_1(%arg0: i32) -> (i32, i32) {
    %c0_i32 = arith.constant 0 : i32
    %c0_i32_0 = arith.constant 0 : i32
    %c0_i32_1 = arith.constant 0 : i32
    return %c0_i32, %c0_i32_0 : i32, i32
  }
  func.func @transform_2(%arg0: i32) -> (i32, i32) {
    %c0_i32 = arith.constant 0 : i32
    %c0_i32_0 = arith.constant 0 : i32
    %c0_i32_1 = arith.constant 0 : i32
    return %c0_i32, %c0_i32_0 : i32, i32
  }
  func.func @transform_3(%arg0: i32) -> (i32, i32) {
    %c0_i32 = arith.constant 0 : i32
    %c0_i32_0 = arith.constant 0 : i32
    %c0_i32_1 = arith.constant 0 : i32
    return %c0_i32, %c0_i32_0 : i32, i32
  }
  func.func @transform_4(%arg0: i32) -> (i32, i32) {
    %c0_i32 = arith.constant 0 : i32
    %c0_i32_0 = arith.constant 0 : i32
    %c0_i32_1 = arith.constant 0 : i32
    return %c0_i32, %c0_i32_0 : i32, i32
  }
  func.func @transform_5(%arg0: i32) -> (i32, i32) {
    %c0_i32 = arith.constant 0 : i32
    %c0_i32_0 = arith.constant 0 : i32
    %c0_i32_1 = arith.constant 0 : i32
    return %c0_i32, %c0_i32_0 : i32, i32
  }
  func.func @transform_6(%arg0: i32) -> (i32, i32) {
    %c0_i32 = arith.constant 0 : i32
    %c0_i32_0 = arith.constant 0 : i32
    %c0_i32_1 = arith.constant 0 : i32
    return %c0_i32, %c0_i32_0 : i32, i32
  }
  func.func @transform_7(%arg0: i32) -> (i32, i32) {
    %c0_i32 = arith.constant 0 : i32
    %c0_i32_0 = arith.constant 0 : i32
    %c0_i32_1 = arith.constant 0 : i32
    return %c0_i32, %c0_i32_0 : i32, i32
  }
  func.func @transform_8(%arg0: i32) -> (i32, i32) {
    %c0_i32 = arith.constant 0 : i32
    %c0_i32_0 = arith.constant 0 : i32
    %c0_i32_1 = arith.constant 0 : i32
    return %c0_i32, %c0_i32_0 : i32, i32
  }
  func.func @transform_9(%arg0: i32) -> (i32, i32) {
    %c0_i32 = arith.constant 0 : i32
    %c0_i32_0 = arith.constant 0 : i32
    %c0_i32_1 = arith.constant 0 : i32
    return %c0_i32, %c0_i32_0 : i32, i32
  }
  func.func @transform_10(%arg0: i32) -> (i32, i32) {
    %c0_i32 = arith.constant 0 : i32
    %c0_i32_0 = arith.constant 0 : i32
    %c0_i32_1 = arith.constant 0 : i32
    return %c0_i32, %c0_i32_0 : i32, i32
  }
  func.func @transform_11(%arg0: i32) -> (i32, i32) {
    %c0_i32 = arith.constant 0 : i32
    %c0_i32_0 = arith.constant 0 : i32
    %c0_i32_1 = arith.constant 0 : i32
    return %c0_i32, %c0_i32_0 : i32, i32
  }
  func.func @transform_12(%arg0: i32) -> (i32, i32, i32) {
    %c0_i32 = arith.constant 0 : i32
    %c0_i32_0 = arith.constant 0 : i32
    %c0_i32_1 = arith.constant 0 : i32
    return %arg0, %c0_i32, %c0_i32_0 : i32, i32, i32
  }
}

</mosaic_0001>

<llo_original>
// kernel: lenet5_repeat_forward.1
$region0: #{lenet5_repeat_forward.1}
  #allocation0 [shape = 'u32[]', space=smem, size = 0x4, offset = 0x4, fixed_abs, tag = 'smem constant byte address 0x4 - core index']
  #allocation1 [shape = 'u32[144,128]{1,0:T(1,128)}', space=vmem, size = 0x12000, scoped, tag = 'internal scratch']
  #allocation2 [shape = 'f32[28,700]{1,0:T(8,128)}', space=vmem, size = 0x18000, scoped, tag = 'scratch operand']
  #allocation3 [shape = 'f32[28,1512]{1,0:T(8,128)}', space=vmem, size = 0x30000, scoped, tag = 'scratch operand']
  #allocation4 [shape = 'f32[10,1500]{1,0:T(8,128)}', space=vmem, size = 0x18000, scoped, tag = 'scratch operand']
  #allocation5 [shape = 'f32[1,400]{1,0:T(1,128)}', space=vmem, size = 0x800, scoped, tag = 'scratch operand']
  %s0 = inlined_call_operand.vmem [shape: f32[2,32,32], index: 0, kind: input, shape index: {}]
  %s1 = inlined_call_operand.vmem [shape: bf16[700,168], index: 1, kind: input, shape index: {}]
  %s2 = inlined_call_operand.vmem [shape: bf16[1512,168], index: 2, kind: input, shape index: {}]
  %s3 = inlined_call_operand.vmem [shape: bf16[1512,168], index: 3, kind: input, shape index: {}]
  %s4 = inlined_call_operand.vmem [shape: bf16[1500,160], index: 4, kind: input, shape index: {}]
  %s5 = inlined_call_operand.vmem [shape: bf16[400,120], index: 5, kind: input, shape index: {}]
  %s6 = inlined_call_operand.vmem [shape: bf16[14,28], index: 6, kind: input, shape index: {}]
  %s7 = inlined_call_operand.vmem [shape: bf16[168,84], index: 7, kind: input, shape index: {}]
  %s8 = inlined_call_operand.vmem [shape: bf16[5,10], index: 8, kind: input, shape index: {}]
  %s9 = inlined_call_operand.vmem [shape: bf16[160,80], index: 9, kind: input, shape index: {}]
  %s10 = inlined_call_operand.vmem [shape: bf16[120,84], index: 10, kind: input, shape index: {}]
  %s11 = inlined_call_operand.vmem [shape: bf16[84,10], index: 11, kind: input, shape index: {}]
  %s12 = inlined_call_operand.hbm [shape: f32[2,1,10], index: 12, kind: output, shape index: {}]
  %s13 = sld [smem:[#allocation0]]
  $region81: #{lenet5_repeat_forward.1} parent=0
    _
  %s15 = ssub.s32 1, %s13
  %s16 = scalar_select 0, %s15, %s13
  $region1: #{lenet5_repeat_forward.1} parent=0
    #allocation6 [shape = 'u8[1024]{0}', space=vmem, size = 0x400, scoped, tag = 'output window, operand 0']
    #allocation7 [shape = 's32[2]{0}', space=sflag, size = 0x8, scoped, tag = 'scoped memory for lenet5_repeat_forward.1']
    %17 = vsyncpa [#allocation7], 0
    %s18 = scalar_lea.sflag [#allocation7], 1
    %19 = vsyncpa %s18, 0
    loop: start=0, step=1, limit=4
    $region2: #{lenet5_repeat_forward.1} parent=1 // loop_pre_header
      _
    $region3: #{lenet5_repeat_forward.1} parent=1 // loop_header
      %s21 = sphi 0, %s25
      %p22 = scmp.ge.s32.totalorder %s21, 4
      %s31 = sphi 0, %s33
      %s34 = sphi 0, %s31
      %s35 = sphi 0, %s34
      %s51 = sphi 0, %s35
      %s55 = sphi 0, %s55
      %s57 = sphi 0, %s55
      %s58 = sphi 0, %s57
      %s72 = sphi 0, %s58
      %s76 = sphi 0, %s76
      %s78 = sphi 0, %s76
      %s79 = sphi 0, %s78
      %s93 = sphi 0, %s79
      %s97 = sphi 0, %s97
      %s99 = sphi 0, %s97
      %s100 = sphi 0, %s99
      %s114 = sphi 0, %s100
      %s118 = sphi 0, %s118
      %s120 = sphi 0, %s118
      %s121 = sphi 0, %s120
      %s135 = sphi 0, %s121
      %s139 = sphi 0, %s139
      %s141 = sphi 0, %s139
      %s142 = sphi 0, %s141
      %s156 = sphi 0, %s142
      %s160 = sphi 0, %s160
      %s162 = sphi 0, %s160
      %s163 = sphi 0, %s162
      %s177 = sphi 0, %s163
      %s181 = sphi 0, %s181
      %s183 = sphi 0, %s181
      %s184 = sphi 0, %s183
      %s198 = sphi 0, %s184
      %s202 = sphi 0, %s202
      %s204 = sphi 0, %s202
      %s205 = sphi 0, %s204
      %s219 = sphi 0, %s205
      %s223 = sphi 0, %s223
      %s225 = sphi 0, %s223
      %s226 = sphi 0, %s225
      %s240 = sphi 0, %s226
      %s244 = sphi 0, %s244
      %s246 = sphi 0, %s244
      %s247 = sphi 0, %s246
      %s261 = sphi 0, %s247
      %s265 = sphi 0, %s265
      %s267 = sphi 0, %s265
      %s268 = sphi 0, %s267
      %s282 = sphi 0, %s268
      %s288 = sphi 0, %s290
      %s291 = sphi 0, %s288
      %s292 = sphi 0, %s291
      %s308 = sphi 0, %s292
    $region4: #{lenet5_repeat_forward.1} parent=1 // loop_header_branch
      %24 = sbr.rel (%p22) target = $region8
    $region5: #{lenet5_repeat_forward.1} parent=1 // loop_body
      %s26 = ssub.s32 %s21, 1
      %s27 = ssub.s32 %s21, 2
      %s28 = sadd.s32 %s21, 1
      %s29 = ssub.s32 %s21, %s28
      %p30 = scmp.eq.s32.totalorder %s29, 0
      %s32 = sadd.s32 %s31, 1
      %s33 = scalar_select %p30, %s31, %s32
      %p36 = pneg %p30
      %p37 = scmp.eq.s32.totalorder %s21, 1
      %p38 = por %p36, %p37
      %p39 = scmp.ne.s32.totalorder %s31, %s34
      %p40 = scmp.eq.s32.totalorder %s21, 0
      %p41 = por %p39, %p40
      %p42 = scmp.ne.s32.totalorder %s31, %s34
      %p43 = scmp.eq.s32.totalorder %s26, 1
      %p44 = por %p42, %p43
      %p45 = scmp.ne.s32.totalorder %s34, %s35
      %p46 = scmp.eq.s32.totalorder %s26, 0
      %p47 = por %p45, %p46
      %p48 = scmp.ne.s32.totalorder %s34, %s35
      %p49 = scmp.eq.s32.totalorder %s27, 1
      %p50 = por %p48, %p49
      %p52 = scmp.ne.s32.totalorder %s35, %s51
      %p53 = scmp.eq.s32.totalorder %s27, 0
      %p54 = por %p52, %p53
      %s56 = sadd.s32 %s55, 1
      %p59 = scmp.eq.s32.totalorder %s21, 1
      %p60 = scmp.ne.s32.totalorder %s55, %s57
      %p61 = scmp.eq.s32.totalorder %s21, 0
      %p62 = por %p60, %p61
      %p63 = scmp.ne.s32.totalorder %s55, %s57
      %p64 = scmp.eq.s32.totalorder %s26, 1
      %p65 = por %p63, %p64
      %p66 = scmp.ne.s32.totalorder %s57, %s58
      %p67 = scmp.eq.s32.totalorder %s26, 0
      %p68 = por %p66, %p67
      %p69 = scmp.ne.s32.totalorder %s57, %s58
      %p70 = scmp.eq.s32.totalorder %s27, 1
      %p71 = por %p69, %p70
      %p73 = scmp.ne.s32.totalorder %s58, %s72
      %p74 = scmp.eq.s32.totalorder %s27, 0
      %p75 = por %p73, %p74
      %s77 = sadd.s32 %s76, 1
      %p80 = scmp.eq.s32.totalorder %s21, 1
      %p81 = scmp.ne.s32.totalorder %s76, %s78
      %p82 = scmp.eq.s32.totalorder %s21, 0
      %p83 = por %p81, %p82
      %p84 = scmp.ne.s32.totalorder %s76, %s78
      %p85 = scmp.eq.s32.totalorder %s26, 1
      %p86 = por %p84, %p85
      %p87 = scmp.ne.s32.totalorder %s78, %s79
      %p88 = scmp.eq.s32.totalorder %s26, 0
      %p89 = por %p87, %p88
      %p90 = scmp.ne.s32.totalorder %s78, %s79
      %p91 = scmp.eq.s32.totalorder %s27, 1
      %p92 = por %p90, %p91
      %p94 = scmp.ne.s32.totalorder %s79, %s93
      %p95 = scmp.eq.s32.totalorder %s27, 0
      %p96 = por %p94, %p95
      %s98 = sadd.s32 %s97, 1
      %p101 = scmp.eq.s32.totalorder %s21, 1
      %p102 = scmp.ne.s32.totalorder %s97, %s99
      %p103 = scmp.eq.s32.totalorder %s21, 0
      %p104 = por %p102, %p103
      %p105 = scmp.ne.s32.totalorder %s97, %s99
      %p106 = scmp.eq.s32.totalorder %s26, 1
      %p107 = por %p105, %p106
      %p108 = scmp.ne.s32.totalorder %s99, %s100
      %p109 = scmp.eq.s32.totalorder %s26, 0
      %p110 = por %p108, %p109
      %p111 = scmp.ne.s32.totalorder %s99, %s100
      %p112 = scmp.eq.s32.totalorder %s27, 1
      %p113 = por %p111, %p112
      %p115 = scmp.ne.s32.totalorder %s100, %s114
      %p116 = scmp.eq.s32.totalorder %s27, 0
      %p117 = por %p115, %p116
      %s119 = sadd.s32 %s118, 1
      %p122 = scmp.eq.s32.totalorder %s21, 1
      %p123 = scmp.ne.s32.totalorder %s118, %s120
      %p124 = scmp.eq.s32.totalorder %s21, 0
      %p125 = por %p123, %p124
      %p126 = scmp.ne.s32.totalorder %s118, %s120
      %p127 = scmp.eq.s32.totalorder %s26, 1
      %p128 = por %p126, %p127
      %p129 = scmp.ne.s32.totalorder %s120, %s121
      %p130 = scmp.eq.s32.totalorder %s26, 0
      %p131 = por %p129, %p130
      %p132 = scmp.ne.s32.totalorder %s120, %s121
      %p133 = scmp.eq.s32.totalorder %s27, 1
      %p134 = por %p132, %p133
      %p136 = scmp.ne.s32.totalorder %s121, %s135
      %p137 = scmp.eq.s32.totalorder %s27, 0
      %p138 = por %p136, %p137
      %s140 = sadd.s32 %s139, 1
      %p143 = scmp.eq.s32.totalorder %s21, 1
      %p144 = scmp.ne.s32.totalorder %s139, %s141
      %p145 = scmp.eq.s32.totalorder %s21, 0
      %p146 = por %p144, %p145
      %p147 = scmp.ne.s32.totalorder %s139, %s141
      %p148 = scmp.eq.s32.totalorder %s26, 1
      %p149 = por %p147, %p148
      %p150 = scmp.ne.s32.totalorder %s141, %s142
      %p151 = scmp.eq.s32.totalorder %s26, 0
      %p152 = por %p150, %p151
      %p153 = scmp.ne.s32.totalorder %s141, %s142
      %p154 = scmp.eq.s32.totalorder %s27, 1
      %p155 = por %p153, %p154
      %p157 = scmp.ne.s32.totalorder %s142, %s156
      %p158 = scmp.eq.s32.totalorder %s27, 0
      %p159 = por %p157, %p158
      %s161 = sadd.s32 %s160, 1
      %p164 = scmp.eq.s32.totalorder %s21, 1
      %p165 = scmp.ne.s32.totalorder %s160, %s162
      %p166 = scmp.eq.s32.totalorder %s21, 0
      %p167 = por %p165, %p166
      %p168 = scmp.ne.s32.totalorder %s160, %s162
      %p169 = scmp.eq.s32.totalorder %s26, 1
      %p170 = por %p168, %p169
      %p171 = scmp.ne.s32.totalorder %s162, %s163
      %p172 = scmp.eq.s32.totalorder %s26, 0
      %p173 = por %p171, %p172
      %p174 = scmp.ne.s32.totalorder %s162, %s163
      %p175 = scmp.eq.s32.totalorder %s27, 1
      %p176 = por %p174, %p175
      %p178 = scmp.ne.s32.totalorder %s163, %s177
      %p179 = scmp.eq.s32.totalorder %s27, 0
      %p180 = por %p178, %p179
      %s182 = sadd.s32 %s181, 1
      %p185 = scmp.eq.s32.totalorder %s21, 1
      %p186 = scmp.ne.s32.totalorder %s181, %s183
      %p187 = scmp.eq.s32.totalorder %s21, 0
      %p188 = por %p186, %p187
      %p189 = scmp.ne.s32.totalorder %s181, %s183
      %p190 = scmp.eq.s32.totalorder %s26, 1
      %p191 = por %p189, %p190
      %p192 = scmp.ne.s32.totalorder %s183, %s184
      %p193 = scmp.eq.s32.totalorder %s26, 0
      %p194 = por %p192, %p193
      %p195 = scmp.ne.s32.totalorder %s183, %s184
      %p196 = scmp.eq.s32.totalorder %s27, 1
      %p197 = por %p195, %p196
      %p199 = scmp.ne.s32.totalorder %s184, %s198
      %p200 = scmp.eq.s32.totalorder %s27, 0
      %p201 = por %p199, %p200
      %s203 = sadd.s32 %s202, 1
      %p206 = scmp.eq.s32.totalorder %s21, 1
      %p207 = scmp.ne.s32.totalorder %s202, %s204
      %p208 = scmp.eq.s32.totalorder %s21, 0
      %p209 = por %p207, %p208
      %p210 = scmp.ne.s32.totalorder %s202, %s204
      %p211 = scmp.eq.s32.totalorder %s26, 1
      %p212 = por %p210, %p211
      %p213 = scmp.ne.s32.totalorder %s204, %s205
      %p214 = scmp.eq.s32.totalorder %s26, 0
      %p215 = por %p213, %p214
      %p216 = scmp.ne.s32.totalorder %s204, %s205
      %p217 = scmp.eq.s32.totalorder %s27, 1
      %p218 = por %p216, %p217
      %p220 = scmp.ne.s32.totalorder %s205, %s219
      %p221 = scmp.eq.s32.totalorder %s27, 0
      %p222 = por %p220, %p221
      %s224 = sadd.s32 %s223, 1
      %p227 = scmp.eq.s32.totalorder %s21, 1
      %p228 = scmp.ne.s32.totalorder %s223, %s225
      %p229 = scmp.eq.s32.totalorder %s21, 0
      %p230 = por %p228, %p229
      %p231 = scmp.ne.s32.totalorder %s223, %s225
      %p232 = scmp.eq.s32.totalorder %s26, 1
      %p233 = por %p231, %p232
      %p234 = scmp.ne.s32.totalorder %s225, %s226
      %p235 = scmp.eq.s32.totalorder %s26, 0
      %p236 = por %p234, %p235
      %p237 = scmp.ne.s32.totalorder %s225, %s226
      %p238 = scmp.eq.s32.totalorder %s27, 1
      %p239 = por %p237, %p238
      %p241 = scmp.ne.s32.totalorder %s226, %s240
      %p242 = scmp.eq.s32.totalorder %s27, 0
      %p243 = por %p241, %p242
      %s245 = sadd.s32 %s244, 1
      %p248 = scmp.eq.s32.totalorder %s21, 1
      %p249 = scmp.ne.s32.totalorder %s244, %s246
      %p250 = scmp.eq.s32.totalorder %s21, 0
      %p251 = por %p249, %p250
      %p252 = scmp.ne.s32.totalorder %s244, %s246
      %p253 = scmp.eq.s32.totalorder %s26, 1
      %p254 = por %p252, %p253
      %p255 = scmp.ne.s32.totalorder %s246, %s247
      %p256 = scmp.eq.s32.totalorder %s26, 0
      %p257 = por %p255, %p256
      %p258 = scmp.ne.s32.totalorder %s246, %s247
      %p259 = scmp.eq.s32.totalorder %s27, 1
      %p260 = por %p258, %p259
      %p262 = scmp.ne.s32.totalorder %s247, %s261
      %p263 = scmp.eq.s32.totalorder %s27, 0
      %p264 = por %p262, %p263
      %s266 = sadd.s32 %s265, 1
      %p269 = scmp.eq.s32.totalorder %s21, 1
      %p270 = scmp.ne.s32.totalorder %s265, %s267
      %p271 = scmp.eq.s32.totalorder %s21, 0
      %p272 = por %p270, %p271
      %p273 = scmp.ne.s32.totalorder %s265, %s267
      %p274 = scmp.eq.s32.totalorder %s26, 1
      %p275 = por %p273, %p274
      %p276 = scmp.ne.s32.totalorder %s267, %s268
      %p277 = scmp.eq.s32.totalorder %s26, 0
      %p278 = por %p276, %p277
      %p279 = scmp.ne.s32.totalorder %s267, %s268
      %p280 = scmp.eq.s32.totalorder %s27, 1
      %p281 = por %p279, %p280
      %p283 = scmp.ne.s32.totalorder %s268, %s282
      %p284 = scmp.eq.s32.totalorder %s27, 0
      %p285 = por %p283, %p284
      %s286 = ssub.s32 %s21, %s28
      %p287 = scmp.eq.s32.totalorder %s286, 0
      %s289 = sadd.s32 %s288, 1
      %s290 = scalar_select %p287, %s288, %s289
      %p293 = pneg %p287
      %p294 = scmp.eq.s32.totalorder %s21, 1
      %p295 = por %p293, %p294
      %p296 = scmp.ne.s32.totalorder %s288, %s291
      %p297 = scmp.eq.s32.totalorder %s21, 0
      %p298 = por %p296, %p297
      %p299 = scmp.ne.s32.totalorder %s288, %s291
      %p300 = scmp.eq.s32.totalorder %s26, 1
      %p301 = por %p299, %p300
      %p302 = scmp.ne.s32.totalorder %s291, %s292
      %p303 = scmp.eq.s32.totalorder %s26, 0
      %p304 = por %p302, %p303
      %p305 = scmp.ne.s32.totalorder %s291, %s292
      %p306 = scmp.eq.s32.totalorder %s27, 1
      %p307 = por %p305, %p306
      %p309 = scmp.ne.s32.totalorder %s292, %s308
      %p310 = scmp.eq.s32.totalorder %s27, 0
      %p311 = por %p309, %p310
      %p312 = scmp.le.s32.totalorder 1, %s21
      %p313 = scmp.lt.s32.totalorder %s21, 3
      %p314 = pnand %p312, %p313
      %p315 = pneg %p314
      // Predicated region
      $region9: #{lenet5_repeat_forward.1} parent=5 // pred_check
        _
      $region10: #{lenet5_repeat_forward.1} parent=5 // pred_check_branch
        %317 = sbr.rel (%p314) target = $region12
      $region11: #{lenet5_repeat_forward.1} parent=5 // pred_region
        %s318 = ssub.s32 %s21, 1
        // Predicated region
        $region13: #{lenet5_repeat_forward.1} parent=11 // pred_check
          %p319 = pneg %p68
        $region14: #{lenet5_repeat_forward.1} parent=11 // pred_check_branch
          %321 = sbr.rel (%p319) target = $region16
        $region15: #{lenet5_repeat_forward.1} parent=11 // pred_region
          _
        $region16: #{lenet5_repeat_forward.1} parent=11 // pred_fallthru
          _
        // Predicated region
        $region17: #{lenet5_repeat_forward.1} parent=11 // pred_check
          %p322 = pneg %p89
        $region18: #{lenet5_repeat_forward.1} parent=11 // pred_check_branch
          %324 = sbr.rel (%p322) target = $region20
        $region19: #{lenet5_repeat_forward.1} parent=11 // pred_region
          _
        $region20: #{lenet5_repeat_forward.1} parent=11 // pred_fallthru
          _
        // Predicated region
        $region21: #{lenet5_repeat_forward.1} parent=11 // pred_check
          %p325 = pneg %p110
        $region22: #{lenet5_repeat_forward.1} parent=11 // pred_check_branch
          %327 = sbr.rel (%p325) target = $region24
        $region23: #{lenet5_repeat_forward.1} parent=11 // pred_region
          _
        $region24: #{lenet5_repeat_forward.1} parent=11 // pred_fallthru
          _
        // Predicated region
        $region25: #{lenet5_repeat_forward.1} parent=11 // pred_check
          %p328 = pneg %p131
        $region26: #{lenet5_repeat_forward.1} parent=11 // pred_check_branch
          %330 = sbr.rel (%p328) target = $region28
        $region27: #{lenet5_repeat_forward.1} parent=11 // pred_region
          _
        $region28: #{lenet5_repeat_forward.1} parent=11 // pred_fallthru
          _
        // Predicated region
        $region29: #{lenet5_repeat_forward.1} parent=11 // pred_check
          %p331 = pneg %p152
        $region30: #{lenet5_repeat_forward.1} parent=11 // pred_check_branch
          %333 = sbr.rel (%p331) target = $region32
        $region31: #{lenet5_repeat_forward.1} parent=11 // pred_region
          _
        $region32: #{lenet5_repeat_forward.1} parent=11 // pred_fallthru
          _
        // Predicated region
        $region33: #{lenet5_repeat_forward.1} parent=11 // pred_check
          %p334 = pneg %p173
        $region34: #{lenet5_repeat_forward.1} parent=11 // pred_check_branch
          %336 = sbr.rel (%p334) target = $region36
        $region35: #{lenet5_repeat_forward.1} parent=11 // pred_region
          _
        $region36: #{lenet5_repeat_forward.1} parent=11 // pred_fallthru
          _
        // Predicated region
        $region37: #{lenet5_repeat_forward.1} parent=11 // pred_check
          %p337 = pneg %p194
        $region38: #{lenet5_repeat_forward.1} parent=11 // pred_check_branch
          %339 = sbr.rel (%p337) target = $region40
        $region39: #{lenet5_repeat_forward.1} parent=11 // pred_region
          _
        $region40: #{lenet5_repeat_forward.1} parent=11 // pred_fallthru
          _
        // Predicated region
        $region41: #{lenet5_repeat_forward.1} parent=11 // pred_check
          %p340 = pneg %p215
        $region42: #{lenet5_repeat_forward.1} parent=11 // pred_check_branch
          %342 = sbr.rel (%p340) target = $region44
        $region43: #{lenet5_repeat_forward.1} parent=11 // pred_region
          _
        $region44: #{lenet5_repeat_forward.1} parent=11 // pred_fallthru
          _
        // Predicated region
        $region45: #{lenet5_repeat_forward.1} parent=11 // pred_check
          %p343 = pneg %p236
        $region46: #{lenet5_repeat_forward.1} parent=11 // pred_check_branch
          %345 = sbr.rel (%p343) target = $region48
        $region47: #{lenet5_repeat_forward.1} parent=11 // pred_region
          _
        $region48: #{lenet5_repeat_forward.1} parent=11 // pred_fallthru
          _
        // Predicated region
        $region49: #{lenet5_repeat_forward.1} parent=11 // pred_check
          %p346 = pneg %p257
        $region50: #{lenet5_repeat_forward.1} parent=11 // pred_check_branch
          %348 = sbr.rel (%p346) target = $region52
        $region51: #{lenet5_repeat_forward.1} parent=11 // pred_region
          _
        $region52: #{lenet5_repeat_forward.1} parent=11 // pred_fallthru
          _
        // Predicated region
        $region53: #{lenet5_repeat_forward.1} parent=11 // pred_check
          %p349 = pneg %p278
        $region54: #{lenet5_repeat_forward.1} parent=11 // pred_check_branch
          %351 = sbr.rel (%p349) target = $region56
        $region55: #{lenet5_repeat_forward.1} parent=11 // pred_region
          _
        $region56: #{lenet5_repeat_forward.1} parent=11 // pred_fallthru
          _
      $region12: #{lenet5_repeat_forward.1} parent=5 // pred_fallthru
        _
      %p352 = scmp.lt.s32.totalorder %s21, 2
      // Predicated region
      $region57: #{lenet5_repeat_forward.1} parent=5 // pred_check
        %p353 = pneg %p352
      $region58: #{lenet5_repeat_forward.1} parent=5 // pred_check_branch
        %355 = sbr.rel (%p353) target = $region60
      $region59: #{lenet5_repeat_forward.1} parent=5 // pred_region
        // Predicated region
        $region61: #{lenet5_repeat_forward.1} parent=59 // pred_check
          %p356 = pneg %p41
        $region62: #{lenet5_repeat_forward.1} parent=59 // pred_check_branch
          %358 = sbr.rel (%p356) target = $region64
        $region63: #{lenet5_repeat_forward.1} parent=59 // pred_region
          %p359 = scmp.lt.s32.totalorder %s21, 1
          %s360 = scalar_select %p359, %s21, 1
          %s361 = smul.addr %s360, 4
          %s362 = smul.addr %s361, 8
          %s363 = scalar_lea.vmem %s0, %s362
        $region64: #{lenet5_repeat_forward.1} parent=59 // pred_fallthru
          _
      $region60: #{lenet5_repeat_forward.1} parent=5 // pred_fallthru
        _
      %p364 = scmp.le.s32.totalorder 1, %s21
      %p365 = scmp.lt.s32.totalorder %s21, 3
      %p366 = pnand %p364, %p365
      %p367 = pneg %p366
      // Predicated region
      $region65: #{lenet5_repeat_forward.1} parent=5 // pred_check
        _
      $region66: #{lenet5_repeat_forward.1} parent=5 // pred_check_branch
        %369 = sbr.rel (%p366) target = $region68
      $region67: #{lenet5_repeat_forward.1} parent=5 // pred_region
        %s370 = ssub.s32 %s21, 1
        %p371 = scmp.lt.s32.totalorder %s26, 1
        %s372 = scalar_select %p371, %s26, 1
        %s373 = smul.addr %s372, 4
        %s374 = smul.addr %s373, 8
        %s375 = scalar_lea.vmem %s0, %s374
        %p376 = pneg %p47
        %p377 = pneg %p44
        %p378 = pneg %p68
        %p379 = pneg %p65
        %p380 = pneg %p89
        %p381 = pneg %p86
        %p382 = pneg %p110
        %p383 = pneg %p107
        %p384 = pneg %p131
        %p385 = pneg %p128
        %p386 = pneg %p152
        %p387 = pneg %p149
        %p388 = pneg %p173
        %p389 = pneg %p170
        %p390 = pneg %p194
        %p391 = pneg %p191
        %p392 = pneg %p215
        %p393 = pneg %p212
        %p394 = pneg %p236
        %p395 = pneg %p233
        %p396 = pneg %p257
        %p397 = pneg %p254
        %p398 = pneg %p278
        %p399 = pneg %p275
        %p400 = pneg %p304
        %p401 = pneg %p301
        %s402 = sand.u32 %s291, 1
        %s403 = scalar_lea.sflag [#allocation7], %s402
        %s404 = sand.u32 %s291, 1
        %s405 = scalar_lea.vmem [#allocation6], %s404
        %p406 = scmp.lt.s32.totalorder %s26, 1
        %s407 = scalar_select %p406, %s26, 1
        %s408 = smul.addr %s407, 4
        %s409 = smul.addr %s408, 8
        %s410 = scalar_lea.vmem %s0, %s409
        %v412 = vld [vmem:[%s410] sm:$0xff]
        %v413 = vld [vmem:[%s410 + $0x8] sm:$0xff]
        %v414 = vld [vmem:[%s410 + $0x10] sm:$0xff]
        %v415 = vld [vmem:[%s410 + $0x18] sm:$0xff]
        %vm416 = vcmask 228352
        %417 = vst.msk [vmem:[#allocation2] sm:$0xff] %vm416, %v412
        %418 = vst.msk [vmem:[#allocation2 + $0x30] sm:$0xff] %vm416, %v413
        %419 = vst.msk [vmem:[#allocation2 + $0x60] sm:$0xff] %vm416, %v414
        %vm420 = vcmask 224256
        %421 = vst.msk [vmem:[#allocation2 + $0x90] sm:$0xf] %vm420, %v415
        %426 = vrot.lane.b32.xlu0 %v412, 27
        %v427 = vpop.permute.xlu0 %426
        %428 = vrot.lane.b32.xlu0 %v413, 27
        %v429 = vpop.permute.xlu0 %428
        %430 = vrot.lane.b32.xlu0 %v414, 27
        %v431 = vpop.permute.xlu0 %430
        %432 = vrot.lane.b32.xlu0 %v415, 27
        %v433 = vpop.permute.xlu0 %432
        %vm438 = vcmask 457952
        %439 = vst.msk [vmem:[#allocation2] sm:$0xff] %vm438, %v427
        %440 = vst.msk [vmem:[#allocation2 + $0x30] sm:$0xff] %vm438, %v429
        %441 = vst.msk [vmem:[#allocation2 + $0x60] sm:$0xff] %vm438, %v431
        %vm442 = vcmask 453856
        %443 = vst.msk [vmem:[#allocation2 + $0x90] sm:$0xf] %vm442, %v433
        %444 = vrot.lane.b32.xlu0 %v412, 54
        %v445 = vpop.permute.xlu0 %444
        %446 = vrot.lane.b32.xlu0 %v413, 54
        %v447 = vpop.permute.xlu0 %446
        %448 = vrot.lane.b32.xlu0 %v414, 54
        %v449 = vpop.permute.xlu0 %448
        %450 = vrot.lane.b32.xlu0 %v415, 54
        %v451 = vpop.permute.xlu0 %450
        %vm456 = vcmask 687552
        %457 = vst.msk [vmem:[#allocation2] sm:$0xff] %vm456, %v445
        %458 = vst.msk [vmem:[#allocation2 + $0x30] sm:$0xff] %vm456, %v447
        %459 = vst.msk [vmem:[#allocation2 + $0x60] sm:$0xff] %vm456, %v449
        %vm460 = vcmask 683456
        %461 = vst.msk [vmem:[#allocation2 + $0x90] sm:$0xf] %vm460, %v451
        %462 = vrot.lane.b32.xlu0 %v412, 81
        %v463 = vpop.permute.xlu0 %462
        %464 = vrot.lane.b32.xlu0 %v413, 81
        %v465 = vpop.permute.xlu0 %464
        %466 = vrot.lane.b32.xlu0 %v414, 81
        %v467 = vpop.permute.xlu0 %466
        %468 = vrot.lane.b32.xlu0 %v415, 81
        %v469 = vpop.permute.xlu0 %468
        %vm474 = vcmask 917152
        %475 = vst.msk [vmem:[#allocation2] sm:$0xff] %vm474, %v463
        %476 = vst.msk [vmem:[#allocation2 + $0x30] sm:$0xff] %vm474, %v465
        %477 = vst.msk [vmem:[#allocation2 + $0x60] sm:$0xff] %vm474, %v467
        %vm478 = vcmask 913056
        %479 = vst.msk [vmem:[#allocation2 + $0x90] sm:$0xf] %vm478, %v469
        %480 = vrot.lane.b32.xlu0 %v412, 108
        %v481 = vpop.permute.xlu0 %480
        %482 = vrot.lane.b32.xlu0 %v413, 108
        %v483 = vpop.permute.xlu0 %482
        %484 = vrot.lane.b32.xlu0 %v414, 108
        %v485 = vpop.permute.xlu0 %484
        %486 = vrot.lane.b32.xlu0 %v415, 108
        %v487 = vpop.permute.xlu0 %486
        %vm492 = vcmask 1048448
        %493 = vst.msk [vmem:[#allocation2] sm:$0xff] %vm492, %v481
        %vm494 = vcmask 97280
        %495 = vst.msk [vmem:[#allocation2 + $0x8] sm:$0xff] %vm494, %v481
        %496 = vst.msk [vmem:[#allocation2 + $0x30] sm:$0xff] %vm492, %v483
        %497 = vst.msk [vmem:[#allocation2 + $0x38] sm:$0xff] %vm494, %v483
        %498 = vst.msk [vmem:[#allocation2 + $0x60] sm:$0xff] %vm492, %v485
        %499 = vst.msk [vmem:[#allocation2 + $0x68] sm:$0xff] %vm494, %v485
        %vm500 = vcmask 1044352
        %501 = vst.msk [vmem:[#allocation2 + $0x90] sm:$0xf] %vm500, %v487
        %vm502 = vcmask 93184
        %503 = vst.msk [vmem:[#allocation2 + $0x98] sm:$0xf] %vm502, %v487
        %vm504 = vcmask 1046528
        %v505 = vrot.slane %v412, 1
        %v506 = vrot.slane %v413, 1
        %v507 = vsel %vm504, %v505, %v506
        %v508 = vrot.slane %v414, 1
        %v509 = vsel %vm504, %v506, %v508
        %v510 = vrot.slane %v415, 1
        %v511 = vsel %vm504, %v508, %v510
        %512 = vrot.lane.b32.xlu0 %v507, 12
        %v513 = vpop.permute.xlu0 %512
        %514 = vrot.lane.b32.xlu0 %v509, 12
        %v515 = vpop.permute.xlu0 %514
        %516 = vrot.lane.b32.xlu0 %v511, 12
        %v517 = vpop.permute.xlu0 %516
        %518 = vrot.lane.b32.xlu0 %v510, 12
        %v519 = vpop.permute.xlu0 %518
        %vm524 = vcmask 326752
        %525 = vst.msk [vmem:[#allocation2 + $0x8] sm:$0xff] %vm524, %v513
        %526 = vst.msk [vmem:[#allocation2 + $0x38] sm:$0xff] %vm524, %v515
        %527 = vst.msk [vmem:[#allocation2 + $0x68] sm:$0xff] %vm524, %v517
        %vm528 = vcmask 322656
        %529 = vst.msk [vmem:[#allocation2 + $0x98] sm:$0xf] %vm528, %v519
        %530 = vrot.lane.b32.xlu0 %v507, 39
        %v531 = vpop.permute.xlu0 %530
        %532 = vrot.lane.b32.xlu0 %v509, 39
        %v533 = vpop.permute.xlu0 %532
        %534 = vrot.lane.b32.xlu0 %v511, 39
        %v535 = vpop.permute.xlu0 %534
        %536 = vrot.lane.b32.xlu0 %v510, 39
        %v537 = vpop.permute.xlu0 %536
        %vm542 = vcmask 556352
        %543 = vst.msk [vmem:[#allocation2 + $0x8] sm:$0xff] %vm542, %v531
        %544 = vst.msk [vmem:[#allocation2 + $0x38] sm:$0xff] %vm542, %v533
        %545 = vst.msk [vmem:[#allocation2 + $0x68] sm:$0xff] %vm542, %v535
        %vm546 = vcmask 552256
        %547 = vst.msk [vmem:[#allocation2 + $0x98] sm:$0xf] %vm546, %v537
        %548 = vrot.lane.b32.xlu0 %v507, 66
        %v549 = vpop.permute.xlu0 %548
        %550 = vrot.lane.b32.xlu0 %v509, 66
        %v551 = vpop.permute.xlu0 %550
        %552 = vrot.lane.b32.xlu0 %v511, 66
        %v553 = vpop.permute.xlu0 %552
        %554 = vrot.lane.b32.xlu0 %v510, 66
        %v555 = vpop.permute.xlu0 %554
        %vm560 = vcmask 785952
        %561 = vst.msk [vmem:[#allocation2 + $0x8] sm:$0xff] %vm560, %v549
        %562 = vst.msk [vmem:[#allocation2 + $0x38] sm:$0xff] %vm560, %v551
        %563 = vst.msk [vmem:[#allocation2 + $0x68] sm:$0xff] %vm560, %v553
        %vm564 = vcmask 781856
        %565 = vst.msk [vmem:[#allocation2 + $0x98] sm:$0xf] %vm564, %v555
        %566 = vrot.lane.b32.xlu0 %v507, 93
        %v567 = vpop.permute.xlu0 %566
        %568 = vrot.lane.b32.xlu0 %v509, 93
        %v569 = vpop.permute.xlu0 %568
        %570 = vrot.lane.b32.xlu0 %v511, 93
        %v571 = vpop.permute.xlu0 %570
        %572 = vrot.lane.b32.xlu0 %v510, 93
        %v573 = vpop.permute.xlu0 %572
        %vm578 = vcmask 1015552
        %579 = vst.msk [vmem:[#allocation2 + $0x8] sm:$0xff] %vm578, %v567
        %580 = vst.msk [vmem:[#allocation2 + $0x38] sm:$0xff] %vm578, %v569
        %581 = vst.msk [vmem:[#allocation2 + $0x68] sm:$0xff] %vm578, %v571
        %vm582 = vcmask 1011456
        %583 = vst.msk [vmem:[#allocation2 + $0x98] sm:$0xf] %vm582, %v573
        %584 = vrot.lane.b32.xlu0 %v507, 120
        %v585 = vpop.permute.xlu0 %584
        %586 = vrot.lane.b32.xlu0 %v509, 120
        %v587 = vpop.permute.xlu0 %586
        %588 = vrot.lane.b32.xlu0 %v511, 120
        %v589 = vpop.permute.xlu0 %588
        %590 = vrot.lane.b32.xlu0 %v510, 120
        %v591 = vpop.permute.xlu0 %590
        %vm596 = vcmask 1048544
        %597 = vst.msk [vmem:[#allocation2 + $0x8] sm:$0xff] %vm596, %v585
        %vm598 = vcmask 195584
        %599 = vst.msk [vmem:[#allocation2 + $0x10] sm:$0xff] %vm598, %v585
        %600 = vst.msk [vmem:[#allocation2 + $0x38] sm:$0xff] %vm596, %v587
        %601 = vst.msk [vmem:[#allocation2 + $0x40] sm:$0xff] %vm598, %v587
        %602 = vst.msk [vmem:[#allocation2 + $0x68] sm:$0xff] %vm596, %v589
        %603 = vst.msk [vmem:[#allocation2 + $0x70] sm:$0xff] %vm598, %v589
        %vm604 = vcmask 1044448
        %605 = vst.msk [vmem:[#allocation2 + $0x98] sm:$0xf] %vm604, %v591
        %vm606 = vcmask 191488
        %607 = vst.msk [vmem:[#allocation2 + $0xa0] sm:$0xf] %vm606, %v591
        %vm608 = vcmask 1045504
        %v609 = vrot.slane %v412, 2
        %v610 = vrot.slane %v413, 2
        %v611 = vsel %vm608, %v609, %v610
        %v612 = vrot.slane %v414, 2
        %v613 = vsel %vm608, %v610, %v612
        %v614 = vrot.slane %v415, 2
        %v615 = vsel %vm608, %v612, %v614
        %616 = vrot.lane.b32.xlu0 %v611, 24
        %v617 = vpop.permute.xlu0 %616
        %618 = vrot.lane.b32.xlu0 %v613, 24
        %v619 = vpop.permute.xlu0 %618
        %620 = vrot.lane.b32.xlu0 %v615, 24
        %v621 = vpop.permute.xlu0 %620
        %622 = vrot.lane.b32.xlu0 %v614, 24
        %v623 = vpop.permute.xlu0 %622
        %vm628 = vcmask 425152
        %629 = vst.msk [vmem:[#allocation2 + $0x10] sm:$0xff] %vm628, %v617
        %630 = vst.msk [vmem:[#allocation2 + $0x40] sm:$0xff] %vm628, %v619
        %631 = vst.msk [vmem:[#allocation2 + $0x70] sm:$0xff] %vm628, %v621
        %vm632 = vcmask 421056
        %633 = vst.msk [vmem:[#allocation2 + $0xa0] sm:$0xf] %vm632, %v623
        %634 = vrot.lane.b32.xlu0 %v611, 51
        %v635 = vpop.permute.xlu0 %634
        %636 = vrot.lane.b32.xlu0 %v613, 51
        %v637 = vpop.permute.xlu0 %636
        %638 = vrot.lane.b32.xlu0 %v615, 51
        %v639 = vpop.permute.xlu0 %638
        %640 = vrot.lane.b32.xlu0 %v614, 51
        %v641 = vpop.permute.xlu0 %640
        %vm646 = vcmask 654752
        %647 = vst.msk [vmem:[#allocation2 + $0x10] sm:$0xff] %vm646, %v635
        %648 = vst.msk [vmem:[#allocation2 + $0x40] sm:$0xff] %vm646, %v637
        %649 = vst.msk [vmem:[#allocation2 + $0x70] sm:$0xff] %vm646, %v639
        %vm650 = vcmask 650656
        %651 = vst.msk [vmem:[#allocation2 + $0xa0] sm:$0xf] %vm650, %v641
        %652 = vrot.lane.b32.xlu0 %v611, 78
        %v653 = vpop.permute.xlu0 %652
        %654 = vrot.lane.b32.xlu0 %v613, 78
        %v655 = vpop.permute.xlu0 %654
        %656 = vrot.lane.b32.xlu0 %v615, 78
        %v657 = vpop.permute.xlu0 %656
        %658 = vrot.lane.b32.xlu0 %v614, 78
        %v659 = vpop.permute.xlu0 %658
        %vm664 = vcmask 884352
        %665 = vst.msk [vmem:[#allocation2 + $0x10] sm:$0xff] %vm664, %v653
        %666 = vst.msk [vmem:[#allocation2 + $0x40] sm:$0xff] %vm664, %v655
        %667 = vst.msk [vmem:[#allocation2 + $0x70] sm:$0xff] %vm664, %v657
        %vm668 = vcmask 880256
        %669 = vst.msk [vmem:[#allocation2 + $0xa0] sm:$0xf] %vm668, %v659
        %670 = vrot.lane.b32.xlu0 %v611, 105
        %v671 = vpop.permute.xlu0 %670
        %672 = vrot.lane.b32.xlu0 %v613, 105
        %v673 = vpop.permute.xlu0 %672
        %674 = vrot.lane.b32.xlu0 %v615, 105
        %v675 = vpop.permute.xlu0 %674
        %676 = vrot.lane.b32.xlu0 %v614, 105
        %v677 = vpop.permute.xlu0 %676
        %vm682 = vcmask 1048416
        %683 = vst.msk [vmem:[#allocation2 + $0x10] sm:$0xff] %vm682, %v671
        %vm684 = vcmask 64512
        %685 = vst.msk [vmem:[#allocation2 + $0x18] sm:$0xff] %vm684, %v671
        %686 = vst.msk [vmem:[#allocation2 + $0x40] sm:$0xff] %vm682, %v673
        %687 = vst.msk [vmem:[#allocation2 + $0x48] sm:$0xff] %vm684, %v673
        %688 = vst.msk [vmem:[#allocation2 + $0x70] sm:$0xff] %vm682, %v675
        %689 = vst.msk [vmem:[#allocation2 + $0x78] sm:$0xff] %vm684, %v675
        %vm690 = vcmask 1044320
        %691 = vst.msk [vmem:[#allocation2 + $0xa0] sm:$0xf] %vm690, %v677
        %vm692 = vcmask 60416
        %693 = vst.msk [vmem:[#allocation2 + $0xa8] sm:$0xf] %vm692, %v677
        %694 = vrot.lane.b32.xlu0 %v611, 4
        %v695 = vpop.permute.xlu0 %694
        %696 = vrot.lane.b32.xlu0 %v613, 4
        %v697 = vpop.permute.xlu0 %696
        %698 = vrot.lane.b32.xlu0 %v615, 4
        %v699 = vpop.permute.xlu0 %698
        %700 = vrot.lane.b32.xlu0 %v614, 4
        %v701 = vpop.permute.xlu0 %700
        %vm706 = vcmask 293952
        %707 = vst.msk [vmem:[#allocation2 + $0x18] sm:$0xff] %vm706, %v695
        %708 = vst.msk [vmem:[#allocation2 + $0x48] sm:$0xff] %vm706, %v697
        %709 = vst.msk [vmem:[#allocation2 + $0x78] sm:$0xff] %vm706, %v699
        %vm710 = vcmask 289856
        %711 = vst.msk [vmem:[#allocation2 + $0xa8] sm:$0xf] %vm710, %v701
        %vm712 = vcmask 1044480
        %v713 = vrot.slane %v412, 3
        %v714 = vrot.slane %v413, 3
        %v715 = vsel %vm712, %v713, %v714
        %v716 = vrot.slane %v414, 3
        %v717 = vsel %vm712, %v714, %v716
        %v718 = vrot.slane %v415, 3
        %v719 = vsel %vm712, %v716, %v718
        %720 = vrot.lane.b32.xlu0 %v715, 36
        %v721 = vpop.permute.xlu0 %720
        %722 = vrot.lane.b32.xlu0 %v717, 36
        %v723 = vpop.permute.xlu0 %722
        %724 = vrot.lane.b32.xlu0 %v719, 36
        %v725 = vpop.permute.xlu0 %724
        %726 = vrot.lane.b32.xlu0 %v718, 36
        %v727 = vpop.permute.xlu0 %726
        %vm732 = vcmask 523552
        %733 = vst.msk [vmem:[#allocation2 + $0x18] sm:$0xff] %vm732, %v721
        %734 = vst.msk [vmem:[#allocation2 + $0x48] sm:$0xff] %vm732, %v723
        %735 = vst.msk [vmem:[#allocation2 + $0x78] sm:$0xff] %vm732, %v725
        %vm736 = vcmask 519456
        %737 = vst.msk [vmem:[#allocation2 + $0xa8] sm:$0xf] %vm736, %v727
        %738 = vrot.lane.b32.xlu0 %v715, 63
        %v739 = vpop.permute.xlu0 %738
        %740 = vrot.lane.b32.xlu0 %v717, 63
        %v741 = vpop.permute.xlu0 %740
        %742 = vrot.lane.b32.xlu0 %v719, 63
        %v743 = vpop.permute.xlu0 %742
        %744 = vrot.lane.b32.xlu0 %v718, 63
        %v745 = vpop.permute.xlu0 %744
        %vm750 = vcmask 753152
        %751 = vst.msk [vmem:[#allocation2 + $0x18] sm:$0xff] %vm750, %v739
        %752 = vst.msk [vmem:[#allocation2 + $0x48] sm:$0xff] %vm750, %v741
        %753 = vst.msk [vmem:[#allocation2 + $0x78] sm:$0xff] %vm750, %v743
        %vm754 = vcmask 749056
        %755 = vst.msk [vmem:[#allocation2 + $0xa8] sm:$0xf] %vm754, %v745
        %756 = vrot.lane.b32.xlu0 %v715, 90
        %v757 = vpop.permute.xlu0 %756
        %758 = vrot.lane.b32.xlu0 %v717, 90
        %v759 = vpop.permute.xlu0 %758
        %760 = vrot.lane.b32.xlu0 %v719, 90
        %v761 = vpop.permute.xlu0 %760
        %762 = vrot.lane.b32.xlu0 %v718, 90
        %v763 = vpop.permute.xlu0 %762
        %vm768 = vcmask 982752
        %769 = vst.msk [vmem:[#allocation2 + $0x18] sm:$0xff] %vm768, %v757
        %770 = vst.msk [vmem:[#allocation2 + $0x48] sm:$0xff] %vm768, %v759
        %771 = vst.msk [vmem:[#allocation2 + $0x78] sm:$0xff] %vm768, %v761
        %vm772 = vcmask 978656
        %773 = vst.msk [vmem:[#allocation2 + $0xa8] sm:$0xf] %vm772, %v763
        %774 = vrot.lane.b32.xlu0 %v715, 117
        %v775 = vpop.permute.xlu0 %774
        %776 = vrot.lane.b32.xlu0 %v717, 117
        %v777 = vpop.permute.xlu0 %776
        %778 = vrot.lane.b32.xlu0 %v719, 117
        %v779 = vpop.permute.xlu0 %778
        %780 = vrot.lane.b32.xlu0 %v718, 117
        %v781 = vpop.permute.xlu0 %780
        %vm786 = vcmask 1048512
        %787 = vst.msk [vmem:[#allocation2 + $0x18] sm:$0xff] %vm786, %v775
        %vm788 = vcmask 162816
        %789 = vst.msk [vmem:[#allocation2 + $0x20] sm:$0xff] %vm788, %v775
        %790 = vst.msk [vmem:[#allocation2 + $0x48] sm:$0xff] %vm786, %v777
        %791 = vst.msk [vmem:[#allocation2 + $0x50] sm:$0xff] %vm788, %v777
        %792 = vst.msk [vmem:[#allocation2 + $0x78] sm:$0xff] %vm786, %v779
        %793 = vst.msk [vmem:[#allocation2 + $0x80] sm:$0xff] %vm788, %v779
        %vm794 = vcmask 1044416
        %795 = vst.msk [vmem:[#allocation2 + $0xa8] sm:$0xf] %vm794, %v781
        %vm796 = vcmask 158720
        %797 = vst.msk [vmem:[#allocation2 + $0xb0] sm:$0xf] %vm796, %v781
        %798 = vrot.lane.b32.xlu0 %v715, 16
        %v799 = vpop.permute.xlu0 %798
        %800 = vrot.lane.b32.xlu0 %v717, 16
        %v801 = vpop.permute.xlu0 %800
        %802 = vrot.lane.b32.xlu0 %v719, 16
        %v803 = vpop.permute.xlu0 %802
        %804 = vrot.lane.b32.xlu0 %v718, 16
        %v805 = vpop.permute.xlu0 %804
        %vm810 = vcmask 392352
        %811 = vst.msk [vmem:[#allocation2 + $0x20] sm:$0xff] %vm810, %v799
        %812 = vst.msk [vmem:[#allocation2 + $0x50] sm:$0xff] %vm810, %v801
        %813 = vst.msk [vmem:[#allocation2 + $0x80] sm:$0xff] %vm810, %v803
        %vm814 = vcmask 388256
        %815 = vst.msk [vmem:[#allocation2 + $0xb0] sm:$0xf] %vm814, %v805
        %vm816 = vcmask 1043456
        %v817 = vrot.slane %v412, 4
        %v818 = vrot.slane %v413, 4
        %v819 = vsel %vm816, %v817, %v818
        %v820 = vrot.slane %v414, 4
        %v821 = vsel %vm816, %v818, %v820
        %v822 = vrot.slane %v415, 4
        %v823 = vsel %vm816, %v820, %v822
        %824 = vrot.lane.b32.xlu0 %v819, 48
        %v825 = vpop.permute.xlu0 %824
        %826 = vrot.lane.b32.xlu0 %v821, 48
        %v827 = vpop.permute.xlu0 %826
        %828 = vrot.lane.b32.xlu0 %v823, 48
        %v829 = vpop.permute.xlu0 %828
        %830 = vrot.lane.b32.xlu0 %v822, 48
        %v831 = vpop.permute.xlu0 %830
        %vm836 = vcmask 621952
        %837 = vst.msk [vmem:[#allocation2 + $0x20] sm:$0xff] %vm836, %v825
        %838 = vst.msk [vmem:[#allocation2 + $0x50] sm:$0xff] %vm836, %v827
        %839 = vst.msk [vmem:[#allocation2 + $0x80] sm:$0xff] %vm836, %v829
        %vm840 = vcmask 617856
        %841 = vst.msk [vmem:[#allocation2 + $0xb0] sm:$0xf] %vm840, %v831
        %842 = vrot.lane.b32.xlu0 %v819, 75
        %v843 = vpop.permute.xlu0 %842
        %844 = vrot.lane.b32.xlu0 %v821, 75
        %v845 = vpop.permute.xlu0 %844
        %846 = vrot.lane.b32.xlu0 %v823, 75
        %v847 = vpop.permute.xlu0 %846
        %848 = vrot.lane.b32.xlu0 %v822, 75
        %v849 = vpop.permute.xlu0 %848
        %vm854 = vcmask 851552
        %855 = vst.msk [vmem:[#allocation2 + $0x20] sm:$0xff] %vm854, %v843
        %856 = vst.msk [vmem:[#allocation2 + $0x50] sm:$0xff] %vm854, %v845
        %857 = vst.msk [vmem:[#allocation2 + $0x80] sm:$0xff] %vm854, %v847
        %vm858 = vcmask 847456
        %859 = vst.msk [vmem:[#allocation2 + $0xb0] sm:$0xf] %vm858, %v849
        %860 = vrot.lane.b32.xlu0 %v819, 102
        %v861 = vpop.permute.xlu0 %860
        %862 = vrot.lane.b32.xlu0 %v821, 102
        %v863 = vpop.permute.xlu0 %862
        %864 = vrot.lane.b32.xlu0 %v823, 102
        %v865 = vpop.permute.xlu0 %864
        %866 = vrot.lane.b32.xlu0 %v822, 102
        %v867 = vpop.permute.xlu0 %866
        %vm872 = vcmask 1048384
        %873 = vst.msk [vmem:[#allocation2 + $0x20] sm:$0xff] %vm872, %v861
        %vm874 = vcmask 31744
        %875 = vst.msk [vmem:[#allocation2 + $0x28] sm:$0xff] %vm874, %v861
        %876 = vst.msk [vmem:[#allocation2 + $0x50] sm:$0xff] %vm872, %v863
        %877 = vst.msk [vmem:[#allocation2 + $0x58] sm:$0xff] %vm874, %v863
        %878 = vst.msk [vmem:[#allocation2 + $0x80] sm:$0xff] %vm872, %v865
        %879 = vst.msk [vmem:[#allocation2 + $0x88] sm:$0xff] %vm874, %v865
        %vm880 = vcmask 1044288
        %881 = vst.msk [vmem:[#allocation2 + $0xb0] sm:$0xf] %vm880, %v867
        %vm882 = vcmask 27648
        %883 = vst.msk [vmem:[#allocation2 + $0xb8] sm:$0xf] %vm882, %v867
        %884 = vrot.lane.b32.xlu0 %v819, 1
        %v885 = vpop.permute.xlu0 %884
        %886 = vrot.lane.b32.xlu0 %v821, 1
        %v887 = vpop.permute.xlu0 %886
        %888 = vrot.lane.b32.xlu0 %v823, 1
        %v889 = vpop.permute.xlu0 %888
        %890 = vrot.lane.b32.xlu0 %v822, 1
        %v891 = vpop.permute.xlu0 %890
        %vm896 = vcmask 261152
        %897 = vst.msk [vmem:[#allocation2 + $0x28] sm:$0xff] %vm896, %v885
        %898 = vst.msk [vmem:[#allocation2 + $0x58] sm:$0xff] %vm896, %v887
        %899 = vst.msk [vmem:[#allocation2 + $0x88] sm:$0xff] %vm896, %v889
        %vm900 = vcmask 257056
        %901 = vst.msk [vmem:[#allocation2 + $0xb8] sm:$0xf] %vm900, %v891
        %902 = vrot.lane.b32.xlu0 %v819, 28
        %v903 = vpop.permute.xlu0 %902
        %904 = vrot.lane.b32.xlu0 %v821, 28
        %v905 = vpop.permute.xlu0 %904
        %906 = vrot.lane.b32.xlu0 %v823, 28
        %v907 = vpop.permute.xlu0 %906
        %908 = vrot.lane.b32.xlu0 %v822, 28
        %v909 = vpop.permute.xlu0 %908
        %vm914 = vcmask 490752
        %915 = vst.msk [vmem:[#allocation2 + $0x28] sm:$0xff] %vm914, %v903
        %916 = vst.msk [vmem:[#allocation2 + $0x58] sm:$0xff] %vm914, %v905
        %917 = vst.msk [vmem:[#allocation2 + $0x88] sm:$0xff] %vm914, %v907
        %vm918 = vcmask 486656
        %919 = vst.msk [vmem:[#allocation2 + $0xb8] sm:$0xf] %vm918, %v909
        %v920 = vld [vmem:[#allocation2] sm:$0xff]
        %v921 = vld [vmem:[#allocation2 + $0x8] sm:$0xff]
        %v922 = vld [vmem:[#allocation2 + $0x10] sm:$0xff]
        %v923 = vld [vmem:[#allocation2 + $0x18] sm:$0xff]
        %v924 = vld [vmem:[#allocation2 + $0x20] sm:$0xff]
        %v925 = vld [vmem:[#allocation2 + $0x28] sm:$0xff]
        %v926 = vld [vmem:[#allocation2 + $0x30] sm:$0xff]
        %v927 = vld [vmem:[#allocation2 + $0x38] sm:$0xff]
        %v928 = vld [vmem:[#allocation2 + $0x40] sm:$0xff]
        %v929 = vld [vmem:[#allocation2 + $0x48] sm:$0xff]
        %v930 = vld [vmem:[#allocation2 + $0x50] sm:$0xff]
        %v931 = vld [vmem:[#allocation2 + $0x58] sm:$0xff]
        %v932 = vld [vmem:[#allocation2 + $0x60] sm:$0xff]
        %v933 = vld [vmem:[#allocation2 + $0x68] sm:$0xff]
        %v934 = vld [vmem:[#allocation2 + $0x70] sm:$0xff]
        %v935 = vld [vmem:[#allocation2 + $0x78] sm:$0xff]
        %v936 = vld [vmem:[#allocation2 + $0x80] sm:$0xff]
        %v937 = vld [vmem:[#allocation2 + $0x88] sm:$0xff]
        %v938 = vld [vmem:[#allocation2 + $0x90] sm:$0xf]
        %v939 = vld [vmem:[#allocation2 + $0x98] sm:$0xf]
        %v940 = vld [vmem:[#allocation2 + $0xa0] sm:$0xf]
        %v941 = vld [vmem:[#allocation2 + $0xa8] sm:$0xf]
        %v942 = vld [vmem:[#allocation2 + $0xb0] sm:$0xf]
        %v943 = vld [vmem:[#allocation2 + $0xb8] sm:$0xf]
        %v944 = vpack.c.bf16 %v926, %v920
        %v945 = vpack.c.bf16 %v927, %v921
        %v946 = vpack.c.bf16 %v928, %v922
        %v947 = vpack.c.bf16 %v929, %v923
        %v948 = vpack.c.bf16 %v930, %v924
        %v949 = vpack.c.bf16 %v931, %v925
        %v950 = vpack.c.bf16 %v938, %v932
        %v951 = vpack.c.bf16 %v939, %v933
        %v952 = vpack.c.bf16 %v940, %v934
        %v953 = vpack.c.bf16 %v941, %v935
        %v954 = vpack.c.bf16 %v942, %v936
        %v955 = vpack.c.bf16 %v943, %v937
        %v956 = vld [vmem:[%s1] sm:$0xff]
        %v957 = vld [vmem:[%s1 + $0x8] sm:$0xff]
        %v958 = vld [vmem:[%s1 + $0x10] sm:$0xff]
        %v959 = vld [vmem:[%s1 + $0x18] sm:$0xff]
        %v960 = vld [vmem:[%s1 + $0x20] sm:$0xff]
        %v961 = vld [vmem:[%s1 + $0x28] sm:$0xff]
        %v962 = vld [vmem:[%s1 + $0x30] sm:$0xff]
        %v963 = vld [vmem:[%s1 + $0x38] sm:$0xff]
        %v964 = vld [vmem:[%s1 + $0x40] sm:$0xff]
        %v965 = vld [vmem:[%s1 + $0x48] sm:$0xff]
        %v966 = vld [vmem:[%s1 + $0x50] sm:$0xff]
        %v967 = vld [vmem:[%s1 + $0x58] sm:$0xff]
        %v968 = vld [vmem:[%s1 + $0x60] sm:$0xff]
        %v969 = vld [vmem:[%s1 + $0x68] sm:$0xff]
        %v970 = vld [vmem:[%s1 + $0x70] sm:$0xff]
        %v971 = vld [vmem:[%s1 + $0x78] sm:$0xff]
        %v972 = vld [vmem:[%s1 + $0x80] sm:$0xff]
        %v973 = vld [vmem:[%s1 + $0x88] sm:$0xff]
        %v974 = vld [vmem:[%s1 + $0x90] sm:$0xff]
        %v975 = vld [vmem:[%s1 + $0x98] sm:$0xff]
        %v976 = vld [vmem:[%s1 + $0xa0] sm:$0xff]
        %v977 = vld [vmem:[%s1 + $0xa8] sm:$0xff]
        %v978 = vld [vmem:[%s1 + $0xb0] sm:$0xff]
        %v979 = vld [vmem:[%s1 + $0xb8] sm:$0xff]
        %v980 = vld [vmem:[%s1 + $0xc0] sm:$0xff]
        %v981 = vld [vmem:[%s1 + $0xc8] sm:$0xff]
        %v982 = vld [vmem:[%s1 + $0xd0] sm:$0xff]
        %v983 = vld [vmem:[%s1 + $0xd8] sm:$0xff]
        %v984 = vld [vmem:[%s1 + $0xe0] sm:$0xff]
        %v985 = vld [vmem:[%s1 + $0xe8] sm:$0xff]
        %v986 = vld [vmem:[%s1 + $0xf0] sm:$0xff]
        %v987 = vld [vmem:[%s1 + $0xf8] sm:$0xff]
        %v988 = vld [vmem:[%s1 + $0x100] sm:$0xff]
        %v989 = vld [vmem:[%s1 + $0x108] sm:$0xff]
        %v990 = vld [vmem:[%s1 + $0x110] sm:$0xff]
        %v991 = vld [vmem:[%s1 + $0x118] sm:$0xff]
        %v992 = vld [vmem:[%s1 + $0x120] sm:$0xff]
        %v993 = vld [vmem:[%s1 + $0x128] sm:$0xff]
        %v994 = vld [vmem:[%s1 + $0x130] sm:$0xff]
        %v995 = vld [vmem:[%s1 + $0x138] sm:$0xff]
        %v996 = vld [vmem:[%s1 + $0x140] sm:$0xff]
        %v997 = vld [vmem:[%s1 + $0x148] sm:$0xff]
        %v998 = vld [vmem:[%s1 + $0x150] sm:$0xff]
        %v999 = vld [vmem:[%s1 + $0x158] sm:$0xff]
        %v1000 = vld [vmem:[%s1 + $0x160] sm:$0xff]
        %v1001 = vld [vmem:[%s1 + $0x168] sm:$0xff]
        %v1002 = vld [vmem:[%s1 + $0x170] sm:$0xff]
        %v1003 = vld [vmem:[%s1 + $0x178] sm:$0xff]
        %v1004 = vld [vmem:[%s1 + $0x180] sm:$0xff]
        %v1005 = vld [vmem:[%s1 + $0x188] sm:$0xff]
        %v1006 = vld [vmem:[%s1 + $0x190] sm:$0xff]
        %v1007 = vld [vmem:[%s1 + $0x198] sm:$0xff]
        %v1008 = vld [vmem:[%s1 + $0x1a0] sm:$0xff]
        %v1009 = vld [vmem:[%s1 + $0x1a8] sm:$0xff]
        %v1010 = vld [vmem:[%s1 + $0x1b0] sm:$0xff]
        %v1011 = vld [vmem:[%s1 + $0x1b8] sm:$0xff]
        %v1012 = vld [vmem:[%s1 + $0x1c0] sm:$0xff]
        %v1013 = vld [vmem:[%s1 + $0x1c8] sm:$0xff]
        %v1014 = vld [vmem:[%s1 + $0x1d0] sm:$0xff]
        %v1015 = vld [vmem:[%s1 + $0x1d8] sm:$0xff]
        %v1016 = vld [vmem:[%s1 + $0x1e0] sm:$0xff]
        %v1017 = vld [vmem:[%s1 + $0x1e8] sm:$0xff]
        %v1018 = vld [vmem:[%s1 + $0x1f0] sm:$0xff]
        %v1019 = vld [vmem:[%s1 + $0x1f8] sm:$0xff]
        %v1020 = vld [vmem:[%s1 + $0x200] sm:$0xff]
        %v1021 = vld [vmem:[%s1 + $0x208] sm:$0xff]
        %v1022 = vld [vmem:[%s1 + $0x210] sm:$0xff]
        %v1023 = vld [vmem:[%s1 + $0x218] sm:$0xff]
        %v1024 = vld [vmem:[%s1 + $0x220] sm:$0xff]
        %v1025 = vld [vmem:[%s1 + $0x228] sm:$0xff]
        %v1026 = vld [vmem:[%s1 + $0x230] sm:$0xff]
        %v1027 = vld [vmem:[%s1 + $0x238] sm:$0xff]
        %v1028 = vld [vmem:[%s1 + $0x240] sm:$0xff]
        %v1029 = vld [vmem:[%s1 + $0x248] sm:$0xff]
        %v1030 = vld [vmem:[%s1 + $0x250] sm:$0xff]
        %v1031 = vld [vmem:[%s1 + $0x258] sm:$0xff]
        %v1032 = vld [vmem:[%s1 + $0x260] sm:$0xff]
        %v1033 = vld [vmem:[%s1 + $0x268] sm:$0xff]
        %v1034 = vld [vmem:[%s1 + $0x270] sm:$0xff]
        %v1035 = vld [vmem:[%s1 + $0x278] sm:$0xff]
        %v1036 = vld [vmem:[%s1 + $0x280] sm:$0xff]
        %v1037 = vld [vmem:[%s1 + $0x288] sm:$0xff]
        %v1038 = vld [vmem:[%s1 + $0x290] sm:$0xff]
        %v1039 = vld [vmem:[%s1 + $0x298] sm:$0xff]
        %v1040 = vld [vmem:[%s1 + $0x2a0] sm:$0xff]
        %v1041 = vld [vmem:[%s1 + $0x2a8] sm:$0xff]
        %v1042 = vld [vmem:[%s1 + $0x2b0] sm:$0xff]
        %v1043 = vld [vmem:[%s1 + $0x2b8] sm:$0x33]
        %v1132 = vunpack.c.l.b16 %v956
        %v1133 = vunpack.c.h.b16 %v956
        %v1134 = vunpack.c.l.b16 %v957
        %v1135 = vunpack.c.h.b16 %v957
        %v1136 = vunpack.c.l.b16 %v958
        %v1137 = vunpack.c.h.b16 %v958
        %v1138 = vunpack.c.l.b16 %v959
        %v1139 = vunpack.c.h.b16 %v959
        %v1140 = vunpack.c.l.b16 %v960
        %v1141 = vunpack.c.h.b16 %v960
        %v1142 = vunpack.c.l.b16 %v961
        %v1143 = vunpack.c.h.b16 %v961
        %v1144 = vunpack.c.l.b16 %v962
        %v1145 = vunpack.c.h.b16 %v962
        %v1146 = vunpack.c.l.b16 %v963
        %v1147 = vunpack.c.h.b16 %v963
        %v1148 = vunpack.c.l.b16 %v964
        %v1149 = vunpack.c.h.b16 %v964
        %v1150 = vunpack.c.l.b16 %v965
        %v1151 = vunpack.c.h.b16 %v965
        %v1152 = vunpack.c.l.b16 %v966
        %v1153 = vunpack.c.h.b16 %v966
        %v1154 = vunpack.c.l.b16 %v967
        %v1155 = vunpack.c.h.b16 %v967
        %v1156 = vunpack.c.l.b16 %v968
        %v1157 = vunpack.c.h.b16 %v968
        %v1158 = vunpack.c.l.b16 %v969
        %v1159 = vunpack.c.h.b16 %v969
        %v1160 = vunpack.c.l.b16 %v970
        %v1161 = vunpack.c.h.b16 %v970
        %v1162 = vunpack.c.l.b16 %v971
        %v1163 = vunpack.c.h.b16 %v971
        %v1164 = vunpack.c.l.b16 %v972
        %v1165 = vunpack.c.h.b16 %v972
        %v1166 = vunpack.c.l.b16 %v973
        %v1167 = vunpack.c.h.b16 %v973
        %v1168 = vunpack.c.l.b16 %v974
        %v1169 = vunpack.c.h.b16 %v974
        %v1170 = vunpack.c.l.b16 %v975
        %v1171 = vunpack.c.h.b16 %v975
        %v1172 = vunpack.c.l.b16 %v976
        %v1173 = vunpack.c.h.b16 %v976
        %v1174 = vunpack.c.l.b16 %v977
        %v1175 = vunpack.c.h.b16 %v977
        %v1176 = vunpack.c.l.b16 %v978
        %v1177 = vunpack.c.h.b16 %v978
        %v1178 = vunpack.c.l.b16 %v979
        %v1179 = vunpack.c.h.b16 %v979
        %v1180 = vunpack.c.l.b16 %v980
        %v1181 = vunpack.c.h.b16 %v980
        %v1182 = vunpack.c.l.b16 %v981
        %v1183 = vunpack.c.h.b16 %v981
        %v1184 = vunpack.c.l.b16 %v982
        %v1185 = vunpack.c.h.b16 %v982
        %v1186 = vunpack.c.l.b16 %v983
        %v1187 = vunpack.c.h.b16 %v983
        %v1188 = vunpack.c.l.b16 %v984
        %v1189 = vunpack.c.h.b16 %v984
        %v1190 = vunpack.c.l.b16 %v985
        %v1191 = vunpack.c.h.b16 %v985
        %v1192 = vunpack.c.l.b16 %v986
        %v1193 = vunpack.c.h.b16 %v986
        %v1194 = vunpack.c.l.b16 %v987
        %v1195 = vunpack.c.h.b16 %v987
        %v1196 = vunpack.c.l.b16 %v988
        %v1197 = vunpack.c.h.b16 %v988
        %v1198 = vunpack.c.l.b16 %v989
        %v1199 = vunpack.c.h.b16 %v989
        %v1200 = vunpack.c.l.b16 %v990
        %v1201 = vunpack.c.h.b16 %v990
        %v1202 = vunpack.c.l.b16 %v991
        %v1203 = vunpack.c.h.b16 %v991
        %v1204 = vunpack.c.l.b16 %v992
        %v1205 = vunpack.c.h.b16 %v992
        %v1206 = vunpack.c.l.b16 %v993
        %v1207 = vunpack.c.h.b16 %v993
        %v1208 = vunpack.c.l.b16 %v994
        %v1209 = vunpack.c.h.b16 %v994
        %v1210 = vunpack.c.l.b16 %v995
        %v1211 = vunpack.c.h.b16 %v995
        %v1212 = vunpack.c.l.b16 %v996
        %v1213 = vunpack.c.h.b16 %v996
        %v1214 = vunpack.c.l.b16 %v997
        %v1215 = vunpack.c.h.b16 %v997
        %v1216 = vunpack.c.l.b16 %v998
        %v1217 = vunpack.c.h.b16 %v998
        %v1218 = vunpack.c.l.b16 %v999
        %v1219 = vunpack.c.h.b16 %v999
        %v1220 = vunpack.c.l.b16 %v1000
        %v1221 = vunpack.c.h.b16 %v1000
        %v1222 = vunpack.c.l.b16 %v1001
        %v1223 = vunpack.c.h.b16 %v1001
        %v1224 = vunpack.c.l.b16 %v1002
        %v1225 = vunpack.c.h.b16 %v1002
        %v1226 = vunpack.c.l.b16 %v1003
        %v1227 = vunpack.c.h.b16 %v1003
        %v1228 = vunpack.c.l.b16 %v1004
        %v1229 = vunpack.c.h.b16 %v1004
        %v1230 = vunpack.c.l.b16 %v1005
        %v1231 = vunpack.c.h.b16 %v1005
        %v1232 = vunpack.c.l.b16 %v1006
        %v1233 = vunpack.c.h.b16 %v1006
        %v1234 = vunpack.c.l.b16 %v1007
        %v1235 = vunpack.c.h.b16 %v1007
        %v1236 = vunpack.c.l.b16 %v1008
        %v1237 = vunpack.c.h.b16 %v1008
        %v1238 = vunpack.c.l.b16 %v1009
        %v1239 = vunpack.c.h.b16 %v1009
        %v1240 = vunpack.c.l.b16 %v1010
        %v1241 = vunpack.c.h.b16 %v1010
        %v1242 = vunpack.c.l.b16 %v1011
        %v1243 = vunpack.c.h.b16 %v1011
        %v1244 = vunpack.c.l.b16 %v1012
        %v1245 = vunpack.c.h.b16 %v1012
        %v1246 = vunpack.c.l.b16 %v1013
        %v1247 = vunpack.c.h.b16 %v1013
        %v1248 = vunpack.c.l.b16 %v1014
        %v1249 = vunpack.c.h.b16 %v1014
        %v1250 = vunpack.c.l.b16 %v1015
        %v1251 = vunpack.c.h.b16 %v1015
        %v1252 = vunpack.c.l.b16 %v1016
        %v1253 = vunpack.c.h.b16 %v1016
        %v1254 = vunpack.c.l.b16 %v1017
        %v1255 = vunpack.c.h.b16 %v1017
        %v1256 = vunpack.c.l.b16 %v1018
        %v1257 = vunpack.c.h.b16 %v1018
        %v1258 = vunpack.c.l.b16 %v1019
        %v1259 = vunpack.c.h.b16 %v1019
        %v1260 = vunpack.c.l.b16 %v1020
        %v1261 = vunpack.c.h.b16 %v1020
        %v1262 = vunpack.c.l.b16 %v1021
        %v1263 = vunpack.c.h.b16 %v1021
        %v1264 = vunpack.c.l.b16 %v1022
        %v1265 = vunpack.c.h.b16 %v1022
        %v1266 = vunpack.c.l.b16 %v1023
        %v1267 = vunpack.c.h.b16 %v1023
        %v1268 = vunpack.c.l.b16 %v1024
        %v1269 = vunpack.c.h.b16 %v1024
        %v1270 = vunpack.c.l.b16 %v1025
        %v1271 = vunpack.c.h.b16 %v1025
        %v1272 = vunpack.c.l.b16 %v1026
        %v1273 = vunpack.c.h.b16 %v1026
        %v1274 = vunpack.c.l.b16 %v1027
        %v1275 = vunpack.c.h.b16 %v1027
        %v1276 = vunpack.c.l.b16 %v1028
        %v1277 = vunpack.c.h.b16 %v1028
        %v1278 = vunpack.c.l.b16 %v1029
        %v1279 = vunpack.c.h.b16 %v1029
        %v1280 = vunpack.c.l.b16 %v1030
        %v1281 = vunpack.c.h.b16 %v1030
        %v1282 = vunpack.c.l.b16 %v1031
        %v1283 = vunpack.c.h.b16 %v1031
        %v1284 = vunpack.c.l.b16 %v1032
        %v1285 = vunpack.c.h.b16 %v1032
        %v1286 = vunpack.c.l.b16 %v1033
        %v1287 = vunpack.c.h.b16 %v1033
        %v1288 = vunpack.c.l.b16 %v1034
        %v1289 = vunpack.c.h.b16 %v1034
        %v1290 = vunpack.c.l.b16 %v1035
        %v1291 = vunpack.c.h.b16 %v1035
        %v1292 = vunpack.c.l.b16 %v1036
        %v1293 = vunpack.c.h.b16 %v1036
        %v1294 = vunpack.c.l.b16 %v1037
        %v1295 = vunpack.c.h.b16 %v1037
        %v1296 = vunpack.c.l.b16 %v1038
        %v1297 = vunpack.c.h.b16 %v1038
        %v1298 = vunpack.c.l.b16 %v1039
        %v1299 = vunpack.c.h.b16 %v1039
        %v1300 = vunpack.c.l.b16 %v1040
        %v1301 = vunpack.c.h.b16 %v1040
        %v1302 = vunpack.c.l.b16 %v1041
        %v1303 = vunpack.c.h.b16 %v1041
        %v1304 = vunpack.c.l.b16 %v1042
        %v1305 = vunpack.c.h.b16 %v1042
        %v1306 = vunpack.c.l.b16 %v1043
        %v1307 = vunpack.c.h.b16 %v1043
        %v1308 = vpack.c.b16 %v1134, %v1132
        %v1309 = vpack.c.b16 %v1135, %v1133
        %v1310 = vpack.c.b16 %v1138, %v1136
        %v1311 = vpack.c.b16 %v1139, %v1137
        %v1312 = vpack.c.b16 %v1142, %v1140
        %v1313 = vpack.c.b16 %v1143, %v1141
        %v1314 = vpack.c.b16 %v1146, %v1144
        %v1315 = vpack.c.b16 %v1147, %v1145
        %v1316 = vpack.c.b16 %v1150, %v1148
        %v1317 = vpack.c.b16 %v1151, %v1149
        %v1318 = vpack.c.b16 %v1154, %v1152
        %v1319 = vpack.c.b16 %v1155, %v1153
        %v1320 = vpack.c.b16 %v1158, %v1156
        %v1321 = vpack.c.b16 %v1159, %v1157
        %v1322 = vpack.c.b16 %v1162, %v1160
        %v1323 = vpack.c.b16 %v1163, %v1161
        %v1324 = vpack.c.b16 %v1166, %v1164
        %v1325 = vpack.c.b16 %v1167, %v1165
        %v1326 = vpack.c.b16 %v1170, %v1168
        %v1327 = vpack.c.b16 %v1171, %v1169
        %v1328 = vpack.c.b16 %v1174, %v1172
        %v1329 = vpack.c.b16 %v1175, %v1173
        %v1330 = vpack.c.b16 %v1178, %v1176
        %v1331 = vpack.c.b16 %v1179, %v1177
        %v1332 = vpack.c.b16 %v1182, %v1180
        %v1333 = vpack.c.b16 %v1183, %v1181
        %v1334 = vpack.c.b16 %v1186, %v1184
        %v1335 = vpack.c.b16 %v1187, %v1185
        %v1336 = vpack.c.b16 %v1190, %v1188
        %v1337 = vpack.c.b16 %v1191, %v1189
        %v1338 = vpack.c.b16 %v1194, %v1192
        %v1339 = vpack.c.b16 %v1195, %v1193
        %v1340 = vpack.c.b16 %v1198, %v1196
        %v1341 = vpack.c.b16 %v1199, %v1197
        %v1342 = vpack.c.b16 %v1202, %v1200
        %v1343 = vpack.c.b16 %v1203, %v1201
        %v1344 = vpack.c.b16 %v1206, %v1204
        %v1345 = vpack.c.b16 %v1207, %v1205
        %v1346 = vpack.c.b16 %v1210, %v1208
        %v1347 = vpack.c.b16 %v1211, %v1209
        %v1348 = vpack.c.b16 %v1214, %v1212
        %v1349 = vpack.c.b16 %v1215, %v1213
        %v1350 = vpack.c.b16 %v1218, %v1216
        %v1351 = vpack.c.b16 %v1219, %v1217
        %v1352 = vpack.c.b16 %v1222, %v1220
        %v1353 = vpack.c.b16 %v1223, %v1221
        %v1354 = vpack.c.b16 %v1226, %v1224
        %v1355 = vpack.c.b16 %v1227, %v1225
        %v1356 = vpack.c.b16 %v1230, %v1228
        %v1357 = vpack.c.b16 %v1231, %v1229
        %v1358 = vpack.c.b16 %v1234, %v1232
        %v1359 = vpack.c.b16 %v1235, %v1233
        %v1360 = vpack.c.b16 %v1238, %v1236
        %v1361 = vpack.c.b16 %v1239, %v1237
        %v1362 = vpack.c.b16 %v1242, %v1240
        %v1363 = vpack.c.b16 %v1243, %v1241
        %v1364 = vpack.c.b16 %v1246, %v1244
        %v1365 = vpack.c.b16 %v1247, %v1245
        %v1366 = vpack.c.b16 %v1250, %v1248
        %v1367 = vpack.c.b16 %v1251, %v1249
        %v1368 = vpack.c.b16 %v1254, %v1252
        %v1369 = vpack.c.b16 %v1255, %v1253
        %v1370 = vpack.c.b16 %v1258, %v1256
        %v1371 = vpack.c.b16 %v1259, %v1257
        %v1372 = vpack.c.b16 %v1262, %v1260
        %v1373 = vpack.c.b16 %v1263, %v1261
        %v1374 = vpack.c.b16 %v1266, %v1264
        %v1375 = vpack.c.b16 %v1267, %v1265
        %v1376 = vpack.c.b16 %v1270, %v1268
        %v1377 = vpack.c.b16 %v1271, %v1269
        %v1378 = vpack.c.b16 %v1274, %v1272
        %v1379 = vpack.c.b16 %v1275, %v1273
        %v1380 = vpack.c.b16 %v1278, %v1276
        %v1381 = vpack.c.b16 %v1279, %v1277
        %v1382 = vpack.c.b16 %v1282, %v1280
        %v1383 = vpack.c.b16 %v1283, %v1281
        %v1384 = vpack.c.b16 %v1286, %v1284
        %v1385 = vpack.c.b16 %v1287, %v1285
        %v1386 = vpack.c.b16 %v1290, %v1288
        %v1387 = vpack.c.b16 %v1291, %v1289
        %v1388 = vpack.c.b16 %v1294, %v1292
        %v1389 = vpack.c.b16 %v1295, %v1293
        %v1390 = vpack.c.b16 %v1298, %v1296
        %v1391 = vpack.c.b16 %v1299, %v1297
        %v1392 = vpack.c.b16 %v1302, %v1300
        %v1393 = vpack.c.b16 %v1303, %v1301
        %v1394 = vpack.c.b16 %v1306, %v1304
        %v1395 = vpack.c.b16 %v1307, %v1305
        %vm1482 = vcmask 490496
        %v1484 = vsel %vm1482, %v949, 0
        %v1487 = vsel %vm1482, %v955, 0
        %v1490 = vsel %vm608, %v1394, 0
        %v1493 = vsel %vm608, %v1395, 0
        %1495 = vmatprep.subr.bf16.mxu0 %v1323
        %1496 = vmatpush1.bf16.msra.mxu0 %v1322
        %1497 = vmatprep.subr.bf16.mxu0 %v1321
        %1498 = vmatpush1.bf16.msra.mxu0 %v1320
        %1499 = vmatprep.subr.bf16.mxu0 %v1319
        %1500 = vmatpush1.bf16.msra.mxu0 %v1318
        %1501 = vmatprep.subr.bf16.mxu0 %v1317
        %1502 = vmatpush1.bf16.msra.mxu0 %v1316
        %1503 = vmatprep.subr.bf16.mxu0 %v1315
        %1504 = vmatpush1.bf16.msra.mxu0 %v1314
        %1505 = vmatprep.subr.bf16.mxu0 %v1313
        %1506 = vmatpush1.bf16.msra.mxu0 %v1312
        %1507 = vmatprep.subr.bf16.mxu0 %v1311
        %1508 = vmatpush1.bf16.msra.mxu0 %v1310
        %1509 = vmatprep.subr.bf16.mxu0 %v1309
        %1510 = vmatpush1.bf16.msra.mxu0 %v1308
        %1511 = vmatprep.subr.bf16.mxu0 %v1339
        %1512 = vmatpush2.bf16.msra.mxu0 %v1338
        %1513 = vmatprep.subr.bf16.mxu0 %v1337
        %1514 = vmatpush2.bf16.msra.mxu0 %v1336
        %1515 = vmatprep.subr.bf16.mxu0 %v1335
        %1516 = vmatpush2.bf16.msra.mxu0 %v1334
        %1517 = vmatprep.subr.bf16.mxu0 %v1333
        %1518 = vmatpush2.bf16.msra.mxu0 %v1332
        %1519 = vmatprep.subr.bf16.mxu0 %v1331
        %1520 = vmatpush2.bf16.msra.mxu0 %v1330
        %1521 = vmatprep.subr.bf16.mxu0 %v1329
        %1522 = vmatpush2.bf16.msra.mxu0 %v1328
        %1523 = vmatprep.subr.bf16.mxu0 %v1327
        %1524 = vmatpush2.bf16.msra.mxu0 %v1326
        %1525 = vmatprep.subr.bf16.mxu0 %v1325
        %1526 = vmatpush2.bf16.msra.mxu0 %v1324
        %1527 = vmatprep.mubr.bf16.mxu0 %v945
        %1528 = vmatmul.mubr.bf16.gmra.mxu0 %v944
        %v1529 = vpop.f32.mrf.mxu0
        %v1530 = vadd.f32 0.0, %v1529
        %v1531 = vpop.f32.mrf.mxu0
        %v1532 = vadd.f32 0.0, %v1531
        %v1533 = vpop.f32.mrf.mxu0
        %v1534 = vadd.f32 0.0, %v1533
        %v1535 = vpop.f32.mrf.mxu0
        %v1536 = vadd.f32 0.0, %v1535
        %1537 = vmatprep.mubr.bf16.mxu0 %v951
        %1538 = vmatmul.mubr.bf16.gmra.mxu0 %v950
        %v1539 = vpop.f32.mrf.mxu0
        %v1540 = vadd.f32 0.0, %v1539
        %v1541 = vpop.f32.mrf.mxu0
        %v1542 = vadd.f32 0.0, %v1541
        %v1543 = vpop.f32.mrf.mxu0
        %v1544 = vadd.f32 0.0, %v1543
        %v1545 = vpop.f32.mrf.mxu0
        %v1546 = vadd.f32 0.0, %v1545
        %1547 = vdwg.mxu0
        %1548 = vmatprep.subr.bf16.mxu0 %v1355
        %1549 = vmatpush1.bf16.msra.mxu0 %v1354
        %1550 = vmatprep.subr.bf16.mxu0 %v1353
        %1551 = vmatpush1.bf16.msra.mxu0 %v1352
        %1552 = vmatprep.subr.bf16.mxu0 %v1351
        %1553 = vmatpush1.bf16.msra.mxu0 %v1350
        %1554 = vmatprep.subr.bf16.mxu0 %v1349
        %1555 = vmatpush1.bf16.msra.mxu0 %v1348
        %1556 = vmatprep.subr.bf16.mxu0 %v1347
        %1557 = vmatpush1.bf16.msra.mxu0 %v1346
        %1558 = vmatprep.subr.bf16.mxu0 %v1345
        %1559 = vmatpush1.bf16.msra.mxu0 %v1344
        %1560 = vmatprep.subr.bf16.mxu0 %v1343
        %1561 = vmatpush1.bf16.msra.mxu0 %v1342
        %1562 = vmatprep.subr.bf16.mxu0 %v1341
        %1563 = vmatpush1.bf16.msra.mxu0 %v1340
        %1564 = vmatprep.subr.bf16.mxu0 %v1371
        %1565 = vmatpush2.bf16.msra.mxu0 %v1370
        %1566 = vmatprep.subr.bf16.mxu0 %v1369
        %1567 = vmatpush2.bf16.msra.mxu0 %v1368
        %1568 = vmatprep.subr.bf16.mxu0 %v1367
        %1569 = vmatpush2.bf16.msra.mxu0 %v1366
        %1570 = vmatprep.subr.bf16.mxu0 %v1365
        %1571 = vmatpush2.bf16.msra.mxu0 %v1364
        %1572 = vmatprep.subr.bf16.mxu0 %v1363
        %1573 = vmatpush2.bf16.msra.mxu0 %v1362
        %1574 = vmatprep.subr.bf16.mxu0 %v1361
        %1575 = vmatpush2.bf16.msra.mxu0 %v1360
        %1576 = vmatprep.subr.bf16.mxu0 %v1359
        %1577 = vmatpush2.bf16.msra.mxu0 %v1358
        %1578 = vmatprep.subr.bf16.mxu0 %v1357
        %1579 = vmatpush2.bf16.msra.mxu0 %v1356
        %1580 = vmatprep.mubr.bf16.mxu0 %v947
        %1581 = vmatmul.mubr.bf16.gmra.mxu0 %v946
        %v1582 = vpop.f32.mrf.mxu0
        %v1583 = vadd.f32 %v1530, %v1582
        %v1584 = vpop.f32.mrf.mxu0
        %v1585 = vadd.f32 %v1532, %v1584
        %v1586 = vpop.f32.mrf.mxu0
        %v1587 = vadd.f32 %v1534, %v1586
        %v1588 = vpop.f32.mrf.mxu0
        %v1589 = vadd.f32 %v1536, %v1588
        %1590 = vmatprep.mubr.bf16.mxu0 %v953
        %1591 = vmatmul.mubr.bf16.gmra.mxu0 %v952
        %v1592 = vpop.f32.mrf.mxu0
        %v1593 = vadd.f32 %v1540, %v1592
        %v1594 = vpop.f32.mrf.mxu0
        %v1595 = vadd.f32 %v1542, %v1594
        %v1596 = vpop.f32.mrf.mxu0
        %v1597 = vadd.f32 %v1544, %v1596
        %v1598 = vpop.f32.mrf.mxu0
        %v1599 = vadd.f32 %v1546, %v1598
        %1600 = vdwg.mxu0
        %1601 = vmatprep.subr.bf16.mxu0 %v1387
        %1602 = vmatpush1.bf16.msra.mxu0 %v1386
        %1603 = vmatprep.subr.bf16.mxu0 %v1385
        %1604 = vmatpush1.bf16.msra.mxu0 %v1384
        %1605 = vmatprep.subr.bf16.mxu0 %v1383
        %1606 = vmatpush1.bf16.msra.mxu0 %v1382
        %1607 = vmatprep.subr.bf16.mxu0 %v1381
        %1608 = vmatpush1.bf16.msra.mxu0 %v1380
        %1609 = vmatprep.subr.bf16.mxu0 %v1379
        %1610 = vmatpush1.bf16.msra.mxu0 %v1378
        %1611 = vmatprep.subr.bf16.mxu0 %v1377
        %1612 = vmatpush1.bf16.msra.mxu0 %v1376
        %1613 = vmatprep.subr.bf16.mxu0 %v1375
        %1614 = vmatpush1.bf16.msra.mxu0 %v1374
        %1615 = vmatprep.subr.bf16.mxu0 %v1373
        %1616 = vmatpush1.bf16.msra.mxu0 %v1372
        %1617 = vmatprep.subr.bf16.mxu0 0
        %1618 = vmatpush2.bf16.msra.mxu0 0
        %1619 = vmatprep.subr.bf16.mxu0 0
        %1620 = vmatpush2.bf16.msra.mxu0 0
        %1621 = vmatprep.subr.bf16.mxu0 0
        %1622 = vmatpush2.bf16.msra.mxu0 0
        %1623 = vmatprep.subr.bf16.mxu0 0
        %1624 = vmatpush2.bf16.msra.mxu0 0
        %1625 = vmatprep.subr.bf16.mxu0 %v1493
        %1626 = vmatpush2.bf16.msra.mxu0 %v1490
        %1627 = vmatprep.subr.bf16.mxu0 %v1393
        %1628 = vmatpush2.bf16.msra.mxu0 %v1392
        %1629 = vmatprep.subr.bf16.mxu0 %v1391
        %1630 = vmatpush2.bf16.msra.mxu0 %v1390
        %1631 = vmatprep.subr.bf16.mxu0 %v1389
        %1632 = vmatpush2.bf16.msra.mxu0 %v1388
        %1633 = vmatprep.mubr.bf16.mxu0 %v1484
        %1634 = vmatmul.mubr.bf16.gmra.mxu0 %v948
        %v1635 = vpop.f32.mrf.mxu0
        %v1636 = vadd.f32 %v1583, %v1635
        %v1637 = vpop.f32.mrf.mxu0
        %v1638 = vadd.f32 %v1585, %v1637
        %v1639 = vpop.f32.mrf.mxu0
        %v1640 = vadd.f32 %v1587, %v1639
        %v1641 = vpop.f32.mrf.mxu0
        %v1642 = vadd.f32 %v1589, %v1641
        %1643 = vmatprep.mubr.bf16.mxu0 %v1487
        %1644 = vmatmul.mubr.bf16.gmra.mxu0 %v954
        %v1645 = vpop.f32.mrf.mxu0
        %v1646 = vadd.f32 %v1593, %v1645
        %v1647 = vpop.f32.mrf.mxu0
        %v1648 = vadd.f32 %v1595, %v1647
        %v1649 = vpop.f32.mrf.mxu0
        %v1650 = vadd.f32 %v1597, %v1649
        %v1651 = vpop.f32.mrf.mxu0
        %v1652 = vadd.f32 %v1599, %v1651
        %1653 = vdwg.mxu0
        %1654 = vst [vmem:[#allocation3] sm:$0xff] 0.0
        %1655 = vst [vmem:[#allocation3 + $0x8] sm:$0xff] 0.0
        %1656 = vst [vmem:[#allocation3 + $0x10] sm:$0xff] 0.0
        %1657 = vst [vmem:[#allocation3 + $0x18] sm:$0xff] 0.0
        %1658 = vst [vmem:[#allocation3 + $0x20] sm:$0xff] 0.0
        %1659 = vst [vmem:[#allocation3 + $0x28] sm:$0xff] 0.0
        %1660 = vst [vmem:[#allocation3 + $0x30] sm:$0xff] 0.0
        %1661 = vst [vmem:[#allocation3 + $0x38] sm:$0xff] 0.0
        %1662 = vst [vmem:[#allocation3 + $0x40] sm:$0xff] 0.0
        %1663 = vst [vmem:[#allocation3 + $0x48] sm:$0xff] 0.0
        %1664 = vst [vmem:[#allocation3 + $0x50] sm:$0xff] 0.0
        %vm1665 = vcmask 850944
        %1666 = vst.msk [vmem:[#allocation3 + $0x58] sm:$0xff] %vm1665, 0.0
        %1667 = vst [vmem:[#allocation3 + $0x60] sm:$0xff] 0.0
        %1668 = vst [vmem:[#allocation3 + $0x68] sm:$0xff] 0.0
        %1669 = vst [vmem:[#allocation3 + $0x70] sm:$0xff] 0.0
        %1670 = vst [vmem:[#allocation3 + $0x78] sm:$0xff] 0.0
        %1671 = vst [vmem:[#allocation3 + $0x80] sm:$0xff] 0.0
        %1672 = vst [vmem:[#allocation3 + $0x88] sm:$0xff] 0.0
        %1673 = vst [vmem:[#allocation3 + $0x90] sm:$0xff] 0.0
        %1674 = vst [vmem:[#allocation3 + $0x98] sm:$0xff] 0.0
        %1675 = vst [vmem:[#allocation3 + $0xa0] sm:$0xff] 0.0
        %1676 = vst [vmem:[#allocation3 + $0xa8] sm:$0xff] 0.0
        %1677 = vst [vmem:[#allocation3 + $0xb0] sm:$0xff] 0.0
        %1678 = vst.msk [vmem:[#allocation3 + $0xb8] sm:$0xff] %vm1665, 0.0
        %1679 = vst [vmem:[#allocation3 + $0xc0] sm:$0xff] 0.0
        %1680 = vst [vmem:[#allocation3 + $0xc8] sm:$0xff] 0.0
        %1681 = vst [vmem:[#allocation3 + $0xd0] sm:$0xff] 0.0
        %1682 = vst [vmem:[#allocation3 + $0xd8] sm:$0xff] 0.0
        %1683 = vst [vmem:[#allocation3 + $0xe0] sm:$0xff] 0.0
        %1684 = vst [vmem:[#allocation3 + $0xe8] sm:$0xff] 0.0
        %1685 = vst [vmem:[#allocation3 + $0xf0] sm:$0xff] 0.0
        %1686 = vst [vmem:[#allocation3 + $0xf8] sm:$0xff] 0.0
        %1687 = vst [vmem:[#allocation3 + $0x100] sm:$0xff] 0.0
        %1688 = vst [vmem:[#allocation3 + $0x108] sm:$0xff] 0.0
        %1689 = vst [vmem:[#allocation3 + $0x110] sm:$0xff] 0.0
        %1690 = vst.msk [vmem:[#allocation3 + $0x118] sm:$0xff] %vm1665, 0.0
        %1691 = vst [vmem:[#allocation3 + $0x120] sm:$0xf] 0.0
        %1692 = vst [vmem:[#allocation3 + $0x128] sm:$0xf] 0.0
        %1693 = vst [vmem:[#allocation3 + $0x130] sm:$0xf] 0.0
        %1694 = vst [vmem:[#allocation3 + $0x138] sm:$0xf] 0.0
        %1695 = vst [vmem:[#allocation3 + $0x140] sm:$0xf] 0.0
        %1696 = vst [vmem:[#allocation3 + $0x148] sm:$0xf] 0.0
        %1697 = vst [vmem:[#allocation3 + $0x150] sm:$0xf] 0.0
        %1698 = vst [vmem:[#allocation3 + $0x158] sm:$0xf] 0.0
        %1699 = vst [vmem:[#allocation3 + $0x160] sm:$0xf] 0.0
        %1700 = vst [vmem:[#allocation3 + $0x168] sm:$0xf] 0.0
        %1701 = vst [vmem:[#allocation3 + $0x170] sm:$0xf] 0.0
        %vm1702 = vcmask 846848
        %1703 = vst.msk [vmem:[#allocation3 + $0x178] sm:$0xf] %vm1702, 0.0
        %vm1712 = vcmask 1040384
        %v1713 = vrot.slane %v1636, 7
        %v1714 = vrot.slane %v1638, 7
        %v1715 = vrot.slane %v1640, 7
        %v1716 = vsel %vm1712, %v1713, %v1715
        %v1717 = vrot.slane %v1642, 7
        %v1718 = vsel %vm1712, %v1714, %v1717
        %v1719 = vrot.slane %v1646, 7
        %v1720 = vsel %vm1712, %v1715, %v1719
        %v1721 = vrot.slane %v1648, 7
        %v1722 = vsel %vm1712, %v1717, %v1721
        %v1723 = vrot.slane %v1650, 7
        %v1724 = vsel %vm1712, %v1719, %v1723
        %v1725 = vrot.slane %v1652, 7
        %v1726 = vsel %vm1712, %v1721, %v1725
        %1727 = vrot.lane.b32.xlu0 %v1713, 6
        %v1728 = vpop.permute.xlu0 %1727
        %1729 = vrot.lane.b32.xlu0 %v1714, 6
        %v1730 = vpop.permute.xlu0 %1729
        %1731 = vrot.lane.b32.xlu0 %v1716, 6
        %v1732 = vpop.permute.xlu0 %1731
        %1733 = vrot.lane.b32.xlu0 %v1718, 6
        %v1734 = vpop.permute.xlu0 %1733
        %1735 = vrot.lane.b32.xlu0 %v1720, 6
        %v1736 = vpop.permute.xlu0 %1735
        %1737 = vrot.lane.b32.xlu0 %v1722, 6
        %v1738 = vpop.permute.xlu0 %1737
        %1739 = vrot.lane.b32.xlu0 %v1724, 6
        %v1740 = vpop.permute.xlu0 %1739
        %1741 = vrot.lane.b32.xlu0 %v1726, 6
        %v1742 = vpop.permute.xlu0 %1741
        %vm1743 = vcmask 48128
        %v1744 = vsel %vm1743, %v1728, %v1730
        %v1745 = vsel %vm1743, %v1732, %v1734
        %v1746 = vsel %vm1743, %v1736, %v1738
        %v1747 = vsel %vm1743, %v1740, %v1742
        %vm1756 = vcmask 1047601
        %1757 = vst.msk [vmem:[#allocation3] sm:$0xfe] %vm1756, %v1728
        %vm1758 = vcmask 326657
        %1759 = vst.msk [vmem:[#allocation3 + $0x8] sm:$0xfe] %vm1758, %v1744
        %vm1760 = vcmask 1047600
        %1761 = vst.msk [vmem:[#allocation3 + $0x60] sm:$0xff] %vm1760, %v1732
        %vm1762 = vcmask 326656
        %1763 = vst.msk [vmem:[#allocation3 + $0x68] sm:$0xff] %vm1762, %v1745
        %1764 = vst.msk [vmem:[#allocation3 + $0xc0] sm:$0xff] %vm1760, %v1736
        %1765 = vst.msk [vmem:[#allocation3 + $0xc8] sm:$0xff] %vm1762, %v1746
        %vm1766 = vcmask 1043504
        %1767 = vst.msk [vmem:[#allocation3 + $0x120] sm:$0xf] %vm1766, %v1740
        %vm1768 = vcmask 322560
        %1769 = vst.msk [vmem:[#allocation3 + $0x128] sm:$0xf] %vm1768, %v1747
        %1770 = vrot.lane.b32.xlu0 %v1713, 40
        %v1771 = vpop.permute.xlu0 %1770
        %1772 = vrot.lane.b32.xlu0 %v1714, 40
        %v1773 = vpop.permute.xlu0 %1772
        %1774 = vrot.lane.b32.xlu0 %v1716, 40
        %v1775 = vpop.permute.xlu0 %1774
        %1776 = vrot.lane.b32.xlu0 %v1718, 40
        %v1777 = vpop.permute.xlu0 %1776
        %1778 = vrot.lane.b32.xlu0 %v1720, 40
        %v1779 = vpop.permute.xlu0 %1778
        %1780 = vrot.lane.b32.xlu0 %v1722, 40
        %v1781 = vpop.permute.xlu0 %1780
        %1782 = vrot.lane.b32.xlu0 %v1724, 40
        %v1783 = vpop.permute.xlu0 %1782
        %1784 = vrot.lane.b32.xlu0 %v1726, 40
        %v1785 = vpop.permute.xlu0 %1784
        %v1786 = vsel %vm1762, %v1771, %v1773
        %v1787 = vsel %vm1762, %v1775, %v1777
        %v1788 = vsel %vm1762, %v1779, %v1781
        %v1789 = vsel %vm1762, %v1783, %v1785
        %vm1798 = vcmask 1047873
        %1799 = vst.msk [vmem:[#allocation3 + $0x8] sm:$0xfe] %vm1798, %v1771
        %vm1800 = vcmask 654337
        %1801 = vst.msk [vmem:[#allocation3 + $0x10] sm:$0xfe] %vm1800, %v1786
        %vm1802 = vcmask 1047872
        %1803 = vst.msk [vmem:[#allocation3 + $0x68] sm:$0xff] %vm1802, %v1775
        %vm1804 = vcmask 654336
        %1805 = vst.msk [vmem:[#allocation3 + $0x70] sm:$0xff] %vm1804, %v1787
        %1806 = vst.msk [vmem:[#allocation3 + $0xc8] sm:$0xff] %vm1802, %v1779
        %1807 = vst.msk [vmem:[#allocation3 + $0xd0] sm:$0xff] %vm1804, %v1788
        %vm1808 = vcmask 1043776
        %1809 = vst.msk [vmem:[#allocation3 + $0x128] sm:$0xf] %vm1808, %v1783
        %vm1810 = vcmask 650240
        %1811 = vst.msk [vmem:[#allocation3 + $0x130] sm:$0xf] %vm1810, %v1789
        %1812 = vrot.lane.b32.xlu0 %v1713, 74
        %v1813 = vpop.permute.xlu0 %1812
        %1814 = vrot.lane.b32.xlu0 %v1714, 74
        %v1815 = vpop.permute.xlu0 %1814
        %1816 = vrot.lane.b32.xlu0 %v1716, 74
        %v1817 = vpop.permute.xlu0 %1816
        %1818 = vrot.lane.b32.xlu0 %v1718, 74
        %v1819 = vpop.permute.xlu0 %1818
        %1820 = vrot.lane.b32.xlu0 %v1720, 74
        %v1821 = vpop.permute.xlu0 %1820
        %1822 = vrot.lane.b32.xlu0 %v1722, 74
        %v1823 = vpop.permute.xlu0 %1822
        %1824 = vrot.lane.b32.xlu0 %v1724, 74
        %v1825 = vpop.permute.xlu0 %1824
        %1826 = vrot.lane.b32.xlu0 %v1726, 74
        %v1827 = vpop.permute.xlu0 %1826
        %vm1828 = vcmask 605184
        %v1829 = vsel %vm1828, %v1813, %v1815
        %v1830 = vsel %vm1828, %v1817, %v1819
        %v1831 = vsel %vm1828, %v1821, %v1823
        %v1832 = vsel %vm1828, %v1825, %v1827
        %vm1841 = vcmask 1048193
        %1842 = vst.msk [vmem:[#allocation3 + $0x10] sm:$0xfe] %vm1841, %v1813
        %vm1843 = vcmask 932865
        %1844 = vst.msk [vmem:[#allocation3 + $0x18] sm:$0xfe] %vm1843, %v1829
        %vm1845 = vcmask 1048192
        %1846 = vst.msk [vmem:[#allocation3 + $0x70] sm:$0xff] %vm1845, %v1817
        %vm1847 = vcmask 932864
        %1848 = vst.msk [vmem:[#allocation3 + $0x78] sm:$0xff] %vm1847, %v1830
        %1849 = vst.msk [vmem:[#allocation3 + $0xd0] sm:$0xff] %vm1845, %v1821
        %1850 = vst.msk [vmem:[#allocation3 + $0xd8] sm:$0xff] %vm1847, %v1831
        %vm1851 = vcmask 1044096
        %1852 = vst.msk [vmem:[#allocation3 + $0x130] sm:$0xf] %vm1851, %v1825
        %vm1853 = vcmask 928768
        %1854 = vst.msk [vmem:[#allocation3 + $0x138] sm:$0xf] %vm1853, %v1832
        %1855 = vrot.lane.b32.xlu0 %v1636, 126
        %v1856 = vpop.permute.xlu0 %1855
        %1857 = vrot.lane.b32.xlu0 %v1638, 126
        %v1858 = vpop.permute.xlu0 %1857
        %1859 = vrot.lane.b32.xlu0 %v1640, 126
        %v1860 = vpop.permute.xlu0 %1859
        %1861 = vrot.lane.b32.xlu0 %v1642, 126
        %v1862 = vpop.permute.xlu0 %1861
        %1863 = vrot.lane.b32.xlu0 %v1646, 126
        %v1864 = vpop.permute.xlu0 %1863
        %1865 = vrot.lane.b32.xlu0 %v1648, 126
        %v1866 = vpop.permute.xlu0 %1865
        %1867 = vrot.lane.b32.xlu0 %v1650, 126
        %v1868 = vpop.permute.xlu0 %1867
        %1869 = vrot.lane.b32.xlu0 %v1652, 126
        %v1870 = vpop.permute.xlu0 %1869
        %vm1871 = vcmask 1031168
        %v1872 = vsel %vm1871, %v1856, %v1858
        %v1873 = vsel %vm1871, %v1860, %v1862
        %v1874 = vsel %vm1871, %v1864, %v1866
        %v1875 = vsel %vm1871, %v1868, %v1870
        %vm1888 = vcmask 1048560
        %1889 = vst.msk [vmem:[#allocation3 + $0x18] sm:$0xff] %vm1888, %v1856
        %1890 = vst [vmem:[#allocation3 + $0x20] sm:$0xff] %v1872
        %vm1891 = vcmask 261120
        %1892 = vst.msk [vmem:[#allocation3 + $0x28] sm:$0xff] %vm1891, %v1858
        %1893 = vst.msk [vmem:[#allocation3 + $0x78] sm:$0xff] %vm1888, %v1860
        %1894 = vst [vmem:[#allocation3 + $0x80] sm:$0xff] %v1873
        %1895 = vst.msk [vmem:[#allocation3 + $0x88] sm:$0xff] %vm1891, %v1862
        %1896 = vst.msk [vmem:[#allocation3 + $0xd8] sm:$0xff] %vm1888, %v1864
        %1897 = vst [vmem:[#allocation3 + $0xe0] sm:$0xff] %v1874
        %1898 = vst.msk [vmem:[#allocation3 + $0xe8] sm:$0xff] %vm1891, %v1866
        %vm1899 = vcmask 1044464
        %1900 = vst.msk [vmem:[#allocation3 + $0x138] sm:$0xf] %vm1899, %v1868
        %1901 = vst [vmem:[#allocation3 + $0x140] sm:$0xf] %v1875
        %vm1902 = vcmask 257024
        %1903 = vst.msk [vmem:[#allocation3 + $0x148] sm:$0xf] %vm1902, %v1870
        %1904 = vrot.lane.b32.xlu0 %v1636, 32
        %v1905 = vpop.permute.xlu0 %1904
        %1906 = vrot.lane.b32.xlu0 %v1638, 32
        %v1907 = vpop.permute.xlu0 %1906
        %1908 = vrot.lane.b32.xlu0 %v1640, 32
        %v1909 = vpop.permute.xlu0 %1908
        %1910 = vrot.lane.b32.xlu0 %v1642, 32
        %v1911 = vpop.permute.xlu0 %1910
        %1912 = vrot.lane.b32.xlu0 %v1646, 32
        %v1913 = vpop.permute.xlu0 %1912
        %1914 = vrot.lane.b32.xlu0 %v1648, 32
        %v1915 = vpop.permute.xlu0 %1914
        %1916 = vrot.lane.b32.xlu0 %v1650, 32
        %v1917 = vpop.permute.xlu0 %1916
        %1918 = vrot.lane.b32.xlu0 %v1652, 32
        %v1919 = vpop.permute.xlu0 %1918
        %v1920 = vsel %vm1891, %v1905, %v1907
        %v1921 = vsel %vm1891, %v1909, %v1911
        %v1922 = vsel %vm1891, %v1913, %v1915
        %v1923 = vsel %vm1891, %v1917, %v1919
        %vm1932 = vcmask 1047808
        %1933 = vst.msk [vmem:[#allocation3 + $0x28] sm:$0xff] %vm1932, %v1905
        %vm1934 = vcmask 588800
        %1935 = vst.msk [vmem:[#allocation3 + $0x30] sm:$0xff] %vm1934, %v1920
        %1936 = vst.msk [vmem:[#allocation3 + $0x88] sm:$0xff] %vm1932, %v1909
        %1937 = vst.msk [vmem:[#allocation3 + $0x90] sm:$0xff] %vm1934, %v1921
        %1938 = vst.msk [vmem:[#allocation3 + $0xe8] sm:$0xff] %vm1932, %v1913
        %1939 = vst.msk [vmem:[#allocation3 + $0xf0] sm:$0xff] %vm1934, %v1922
        %vm1940 = vcmask 1043712
        %1941 = vst.msk [vmem:[#allocation3 + $0x148] sm:$0xf] %vm1940, %v1917
        %vm1942 = vcmask 584704
        %1943 = vst.msk [vmem:[#allocation3 + $0x150] sm:$0xf] %vm1942, %v1923
        %1944 = vrot.lane.b32.xlu0 %v1636, 66
        %v1945 = vpop.permute.xlu0 %1944
        %1946 = vrot.lane.b32.xlu0 %v1638, 66
        %v1947 = vpop.permute.xlu0 %1946
        %1948 = vrot.lane.b32.xlu0 %v1640, 66
        %v1949 = vpop.permute.xlu0 %1948
        %1950 = vrot.lane.b32.xlu0 %v1642, 66
        %v1951 = vpop.permute.xlu0 %1950
        %1952 = vrot.lane.b32.xlu0 %v1646, 66
        %v1953 = vpop.permute.xlu0 %1952
        %1954 = vrot.lane.b32.xlu0 %v1648, 66
        %v1955 = vpop.permute.xlu0 %1954
        %1956 = vrot.lane.b32.xlu0 %v1650, 66
        %v1957 = vpop.permute.xlu0 %1956
        %1958 = vrot.lane.b32.xlu0 %v1652, 66
        %v1959 = vpop.permute.xlu0 %1958
        %vm1960 = vcmask 539648
        %v1961 = vsel %vm1960, %v1945, %v1947
        %v1962 = vsel %vm1960, %v1949, %v1951
        %v1963 = vsel %vm1960, %v1953, %v1955
        %v1964 = vsel %vm1960, %v1957, %v1959
        %vm1973 = vcmask 1048128
        %1974 = vst.msk [vmem:[#allocation3 + $0x30] sm:$0xff] %vm1973, %v1945
        %vm1975 = vcmask 867328
        %1976 = vst.msk [vmem:[#allocation3 + $0x38] sm:$0xff] %vm1975, %v1961
        %1977 = vst.msk [vmem:[#allocation3 + $0x90] sm:$0xff] %vm1973, %v1949
        %1978 = vst.msk [vmem:[#allocation3 + $0x98] sm:$0xff] %vm1975, %v1962
        %1979 = vst.msk [vmem:[#allocation3 + $0xf0] sm:$0xff] %vm1973, %v1953
        %1980 = vst.msk [vmem:[#allocation3 + $0xf8] sm:$0xff] %vm1975, %v1963
        %vm1981 = vcmask 1044032
        %1982 = vst.msk [vmem:[#allocation3 + $0x150] sm:$0xf] %vm1981, %v1957
        %vm1983 = vcmask 863232
        %1984 = vst.msk [vmem:[#allocation3 + $0x158] sm:$0xf] %vm1983, %v1964
        %v1985 = vrot.slane %v1636, 1
        %v1986 = vrot.slane %v1640, 1
        %v1987 = vsel %vm504, %v1985, %v1986
        %v1988 = vrot.slane %v1638, 1
        %v1989 = vrot.slane %v1642, 1
        %v1990 = vsel %vm504, %v1988, %v1989
        %v1991 = vrot.slane %v1646, 1
        %v1992 = vsel %vm504, %v1986, %v1991
        %v1993 = vrot.slane %v1648, 1
        %v1994 = vsel %vm504, %v1989, %v1993
        %v1995 = vrot.slane %v1650, 1
        %v1996 = vsel %vm504, %v1991, %v1995
        %v1997 = vrot.slane %v1652, 1
        %v1998 = vsel %vm504, %v1993, %v1997
        %1999 = vrot.lane.b32.xlu0 %v1987, 118
        %v2000 = vpop.permute.xlu0 %1999
        %2001 = vrot.lane.b32.xlu0 %v1990, 118
        %v2002 = vpop.permute.xlu0 %2001
        %2003 = vrot.lane.b32.xlu0 %v1992, 118
        %v2004 = vpop.permute.xlu0 %2003
        %2005 = vrot.lane.b32.xlu0 %v1994, 118
        %v2006 = vpop.permute.xlu0 %2005
        %2007 = vrot.lane.b32.xlu0 %v1996, 118
        %v2008 = vpop.permute.xlu0 %2007
        %2009 = vrot.lane.b32.xlu0 %v1998, 118
        %v2010 = vpop.permute.xlu0 %2009
        %2011 = vrot.lane.b32.xlu0 %v1995, 118
        %v2012 = vpop.permute.xlu0 %2011
        %2013 = vrot.lane.b32.xlu0 %v1997, 118
        %v2014 = vpop.permute.xlu0 %2013
        %vm2015 = vcmask 965632
        %v2016 = vsel %vm2015, %v2000, %v2002
        %v2017 = vsel %vm2015, %v2004, %v2006
        %v2018 = vsel %vm2015, %v2008, %v2010
        %v2019 = vsel %vm2015, %v2012, %v2014
        %vm2032 = vcmask 1048496
        %2033 = vst.msk [vmem:[#allocation3 + $0x38] sm:$0xff] %vm2032, %v2000
        %2034 = vst [vmem:[#allocation3 + $0x40] sm:$0xff] %v2016
        %2035 = vst.msk [vmem:[#allocation3 + $0x48] sm:$0xff] %vm598, %v2002
        %2036 = vst.msk [vmem:[#allocation3 + $0x98] sm:$0xff] %vm2032, %v2004
        %2037 = vst [vmem:[#allocation3 + $0xa0] sm:$0xff] %v2017
        %2038 = vst.msk [vmem:[#allocation3 + $0xa8] sm:$0xff] %vm598, %v2006
        %2039 = vst.msk [vmem:[#allocation3 + $0xf8] sm:$0xff] %vm2032, %v2008
        %2040 = vst [vmem:[#allocation3 + $0x100] sm:$0xff] %v2018
        %2041 = vst.msk [vmem:[#allocation3 + $0x108] sm:$0xff] %vm598, %v2010
        %vm2042 = vcmask 1043376
        %2043 = vst.msk [vmem:[#allocation3 + $0x158] sm:$0x7] %vm2042, %v2012
        %2044 = vst [vmem:[#allocation3 + $0x160] sm:$0x7] %v2019
        %vm2045 = vcmask 190464
        %2046 = vst.msk [vmem:[#allocation3 + $0x168] sm:$0x7] %vm2045, %v2014
        %2047 = vrot.lane.b32.xlu0 %v1987, 24
        %v2048 = vpop.permute.xlu0 %2047
        %2049 = vrot.lane.b32.xlu0 %v1990, 24
        %v2050 = vpop.permute.xlu0 %2049
        %2051 = vrot.lane.b32.xlu0 %v1992, 24
        %v2052 = vpop.permute.xlu0 %2051
        %2053 = vrot.lane.b32.xlu0 %v1994, 24
        %v2054 = vpop.permute.xlu0 %2053
        %2055 = vrot.lane.b32.xlu0 %v1996, 24
        %v2056 = vpop.permute.xlu0 %2055
        %2057 = vrot.lane.b32.xlu0 %v1998, 24
        %v2058 = vpop.permute.xlu0 %2057
        %2059 = vrot.lane.b32.xlu0 %v1995, 24
        %v2060 = vpop.permute.xlu0 %2059
        %2061 = vrot.lane.b32.xlu0 %v1997, 24
        %v2062 = vpop.permute.xlu0 %2061
        %v2063 = vsel %vm598, %v2048, %v2050
        %v2064 = vsel %vm598, %v2052, %v2054
        %v2065 = vsel %vm598, %v2056, %v2058
        %v2066 = vsel %vm598, %v2060, %v2062
        %vm2075 = vcmask 1047744
        %2076 = vst.msk [vmem:[#allocation3 + $0x48] sm:$0xff] %vm2075, %v2048
        %vm2077 = vcmask 523264
        %2078 = vst.msk [vmem:[#allocation3 + $0x50] sm:$0xff] %vm2077, %v2063
        %2079 = vst.msk [vmem:[#allocation3 + $0xa8] sm:$0xff] %vm2075, %v2052
        %2080 = vst.msk [vmem:[#allocation3 + $0xb0] sm:$0xff] %vm2077, %v2064
        %2081 = vst.msk [vmem:[#allocation3 + $0x108] sm:$0xff] %vm2075, %v2056
        %2082 = vst.msk [vmem:[#allocation3 + $0x110] sm:$0xff] %vm2077, %v2065
        %vm2083 = vcmask 1042624
        %2084 = vst.msk [vmem:[#allocation3 + $0x168] sm:$0x7] %vm2083, %v2060
        %vm2085 = vcmask 518144
        %2086 = vst.msk [vmem:[#allocation3 + $0x170] sm:$0x7] %vm2085, %v2066
        %2087 = vrot.lane.b32.xlu0 %v1987, 58
        %v2088 = vpop.permute.xlu0 %2087
        %2089 = vrot.lane.b32.xlu0 %v1990, 58
        %v2090 = vpop.permute.xlu0 %2089
        %2091 = vrot.lane.b32.xlu0 %v1992, 58
        %v2092 = vpop.permute.xlu0 %2091
        %2093 = vrot.lane.b32.xlu0 %v1994, 58
        %v2094 = vpop.permute.xlu0 %2093
        %2095 = vrot.lane.b32.xlu0 %v1996, 58
        %v2096 = vpop.permute.xlu0 %2095
        %2097 = vrot.lane.b32.xlu0 %v1998, 58
        %v2098 = vpop.permute.xlu0 %2097
        %2099 = vrot.lane.b32.xlu0 %v1995, 58
        %v2100 = vpop.permute.xlu0 %2099
        %2101 = vrot.lane.b32.xlu0 %v1997, 58
        %v2102 = vpop.permute.xlu0 %2101
        %vm2103 = vcmask 474112
        %v2104 = vsel %vm2103, %v2088, %v2090
        %v2105 = vsel %vm2103, %v2092, %v2094
        %v2106 = vsel %vm2103, %v2096, %v2098
        %v2107 = vsel %vm2103, %v2100, %v2102
        %vm2116 = vcmask 1048064
        %2117 = vst.msk [vmem:[#allocation3 + $0x50] sm:$0xff] %vm2116, %v2088
        %vm2118 = vcmask 801792
        %2119 = vst.msk [vmem:[#allocation3 + $0x58] sm:$0xff] %vm2118, %v2104
        %2120 = vst.msk [vmem:[#allocation3 + $0xb0] sm:$0xff] %vm2116, %v2092
        %2121 = vst.msk [vmem:[#allocation3 + $0xb8] sm:$0xff] %vm2118, %v2105
        %2122 = vst.msk [vmem:[#allocation3 + $0x110] sm:$0xff] %vm2116, %v2096
        %2123 = vst.msk [vmem:[#allocation3 + $0x118] sm:$0xff] %vm2118, %v2106
        %vm2124 = vcmask 1042944
        %2125 = vst.msk [vmem:[#allocation3 + $0x170] sm:$0x7] %vm2124, %v2100
        %vm2126 = vcmask 796672
        %2127 = vst.msk [vmem:[#allocation3 + $0x178] sm:$0x7] %vm2126, %v2107
        %v2128 = vld [vmem:[#allocation3] sm:$0xff]
        %v2129 = vld [vmem:[#allocation3 + $0x8] sm:$0xff]
        %v2130 = vld [vmem:[#allocation3 + $0x10] sm:$0xff]
        %v2131 = vld [vmem:[#allocation3 + $0x18] sm:$0xff]
        %v2132 = vld [vmem:[#allocation3 + $0x20] sm:$0xff]
        %v2133 = vld [vmem:[#allocation3 + $0x28] sm:$0xff]
        %v2134 = vld [vmem:[#allocation3 + $0x30] sm:$0xff]
        %v2135 = vld [vmem:[#allocation3 + $0x38] sm:$0xff]
        %v2136 = vld [vmem:[#allocation3 + $0x40] sm:$0xff]
        %v2137 = vld [vmem:[#allocation3 + $0x48] sm:$0xff]
        %v2138 = vld [vmem:[#allocation3 + $0x50] sm:$0xff]
        %v2139 = vld [vmem:[#allocation3 + $0x58] sm:$0xff]
        %v2140 = vld [vmem:[#allocation3 + $0x60] sm:$0xff]
        %v2141 = vld [vmem:[#allocation3 + $0x68] sm:$0xff]
        %v2142 = vld [vmem:[#allocation3 + $0x70] sm:$0xff]
        %v2143 = vld [vmem:[#allocation3 + $0x78] sm:$0xff]
        %v2144 = vld [vmem:[#allocation3 + $0x80] sm:$0xff]
        %v2145 = vld [vmem:[#allocation3 + $0x88] sm:$0xff]
        %v2146 = vld [vmem:[#allocation3 + $0x90] sm:$0xff]
        %v2147 = vld [vmem:[#allocation3 + $0x98] sm:$0xff]
        %v2148 = vld [vmem:[#allocation3 + $0xa0] sm:$0xff]
        %v2149 = vld [vmem:[#allocation3 + $0xa8] sm:$0xff]
        %v2150 = vld [vmem:[#allocation3 + $0xb0] sm:$0xff]
        %v2151 = vld [vmem:[#allocation3 + $0xb8] sm:$0xff]
        %v2152 = vld [vmem:[#allocation3 + $0xc0] sm:$0xff]
        %v2153 = vld [vmem:[#allocation3 + $0xc8] sm:$0xff]
        %v2154 = vld [vmem:[#allocation3 + $0xd0] sm:$0xff]
        %v2155 = vld [vmem:[#allocation3 + $0xd8] sm:$0xff]
        %v2156 = vld [vmem:[#allocation3 + $0xe0] sm:$0xff]
        %v2157 = vld [vmem:[#allocation3 + $0xe8] sm:$0xff]
        %v2158 = vld [vmem:[#allocation3 + $0xf0] sm:$0xff]
        %v2159 = vld [vmem:[#allocation3 + $0xf8] sm:$0xff]
        %v2160 = vld [vmem:[#allocation3 + $0x100] sm:$0xff]
        %v2161 = vld [vmem:[#allocation3 + $0x108] sm:$0xff]
        %v2162 = vld [vmem:[#allocation3 + $0x110] sm:$0xff]
        %v2163 = vld [vmem:[#allocation3 + $0x118] sm:$0xff]
        %v2164 = vld [vmem:[#allocation3 + $0x120] sm:$0xf]
        %v2165 = vld [vmem:[#allocation3 + $0x128] sm:$0xf]
        %v2166 = vld [vmem:[#allocation3 + $0x130] sm:$0xf]
        %v2167 = vld [vmem:[#allocation3 + $0x138] sm:$0xf]
        %v2168 = vld [vmem:[#allocation3 + $0x140] sm:$0xf]
        %v2169 = vld [vmem:[#allocation3 + $0x148] sm:$0xf]
        %v2170 = vld [vmem:[#allocation3 + $0x150] sm:$0xf]
        %v2171 = vld [vmem:[#allocation3 + $0x158] sm:$0xf]
        %v2172 = vld [vmem:[#allocation3 + $0x160] sm:$0xf]
        %v2173 = vld [vmem:[#allocation3 + $0x168] sm:$0xf]
        %v2174 = vld [vmem:[#allocation3 + $0x170] sm:$0xf]
        %v2175 = vld [vmem:[#allocation3 + $0x178] sm:$0xf]
        %v2176 = vpack.c.bf16 %v2140, %v2128
        %v2177 = vpack.c.bf16 %v2141, %v2129
        %v2178 = vpack.c.bf16 %v2142, %v2130
        %v2179 = vpack.c.bf16 %v2143, %v2131
        %v2180 = vpack.c.bf16 %v2144, %v2132
        %v2181 = vpack.c.bf16 %v2145, %v2133
        %v2182 = vpack.c.bf16 %v2146, %v2134
        %v2183 = vpack.c.bf16 %v2147, %v2135
        %v2184 = vpack.c.bf16 %v2148, %v2136
        %v2185 = vpack.c.bf16 %v2149, %v2137
        %v2186 = vpack.c.bf16 %v2150, %v2138
        %v2187 = vpack.c.bf16 %v2151, %v2139
        %v2188 = vpack.c.bf16 %v2164, %v2152
        %v2189 = vpack.c.bf16 %v2165, %v2153
        %v2190 = vpack.c.bf16 %v2166, %v2154
        %v2191 = vpack.c.bf16 %v2167, %v2155
        %v2192 = vpack.c.bf16 %v2168, %v2156
        %v2193 = vpack.c.bf16 %v2169, %v2157
        %v2194 = vpack.c.bf16 %v2170, %v2158
        %v2195 = vpack.c.bf16 %v2171, %v2159
        %v2196 = vpack.c.bf16 %v2172, %v2160
        %v2197 = vpack.c.bf16 %v2173, %v2161
        %v2198 = vpack.c.bf16 %v2174, %v2162
        %v2199 = vpack.c.bf16 %v2175, %v2163
        %v2200 = vld [vmem:[%s2] sm:$0xff]
        %v2201 = vld [vmem:[%s2 + $0x8] sm:$0xff]
        %v2202 = vld [vmem:[%s2 + $0x10] sm:$0xff]
        %v2203 = vld [vmem:[%s2 + $0x18] sm:$0xff]
        %v2204 = vld [vmem:[%s2 + $0x20] sm:$0xff]
        %v2205 = vld [vmem:[%s2 + $0x28] sm:$0xff]
        %v2206 = vld [vmem:[%s2 + $0x30] sm:$0xff]
        %v2207 = vld [vmem:[%s2 + $0x38] sm:$0xff]
        %v2208 = vld [vmem:[%s2 + $0x40] sm:$0xff]
        %v2209 = vld [vmem:[%s2 + $0x48] sm:$0xff]
        %v2210 = vld [vmem:[%s2 + $0x50] sm:$0xff]
        %v2211 = vld [vmem:[%s2 + $0x58] sm:$0xff]
        %v2212 = vld [vmem:[%s2 + $0x60] sm:$0xff]
        %v2213 = vld [vmem:[%s2 + $0x68] sm:$0xff]
        %v2214 = vld [vmem:[%s2 + $0x70] sm:$0xff]
        %v2215 = vld [vmem:[%s2 + $0x78] sm:$0xff]
        %v2216 = vld [vmem:[%s2 + $0x80] sm:$0xff]
        %v2217 = vld [vmem:[%s2 + $0x88] sm:$0xff]
        %v2218 = vld [vmem:[%s2 + $0x90] sm:$0xff]
        %v2219 = vld [vmem:[%s2 + $0x98] sm:$0xff]
        %v2220 = vld [vmem:[%s2 + $0xa0] sm:$0xff]
        %v2221 = vld [vmem:[%s2 + $0xa8] sm:$0xff]
        %v2222 = vld [vmem:[%s2 + $0xb0] sm:$0xff]
        %v2223 = vld [vmem:[%s2 + $0xb8] sm:$0xff]
        %v2224 = vld [vmem:[%s2 + $0xc0] sm:$0xff]
        %v2225 = vld [vmem:[%s2 + $0xc8] sm:$0xff]
        %v2226 = vld [vmem:[%s2 + $0xd0] sm:$0xff]
        %v2227 = vld [vmem:[%s2 + $0xd8] sm:$0xff]
        %v2228 = vld [vmem:[%s2 + $0xe0] sm:$0xff]
        %v2229 = vld [vmem:[%s2 + $0xe8] sm:$0xff]
        %v2230 = vld [vmem:[%s2 + $0xf0] sm:$0xff]
        %v2231 = vld [vmem:[%s2 + $0xf8] sm:$0xff]
        %v2232 = vld [vmem:[%s2 + $0x100] sm:$0xff]
        %v2233 = vld [vmem:[%s2 + $0x108] sm:$0xff]
        %v2234 = vld [vmem:[%s2 + $0x110] sm:$0xff]
        %v2235 = vld [vmem:[%s2 + $0x118] sm:$0xff]
        %v2236 = vld [vmem:[%s2 + $0x120] sm:$0xff]
        %v2237 = vld [vmem:[%s2 + $0x128] sm:$0xff]
        %v2238 = vld [vmem:[%s2 + $0x130] sm:$0xff]
        %v2239 = vld [vmem:[%s2 + $0x138] sm:$0xff]
        %v2240 = vld [vmem:[%s2 + $0x140] sm:$0xff]
        %v2241 = vld [vmem:[%s2 + $0x148] sm:$0xff]
        %v2242 = vld [vmem:[%s2 + $0x150] sm:$0xff]
        %v2243 = vld [vmem:[%s2 + $0x158] sm:$0xff]
        %v2244 = vld [vmem:[%s2 + $0x160] sm:$0xff]
        %v2245 = vld [vmem:[%s2 + $0x168] sm:$0xff]
        %v2246 = vld [vmem:[%s2 + $0x170] sm:$0xff]
        %v2247 = vld [vmem:[%s2 + $0x178] sm:$0xff]
        %v2248 = vld [vmem:[%s2 + $0x180] sm:$0xff]
        %v2249 = vld [vmem:[%s2 + $0x188] sm:$0xff]
        %v2250 = vld [vmem:[%s2 + $0x190] sm:$0xff]
        %v2251 = vld [vmem:[%s2 + $0x198] sm:$0xff]
        %v2252 = vld [vmem:[%s2 + $0x1a0] sm:$0xff]
        %v2253 = vld [vmem:[%s2 + $0x1a8] sm:$0xff]
        %v2254 = vld [vmem:[%s2 + $0x1b0] sm:$0xff]
        %v2255 = vld [vmem:[%s2 + $0x1b8] sm:$0xff]
        %v2256 = vld [vmem:[%s2 + $0x1c0] sm:$0xff]
        %v2257 = vld [vmem:[%s2 + $0x1c8] sm:$0xff]
        %v2258 = vld [vmem:[%s2 + $0x1d0] sm:$0xff]
        %v2259 = vld [vmem:[%s2 + $0x1d8] sm:$0xff]
        %v2260 = vld [vmem:[%s2 + $0x1e0] sm:$0xff]
        %v2261 = vld [vmem:[%s2 + $0x1e8] sm:$0xff]
        %v2262 = vld [vmem:[%s2 + $0x1f0] sm:$0xff]
        %v2263 = vld [vmem:[%s2 + $0x1f8] sm:$0xff]
        %v2264 = vld [vmem:[%s2 + $0x200] sm:$0xff]
        %v2265 = vld [vmem:[%s2 + $0x208] sm:$0xff]
        %v2266 = vld [vmem:[%s2 + $0x210] sm:$0xff]
        %v2267 = vld [vmem:[%s2 + $0x218] sm:$0xff]
        %v2268 = vld [vmem:[%s2 + $0x220] sm:$0xff]
        %v2269 = vld [vmem:[%s2 + $0x228] sm:$0xff]
        %v2270 = vld [vmem:[%s2 + $0x230] sm:$0xff]
        %v2271 = vld [vmem:[%s2 + $0x238] sm:$0xff]
        %v2272 = vld [vmem:[%s2 + $0x240] sm:$0xff]
        %v2273 = vld [vmem:[%s2 + $0x248] sm:$0xff]
        %v2274 = vld [vmem:[%s2 + $0x250] sm:$0xff]
        %v2275 = vld [vmem:[%s2 + $0x258] sm:$0xff]
        %v2276 = vld [vmem:[%s2 + $0x260] sm:$0xff]
        %v2277 = vld [vmem:[%s2 + $0x268] sm:$0xff]
        %v2278 = vld [vmem:[%s2 + $0x270] sm:$0xff]
        %v2279 = vld [vmem:[%s2 + $0x278] sm:$0xff]
        %v2280 = vld [vmem:[%s2 + $0x280] sm:$0xff]
        %v2281 = vld [vmem:[%s2 + $0x288] sm:$0xff]
        %v2282 = vld [vmem:[%s2 + $0x290] sm:$0xff]
        %v2283 = vld [vmem:[%s2 + $0x298] sm:$0xff]
        %v2284 = vld [vmem:[%s2 + $0x2a0] sm:$0xff]
        %v2285 = vld [vmem:[%s2 + $0x2a8] sm:$0xff]
        %v2286 = vld [vmem:[%s2 + $0x2b0] sm:$0xff]
        %v2287 = vld [vmem:[%s2 + $0x2b8] sm:$0xff]
        %v2288 = vld [vmem:[%s2 + $0x2c0] sm:$0xff]
        %v2289 = vld [vmem:[%s2 + $0x2c8] sm:$0xff]
        %v2290 = vld [vmem:[%s2 + $0x2d0] sm:$0xff]
        %v2291 = vld [vmem:[%s2 + $0x2d8] sm:$0xff]
        %v2292 = vld [vmem:[%s2 + $0x2e0] sm:$0xff]
        %v2293 = vld [vmem:[%s2 + $0x2e8] sm:$0xff]
        %v2294 = vld [vmem:[%s2 + $0x2f0] sm:$0xff]
        %v2295 = vld [vmem:[%s2 + $0x2f8] sm:$0xff]
        %v2296 = vld [vmem:[%s2 + $0x300] sm:$0xff]
        %v2297 = vld [vmem:[%s2 + $0x308] sm:$0xff]
        %v2298 = vld [vmem:[%s2 + $0x310] sm:$0xff]
        %v2299 = vld [vmem:[%s2 + $0x318] sm:$0xff]
        %v2300 = vld [vmem:[%s2 + $0x320] sm:$0xff]
        %v2301 = vld [vmem:[%s2 + $0x328] sm:$0xff]
        %v2302 = vld [vmem:[%s2 + $0x330] sm:$0xff]
        %v2303 = vld [vmem:[%s2 + $0x338] sm:$0xff]
        %v2304 = vld [vmem:[%s2 + $0x340] sm:$0xff]
        %v2305 = vld [vmem:[%s2 + $0x348] sm:$0xff]
        %v2306 = vld [vmem:[%s2 + $0x350] sm:$0xff]
        %v2307 = vld [vmem:[%s2 + $0x358] sm:$0xff]
        %v2308 = vld [vmem:[%s2 + $0x360] sm:$0xff]
        %v2309 = vld [vmem:[%s2 + $0x368] sm:$0xff]
        %v2310 = vld [vmem:[%s2 + $0x370] sm:$0xff]
        %v2311 = vld [vmem:[%s2 + $0x378] sm:$0xff]
        %v2312 = vld [vmem:[%s2 + $0x380] sm:$0xff]
        %v2313 = vld [vmem:[%s2 + $0x388] sm:$0xff]
        %v2314 = vld [vmem:[%s2 + $0x390] sm:$0xff]
        %v2315 = vld [vmem:[%s2 + $0x398] sm:$0xff]
        %v2316 = vld [vmem:[%s2 + $0x3a0] sm:$0xff]
        %v2317 = vld [vmem:[%s2 + $0x3a8] sm:$0xff]
        %v2318 = vld [vmem:[%s2 + $0x3b0] sm:$0xff]
        %v2319 = vld [vmem:[%s2 + $0x3b8] sm:$0xff]
        %v2320 = vld [vmem:[%s2 + $0x3c0] sm:$0xff]
        %v2321 = vld [vmem:[%s2 + $0x3c8] sm:$0xff]
        %v2322 = vld [vmem:[%s2 + $0x3d0] sm:$0xff]
        %v2323 = vld [vmem:[%s2 + $0x3d8] sm:$0xff]
        %v2324 = vld [vmem:[%s2 + $0x3e0] sm:$0xff]
        %v2325 = vld [vmem:[%s2 + $0x3e8] sm:$0xff]
        %v2326 = vld [vmem:[%s2 + $0x3f0] sm:$0xff]
        %v2327 = vld [vmem:[%s2 + $0x3f8] sm:$0xff]
        %v2328 = vld [vmem:[%s2 + $0x400] sm:$0xff]
        %v2329 = vld [vmem:[%s2 + $0x408] sm:$0xff]
        %v2330 = vld [vmem:[%s2 + $0x410] sm:$0xff]
        %v2331 = vld [vmem:[%s2 + $0x418] sm:$0xff]
        %v2332 = vld [vmem:[%s2 + $0x420] sm:$0xff]
        %v2333 = vld [vmem:[%s2 + $0x428] sm:$0xff]
        %v2334 = vld [vmem:[%s2 + $0x430] sm:$0xff]
        %v2335 = vld [vmem:[%s2 + $0x438] sm:$0xff]
        %v2336 = vld [vmem:[%s2 + $0x440] sm:$0xff]
        %v2337 = vld [vmem:[%s2 + $0x448] sm:$0xff]
        %v2338 = vld [vmem:[%s2 + $0x450] sm:$0xff]
        %v2339 = vld [vmem:[%s2 + $0x458] sm:$0xff]
        %v2340 = vld [vmem:[%s2 + $0x460] sm:$0xff]
        %v2341 = vld [vmem:[%s2 + $0x468] sm:$0xff]
        %v2342 = vld [vmem:[%s2 + $0x470] sm:$0xff]
        %v2343 = vld [vmem:[%s2 + $0x478] sm:$0xff]
        %v2344 = vld [vmem:[%s2 + $0x480] sm:$0xff]
        %v2345 = vld [vmem:[%s2 + $0x488] sm:$0xff]
        %v2346 = vld [vmem:[%s2 + $0x490] sm:$0xff]
        %v2347 = vld [vmem:[%s2 + $0x498] sm:$0xff]
        %v2348 = vld [vmem:[%s2 + $0x4a0] sm:$0xff]
        %v2349 = vld [vmem:[%s2 + $0x4a8] sm:$0xff]
        %v2350 = vld [vmem:[%s2 + $0x4b0] sm:$0xff]
        %v2351 = vld [vmem:[%s2 + $0x4b8] sm:$0xff]
        %v2352 = vld [vmem:[%s2 + $0x4c0] sm:$0xff]
        %v2353 = vld [vmem:[%s2 + $0x4c8] sm:$0xff]
        %v2354 = vld [vmem:[%s2 + $0x4d0] sm:$0xff]
        %v2355 = vld [vmem:[%s2 + $0x4d8] sm:$0xff]
        %v2356 = vld [vmem:[%s2 + $0x4e0] sm:$0xff]
        %v2357 = vld [vmem:[%s2 + $0x4e8] sm:$0xff]
        %v2358 = vld [vmem:[%s2 + $0x4f0] sm:$0xff]
        %v2359 = vld [vmem:[%s2 + $0x4f8] sm:$0xff]
        %v2360 = vld [vmem:[%s2 + $0x500] sm:$0xff]
        %v2361 = vld [vmem:[%s2 + $0x508] sm:$0xff]
        %v2362 = vld [vmem:[%s2 + $0x510] sm:$0xff]
        %v2363 = vld [vmem:[%s2 + $0x518] sm:$0xff]
        %v2364 = vld [vmem:[%s2 + $0x520] sm:$0xff]
        %v2365 = vld [vmem:[%s2 + $0x528] sm:$0xff]
        %v2366 = vld [vmem:[%s2 + $0x530] sm:$0xff]
        %v2367 = vld [vmem:[%s2 + $0x538] sm:$0xff]
        %v2368 = vld [vmem:[%s2 + $0x540] sm:$0xff]
        %v2369 = vld [vmem:[%s2 + $0x548] sm:$0xff]
        %v2370 = vld [vmem:[%s2 + $0x550] sm:$0xff]
        %v2371 = vld [vmem:[%s2 + $0x558] sm:$0xff]
        %v2372 = vld [vmem:[%s2 + $0x560] sm:$0xff]
        %v2373 = vld [vmem:[%s2 + $0x568] sm:$0xff]
        %v2374 = vld [vmem:[%s2 + $0x570] sm:$0xff]
        %v2375 = vld [vmem:[%s2 + $0x578] sm:$0xff]
        %v2376 = vld [vmem:[%s2 + $0x580] sm:$0xff]
        %v2377 = vld [vmem:[%s2 + $0x588] sm:$0xff]
        %v2378 = vld [vmem:[%s2 + $0x590] sm:$0xff]
        %v2379 = vld [vmem:[%s2 + $0x598] sm:$0xff]
        %v2380 = vld [vmem:[%s2 + $0x5a0] sm:$0xff]
        %v2381 = vld [vmem:[%s2 + $0x5a8] sm:$0xff]
        %v2382 = vld [vmem:[%s2 + $0x5b0] sm:$0xff]
        %v2383 = vld [vmem:[%s2 + $0x5b8] sm:$0xff]
        %v2384 = vld [vmem:[%s2 + $0x5c0] sm:$0xff]
        %v2385 = vld [vmem:[%s2 + $0x5c8] sm:$0xff]
        %v2386 = vld [vmem:[%s2 + $0x5d0] sm:$0xff]
        %v2387 = vld [vmem:[%s2 + $0x5d8] sm:$0xff]
        %v2388 = vld [vmem:[%s2 + $0x5e0] sm:$0xff]
        %v2578 = vunpack.c.l.b16 %v2200
        %v2579 = vunpack.c.h.b16 %v2200
        %v2580 = vunpack.c.l.b16 %v2201
        %v2581 = vunpack.c.h.b16 %v2201
        %v2582 = vunpack.c.l.b16 %v2202
        %v2583 = vunpack.c.h.b16 %v2202
        %v2584 = vunpack.c.l.b16 %v2203
        %v2585 = vunpack.c.h.b16 %v2203
        %v2586 = vunpack.c.l.b16 %v2204
        %v2587 = vunpack.c.h.b16 %v2204
        %v2588 = vunpack.c.l.b16 %v2205
        %v2589 = vunpack.c.h.b16 %v2205
        %v2590 = vunpack.c.l.b16 %v2206
        %v2591 = vunpack.c.h.b16 %v2206
        %v2592 = vunpack.c.l.b16 %v2207
        %v2593 = vunpack.c.h.b16 %v2207
        %v2594 = vunpack.c.l.b16 %v2208
        %v2595 = vunpack.c.h.b16 %v2208
        %v2596 = vunpack.c.l.b16 %v2209
        %v2597 = vunpack.c.h.b16 %v2209
        %v2598 = vunpack.c.l.b16 %v2210
        %v2599 = vunpack.c.h.b16 %v2210
        %v2600 = vunpack.c.l.b16 %v2211
        %v2601 = vunpack.c.h.b16 %v2211
        %v2602 = vunpack.c.l.b16 %v2212
        %v2603 = vunpack.c.h.b16 %v2212
        %v2604 = vunpack.c.l.b16 %v2213
        %v2605 = vunpack.c.h.b16 %v2213
        %v2606 = vunpack.c.l.b16 %v2214
        %v2607 = vunpack.c.h.b16 %v2214
        %v2608 = vunpack.c.l.b16 %v2215
        %v2609 = vunpack.c.h.b16 %v2215
        %v2610 = vunpack.c.l.b16 %v2216
        %v2611 = vunpack.c.h.b16 %v2216
        %v2612 = vunpack.c.l.b16 %v2217
        %v2613 = vunpack.c.h.b16 %v2217
        %v2614 = vunpack.c.l.b16 %v2218
        %v2615 = vunpack.c.h.b16 %v2218
        %v2616 = vunpack.c.l.b16 %v2219
        %v2617 = vunpack.c.h.b16 %v2219
        %v2618 = vunpack.c.l.b16 %v2220
        %v2619 = vunpack.c.h.b16 %v2220
        %v2620 = vunpack.c.l.b16 %v2221
        %v2621 = vunpack.c.h.b16 %v2221
        %v2622 = vunpack.c.l.b16 %v2222
        %v2623 = vunpack.c.h.b16 %v2222
        %v2624 = vunpack.c.l.b16 %v2223
        %v2625 = vunpack.c.h.b16 %v2223
        %v2626 = vunpack.c.l.b16 %v2224
        %v2627 = vunpack.c.h.b16 %v2224
        %v2628 = vunpack.c.l.b16 %v2225
        %v2629 = vunpack.c.h.b16 %v2225
        %v2630 = vunpack.c.l.b16 %v2226
        %v2631 = vunpack.c.h.b16 %v2226
        %v2632 = vunpack.c.l.b16 %v2227
        %v2633 = vunpack.c.h.b16 %v2227
        %v2634 = vunpack.c.l.b16 %v2228
        %v2635 = vunpack.c.h.b16 %v2228
        %v2636 = vunpack.c.l.b16 %v2229
        %v2637 = vunpack.c.h.b16 %v2229
        %v2638 = vunpack.c.l.b16 %v2230
        %v2639 = vunpack.c.h.b16 %v2230
        %v2640 = vunpack.c.l.b16 %v2231
        %v2641 = vunpack.c.h.b16 %v2231
        %v2642 = vunpack.c.l.b16 %v2232
        %v2643 = vunpack.c.h.b16 %v2232
        %v2644 = vunpack.c.l.b16 %v2233
        %v2645 = vunpack.c.h.b16 %v2233
        %v2646 = vunpack.c.l.b16 %v2234
        %v2647 = vunpack.c.h.b16 %v2234
        %v2648 = vunpack.c.l.b16 %v2235
        %v2649 = vunpack.c.h.b16 %v2235
        %v2650 = vunpack.c.l.b16 %v2236
        %v2651 = vunpack.c.h.b16 %v2236
        %v2652 = vunpack.c.l.b16 %v2237
        %v2653 = vunpack.c.h.b16 %v2237
        %v2654 = vunpack.c.l.b16 %v2238
        %v2655 = vunpack.c.h.b16 %v2238
        %v2656 = vunpack.c.l.b16 %v2239
        %v2657 = vunpack.c.h.b16 %v2239
        %v2658 = vunpack.c.l.b16 %v2240
        %v2659 = vunpack.c.h.b16 %v2240
        %v2660 = vunpack.c.l.b16 %v2241
        %v2661 = vunpack.c.h.b16 %v2241
        %v2662 = vunpack.c.l.b16 %v2242
        %v2663 = vunpack.c.h.b16 %v2242
        %v2664 = vunpack.c.l.b16 %v2243
        %v2665 = vunpack.c.h.b16 %v2243
        %v2666 = vunpack.c.l.b16 %v2244
        %v2667 = vunpack.c.h.b16 %v2244
        %v2668 = vunpack.c.l.b16 %v2245
        %v2669 = vunpack.c.h.b16 %v2245
        %v2670 = vunpack.c.l.b16 %v2246
        %v2671 = vunpack.c.h.b16 %v2246
        %v2672 = vunpack.c.l.b16 %v2247
        %v2673 = vunpack.c.h.b16 %v2247
        %v2674 = vunpack.c.l.b16 %v2248
        %v2675 = vunpack.c.h.b16 %v2248
        %v2676 = vunpack.c.l.b16 %v2249
        %v2677 = vunpack.c.h.b16 %v2249
        %v2678 = vunpack.c.l.b16 %v2250
        %v2679 = vunpack.c.h.b16 %v2250
        %v2680 = vunpack.c.l.b16 %v2251
        %v2681 = vunpack.c.h.b16 %v2251
        %v2682 = vunpack.c.l.b16 %v2252
        %v2683 = vunpack.c.h.b16 %v2252
        %v2684 = vunpack.c.l.b16 %v2253
        %v2685 = vunpack.c.h.b16 %v2253
        %v2686 = vunpack.c.l.b16 %v2254
        %v2687 = vunpack.c.h.b16 %v2254
        %v2688 = vunpack.c.l.b16 %v2255
        %v2689 = vunpack.c.h.b16 %v2255
        %v2690 = vunpack.c.l.b16 %v2256
        %v2691 = vunpack.c.h.b16 %v2256
        %v2692 = vunpack.c.l.b16 %v2257
        %v2693 = vunpack.c.h.b16 %v2257
        %v2694 = vunpack.c.l.b16 %v2258
        %v2695 = vunpack.c.h.b16 %v2258
        %v2696 = vunpack.c.l.b16 %v2259
        %v2697 = vunpack.c.h.b16 %v2259
        %v2698 = vunpack.c.l.b16 %v2260
        %v2699 = vunpack.c.h.b16 %v2260
        %v2700 = vunpack.c.l.b16 %v2261
        %v2701 = vunpack.c.h.b16 %v2261
        %v2702 = vunpack.c.l.b16 %v2262
        %v2703 = vunpack.c.h.b16 %v2262
        %v2704 = vunpack.c.l.b16 %v2263
        %v2705 = vunpack.c.h.b16 %v2263
        %v2706 = vunpack.c.l.b16 %v2264
        %v2707 = vunpack.c.h.b16 %v2264
        %v2708 = vunpack.c.l.b16 %v2265
        %v2709 = vunpack.c.h.b16 %v2265
        %v2710 = vunpack.c.l.b16 %v2266
        %v2711 = vunpack.c.h.b16 %v2266
        %v2712 = vunpack.c.l.b16 %v2267
        %v2713 = vunpack.c.h.b16 %v2267
        %v2714 = vunpack.c.l.b16 %v2268
        %v2715 = vunpack.c.h.b16 %v2268
        %v2716 = vunpack.c.l.b16 %v2269
        %v2717 = vunpack.c.h.b16 %v2269
        %v2718 = vunpack.c.l.b16 %v2270
        %v2719 = vunpack.c.h.b16 %v2270
        %v2720 = vunpack.c.l.b16 %v2271
        %v2721 = vunpack.c.h.b16 %v2271
        %v2722 = vunpack.c.l.b16 %v2272
        %v2723 = vunpack.c.h.b16 %v2272
        %v2724 = vunpack.c.l.b16 %v2273
        %v2725 = vunpack.c.h.b16 %v2273
        %v2726 = vunpack.c.l.b16 %v2274
        %v2727 = vunpack.c.h.b16 %v2274
        %v2728 = vunpack.c.l.b16 %v2275
        %v2729 = vunpack.c.h.b16 %v2275
        %v2730 = vunpack.c.l.b16 %v2276
        %v2731 = vunpack.c.h.b16 %v2276
        %v2732 = vunpack.c.l.b16 %v2277
        %v2733 = vunpack.c.h.b16 %v2277
        %v2734 = vunpack.c.l.b16 %v2278
        %v2735 = vunpack.c.h.b16 %v2278
        %v2736 = vunpack.c.l.b16 %v2279
        %v2737 = vunpack.c.h.b16 %v2279
        %v2738 = vunpack.c.l.b16 %v2280
        %v2739 = vunpack.c.h.b16 %v2280
        %v2740 = vunpack.c.l.b16 %v2281
        %v2741 = vunpack.c.h.b16 %v2281
        %v2742 = vunpack.c.l.b16 %v2282
        %v2743 = vunpack.c.h.b16 %v2282
        %v2744 = vunpack.c.l.b16 %v2283
        %v2745 = vunpack.c.h.b16 %v2283
        %v2746 = vunpack.c.l.b16 %v2284
        %v2747 = vunpack.c.h.b16 %v2284
        %v2748 = vunpack.c.l.b16 %v2285
        %v2749 = vunpack.c.h.b16 %v2285
        %v2750 = vunpack.c.l.b16 %v2286
        %v2751 = vunpack.c.h.b16 %v2286
        %v2752 = vunpack.c.l.b16 %v2287
        %v2753 = vunpack.c.h.b16 %v2287
        %v2754 = vunpack.c.l.b16 %v2288
        %v2755 = vunpack.c.h.b16 %v2288
        %v2756 = vunpack.c.l.b16 %v2289
        %v2757 = vunpack.c.h.b16 %v2289
        %v2758 = vunpack.c.l.b16 %v2290
        %v2759 = vunpack.c.h.b16 %v2290
        %v2760 = vunpack.c.l.b16 %v2291
        %v2761 = vunpack.c.h.b16 %v2291
        %v2762 = vunpack.c.l.b16 %v2292
        %v2763 = vunpack.c.h.b16 %v2292
        %v2764 = vunpack.c.l.b16 %v2293
        %v2765 = vunpack.c.h.b16 %v2293
        %v2766 = vunpack.c.l.b16 %v2294
        %v2767 = vunpack.c.h.b16 %v2294
        %v2768 = vunpack.c.l.b16 %v2295
        %v2769 = vunpack.c.h.b16 %v2295
        %v2770 = vunpack.c.l.b16 %v2296
        %v2771 = vunpack.c.h.b16 %v2296
        %v2772 = vunpack.c.l.b16 %v2297
        %v2773 = vunpack.c.h.b16 %v2297
        %v2774 = vunpack.c.l.b16 %v2298
        %v2775 = vunpack.c.h.b16 %v2298
        %v2776 = vunpack.c.l.b16 %v2299
        %v2777 = vunpack.c.h.b16 %v2299
        %v2778 = vunpack.c.l.b16 %v2300
        %v2779 = vunpack.c.h.b16 %v2300
        %v2780 = vunpack.c.l.b16 %v2301
        %v2781 = vunpack.c.h.b16 %v2301
        %v2782 = vunpack.c.l.b16 %v2302
        %v2783 = vunpack.c.h.b16 %v2302
        %v2784 = vunpack.c.l.b16 %v2303
        %v2785 = vunpack.c.h.b16 %v2303
        %v2786 = vunpack.c.l.b16 %v2304
        %v2787 = vunpack.c.h.b16 %v2304
        %v2788 = vunpack.c.l.b16 %v2305
        %v2789 = vunpack.c.h.b16 %v2305
        %v2790 = vunpack.c.l.b16 %v2306
        %v2791 = vunpack.c.h.b16 %v2306
        %v2792 = vunpack.c.l.b16 %v2307
        %v2793 = vunpack.c.h.b16 %v2307
        %v2794 = vunpack.c.l.b16 %v2308
        %v2795 = vunpack.c.h.b16 %v2308
        %v2796 = vunpack.c.l.b16 %v2309
        %v2797 = vunpack.c.h.b16 %v2309
        %v2798 = vunpack.c.l.b16 %v2310
        %v2799 = vunpack.c.h.b16 %v2310
        %v2800 = vunpack.c.l.b16 %v2311
        %v2801 = vunpack.c.h.b16 %v2311
        %v2802 = vunpack.c.l.b16 %v2312
        %v2803 = vunpack.c.h.b16 %v2312
        %v2804 = vunpack.c.l.b16 %v2313
        %v2805 = vunpack.c.h.b16 %v2313
        %v2806 = vunpack.c.l.b16 %v2314
        %v2807 = vunpack.c.h.b16 %v2314
        %v2808 = vunpack.c.l.b16 %v2315
        %v2809 = vunpack.c.h.b16 %v2315
        %v2810 = vunpack.c.l.b16 %v2316
        %v2811 = vunpack.c.h.b16 %v2316
        %v2812 = vunpack.c.l.b16 %v2317
        %v2813 = vunpack.c.h.b16 %v2317
        %v2814 = vunpack.c.l.b16 %v2318
        %v2815 = vunpack.c.h.b16 %v2318
        %v2816 = vunpack.c.l.b16 %v2319
        %v2817 = vunpack.c.h.b16 %v2319
        %v2818 = vunpack.c.l.b16 %v2320
        %v2819 = vunpack.c.h.b16 %v2320
        %v2820 = vunpack.c.l.b16 %v2321
        %v2821 = vunpack.c.h.b16 %v2321
        %v2822 = vunpack.c.l.b16 %v2322
        %v2823 = vunpack.c.h.b16 %v2322
        %v2824 = vunpack.c.l.b16 %v2323
        %v2825 = vunpack.c.h.b16 %v2323
        %v2826 = vunpack.c.l.b16 %v2324
        %v2827 = vunpack.c.h.b16 %v2324
        %v2828 = vunpack.c.l.b16 %v2325
        %v2829 = vunpack.c.h.b16 %v2325
        %v2830 = vunpack.c.l.b16 %v2326
        %v2831 = vunpack.c.h.b16 %v2326
        %v2832 = vunpack.c.l.b16 %v2327
        %v2833 = vunpack.c.h.b16 %v2327
        %v2834 = vunpack.c.l.b16 %v2328
        %v2835 = vunpack.c.h.b16 %v2328
        %v2836 = vunpack.c.l.b16 %v2329
        %v2837 = vunpack.c.h.b16 %v2329
        %v2838 = vunpack.c.l.b16 %v2330
        %v2839 = vunpack.c.h.b16 %v2330
        %v2840 = vunpack.c.l.b16 %v2331
        %v2841 = vunpack.c.h.b16 %v2331
        %v2842 = vunpack.c.l.b16 %v2332
        %v2843 = vunpack.c.h.b16 %v2332
        %v2844 = vunpack.c.l.b16 %v2333
        %v2845 = vunpack.c.h.b16 %v2333
        %v2846 = vunpack.c.l.b16 %v2334
        %v2847 = vunpack.c.h.b16 %v2334
        %v2848 = vunpack.c.l.b16 %v2335
        %v2849 = vunpack.c.h.b16 %v2335
        %v2850 = vunpack.c.l.b16 %v2336
        %v2851 = vunpack.c.h.b16 %v2336
        %v2852 = vunpack.c.l.b16 %v2337
        %v2853 = vunpack.c.h.b16 %v2337
        %v2854 = vunpack.c.l.b16 %v2338
        %v2855 = vunpack.c.h.b16 %v2338
        %v2856 = vunpack.c.l.b16 %v2339
        %v2857 = vunpack.c.h.b16 %v2339
        %v2858 = vunpack.c.l.b16 %v2340
        %v2859 = vunpack.c.h.b16 %v2340
        %v2860 = vunpack.c.l.b16 %v2341
        %v2861 = vunpack.c.h.b16 %v2341
        %v2862 = vunpack.c.l.b16 %v2342
        %v2863 = vunpack.c.h.b16 %v2342
        %v2864 = vunpack.c.l.b16 %v2343
        %v2865 = vunpack.c.h.b16 %v2343
        %v2866 = vunpack.c.l.b16 %v2344
        %v2867 = vunpack.c.h.b16 %v2344
        %v2868 = vunpack.c.l.b16 %v2345
        %v2869 = vunpack.c.h.b16 %v2345
        %v2870 = vunpack.c.l.b16 %v2346
        %v2871 = vunpack.c.h.b16 %v2346
        %v2872 = vunpack.c.l.b16 %v2347
        %v2873 = vunpack.c.h.b16 %v2347
        %v2874 = vunpack.c.l.b16 %v2348
        %v2875 = vunpack.c.h.b16 %v2348
        %v2876 = vunpack.c.l.b16 %v2349
        %v2877 = vunpack.c.h.b16 %v2349
        %v2878 = vunpack.c.l.b16 %v2350
        %v2879 = vunpack.c.h.b16 %v2350
        %v2880 = vunpack.c.l.b16 %v2351
        %v2881 = vunpack.c.h.b16 %v2351
        %v2882 = vunpack.c.l.b16 %v2352
        %v2883 = vunpack.c.h.b16 %v2352
        %v2884 = vunpack.c.l.b16 %v2353
        %v2885 = vunpack.c.h.b16 %v2353
        %v2886 = vunpack.c.l.b16 %v2354
        %v2887 = vunpack.c.h.b16 %v2354
        %v2888 = vunpack.c.l.b16 %v2355
        %v2889 = vunpack.c.h.b16 %v2355
        %v2890 = vunpack.c.l.b16 %v2356
        %v2891 = vunpack.c.h.b16 %v2356
        %v2892 = vunpack.c.l.b16 %v2357
        %v2893 = vunpack.c.h.b16 %v2357
        %v2894 = vunpack.c.l.b16 %v2358
        %v2895 = vunpack.c.h.b16 %v2358
        %v2896 = vunpack.c.l.b16 %v2359
        %v2897 = vunpack.c.h.b16 %v2359
        %v2898 = vunpack.c.l.b16 %v2360
        %v2899 = vunpack.c.h.b16 %v2360
        %v2900 = vunpack.c.l.b16 %v2361
        %v2901 = vunpack.c.h.b16 %v2361
        %v2902 = vunpack.c.l.b16 %v2362
        %v2903 = vunpack.c.h.b16 %v2362
        %v2904 = vunpack.c.l.b16 %v2363
        %v2905 = vunpack.c.h.b16 %v2363
        %v2906 = vunpack.c.l.b16 %v2364
        %v2907 = vunpack.c.h.b16 %v2364
        %v2908 = vunpack.c.l.b16 %v2365
        %v2909 = vunpack.c.h.b16 %v2365
        %v2910 = vunpack.c.l.b16 %v2366
        %v2911 = vunpack.c.h.b16 %v2366
        %v2912 = vunpack.c.l.b16 %v2367
        %v2913 = vunpack.c.h.b16 %v2367
        %v2914 = vunpack.c.l.b16 %v2368
        %v2915 = vunpack.c.h.b16 %v2368
        %v2916 = vunpack.c.l.b16 %v2369
        %v2917 = vunpack.c.h.b16 %v2369
        %v2918 = vunpack.c.l.b16 %v2370
        %v2919 = vunpack.c.h.b16 %v2370
        %v2920 = vunpack.c.l.b16 %v2371
        %v2921 = vunpack.c.h.b16 %v2371
        %v2922 = vunpack.c.l.b16 %v2372
        %v2923 = vunpack.c.h.b16 %v2372
        %v2924 = vunpack.c.l.b16 %v2373
        %v2925 = vunpack.c.h.b16 %v2373
        %v2926 = vunpack.c.l.b16 %v2374
        %v2927 = vunpack.c.h.b16 %v2374
        %v2928 = vunpack.c.l.b16 %v2375
        %v2929 = vunpack.c.h.b16 %v2375
        %v2930 = vunpack.c.l.b16 %v2376
        %v2931 = vunpack.c.h.b16 %v2376
        %v2932 = vunpack.c.l.b16 %v2377
        %v2933 = vunpack.c.h.b16 %v2377
        %v2934 = vunpack.c.l.b16 %v2378
        %v2935 = vunpack.c.h.b16 %v2378
        %v2936 = vunpack.c.l.b16 %v2379
        %v2937 = vunpack.c.h.b16 %v2379
        %v2938 = vunpack.c.l.b16 %v2380
        %v2939 = vunpack.c.h.b16 %v2380
        %v2940 = vunpack.c.l.b16 %v2381
        %v2941 = vunpack.c.h.b16 %v2381
        %v2942 = vunpack.c.l.b16 %v2382
        %v2943 = vunpack.c.h.b16 %v2382
        %v2944 = vunpack.c.l.b16 %v2383
        %v2945 = vunpack.c.h.b16 %v2383
        %v2946 = vunpack.c.l.b16 %v2384
        %v2947 = vunpack.c.h.b16 %v2384
        %v2948 = vunpack.c.l.b16 %v2385
        %v2949 = vunpack.c.h.b16 %v2385
        %v2950 = vunpack.c.l.b16 %v2386
        %v2951 = vunpack.c.h.b16 %v2386
        %v2952 = vunpack.c.l.b16 %v2387
        %v2953 = vunpack.c.h.b16 %v2387
        %v2954 = vunpack.c.l.b16 %v2388
        %v2955 = vunpack.c.h.b16 %v2388
        %v2956 = vpack.c.b16 %v2580, %v2578
        %v2957 = vpack.c.b16 %v2581, %v2579
        %v2958 = vpack.c.b16 %v2584, %v2582
        %v2959 = vpack.c.b16 %v2585, %v2583
        %v2960 = vpack.c.b16 %v2588, %v2586
        %v2961 = vpack.c.b16 %v2589, %v2587
        %v2962 = vpack.c.b16 %v2592, %v2590
        %v2963 = vpack.c.b16 %v2593, %v2591
        %v2964 = vpack.c.b16 %v2596, %v2594
        %v2965 = vpack.c.b16 %v2597, %v2595
        %v2966 = vpack.c.b16 %v2600, %v2598
        %v2967 = vpack.c.b16 %v2601, %v2599
        %v2968 = vpack.c.b16 %v2604, %v2602
        %v2969 = vpack.c.b16 %v2605, %v2603
        %v2970 = vpack.c.b16 %v2608, %v2606
        %v2971 = vpack.c.b16 %v2609, %v2607
        %v2972 = vpack.c.b16 %v2612, %v2610
        %v2973 = vpack.c.b16 %v2613, %v2611
        %v2974 = vpack.c.b16 %v2616, %v2614
        %v2975 = vpack.c.b16 %v2617, %v2615
        %v2976 = vpack.c.b16 %v2620, %v2618
        %v2977 = vpack.c.b16 %v2621, %v2619
        %v2978 = vpack.c.b16 %v2624, %v2622
        %v2979 = vpack.c.b16 %v2625, %v2623
        %v2980 = vpack.c.b16 %v2628, %v2626
        %v2981 = vpack.c.b16 %v2629, %v2627
        %v2982 = vpack.c.b16 %v2632, %v2630
        %v2983 = vpack.c.b16 %v2633, %v2631
        %v2984 = vpack.c.b16 %v2636, %v2634
        %v2985 = vpack.c.b16 %v2637, %v2635
        %v2986 = vpack.c.b16 %v2640, %v2638
        %v2987 = vpack.c.b16 %v2641, %v2639
        %v2988 = vpack.c.b16 %v2644, %v2642
        %v2989 = vpack.c.b16 %v2645, %v2643
        %v2990 = vpack.c.b16 %v2648, %v2646
        %v2991 = vpack.c.b16 %v2649, %v2647
        %v2992 = vpack.c.b16 %v2652, %v2650
        %v2993 = vpack.c.b16 %v2653, %v2651
        %v2994 = vpack.c.b16 %v2656, %v2654
        %v2995 = vpack.c.b16 %v2657, %v2655
        %v2996 = vpack.c.b16 %v2660, %v2658
        %v2997 = vpack.c.b16 %v2661, %v2659
        %v2998 = vpack.c.b16 %v2664, %v2662
        %v2999 = vpack.c.b16 %v2665, %v2663
        %v3000 = vpack.c.b16 %v2668, %v2666
        %v3001 = vpack.c.b16 %v2669, %v2667
        %v3002 = vpack.c.b16 %v2672, %v2670
        %v3003 = vpack.c.b16 %v2673, %v2671
        %v3004 = vpack.c.b16 %v2676, %v2674
        %v3005 = vpack.c.b16 %v2677, %v2675
        %v3006 = vpack.c.b16 %v2680, %v2678
        %v3007 = vpack.c.b16 %v2681, %v2679
        %v3008 = vpack.c.b16 %v2684, %v2682
        %v3009 = vpack.c.b16 %v2685, %v2683
        %v3010 = vpack.c.b16 %v2688, %v2686
        %v3011 = vpack.c.b16 %v2689, %v2687
        %v3012 = vpack.c.b16 %v2692, %v2690
        %v3013 = vpack.c.b16 %v2693, %v2691
        %v3014 = vpack.c.b16 %v2696, %v2694
        %v3015 = vpack.c.b16 %v2697, %v2695
        %v3016 = vpack.c.b16 %v2700, %v2698
        %v3017 = vpack.c.b16 %v2701, %v2699
        %v3018 = vpack.c.b16 %v2704, %v2702
        %v3019 = vpack.c.b16 %v2705, %v2703
        %v3020 = vpack.c.b16 %v2708, %v2706
        %v3021 = vpack.c.b16 %v2709, %v2707
        %v3022 = vpack.c.b16 %v2712, %v2710
        %v3023 = vpack.c.b16 %v2713, %v2711
        %v3024 = vpack.c.b16 %v2716, %v2714
        %v3025 = vpack.c.b16 %v2717, %v2715
        %v3026 = vpack.c.b16 %v2720, %v2718
        %v3027 = vpack.c.b16 %v2721, %v2719
        %v3028 = vpack.c.b16 %v2724, %v2722
        %v3029 = vpack.c.b16 %v2725, %v2723
        %v3030 = vpack.c.b16 %v2728, %v2726
        %v3031 = vpack.c.b16 %v2729, %v2727
        %v3032 = vpack.c.b16 %v2732, %v2730
        %v3033 = vpack.c.b16 %v2733, %v2731
        %v3034 = vpack.c.b16 %v2736, %v2734
        %v3035 = vpack.c.b16 %v2737, %v2735
        %v3036 = vpack.c.b16 %v2740, %v2738
        %v3037 = vpack.c.b16 %v2741, %v2739
        %v3038 = vpack.c.b16 %v2744, %v2742
        %v3039 = vpack.c.b16 %v2745, %v2743
        %v3040 = vpack.c.b16 %v2748, %v2746
        %v3041 = vpack.c.b16 %v2749, %v2747
        %v3042 = vpack.c.b16 %v2752, %v2750
        %v3043 = vpack.c.b16 %v2753, %v2751
        %v3044 = vpack.c.b16 %v2756, %v2754
        %v3045 = vpack.c.b16 %v2757, %v2755
        %v3046 = vpack.c.b16 %v2760, %v2758
        %v3047 = vpack.c.b16 %v2761, %v2759
        %v3048 = vpack.c.b16 %v2764, %v2762
        %v3049 = vpack.c.b16 %v2765, %v2763
        %v3050 = vpack.c.b16 %v2768, %v2766
        %v3051 = vpack.c.b16 %v2769, %v2767
        %v3052 = vpack.c.b16 %v2772, %v2770
        %v3053 = vpack.c.b16 %v2773, %v2771
        %v3054 = vpack.c.b16 %v2776, %v2774
        %v3055 = vpack.c.b16 %v2777, %v2775
        %v3056 = vpack.c.b16 %v2780, %v2778
        %v3057 = vpack.c.b16 %v2781, %v2779
        %v3058 = vpack.c.b16 %v2784, %v2782
        %v3059 = vpack.c.b16 %v2785, %v2783
        %v3060 = vpack.c.b16 %v2788, %v2786
        %v3061 = vpack.c.b16 %v2789, %v2787
        %v3062 = vpack.c.b16 %v2792, %v2790
        %v3063 = vpack.c.b16 %v2793, %v2791
        %v3064 = vpack.c.b16 %v2796, %v2794
        %v3065 = vpack.c.b16 %v2797, %v2795
        %v3066 = vpack.c.b16 %v2800, %v2798
        %v3067 = vpack.c.b16 %v2801, %v2799
        %v3068 = vpack.c.b16 %v2804, %v2802
        %v3069 = vpack.c.b16 %v2805, %v2803
        %v3070 = vpack.c.b16 %v2808, %v2806
        %v3071 = vpack.c.b16 %v2809, %v2807
        %v3072 = vpack.c.b16 %v2812, %v2810
        %v3073 = vpack.c.b16 %v2813, %v2811
        %v3074 = vpack.c.b16 %v2816, %v2814
        %v3075 = vpack.c.b16 %v2817, %v2815
        %v3076 = vpack.c.b16 %v2820, %v2818
        %v3077 = vpack.c.b16 %v2821, %v2819
        %v3078 = vpack.c.b16 %v2824, %v2822
        %v3079 = vpack.c.b16 %v2825, %v2823
        %v3080 = vpack.c.b16 %v2828, %v2826
        %v3081 = vpack.c.b16 %v2829, %v2827
        %v3082 = vpack.c.b16 %v2832, %v2830
        %v3083 = vpack.c.b16 %v2833, %v2831
        %v3084 = vpack.c.b16 %v2836, %v2834
        %v3085 = vpack.c.b16 %v2837, %v2835
        %v3086 = vpack.c.b16 %v2840, %v2838
        %v3087 = vpack.c.b16 %v2841, %v2839
        %v3088 = vpack.c.b16 %v2844, %v2842
        %v3089 = vpack.c.b16 %v2845, %v2843
        %v3090 = vpack.c.b16 %v2848, %v2846
        %v3091 = vpack.c.b16 %v2849, %v2847
        %v3092 = vpack.c.b16 %v2852, %v2850
        %v3093 = vpack.c.b16 %v2853, %v2851
        %v3094 = vpack.c.b16 %v2856, %v2854
        %v3095 = vpack.c.b16 %v2857, %v2855
        %v3096 = vpack.c.b16 %v2860, %v2858
        %v3097 = vpack.c.b16 %v2861, %v2859
        %v3098 = vpack.c.b16 %v2864, %v2862
        %v3099 = vpack.c.b16 %v2865, %v2863
        %v3100 = vpack.c.b16 %v2868, %v2866
        %v3101 = vpack.c.b16 %v2869, %v2867
        %v3102 = vpack.c.b16 %v2872, %v2870
        %v3103 = vpack.c.b16 %v2873, %v2871
        %v3104 = vpack.c.b16 %v2876, %v2874
        %v3105 = vpack.c.b16 %v2877, %v2875
        %v3106 = vpack.c.b16 %v2880, %v2878
        %v3107 = vpack.c.b16 %v2881, %v2879
        %v3108 = vpack.c.b16 %v2884, %v2882
        %v3109 = vpack.c.b16 %v2885, %v2883
        %v3110 = vpack.c.b16 %v2888, %v2886
        %v3111 = vpack.c.b16 %v2889, %v2887
        %v3112 = vpack.c.b16 %v2892, %v2890
        %v3113 = vpack.c.b16 %v2893, %v2891
        %v3114 = vpack.c.b16 %v2896, %v2894
        %v3115 = vpack.c.b16 %v2897, %v2895
        %v3116 = vpack.c.b16 %v2900, %v2898
        %v3117 = vpack.c.b16 %v2901, %v2899
        %v3118 = vpack.c.b16 %v2904, %v2902
        %v3119 = vpack.c.b16 %v2905, %v2903
        %v3120 = vpack.c.b16 %v2908, %v2906
        %v3121 = vpack.c.b16 %v2909, %v2907
        %v3122 = vpack.c.b16 %v2912, %v2910
        %v3123 = vpack.c.b16 %v2913, %v2911
        %v3124 = vpack.c.b16 %v2916, %v2914
        %v3125 = vpack.c.b16 %v2917, %v2915
        %v3126 = vpack.c.b16 %v2920, %v2918
        %v3127 = vpack.c.b16 %v2921, %v2919
        %v3128 = vpack.c.b16 %v2924, %v2922
        %v3129 = vpack.c.b16 %v2925, %v2923
        %v3130 = vpack.c.b16 %v2928, %v2926
        %v3131 = vpack.c.b16 %v2929, %v2927
        %v3132 = vpack.c.b16 %v2932, %v2930
        %v3133 = vpack.c.b16 %v2933, %v2931
        %v3134 = vpack.c.b16 %v2936, %v2934
        %v3135 = vpack.c.b16 %v2937, %v2935
        %v3136 = vpack.c.b16 %v2940, %v2938
        %v3137 = vpack.c.b16 %v2941, %v2939
        %v3138 = vpack.c.b16 %v2944, %v2942
        %v3139 = vpack.c.b16 %v2945, %v2943
        %v3140 = vpack.c.b16 %v2948, %v2946
        %v3141 = vpack.c.b16 %v2949, %v2947
        %v3142 = vpack.c.b16 %v2952, %v2950
        %v3143 = vpack.c.b16 %v2953, %v2951
        %v3144 = vpack.c.b16 %v2954, %v2954
        %v3145 = vpack.c.b16 %v2955, %v2955
        %v3335 = vsel %vm1665, %v2187, 0
        %v3338 = vsel %vm1665, %v2199, 0
        %v3341 = vsel %vm816, %v3144, 0
        %v3344 = vsel %vm816, %v3145, 0
        %3346 = vmatprep.subr.bf16.mxu0 %v2971
        %3347 = vmatpush1.bf16.msra.mxu0 %v2970
        %3348 = vmatprep.subr.bf16.mxu0 %v2969
        %3349 = vmatpush1.bf16.msra.mxu0 %v2968
        %3350 = vmatprep.subr.bf16.mxu0 %v2967
        %3351 = vmatpush1.bf16.msra.mxu0 %v2966
        %3352 = vmatprep.subr.bf16.mxu0 %v2965
        %3353 = vmatpush1.bf16.msra.mxu0 %v2964
        %3354 = vmatprep.subr.bf16.mxu0 %v2963
        %3355 = vmatpush1.bf16.msra.mxu0 %v2962
        %3356 = vmatprep.subr.bf16.mxu0 %v2961
        %3357 = vmatpush1.bf16.msra.mxu0 %v2960
        %3358 = vmatprep.subr.bf16.mxu0 %v2959
        %3359 = vmatpush1.bf16.msra.mxu0 %v2958
        %3360 = vmatprep.subr.bf16.mxu0 %v2957
        %3361 = vmatpush1.bf16.msra.mxu0 %v2956
        %3362 = vmatprep.subr.bf16.mxu0 %v2987
        %3363 = vmatpush2.bf16.msra.mxu0 %v2986
        %3364 = vmatprep.subr.bf16.mxu0 %v2985
        %3365 = vmatpush2.bf16.msra.mxu0 %v2984
        %3366 = vmatprep.subr.bf16.mxu0 %v2983
        %3367 = vmatpush2.bf16.msra.mxu0 %v2982
        %3368 = vmatprep.subr.bf16.mxu0 %v2981
        %3369 = vmatpush2.bf16.msra.mxu0 %v2980
        %3370 = vmatprep.subr.bf16.mxu0 %v2979
        %3371 = vmatpush2.bf16.msra.mxu0 %v2978
        %3372 = vmatprep.subr.bf16.mxu0 %v2977
        %3373 = vmatpush2.bf16.msra.mxu0 %v2976
        %3374 = vmatprep.subr.bf16.mxu0 %v2975
        %3375 = vmatpush2.bf16.msra.mxu0 %v2974
        %3376 = vmatprep.subr.bf16.mxu0 %v2973
        %3377 = vmatpush2.bf16.msra.mxu0 %v2972
        %3378 = vmatprep.mubr.bf16.mxu0 %v2177
        %3379 = vmatmul.mubr.bf16.gmra.mxu0 %v2176
        %v3380 = vpop.f32.mrf.mxu0
        %v3381 = vadd.f32 0.0, %v3380
        %v3382 = vpop.f32.mrf.mxu0
        %v3383 = vadd.f32 0.0, %v3382
        %v3384 = vpop.f32.mrf.mxu0
        %v3385 = vadd.f32 0.0, %v3384
        %v3386 = vpop.f32.mrf.mxu0
        %v3387 = vadd.f32 0.0, %v3386
        %3388 = vmatprep.mubr.bf16.mxu0 %v2189
        %3389 = vmatmul.mubr.bf16.gmra.mxu0 %v2188
        %v3390 = vpop.f32.mrf.mxu0
        %v3391 = vadd.f32 0.0, %v3390
        %v3392 = vpop.f32.mrf.mxu0
        %v3393 = vadd.f32 0.0, %v3392
        %v3394 = vpop.f32.mrf.mxu0
        %v3395 = vadd.f32 0.0, %v3394
        %v3396 = vpop.f32.mrf.mxu0
        %v3397 = vadd.f32 0.0, %v3396
        %3398 = vdwg.mxu0
        %3399 = vmatprep.subr.bf16.mxu0 %v3003
        %3400 = vmatpush1.bf16.msra.mxu0 %v3002
        %3401 = vmatprep.subr.bf16.mxu0 %v3001
        %3402 = vmatpush1.bf16.msra.mxu0 %v3000
        %3403 = vmatprep.subr.bf16.mxu0 %v2999
        %3404 = vmatpush1.bf16.msra.mxu0 %v2998
        %3405 = vmatprep.subr.bf16.mxu0 %v2997
        %3406 = vmatpush1.bf16.msra.mxu0 %v2996
        %3407 = vmatprep.subr.bf16.mxu0 %v2995
        %3408 = vmatpush1.bf16.msra.mxu0 %v2994
        %3409 = vmatprep.subr.bf16.mxu0 %v2993
        %3410 = vmatpush1.bf16.msra.mxu0 %v2992
        %3411 = vmatprep.subr.bf16.mxu0 %v2991
        %3412 = vmatpush1.bf16.msra.mxu0 %v2990
        %3413 = vmatprep.subr.bf16.mxu0 %v2989
        %3414 = vmatpush1.bf16.msra.mxu0 %v2988
        %3415 = vmatprep.subr.bf16.mxu0 %v3019
        %3416 = vmatpush2.bf16.msra.mxu0 %v3018
        %3417 = vmatprep.subr.bf16.mxu0 %v3017
        %3418 = vmatpush2.bf16.msra.mxu0 %v3016
        %3419 = vmatprep.subr.bf16.mxu0 %v3015
        %3420 = vmatpush2.bf16.msra.mxu0 %v3014
        %3421 = vmatprep.subr.bf16.mxu0 %v3013
        %3422 = vmatpush2.bf16.msra.mxu0 %v3012
        %3423 = vmatprep.subr.bf16.mxu0 %v3011
        %3424 = vmatpush2.bf16.msra.mxu0 %v3010
        %3425 = vmatprep.subr.bf16.mxu0 %v3009
        %3426 = vmatpush2.bf16.msra.mxu0 %v3008
        %3427 = vmatprep.subr.bf16.mxu0 %v3007
        %3428 = vmatpush2.bf16.msra.mxu0 %v3006
        %3429 = vmatprep.subr.bf16.mxu0 %v3005
        %3430 = vmatpush2.bf16.msra.mxu0 %v3004
        %3431 = vmatprep.mubr.bf16.mxu0 %v2179
        %3432 = vmatmul.mubr.bf16.gmra.mxu0 %v2178
        %v3433 = vpop.f32.mrf.mxu0
        %v3434 = vadd.f32 %v3381, %v3433
        %v3435 = vpop.f32.mrf.mxu0
        %v3436 = vadd.f32 %v3383, %v3435
        %v3437 = vpop.f32.mrf.mxu0
        %v3438 = vadd.f32 %v3385, %v3437
        %v3439 = vpop.f32.mrf.mxu0
        %v3440 = vadd.f32 %v3387, %v3439
        %3441 = vmatprep.mubr.bf16.mxu0 %v2191
        %3442 = vmatmul.mubr.bf16.gmra.mxu0 %v2190
        %v3443 = vpop.f32.mrf.mxu0
        %v3444 = vadd.f32 %v3391, %v3443
        %v3445 = vpop.f32.mrf.mxu0
        %v3446 = vadd.f32 %v3393, %v3445
        %v3447 = vpop.f32.mrf.mxu0
        %v3448 = vadd.f32 %v3395, %v3447
        %v3449 = vpop.f32.mrf.mxu0
        %v3450 = vadd.f32 %v3397, %v3449
        %3451 = vdwg.mxu0
        %3452 = vmatprep.subr.bf16.mxu0 %v3035
        %3453 = vmatpush1.bf16.msra.mxu0 %v3034
        %3454 = vmatprep.subr.bf16.mxu0 %v3033
        %3455 = vmatpush1.bf16.msra.mxu0 %v3032
        %3456 = vmatprep.subr.bf16.mxu0 %v3031
        %3457 = vmatpush1.bf16.msra.mxu0 %v3030
        %3458 = vmatprep.subr.bf16.mxu0 %v3029
        %3459 = vmatpush1.bf16.msra.mxu0 %v3028
        %3460 = vmatprep.subr.bf16.mxu0 %v3027
        %3461 = vmatpush1.bf16.msra.mxu0 %v3026
        %3462 = vmatprep.subr.bf16.mxu0 %v3025
        %3463 = vmatpush1.bf16.msra.mxu0 %v3024
        %3464 = vmatprep.subr.bf16.mxu0 %v3023
        %3465 = vmatpush1.bf16.msra.mxu0 %v3022
        %3466 = vmatprep.subr.bf16.mxu0 %v3021
        %3467 = vmatpush1.bf16.msra.mxu0 %v3020
        %3468 = vmatprep.subr.bf16.mxu0 %v3051
        %3469 = vmatpush2.bf16.msra.mxu0 %v3050
        %3470 = vmatprep.subr.bf16.mxu0 %v3049
        %3471 = vmatpush2.bf16.msra.mxu0 %v3048
        %3472 = vmatprep.subr.bf16.mxu0 %v3047
        %3473 = vmatpush2.bf16.msra.mxu0 %v3046
        %3474 = vmatprep.subr.bf16.mxu0 %v3045
        %3475 = vmatpush2.bf16.msra.mxu0 %v3044
        %3476 = vmatprep.subr.bf16.mxu0 %v3043
        %3477 = vmatpush2.bf16.msra.mxu0 %v3042
        %3478 = vmatprep.subr.bf16.mxu0 %v3041
        %3479 = vmatpush2.bf16.msra.mxu0 %v3040
        %3480 = vmatprep.subr.bf16.mxu0 %v3039
        %3481 = vmatpush2.bf16.msra.mxu0 %v3038
        %3482 = vmatprep.subr.bf16.mxu0 %v3037
        %3483 = vmatpush2.bf16.msra.mxu0 %v3036
        %3484 = vmatprep.mubr.bf16.mxu0 %v2181
        %3485 = vmatmul.mubr.bf16.gmra.mxu0 %v2180
        %v3486 = vpop.f32.mrf.mxu0
        %v3487 = vadd.f32 %v3434, %v3486
        %v3488 = vpop.f32.mrf.mxu0
        %v3489 = vadd.f32 %v3436, %v3488
        %v3490 = vpop.f32.mrf.mxu0
        %v3491 = vadd.f32 %v3438, %v3490
        %v3492 = vpop.f32.mrf.mxu0
        %v3493 = vadd.f32 %v3440, %v3492
        %3494 = vmatprep.mubr.bf16.mxu0 %v2193
        %3495 = vmatmul.mubr.bf16.gmra.mxu0 %v2192
        %v3496 = vpop.f32.mrf.mxu0
        %v3497 = vadd.f32 %v3444, %v3496
        %v3498 = vpop.f32.mrf.mxu0
        %v3499 = vadd.f32 %v3446, %v3498
        %v3500 = vpop.f32.mrf.mxu0
        %v3501 = vadd.f32 %v3448, %v3500
        %v3502 = vpop.f32.mrf.mxu0
        %v3503 = vadd.f32 %v3450, %v3502
        %3504 = vdwg.mxu0
        %3505 = vmatprep.subr.bf16.mxu0 %v3067
        %3506 = vmatpush1.bf16.msra.mxu0 %v3066
        %3507 = vmatprep.subr.bf16.mxu0 %v3065
        %3508 = vmatpush1.bf16.msra.mxu0 %v3064
        %3509 = vmatprep.subr.bf16.mxu0 %v3063
        %3510 = vmatpush1.bf16.msra.mxu0 %v3062
        %3511 = vmatprep.subr.bf16.mxu0 %v3061
        %3512 = vmatpush1.bf16.msra.mxu0 %v3060
        %3513 = vmatprep.subr.bf16.mxu0 %v3059
        %3514 = vmatpush1.bf16.msra.mxu0 %v3058
        %3515 = vmatprep.subr.bf16.mxu0 %v3057
        %3516 = vmatpush1.bf16.msra.mxu0 %v3056
        %3517 = vmatprep.subr.bf16.mxu0 %v3055
        %3518 = vmatpush1.bf16.msra.mxu0 %v3054
        %3519 = vmatprep.subr.bf16.mxu0 %v3053
        %3520 = vmatpush1.bf16.msra.mxu0 %v3052
        %3521 = vmatprep.subr.bf16.mxu0 %v3083
        %3522 = vmatpush2.bf16.msra.mxu0 %v3082
        %3523 = vmatprep.subr.bf16.mxu0 %v3081
        %3524 = vmatpush2.bf16.msra.mxu0 %v3080
        %3525 = vmatprep.subr.bf16.mxu0 %v3079
        %3526 = vmatpush2.bf16.msra.mxu0 %v3078
        %3527 = vmatprep.subr.bf16.mxu0 %v3077
        %3528 = vmatpush2.bf16.msra.mxu0 %v3076
        %3529 = vmatprep.subr.bf16.mxu0 %v3075
        %3530 = vmatpush2.bf16.msra.mxu0 %v3074
        %3531 = vmatprep.subr.bf16.mxu0 %v3073
        %3532 = vmatpush2.bf16.msra.mxu0 %v3072
        %3533 = vmatprep.subr.bf16.mxu0 %v3071
        %3534 = vmatpush2.bf16.msra.mxu0 %v3070
        %3535 = vmatprep.subr.bf16.mxu0 %v3069
        %3536 = vmatpush2.bf16.msra.mxu0 %v3068
        %3537 = vmatprep.mubr.bf16.mxu0 %v2183
        %3538 = vmatmul.mubr.bf16.gmra.mxu0 %v2182
        %v3539 = vpop.f32.mrf.mxu0
        %v3540 = vadd.f32 %v3487, %v3539
        %v3541 = vpop.f32.mrf.mxu0
        %v3542 = vadd.f32 %v3489, %v3541
        %v3543 = vpop.f32.mrf.mxu0
        %v3544 = vadd.f32 %v3491, %v3543
        %v3545 = vpop.f32.mrf.mxu0
        %v3546 = vadd.f32 %v3493, %v3545
        %3547 = vmatprep.mubr.bf16.mxu0 %v2195
        %3548 = vmatmul.mubr.bf16.gmra.mxu0 %v2194
        %v3549 = vpop.f32.mrf.mxu0
        %v3550 = vadd.f32 %v3497, %v3549
        %v3551 = vpop.f32.mrf.mxu0
        %v3552 = vadd.f32 %v3499, %v3551
        %v3553 = vpop.f32.mrf.mxu0
        %v3554 = vadd.f32 %v3501, %v3553
        %v3555 = vpop.f32.mrf.mxu0
        %v3556 = vadd.f32 %v3503, %v3555
        %3557 = vdwg.mxu0
        %3558 = vmatprep.subr.bf16.mxu0 %v3099
        %3559 = vmatpush1.bf16.msra.mxu0 %v3098
        %3560 = vmatprep.subr.bf16.mxu0 %v3097
        %3561 = vmatpush1.bf16.msra.mxu0 %v3096
        %3562 = vmatprep.subr.bf16.mxu0 %v3095
        %3563 = vmatpush1.bf16.msra.mxu0 %v3094
        %3564 = vmatprep.subr.bf16.mxu0 %v3093
        %3565 = vmatpush1.bf16.msra.mxu0 %v3092
        %3566 = vmatprep.subr.bf16.mxu0 %v3091
        %3567 = vmatpush1.bf16.msra.mxu0 %v3090
        %3568 = vmatprep.subr.bf16.mxu0 %v3089
        %3569 = vmatpush1.bf16.msra.mxu0 %v3088
        %3570 = vmatprep.subr.bf16.mxu0 %v3087
        %3571 = vmatpush1.bf16.msra.mxu0 %v3086
        %3572 = vmatprep.subr.bf16.mxu0 %v3085
        %3573 = vmatpush1.bf16.msra.mxu0 %v3084
        %3574 = vmatprep.subr.bf16.mxu0 %v3115
        %3575 = vmatpush2.bf16.msra.mxu0 %v3114
        %3576 = vmatprep.subr.bf16.mxu0 %v3113
        %3577 = vmatpush2.bf16.msra.mxu0 %v3112
        %3578 = vmatprep.subr.bf16.mxu0 %v3111
        %3579 = vmatpush2.bf16.msra.mxu0 %v3110
        %3580 = vmatprep.subr.bf16.mxu0 %v3109
        %3581 = vmatpush2.bf16.msra.mxu0 %v3108
        %3582 = vmatprep.subr.bf16.mxu0 %v3107
        %3583 = vmatpush2.bf16.msra.mxu0 %v3106
        %3584 = vmatprep.subr.bf16.mxu0 %v3105
        %3585 = vmatpush2.bf16.msra.mxu0 %v3104
        %3586 = vmatprep.subr.bf16.mxu0 %v3103
        %3587 = vmatpush2.bf16.msra.mxu0 %v3102
        %3588 = vmatprep.subr.bf16.mxu0 %v3101
        %3589 = vmatpush2.bf16.msra.mxu0 %v3100
        %3590 = vmatprep.mubr.bf16.mxu0 %v2185
        %3591 = vmatmul.mubr.bf16.gmra.mxu0 %v2184
        %v3592 = vpop.f32.mrf.mxu0
        %v3593 = vadd.f32 %v3540, %v3592
        %v3594 = vpop.f32.mrf.mxu0
        %v3595 = vadd.f32 %v3542, %v3594
        %v3596 = vpop.f32.mrf.mxu0
        %v3597 = vadd.f32 %v3544, %v3596
        %v3598 = vpop.f32.mrf.mxu0
        %v3599 = vadd.f32 %v3546, %v3598
        %3600 = vmatprep.mubr.bf16.mxu0 %v2197
        %3601 = vmatmul.mubr.bf16.gmra.mxu0 %v2196
        %v3602 = vpop.f32.mrf.mxu0
        %v3603 = vadd.f32 %v3550, %v3602
        %v3604 = vpop.f32.mrf.mxu0
        %v3605 = vadd.f32 %v3552, %v3604
        %v3606 = vpop.f32.mrf.mxu0
        %v3607 = vadd.f32 %v3554, %v3606
        %v3608 = vpop.f32.mrf.mxu0
        %v3609 = vadd.f32 %v3556, %v3608
        %3610 = vdwg.mxu0
        %3611 = vmatprep.subr.bf16.mxu0 %v3131
        %3612 = vmatpush1.bf16.msra.mxu0 %v3130
        %3613 = vmatprep.subr.bf16.mxu0 %v3129
        %3614 = vmatpush1.bf16.msra.mxu0 %v3128
        %3615 = vmatprep.subr.bf16.mxu0 %v3127
        %3616 = vmatpush1.bf16.msra.mxu0 %v3126
        %3617 = vmatprep.subr.bf16.mxu0 %v3125
        %3618 = vmatpush1.bf16.msra.mxu0 %v3124
        %3619 = vmatprep.subr.bf16.mxu0 %v3123
        %3620 = vmatpush1.bf16.msra.mxu0 %v3122
        %3621 = vmatprep.subr.bf16.mxu0 %v3121
        %3622 = vmatpush1.bf16.msra.mxu0 %v3120
        %3623 = vmatprep.subr.bf16.mxu0 %v3119
        %3624 = vmatpush1.bf16.msra.mxu0 %v3118
        %3625 = vmatprep.subr.bf16.mxu0 %v3117
        %3626 = vmatpush1.bf16.msra.mxu0 %v3116
        %3627 = vmatprep.subr.bf16.mxu0 0
        %3628 = vmatpush2.bf16.msra.mxu0 0
        %3629 = vmatprep.subr.bf16.mxu0 %v3344
        %3630 = vmatpush2.bf16.msra.mxu0 %v3341
        %3631 = vmatprep.subr.bf16.mxu0 %v3143
        %3632 = vmatpush2.bf16.msra.mxu0 %v3142
        %3633 = vmatprep.subr.bf16.mxu0 %v3141
        %3634 = vmatpush2.bf16.msra.mxu0 %v3140
        %3635 = vmatprep.subr.bf16.mxu0 %v3139
        %3636 = vmatpush2.bf16.msra.mxu0 %v3138
        %3637 = vmatprep.subr.bf16.mxu0 %v3137
        %3638 = vmatpush2.bf16.msra.mxu0 %v3136
        %3639 = vmatprep.subr.bf16.mxu0 %v3135
        %3640 = vmatpush2.bf16.msra.mxu0 %v3134
        %3641 = vmatprep.subr.bf16.mxu0 %v3133
        %3642 = vmatpush2.bf16.msra.mxu0 %v3132
        %3643 = vmatprep.mubr.bf16.mxu0 %v3335
        %3644 = vmatmul.mubr.bf16.gmra.mxu0 %v2186
        %v3645 = vpop.f32.mrf.mxu0
        %v3646 = vadd.f32 %v3593, %v3645
        %v3647 = vpop.f32.mrf.mxu0
        %v3648 = vadd.f32 %v3595, %v3647
        %v3649 = vpop.f32.mrf.mxu0
        %v3650 = vadd.f32 %v3597, %v3649
        %v3651 = vpop.f32.mrf.mxu0
        %v3652 = vadd.f32 %v3599, %v3651
        %3653 = vmatprep.mubr.bf16.mxu0 %v3338
        %3654 = vmatmul.mubr.bf16.gmra.mxu0 %v2198
        %v3655 = vpop.f32.mrf.mxu0
        %v3656 = vadd.f32 %v3603, %v3655
        %v3657 = vpop.f32.mrf.mxu0
        %v3658 = vadd.f32 %v3605, %v3657
        %v3659 = vpop.f32.mrf.mxu0
        %v3660 = vadd.f32 %v3607, %v3659
        %v3661 = vpop.f32.mrf.mxu0
        %v3662 = vadd.f32 %v3609, %v3661
        %3663 = vdwg.mxu0
        %3664 = vst [vmem:[#allocation3] sm:$0xff] 0.0
        %3665 = vst [vmem:[#allocation3 + $0x8] sm:$0xff] 0.0
        %3666 = vst [vmem:[#allocation3 + $0x10] sm:$0xff] 0.0
        %3667 = vst [vmem:[#allocation3 + $0x18] sm:$0xff] 0.0
        %3668 = vst [vmem:[#allocation3 + $0x20] sm:$0xff] 0.0
        %3669 = vst [vmem:[#allocation3 + $0x28] sm:$0xff] 0.0
        %3670 = vst [vmem:[#allocation3 + $0x30] sm:$0xff] 0.0
        %3671 = vst [vmem:[#allocation3 + $0x38] sm:$0xff] 0.0
        %3672 = vst [vmem:[#allocation3 + $0x40] sm:$0xff] 0.0
        %3673 = vst [vmem:[#allocation3 + $0x48] sm:$0xff] 0.0
        %3674 = vst [vmem:[#allocation3 + $0x50] sm:$0xff] 0.0
        %3675 = vst.msk [vmem:[#allocation3 + $0x58] sm:$0xff] %vm1665, 0.0
        %3676 = vst [vmem:[#allocation3 + $0x60] sm:$0xff] 0.0
        %3677 = vst [vmem:[#allocation3 + $0x68] sm:$0xff] 0.0
        %3678 = vst [vmem:[#allocation3 + $0x70] sm:$0xff] 0.0
        %3679 = vst [vmem:[#allocation3 + $0x78] sm:$0xff] 0.0
        %3680 = vst [vmem:[#allocation3 + $0x80] sm:$0xff] 0.0
        %3681 = vst [vmem:[#allocation3 + $0x88] sm:$0xff] 0.0
        %3682 = vst [vmem:[#allocation3 + $0x90] sm:$0xff] 0.0
        %3683 = vst [vmem:[#allocation3 + $0x98] sm:$0xff] 0.0
        %3684 = vst [vmem:[#allocation3 + $0xa0] sm:$0xff] 0.0
        %3685 = vst [vmem:[#allocation3 + $0xa8] sm:$0xff] 0.0
        %3686 = vst [vmem:[#allocation3 + $0xb0] sm:$0xff] 0.0
        %3687 = vst.msk [vmem:[#allocation3 + $0xb8] sm:$0xff] %vm1665, 0.0
        %3688 = vst [vmem:[#allocation3 + $0xc0] sm:$0xff] 0.0
        %3689 = vst [vmem:[#allocation3 + $0xc8] sm:$0xff] 0.0
        %3690 = vst [vmem:[#allocation3 + $0xd0] sm:$0xff] 0.0
        %3691 = vst [vmem:[#allocation3 + $0xd8] sm:$0xff] 0.0
        %3692 = vst [vmem:[#allocation3 + $0xe0] sm:$0xff] 0.0
        %3693 = vst [vmem:[#allocation3 + $0xe8] sm:$0xff] 0.0
        %3694 = vst [vmem:[#allocation3 + $0xf0] sm:$0xff] 0.0
        %3695 = vst [vmem:[#allocation3 + $0xf8] sm:$0xff] 0.0
        %3696 = vst [vmem:[#allocation3 + $0x100] sm:$0xff] 0.0
        %3697 = vst [vmem:[#allocation3 + $0x108] sm:$0xff] 0.0
        %3698 = vst [vmem:[#allocation3 + $0x110] sm:$0xff] 0.0
        %3699 = vst.msk [vmem:[#allocation3 + $0x118] sm:$0xff] %vm1665, 0.0
        %3700 = vst [vmem:[#allocation3 + $0x120] sm:$0xf] 0.0
        %3701 = vst [vmem:[#allocation3 + $0x128] sm:$0xf] 0.0
        %3702 = vst [vmem:[#allocation3 + $0x130] sm:$0xf] 0.0
        %3703 = vst [vmem:[#allocation3 + $0x138] sm:$0xf] 0.0
        %3704 = vst [vmem:[#allocation3 + $0x140] sm:$0xf] 0.0
        %3705 = vst [vmem:[#allocation3 + $0x148] sm:$0xf] 0.0
        %3706 = vst [vmem:[#allocation3 + $0x150] sm:$0xf] 0.0
        %3707 = vst [vmem:[#allocation3 + $0x158] sm:$0xf] 0.0
        %3708 = vst [vmem:[#allocation3 + $0x160] sm:$0xf] 0.0
        %3709 = vst [vmem:[#allocation3 + $0x168] sm:$0xf] 0.0
        %3710 = vst [vmem:[#allocation3 + $0x170] sm:$0xf] 0.0
        %3711 = vst.msk [vmem:[#allocation3 + $0x178] sm:$0xf] %vm1702, 0.0
        %v3720 = vrot.slane %v3646, 7
        %v3721 = vrot.slane %v3648, 7
        %v3722 = vrot.slane %v3650, 7
        %v3723 = vsel %vm1712, %v3720, %v3722
        %v3724 = vrot.slane %v3652, 7
        %v3725 = vsel %vm1712, %v3721, %v3724
        %v3726 = vrot.slane %v3656, 7
        %v3727 = vsel %vm1712, %v3722, %v3726
        %v3728 = vrot.slane %v3658, 7
        %v3729 = vsel %vm1712, %v3724, %v3728
        %v3730 = vrot.slane %v3660, 7
        %v3731 = vsel %vm1712, %v3726, %v3730
        %v3732 = vrot.slane %v3662, 7
        %v3733 = vsel %vm1712, %v3728, %v3732
        %3734 = vrot.lane.b32.xlu0 %v3720, 6
        %v3735 = vpop.permute.xlu0 %3734
        %3736 = vrot.lane.b32.xlu0 %v3721, 6
        %v3737 = vpop.permute.xlu0 %3736
        %3738 = vrot.lane.b32.xlu0 %v3723, 6
        %v3739 = vpop.permute.xlu0 %3738
        %3740 = vrot.lane.b32.xlu0 %v3725, 6
        %v3741 = vpop.permute.xlu0 %3740
        %3742 = vrot.lane.b32.xlu0 %v3727, 6
        %v3743 = vpop.permute.xlu0 %3742
        %3744 = vrot.lane.b32.xlu0 %v3729, 6
        %v3745 = vpop.permute.xlu0 %3744
        %3746 = vrot.lane.b32.xlu0 %v3731, 6
        %v3747 = vpop.permute.xlu0 %3746
        %3748 = vrot.lane.b32.xlu0 %v3733, 6
        %v3749 = vpop.permute.xlu0 %3748
        %v3750 = vsel %vm1743, %v3735, %v3737
        %v3751 = vsel %vm1743, %v3739, %v3741
        %v3752 = vsel %vm1743, %v3743, %v3745
        %v3753 = vsel %vm1743, %v3747, %v3749
        %3762 = vst.msk [vmem:[#allocation3] sm:$0xfe] %vm1756, %v3735
        %3763 = vst.msk [vmem:[#allocation3 + $0x8] sm:$0xfe] %vm1758, %v3750
        %3764 = vst.msk [vmem:[#allocation3 + $0x60] sm:$0xff] %vm1760, %v3739
        %3765 = vst.msk [vmem:[#allocation3 + $0x68] sm:$0xff] %vm1762, %v3751
        %3766 = vst.msk [vmem:[#allocation3 + $0xc0] sm:$0xff] %vm1760, %v3743
        %3767 = vst.msk [vmem:[#allocation3 + $0xc8] sm:$0xff] %vm1762, %v3752
        %3768 = vst.msk [vmem:[#allocation3 + $0x120] sm:$0xf] %vm1766, %v3747
        %3769 = vst.msk [vmem:[#allocation3 + $0x128] sm:$0xf] %vm1768, %v3753
        %3770 = vrot.lane.b32.xlu0 %v3720, 40
        %v3771 = vpop.permute.xlu0 %3770
        %3772 = vrot.lane.b32.xlu0 %v3721, 40
        %v3773 = vpop.permute.xlu0 %3772
        %3774 = vrot.lane.b32.xlu0 %v3723, 40
        %v3775 = vpop.permute.xlu0 %3774
        %3776 = vrot.lane.b32.xlu0 %v3725, 40
        %v3777 = vpop.permute.xlu0 %3776
        %3778 = vrot.lane.b32.xlu0 %v3727, 40
        %v3779 = vpop.permute.xlu0 %3778
        %3780 = vrot.lane.b32.xlu0 %v3729, 40
        %v3781 = vpop.permute.xlu0 %3780
        %3782 = vrot.lane.b32.xlu0 %v3731, 40
        %v3783 = vpop.permute.xlu0 %3782
        %3784 = vrot.lane.b32.xlu0 %v3733, 40
        %v3785 = vpop.permute.xlu0 %3784
        %v3786 = vsel %vm1762, %v3771, %v3773
        %v3787 = vsel %vm1762, %v3775, %v3777
        %v3788 = vsel %vm1762, %v3779, %v3781
        %v3789 = vsel %vm1762, %v3783, %v3785
        %3798 = vst.msk [vmem:[#allocation3 + $0x8] sm:$0xfe] %vm1798, %v3771
        %3799 = vst.msk [vmem:[#allocation3 + $0x10] sm:$0xfe] %vm1800, %v3786
        %3800 = vst.msk [vmem:[#allocation3 + $0x68] sm:$0xff] %vm1802, %v3775
        %3801 = vst.msk [vmem:[#allocation3 + $0x70] sm:$0xff] %vm1804, %v3787
        %3802 = vst.msk [vmem:[#allocation3 + $0xc8] sm:$0xff] %vm1802, %v3779
        %3803 = vst.msk [vmem:[#allocation3 + $0xd0] sm:$0xff] %vm1804, %v3788
        %3804 = vst.msk [vmem:[#allocation3 + $0x128] sm:$0xf] %vm1808, %v3783
        %3805 = vst.msk [vmem:[#allocation3 + $0x130] sm:$0xf] %vm1810, %v3789
        %3806 = vrot.lane.b32.xlu0 %v3720, 74
        %v3807 = vpop.permute.xlu0 %3806
        %3808 = vrot.lane.b32.xlu0 %v3721, 74
        %v3809 = vpop.permute.xlu0 %3808
        %3810 = vrot.lane.b32.xlu0 %v3723, 74
        %v3811 = vpop.permute.xlu0 %3810
        %3812 = vrot.lane.b32.xlu0 %v3725, 74
        %v3813 = vpop.permute.xlu0 %3812
        %3814 = vrot.lane.b32.xlu0 %v3727, 74
        %v3815 = vpop.permute.xlu0 %3814
        %3816 = vrot.lane.b32.xlu0 %v3729, 74
        %v3817 = vpop.permute.xlu0 %3816
        %3818 = vrot.lane.b32.xlu0 %v3731, 74
        %v3819 = vpop.permute.xlu0 %3818
        %3820 = vrot.lane.b32.xlu0 %v3733, 74
        %v3821 = vpop.permute.xlu0 %3820
        %v3822 = vsel %vm1828, %v3807, %v3809
        %v3823 = vsel %vm1828, %v3811, %v3813
        %v3824 = vsel %vm1828, %v3815, %v3817
        %v3825 = vsel %vm1828, %v3819, %v3821
        %3834 = vst.msk [vmem:[#allocation3 + $0x10] sm:$0xfe] %vm1841, %v3807
        %3835 = vst.msk [vmem:[#allocation3 + $0x18] sm:$0xfe] %vm1843, %v3822
        %3836 = vst.msk [vmem:[#allocation3 + $0x70] sm:$0xff] %vm1845, %v3811
        %3837 = vst.msk [vmem:[#allocation3 + $0x78] sm:$0xff] %vm1847, %v3823
        %3838 = vst.msk [vmem:[#allocation3 + $0xd0] sm:$0xff] %vm1845, %v3815
        %3839 = vst.msk [vmem:[#allocation3 + $0xd8] sm:$0xff] %vm1847, %v3824
        %3840 = vst.msk [vmem:[#allocation3 + $0x130] sm:$0xf] %vm1851, %v3819
        %3841 = vst.msk [vmem:[#allocation3 + $0x138] sm:$0xf] %vm1853, %v3825
        %3842 = vrot.lane.b32.xlu0 %v3646, 126
        %v3843 = vpop.permute.xlu0 %3842
        %3844 = vrot.lane.b32.xlu0 %v3648, 126
        %v3845 = vpop.permute.xlu0 %3844
        %3846 = vrot.lane.b32.xlu0 %v3650, 126
        %v3847 = vpop.permute.xlu0 %3846
        %3848 = vrot.lane.b32.xlu0 %v3652, 126
        %v3849 = vpop.permute.xlu0 %3848
        %3850 = vrot.lane.b32.xlu0 %v3656, 126
        %v3851 = vpop.permute.xlu0 %3850
        %3852 = vrot.lane.b32.xlu0 %v3658, 126
        %v3853 = vpop.permute.xlu0 %3852
        %3854 = vrot.lane.b32.xlu0 %v3660, 126
        %v3855 = vpop.permute.xlu0 %3854
        %3856 = vrot.lane.b32.xlu0 %v3662, 126
        %v3857 = vpop.permute.xlu0 %3856
        %v3858 = vsel %vm1871, %v3843, %v3845
        %v3859 = vsel %vm1871, %v3847, %v3849
        %v3860 = vsel %vm1871, %v3851, %v3853
        %v3861 = vsel %vm1871, %v3855, %v3857
        %3874 = vst.msk [vmem:[#allocation3 + $0x18] sm:$0xff] %vm1888, %v3843
        %3875 = vst [vmem:[#allocation3 + $0x20] sm:$0xff] %v3858
        %3876 = vst.msk [vmem:[#allocation3 + $0x28] sm:$0xff] %vm1891, %v3845
        %3877 = vst.msk [vmem:[#allocation3 + $0x78] sm:$0xff] %vm1888, %v3847
        %3878 = vst [vmem:[#allocation3 + $0x80] sm:$0xff] %v3859
        %3879 = vst.msk [vmem:[#allocation3 + $0x88] sm:$0xff] %vm1891, %v3849
        %3880 = vst.msk [vmem:[#allocation3 + $0xd8] sm:$0xff] %vm1888, %v3851
        %3881 = vst [vmem:[#allocation3 + $0xe0] sm:$0xff] %v3860
        %3882 = vst.msk [vmem:[#allocation3 + $0xe8] sm:$0xff] %vm1891, %v3853
        %3883 = vst.msk [vmem:[#allocation3 + $0x138] sm:$0xf] %vm1899, %v3855
        %3884 = vst [vmem:[#allocation3 + $0x140] sm:$0xf] %v3861
        %3885 = vst.msk [vmem:[#allocation3 + $0x148] sm:$0xf] %vm1902, %v3857
        %3886 = vrot.lane.b32.xlu0 %v3646, 32
        %v3887 = vpop.permute.xlu0 %3886
        %3888 = vrot.lane.b32.xlu0 %v3648, 32
        %v3889 = vpop.permute.xlu0 %3888
        %3890 = vrot.lane.b32.xlu0 %v3650, 32
        %v3891 = vpop.permute.xlu0 %3890
        %3892 = vrot.lane.b32.xlu0 %v3652, 32
        %v3893 = vpop.permute.xlu0 %3892
        %3894 = vrot.lane.b32.xlu0 %v3656, 32
        %v3895 = vpop.permute.xlu0 %3894
        %3896 = vrot.lane.b32.xlu0 %v3658, 32
        %v3897 = vpop.permute.xlu0 %3896
        %3898 = vrot.lane.b32.xlu0 %v3660, 32
        %v3899 = vpop.permute.xlu0 %3898
        %3900 = vrot.lane.b32.xlu0 %v3662, 32
        %v3901 = vpop.permute.xlu0 %3900
        %v3902 = vsel %vm1891, %v3887, %v3889
        %v3903 = vsel %vm1891, %v3891, %v3893
        %v3904 = vsel %vm1891, %v3895, %v3897
        %v3905 = vsel %vm1891, %v3899, %v3901
        %3914 = vst.msk [vmem:[#allocation3 + $0x28] sm:$0xff] %vm1932, %v3887
        %3915 = vst.msk [vmem:[#allocation3 + $0x30] sm:$0xff] %vm1934, %v3902
        %3916 = vst.msk [vmem:[#allocation3 + $0x88] sm:$0xff] %vm1932, %v3891
        %3917 = vst.msk [vmem:[#allocation3 + $0x90] sm:$0xff] %vm1934, %v3903
        %3918 = vst.msk [vmem:[#allocation3 + $0xe8] sm:$0xff] %vm1932, %v3895
        %3919 = vst.msk [vmem:[#allocation3 + $0xf0] sm:$0xff] %vm1934, %v3904
        %3920 = vst.msk [vmem:[#allocation3 + $0x148] sm:$0xf] %vm1940, %v3899
        %3921 = vst.msk [vmem:[#allocation3 + $0x150] sm:$0xf] %vm1942, %v3905
        %3922 = vrot.lane.b32.xlu0 %v3646, 66
        %v3923 = vpop.permute.xlu0 %3922
        %3924 = vrot.lane.b32.xlu0 %v3648, 66
        %v3925 = vpop.permute.xlu0 %3924
        %3926 = vrot.lane.b32.xlu0 %v3650, 66
        %v3927 = vpop.permute.xlu0 %3926
        %3928 = vrot.lane.b32.xlu0 %v3652, 66
        %v3929 = vpop.permute.xlu0 %3928
        %3930 = vrot.lane.b32.xlu0 %v3656, 66
        %v3931 = vpop.permute.xlu0 %3930
        %3932 = vrot.lane.b32.xlu0 %v3658, 66
        %v3933 = vpop.permute.xlu0 %3932
        %3934 = vrot.lane.b32.xlu0 %v3660, 66
        %v3935 = vpop.permute.xlu0 %3934
        %3936 = vrot.lane.b32.xlu0 %v3662, 66
        %v3937 = vpop.permute.xlu0 %3936
        %v3938 = vsel %vm1960, %v3923, %v3925
        %v3939 = vsel %vm1960, %v3927, %v3929
        %v3940 = vsel %vm1960, %v3931, %v3933
        %v3941 = vsel %vm1960, %v3935, %v3937
        %3950 = vst.msk [vmem:[#allocation3 + $0x30] sm:$0xff] %vm1973, %v3923
        %3951 = vst.msk [vmem:[#allocation3 + $0x38] sm:$0xff] %vm1975, %v3938
        %3952 = vst.msk [vmem:[#allocation3 + $0x90] sm:$0xff] %vm1973, %v3927
        %3953 = vst.msk [vmem:[#allocation3 + $0x98] sm:$0xff] %vm1975, %v3939
        %3954 = vst.msk [vmem:[#allocation3 + $0xf0] sm:$0xff] %vm1973, %v3931
        %3955 = vst.msk [vmem:[#allocation3 + $0xf8] sm:$0xff] %vm1975, %v3940
        %3956 = vst.msk [vmem:[#allocation3 + $0x150] sm:$0xf] %vm1981, %v3935
        %3957 = vst.msk [vmem:[#allocation3 + $0x158] sm:$0xf] %vm1983, %v3941
        %v3958 = vrot.slane %v3646, 1
        %v3959 = vrot.slane %v3650, 1
        %v3960 = vsel %vm504, %v3958, %v3959
        %v3961 = vrot.slane %v3648, 1
        %v3962 = vrot.slane %v3652, 1
        %v3963 = vsel %vm504, %v3961, %v3962
        %v3964 = vrot.slane %v3656, 1
        %v3965 = vsel %vm504, %v3959, %v3964
        %v3966 = vrot.slane %v3658, 1
        %v3967 = vsel %vm504, %v3962, %v3966
        %v3968 = vrot.slane %v3660, 1
        %v3969 = vsel %vm504, %v3964, %v3968
        %v3970 = vrot.slane %v3662, 1
        %v3971 = vsel %vm504, %v3966, %v3970
        %3972 = vrot.lane.b32.xlu0 %v3960, 118
        %v3973 = vpop.permute.xlu0 %3972
        %3974 = vrot.lane.b32.xlu0 %v3963, 118
        %v3975 = vpop.permute.xlu0 %3974
        %3976 = vrot.lane.b32.xlu0 %v3965, 118
        %v3977 = vpop.permute.xlu0 %3976
        %3978 = vrot.lane.b32.xlu0 %v3967, 118
        %v3979 = vpop.permute.xlu0 %3978
        %3980 = vrot.lane.b32.xlu0 %v3969, 118
        %v3981 = vpop.permute.xlu0 %3980
        %3982 = vrot.lane.b32.xlu0 %v3971, 118
        %v3983 = vpop.permute.xlu0 %3982
        %3984 = vrot.lane.b32.xlu0 %v3968, 118
        %v3985 = vpop.permute.xlu0 %3984
        %3986 = vrot.lane.b32.xlu0 %v3970, 118
        %v3987 = vpop.permute.xlu0 %3986
        %v3988 = vsel %vm2015, %v3973, %v3975
        %v3989 = vsel %vm2015, %v3977, %v3979
        %v3990 = vsel %vm2015, %v3981, %v3983
        %v3991 = vsel %vm2015, %v3985, %v3987
        %4004 = vst.msk [vmem:[#allocation3 + $0x38] sm:$0xff] %vm2032, %v3973
        %4005 = vst [vmem:[#allocation3 + $0x40] sm:$0xff] %v3988
        %4006 = vst.msk [vmem:[#allocation3 + $0x48] sm:$0xff] %vm598, %v3975
        %4007 = vst.msk [vmem:[#allocation3 + $0x98] sm:$0xff] %vm2032, %v3977
        %4008 = vst [vmem:[#allocation3 + $0xa0] sm:$0xff] %v3989
        %4009 = vst.msk [vmem:[#allocation3 + $0xa8] sm:$0xff] %vm598, %v3979
        %4010 = vst.msk [vmem:[#allocation3 + $0xf8] sm:$0xff] %vm2032, %v3981
        %4011 = vst [vmem:[#allocation3 + $0x100] sm:$0xff] %v3990
        %4012 = vst.msk [vmem:[#allocation3 + $0x108] sm:$0xff] %vm598, %v3983
        %4013 = vst.msk [vmem:[#allocation3 + $0x158] sm:$0x7] %vm2042, %v3985
        %4014 = vst [vmem:[#allocation3 + $0x160] sm:$0x7] %v3991
        %4015 = vst.msk [vmem:[#allocation3 + $0x168] sm:$0x7] %vm2045, %v3987
        %4016 = vrot.lane.b32.xlu0 %v3960, 24
        %v4017 = vpop.permute.xlu0 %4016
        %4018 = vrot.lane.b32.xlu0 %v3963, 24
        %v4019 = vpop.permute.xlu0 %4018
        %4020 = vrot.lane.b32.xlu0 %v3965, 24
        %v4021 = vpop.permute.xlu0 %4020
        %4022 = vrot.lane.b32.xlu0 %v3967, 24
        %v4023 = vpop.permute.xlu0 %4022
        %4024 = vrot.lane.b32.xlu0 %v3969, 24
        %v4025 = vpop.permute.xlu0 %4024
        %4026 = vrot.lane.b32.xlu0 %v3971, 24
        %v4027 = vpop.permute.xlu0 %4026
        %4028 = vrot.lane.b32.xlu0 %v3968, 24
        %v4029 = vpop.permute.xlu0 %4028
        %4030 = vrot.lane.b32.xlu0 %v3970, 24
        %v4031 = vpop.permute.xlu0 %4030
        %v4032 = vsel %vm598, %v4017, %v4019
        %v4033 = vsel %vm598, %v4021, %v4023
        %v4034 = vsel %vm598, %v4025, %v4027
        %v4035 = vsel %vm598, %v4029, %v4031
        %4044 = vst.msk [vmem:[#allocation3 + $0x48] sm:$0xff] %vm2075, %v4017
        %4045 = vst.msk [vmem:[#allocation3 + $0x50] sm:$0xff] %vm2077, %v4032
        %4046 = vst.msk [vmem:[#allocation3 + $0xa8] sm:$0xff] %vm2075, %v4021
        %4047 = vst.msk [vmem:[#allocation3 + $0xb0] sm:$0xff] %vm2077, %v4033
        %4048 = vst.msk [vmem:[#allocation3 + $0x108] sm:$0xff] %vm2075, %v4025
        %4049 = vst.msk [vmem:[#allocation3 + $0x110] sm:$0xff] %vm2077, %v4034
        %4050 = vst.msk [vmem:[#allocation3 + $0x168] sm:$0x7] %vm2083, %v4029
        %4051 = vst.msk [vmem:[#allocation3 + $0x170] sm:$0x7] %vm2085, %v4035
        %4052 = vrot.lane.b32.xlu0 %v3960, 58
        %v4053 = vpop.permute.xlu0 %4052
        %4054 = vrot.lane.b32.xlu0 %v3963, 58
        %v4055 = vpop.permute.xlu0 %4054
        %4056 = vrot.lane.b32.xlu0 %v3965, 58
        %v4057 = vpop.permute.xlu0 %4056
        %4058 = vrot.lane.b32.xlu0 %v3967, 58
        %v4059 = vpop.permute.xlu0 %4058
        %4060 = vrot.lane.b32.xlu0 %v3969, 58
        %v4061 = vpop.permute.xlu0 %4060
        %4062 = vrot.lane.b32.xlu0 %v3971, 58
        %v4063 = vpop.permute.xlu0 %4062
        %4064 = vrot.lane.b32.xlu0 %v3968, 58
        %v4065 = vpop.permute.xlu0 %4064
        %4066 = vrot.lane.b32.xlu0 %v3970, 58
        %v4067 = vpop.permute.xlu0 %4066
        %v4068 = vsel %vm2103, %v4053, %v4055
        %v4069 = vsel %vm2103, %v4057, %v4059
        %v4070 = vsel %vm2103, %v4061, %v4063
        %v4071 = vsel %vm2103, %v4065, %v4067
        %4080 = vst.msk [vmem:[#allocation3 + $0x50] sm:$0xff] %vm2116, %v4053
        %4081 = vst.msk [vmem:[#allocation3 + $0x58] sm:$0xff] %vm2118, %v4068
        %4082 = vst.msk [vmem:[#allocation3 + $0xb0] sm:$0xff] %vm2116, %v4057
        %4083 = vst.msk [vmem:[#allocation3 + $0xb8] sm:$0xff] %vm2118, %v4069
        %4084 = vst.msk [vmem:[#allocation3 + $0x110] sm:$0xff] %vm2116, %v4061
        %4085 = vst.msk [vmem:[#allocation3 + $0x118] sm:$0xff] %vm2118, %v4070
        %4086 = vst.msk [vmem:[#allocation3 + $0x170] sm:$0x7] %vm2124, %v4065
        %4087 = vst.msk [vmem:[#allocation3 + $0x178] sm:$0x7] %vm2126, %v4071
        %v4088 = vld [vmem:[#allocation3] sm:$0xff]
        %v4089 = vld [vmem:[#allocation3 + $0x8] sm:$0xff]
        %v4090 = vld [vmem:[#allocation3 + $0x10] sm:$0xff]
        %v4091 = vld [vmem:[#allocation3 + $0x18] sm:$0xff]
        %v4092 = vld [vmem:[#allocation3 + $0x20] sm:$0xff]
        %v4093 = vld [vmem:[#allocation3 + $0x28] sm:$0xff]
        %v4094 = vld [vmem:[#allocation3 + $0x30] sm:$0xff]
        %v4095 = vld [vmem:[#allocation3 + $0x38] sm:$0xff]
        %v4096 = vld [vmem:[#allocation3 + $0x40] sm:$0xff]
        %v4097 = vld [vmem:[#allocation3 + $0x48] sm:$0xff]
        %v4098 = vld [vmem:[#allocation3 + $0x50] sm:$0xff]
        %v4099 = vld [vmem:[#allocation3 + $0x58] sm:$0xff]
        %v4100 = vld [vmem:[#allocation3 + $0x60] sm:$0xff]
        %v4101 = vld [vmem:[#allocation3 + $0x68] sm:$0xff]
        %v4102 = vld [vmem:[#allocation3 + $0x70] sm:$0xff]
        %v4103 = vld [vmem:[#allocation3 + $0x78] sm:$0xff]
        %v4104 = vld [vmem:[#allocation3 + $0x80] sm:$0xff]
        %v4105 = vld [vmem:[#allocation3 + $0x88] sm:$0xff]
        %v4106 = vld [vmem:[#allocation3 + $0x90] sm:$0xff]
        %v4107 = vld [vmem:[#allocation3 + $0x98] sm:$0xff]
        %v4108 = vld [vmem:[#allocation3 + $0xa0] sm:$0xff]
        %v4109 = vld [vmem:[#allocation3 + $0xa8] sm:$0xff]
        %v4110 = vld [vmem:[#allocation3 + $0xb0] sm:$0xff]
        %v4111 = vld [vmem:[#allocation3 + $0xb8] sm:$0xff]
        %v4112 = vld [vmem:[#allocation3 + $0xc0] sm:$0xff]
        %v4113 = vld [vmem:[#allocation3 + $0xc8] sm:$0xff]
        %v4114 = vld [vmem:[#allocation3 + $0xd0] sm:$0xff]
        %v4115 = vld [vmem:[#allocation3 + $0xd8] sm:$0xff]
        %v4116 = vld [vmem:[#allocation3 + $0xe0] sm:$0xff]
        %v4117 = vld [vmem:[#allocation3 + $0xe8] sm:$0xff]
        %v4118 = vld [vmem:[#allocation3 + $0xf0] sm:$0xff]
        %v4119 = vld [vmem:[#allocation3 + $0xf8] sm:$0xff]
        %v4120 = vld [vmem:[#allocation3 + $0x100] sm:$0xff]
        %v4121 = vld [vmem:[#allocation3 + $0x108] sm:$0xff]
        %v4122 = vld [vmem:[#allocation3 + $0x110] sm:$0xff]
        %v4123 = vld [vmem:[#allocation3 + $0x118] sm:$0xff]
        %v4124 = vld [vmem:[#allocation3 + $0x120] sm:$0xf]
        %v4125 = vld [vmem:[#allocation3 + $0x128] sm:$0xf]
        %v4126 = vld [vmem:[#allocation3 + $0x130] sm:$0xf]
        %v4127 = vld [vmem:[#allocation3 + $0x138] sm:$0xf]
        %v4128 = vld [vmem:[#allocation3 + $0x140] sm:$0xf]
        %v4129 = vld [vmem:[#allocation3 + $0x148] sm:$0xf]
        %v4130 = vld [vmem:[#allocation3 + $0x150] sm:$0xf]
        %v4131 = vld [vmem:[#allocation3 + $0x158] sm:$0xf]
        %v4132 = vld [vmem:[#allocation3 + $0x160] sm:$0xf]
        %v4133 = vld [vmem:[#allocation3 + $0x168] sm:$0xf]
        %v4134 = vld [vmem:[#allocation3 + $0x170] sm:$0xf]
        %v4135 = vld [vmem:[#allocation3 + $0x178] sm:$0xf]
        %v4136 = vpack.c.bf16 %v4100, %v4088
        %v4137 = vpack.c.bf16 %v4101, %v4089
        %v4138 = vpack.c.bf16 %v4102, %v4090
        %v4139 = vpack.c.bf16 %v4103, %v4091
        %v4140 = vpack.c.bf16 %v4104, %v4092
        %v4141 = vpack.c.bf16 %v4105, %v4093
        %v4142 = vpack.c.bf16 %v4106, %v4094
        %v4143 = vpack.c.bf16 %v4107, %v4095
        %v4144 = vpack.c.bf16 %v4108, %v4096
        %v4145 = vpack.c.bf16 %v4109, %v4097
        %v4146 = vpack.c.bf16 %v4110, %v4098
        %v4147 = vpack.c.bf16 %v4111, %v4099
        %v4148 = vpack.c.bf16 %v4124, %v4112
        %v4149 = vpack.c.bf16 %v4125, %v4113
        %v4150 = vpack.c.bf16 %v4126, %v4114
        %v4151 = vpack.c.bf16 %v4127, %v4115
        %v4152 = vpack.c.bf16 %v4128, %v4116
        %v4153 = vpack.c.bf16 %v4129, %v4117
        %v4154 = vpack.c.bf16 %v4130, %v4118
        %v4155 = vpack.c.bf16 %v4131, %v4119
        %v4156 = vpack.c.bf16 %v4132, %v4120
        %v4157 = vpack.c.bf16 %v4133, %v4121
        %v4158 = vpack.c.bf16 %v4134, %v4122
        %v4159 = vpack.c.bf16 %v4135, %v4123
        %v4160 = vld [vmem:[%s3] sm:$0xff]
        %v4161 = vld [vmem:[%s3 + $0x8] sm:$0xff]
        %v4162 = vld [vmem:[%s3 + $0x10] sm:$0xff]
        %v4163 = vld [vmem:[%s3 + $0x18] sm:$0xff]
        %v4164 = vld [vmem:[%s3 + $0x20] sm:$0xff]
        %v4165 = vld [vmem:[%s3 + $0x28] sm:$0xff]
        %v4166 = vld [vmem:[%s3 + $0x30] sm:$0xff]
        %v4167 = vld [vmem:[%s3 + $0x38] sm:$0xff]
        %v4168 = vld [vmem:[%s3 + $0x40] sm:$0xff]
        %v4169 = vld [vmem:[%s3 + $0x48] sm:$0xff]
        %v4170 = vld [vmem:[%s3 + $0x50] sm:$0xff]
        %v4171 = vld [vmem:[%s3 + $0x58] sm:$0xff]
        %v4172 = vld [vmem:[%s3 + $0x60] sm:$0xff]
        %v4173 = vld [vmem:[%s3 + $0x68] sm:$0xff]
        %v4174 = vld [vmem:[%s3 + $0x70] sm:$0xff]
        %v4175 = vld [vmem:[%s3 + $0x78] sm:$0xff]
        %v4176 = vld [vmem:[%s3 + $0x80] sm:$0xff]
        %v4177 = vld [vmem:[%s3 + $0x88] sm:$0xff]
        %v4178 = vld [vmem:[%s3 + $0x90] sm:$0xff]
        %v4179 = vld [vmem:[%s3 + $0x98] sm:$0xff]
        %v4180 = vld [vmem:[%s3 + $0xa0] sm:$0xff]
        %v4181 = vld [vmem:[%s3 + $0xa8] sm:$0xff]
        %v4182 = vld [vmem:[%s3 + $0xb0] sm:$0xff]
        %v4183 = vld [vmem:[%s3 + $0xb8] sm:$0xff]
        %v4184 = vld [vmem:[%s3 + $0xc0] sm:$0xff]
        %v4185 = vld [vmem:[%s3 + $0xc8] sm:$0xff]
        %v4186 = vld [vmem:[%s3 + $0xd0] sm:$0xff]
        %v4187 = vld [vmem:[%s3 + $0xd8] sm:$0xff]
        %v4188 = vld [vmem:[%s3 + $0xe0] sm:$0xff]
        %v4189 = vld [vmem:[%s3 + $0xe8] sm:$0xff]
        %v4190 = vld [vmem:[%s3 + $0xf0] sm:$0xff]
        %v4191 = vld [vmem:[%s3 + $0xf8] sm:$0xff]
        %v4192 = vld [vmem:[%s3 + $0x100] sm:$0xff]
        %v4193 = vld [vmem:[%s3 + $0x108] sm:$0xff]
        %v4194 = vld [vmem:[%s3 + $0x110] sm:$0xff]
        %v4195 = vld [vmem:[%s3 + $0x118] sm:$0xff]
        %v4196 = vld [vmem:[%s3 + $0x120] sm:$0xff]
        %v4197 = vld [vmem:[%s3 + $0x128] sm:$0xff]
        %v4198 = vld [vmem:[%s3 + $0x130] sm:$0xff]
        %v4199 = vld [vmem:[%s3 + $0x138] sm:$0xff]
        %v4200 = vld [vmem:[%s3 + $0x140] sm:$0xff]
        %v4201 = vld [vmem:[%s3 + $0x148] sm:$0xff]
        %v4202 = vld [vmem:[%s3 + $0x150] sm:$0xff]
        %v4203 = vld [vmem:[%s3 + $0x158] sm:$0xff]
        %v4204 = vld [vmem:[%s3 + $0x160] sm:$0xff]
        %v4205 = vld [vmem:[%s3 + $0x168] sm:$0xff]
        %v4206 = vld [vmem:[%s3 + $0x170] sm:$0xff]
        %v4207 = vld [vmem:[%s3 + $0x178] sm:$0xff]
        %v4208 = vld [vmem:[%s3 + $0x180] sm:$0xff]
        %v4209 = vld [vmem:[%s3 + $0x188] sm:$0xff]
        %v4210 = vld [vmem:[%s3 + $0x190] sm:$0xff]
        %v4211 = vld [vmem:[%s3 + $0x198] sm:$0xff]
        %v4212 = vld [vmem:[%s3 + $0x1a0] sm:$0xff]
        %v4213 = vld [vmem:[%s3 + $0x1a8] sm:$0xff]
        %v4214 = vld [vmem:[%s3 + $0x1b0] sm:$0xff]
        %v4215 = vld [vmem:[%s3 + $0x1b8] sm:$0xff]
        %v4216 = vld [vmem:[%s3 + $0x1c0] sm:$0xff]
        %v4217 = vld [vmem:[%s3 + $0x1c8] sm:$0xff]
        %v4218 = vld [vmem:[%s3 + $0x1d0] sm:$0xff]
        %v4219 = vld [vmem:[%s3 + $0x1d8] sm:$0xff]
        %v4220 = vld [vmem:[%s3 + $0x1e0] sm:$0xff]
        %v4221 = vld [vmem:[%s3 + $0x1e8] sm:$0xff]
        %v4222 = vld [vmem:[%s3 + $0x1f0] sm:$0xff]
        %v4223 = vld [vmem:[%s3 + $0x1f8] sm:$0xff]
        %v4224 = vld [vmem:[%s3 + $0x200] sm:$0xff]
        %v4225 = vld [vmem:[%s3 + $0x208] sm:$0xff]
        %v4226 = vld [vmem:[%s3 + $0x210] sm:$0xff]
        %v4227 = vld [vmem:[%s3 + $0x218] sm:$0xff]
        %v4228 = vld [vmem:[%s3 + $0x220] sm:$0xff]
        %v4229 = vld [vmem:[%s3 + $0x228] sm:$0xff]
        %v4230 = vld [vmem:[%s3 + $0x230] sm:$0xff]
        %v4231 = vld [vmem:[%s3 + $0x238] sm:$0xff]
        %v4232 = vld [vmem:[%s3 + $0x240] sm:$0xff]
        %v4233 = vld [vmem:[%s3 + $0x248] sm:$0xff]
        %v4234 = vld [vmem:[%s3 + $0x250] sm:$0xff]
        %v4235 = vld [vmem:[%s3 + $0x258] sm:$0xff]
        %v4236 = vld [vmem:[%s3 + $0x260] sm:$0xff]
        %v4237 = vld [vmem:[%s3 + $0x268] sm:$0xff]
        %v4238 = vld [vmem:[%s3 + $0x270] sm:$0xff]
        %v4239 = vld [vmem:[%s3 + $0x278] sm:$0xff]
        %v4240 = vld [vmem:[%s3 + $0x280] sm:$0xff]
        %v4241 = vld [vmem:[%s3 + $0x288] sm:$0xff]
        %v4242 = vld [vmem:[%s3 + $0x290] sm:$0xff]
        %v4243 = vld [vmem:[%s3 + $0x298] sm:$0xff]
        %v4244 = vld [vmem:[%s3 + $0x2a0] sm:$0xff]
        %v4245 = vld [vmem:[%s3 + $0x2a8] sm:$0xff]
        %v4246 = vld [vmem:[%s3 + $0x2b0] sm:$0xff]
        %v4247 = vld [vmem:[%s3 + $0x2b8] sm:$0xff]
        %v4248 = vld [vmem:[%s3 + $0x2c0] sm:$0xff]
        %v4249 = vld [vmem:[%s3 + $0x2c8] sm:$0xff]
        %v4250 = vld [vmem:[%s3 + $0x2d0] sm:$0xff]
        %v4251 = vld [vmem:[%s3 + $0x2d8] sm:$0xff]
        %v4252 = vld [vmem:[%s3 + $0x2e0] sm:$0xff]
        %v4253 = vld [vmem:[%s3 + $0x2e8] sm:$0xff]
        %v4254 = vld [vmem:[%s3 + $0x2f0] sm:$0xff]
        %v4255 = vld [vmem:[%s3 + $0x2f8] sm:$0xff]
        %v4256 = vld [vmem:[%s3 + $0x300] sm:$0xff]
        %v4257 = vld [vmem:[%s3 + $0x308] sm:$0xff]
        %v4258 = vld [vmem:[%s3 + $0x310] sm:$0xff]
        %v4259 = vld [vmem:[%s3 + $0x318] sm:$0xff]
        %v4260 = vld [vmem:[%s3 + $0x320] sm:$0xff]
        %v4261 = vld [vmem:[%s3 + $0x328] sm:$0xff]
        %v4262 = vld [vmem:[%s3 + $0x330] sm:$0xff]
        %v4263 = vld [vmem:[%s3 + $0x338] sm:$0xff]
        %v4264 = vld [vmem:[%s3 + $0x340] sm:$0xff]
        %v4265 = vld [vmem:[%s3 + $0x348] sm:$0xff]
        %v4266 = vld [vmem:[%s3 + $0x350] sm:$0xff]
        %v4267 = vld [vmem:[%s3 + $0x358] sm:$0xff]
        %v4268 = vld [vmem:[%s3 + $0x360] sm:$0xff]
        %v4269 = vld [vmem:[%s3 + $0x368] sm:$0xff]
        %v4270 = vld [vmem:[%s3 + $0x370] sm:$0xff]
        %v4271 = vld [vmem:[%s3 + $0x378] sm:$0xff]
        %v4272 = vld [vmem:[%s3 + $0x380] sm:$0xff]
        %v4273 = vld [vmem:[%s3 + $0x388] sm:$0xff]
        %v4274 = vld [vmem:[%s3 + $0x390] sm:$0xff]
        %v4275 = vld [vmem:[%s3 + $0x398] sm:$0xff]
        %v4276 = vld [vmem:[%s3 + $0x3a0] sm:$0xff]
        %v4277 = vld [vmem:[%s3 + $0x3a8] sm:$0xff]
        %v4278 = vld [vmem:[%s3 + $0x3b0] sm:$0xff]
        %v4279 = vld [vmem:[%s3 + $0x3b8] sm:$0xff]
        %v4280 = vld [vmem:[%s3 + $0x3c0] sm:$0xff]
        %v4281 = vld [vmem:[%s3 + $0x3c8] sm:$0xff]
        %v4282 = vld [vmem:[%s3 + $0x3d0] sm:$0xff]
        %v4283 = vld [vmem:[%s3 + $0x3d8] sm:$0xff]
        %v4284 = vld [vmem:[%s3 + $0x3e0] sm:$0xff]
        %v4285 = vld [vmem:[%s3 + $0x3e8] sm:$0xff]
        %v4286 = vld [vmem:[%s3 + $0x3f0] sm:$0xff]
        %v4287 = vld [vmem:[%s3 + $0x3f8] sm:$0xff]
        %v4288 = vld [vmem:[%s3 + $0x400] sm:$0xff]
        %v4289 = vld [vmem:[%s3 + $0x408] sm:$0xff]
        %v4290 = vld [vmem:[%s3 + $0x410] sm:$0xff]
        %v4291 = vld [vmem:[%s3 + $0x418] sm:$0xff]
        %v4292 = vld [vmem:[%s3 + $0x420] sm:$0xff]
        %v4293 = vld [vmem:[%s3 + $0x428] sm:$0xff]
        %v4294 = vld [vmem:[%s3 + $0x430] sm:$0xff]
        %v4295 = vld [vmem:[%s3 + $0x438] sm:$0xff]
        %v4296 = vld [vmem:[%s3 + $0x440] sm:$0xff]
        %v4297 = vld [vmem:[%s3 + $0x448] sm:$0xff]
        %v4298 = vld [vmem:[%s3 + $0x450] sm:$0xff]
        %v4299 = vld [vmem:[%s3 + $0x458] sm:$0xff]
        %v4300 = vld [vmem:[%s3 + $0x460] sm:$0xff]
        %v4301 = vld [vmem:[%s3 + $0x468] sm:$0xff]
        %v4302 = vld [vmem:[%s3 + $0x470] sm:$0xff]
        %v4303 = vld [vmem:[%s3 + $0x478] sm:$0xff]
        %v4304 = vld [vmem:[%s3 + $0x480] sm:$0xff]
        %v4305 = vld [vmem:[%s3 + $0x488] sm:$0xff]
        %v4306 = vld [vmem:[%s3 + $0x490] sm:$0xff]
        %v4307 = vld [vmem:[%s3 + $0x498] sm:$0xff]
        %v4308 = vld [vmem:[%s3 + $0x4a0] sm:$0xff]
        %v4309 = vld [vmem:[%s3 + $0x4a8] sm:$0xff]
        %v4310 = vld [vmem:[%s3 + $0x4b0] sm:$0xff]
        %v4311 = vld [vmem:[%s3 + $0x4b8] sm:$0xff]
        %v4312 = vld [vmem:[%s3 + $0x4c0] sm:$0xff]
        %v4313 = vld [vmem:[%s3 + $0x4c8] sm:$0xff]
        %v4314 = vld [vmem:[%s3 + $0x4d0] sm:$0xff]
        %v4315 = vld [vmem:[%s3 + $0x4d8] sm:$0xff]
        %v4316 = vld [vmem:[%s3 + $0x4e0] sm:$0xff]
        %v4317 = vld [vmem:[%s3 + $0x4e8] sm:$0xff]
        %v4318 = vld [vmem:[%s3 + $0x4f0] sm:$0xff]
        %v4319 = vld [vmem:[%s3 + $0x4f8] sm:$0xff]
        %v4320 = vld [vmem:[%s3 + $0x500] sm:$0xff]
        %v4321 = vld [vmem:[%s3 + $0x508] sm:$0xff]
        %v4322 = vld [vmem:[%s3 + $0x510] sm:$0xff]
        %v4323 = vld [vmem:[%s3 + $0x518] sm:$0xff]
        %v4324 = vld [vmem:[%s3 + $0x520] sm:$0xff]
        %v4325 = vld [vmem:[%s3 + $0x528] sm:$0xff]
        %v4326 = vld [vmem:[%s3 + $0x530] sm:$0xff]
        %v4327 = vld [vmem:[%s3 + $0x538] sm:$0xff]
        %v4328 = vld [vmem:[%s3 + $0x540] sm:$0xff]
        %v4329 = vld [vmem:[%s3 + $0x548] sm:$0xff]
        %v4330 = vld [vmem:[%s3 + $0x550] sm:$0xff]
        %v4331 = vld [vmem:[%s3 + $0x558] sm:$0xff]
        %v4332 = vld [vmem:[%s3 + $0x560] sm:$0xff]
        %v4333 = vld [vmem:[%s3 + $0x568] sm:$0xff]
        %v4334 = vld [vmem:[%s3 + $0x570] sm:$0xff]
        %v4335 = vld [vmem:[%s3 + $0x578] sm:$0xff]
        %v4336 = vld [vmem:[%s3 + $0x580] sm:$0xff]
        %v4337 = vld [vmem:[%s3 + $0x588] sm:$0xff]
        %v4338 = vld [vmem:[%s3 + $0x590] sm:$0xff]
        %v4339 = vld [vmem:[%s3 + $0x598] sm:$0xff]
        %v4340 = vld [vmem:[%s3 + $0x5a0] sm:$0xff]
        %v4341 = vld [vmem:[%s3 + $0x5a8] sm:$0xff]
        %v4342 = vld [vmem:[%s3 + $0x5b0] sm:$0xff]
        %v4343 = vld [vmem:[%s3 + $0x5b8] sm:$0xff]
        %v4344 = vld [vmem:[%s3 + $0x5c0] sm:$0xff]
        %v4345 = vld [vmem:[%s3 + $0x5c8] sm:$0xff]
        %v4346 = vld [vmem:[%s3 + $0x5d0] sm:$0xff]
        %v4347 = vld [vmem:[%s3 + $0x5d8] sm:$0xff]
        %v4348 = vld [vmem:[%s3 + $0x5e0] sm:$0xff]
        %v4538 = vunpack.c.l.b16 %v4160
        %v4539 = vunpack.c.h.b16 %v4160
        %v4540 = vunpack.c.l.b16 %v4161
        %v4541 = vunpack.c.h.b16 %v4161
        %v4542 = vunpack.c.l.b16 %v4162
        %v4543 = vunpack.c.h.b16 %v4162
        %v4544 = vunpack.c.l.b16 %v4163
        %v4545 = vunpack.c.h.b16 %v4163
        %v4546 = vunpack.c.l.b16 %v4164
        %v4547 = vunpack.c.h.b16 %v4164
        %v4548 = vunpack.c.l.b16 %v4165
        %v4549 = vunpack.c.h.b16 %v4165
        %v4550 = vunpack.c.l.b16 %v4166
        %v4551 = vunpack.c.h.b16 %v4166
        %v4552 = vunpack.c.l.b16 %v4167
        %v4553 = vunpack.c.h.b16 %v4167
        %v4554 = vunpack.c.l.b16 %v4168
        %v4555 = vunpack.c.h.b16 %v4168
        %v4556 = vunpack.c.l.b16 %v4169
        %v4557 = vunpack.c.h.b16 %v4169
        %v4558 = vunpack.c.l.b16 %v4170
        %v4559 = vunpack.c.h.b16 %v4170
        %v4560 = vunpack.c.l.b16 %v4171
        %v4561 = vunpack.c.h.b16 %v4171
        %v4562 = vunpack.c.l.b16 %v4172
        %v4563 = vunpack.c.h.b16 %v4172
        %v4564 = vunpack.c.l.b16 %v4173
        %v4565 = vunpack.c.h.b16 %v4173
        %v4566 = vunpack.c.l.b16 %v4174
        %v4567 = vunpack.c.h.b16 %v4174
        %v4568 = vunpack.c.l.b16 %v4175
        %v4569 = vunpack.c.h.b16 %v4175
        %v4570 = vunpack.c.l.b16 %v4176
        %v4571 = vunpack.c.h.b16 %v4176
        %v4572 = vunpack.c.l.b16 %v4177
        %v4573 = vunpack.c.h.b16 %v4177
        %v4574 = vunpack.c.l.b16 %v4178
        %v4575 = vunpack.c.h.b16 %v4178
        %v4576 = vunpack.c.l.b16 %v4179
        %v4577 = vunpack.c.h.b16 %v4179
        %v4578 = vunpack.c.l.b16 %v4180
        %v4579 = vunpack.c.h.b16 %v4180
        %v4580 = vunpack.c.l.b16 %v4181
        %v4581 = vunpack.c.h.b16 %v4181
        %v4582 = vunpack.c.l.b16 %v4182
        %v4583 = vunpack.c.h.b16 %v4182
        %v4584 = vunpack.c.l.b16 %v4183
        %v4585 = vunpack.c.h.b16 %v4183
        %v4586 = vunpack.c.l.b16 %v4184
        %v4587 = vunpack.c.h.b16 %v4184
        %v4588 = vunpack.c.l.b16 %v4185
        %v4589 = vunpack.c.h.b16 %v4185
        %v4590 = vunpack.c.l.b16 %v4186
        %v4591 = vunpack.c.h.b16 %v4186
        %v4592 = vunpack.c.l.b16 %v4187
        %v4593 = vunpack.c.h.b16 %v4187
        %v4594 = vunpack.c.l.b16 %v4188
        %v4595 = vunpack.c.h.b16 %v4188
        %v4596 = vunpack.c.l.b16 %v4189
        %v4597 = vunpack.c.h.b16 %v4189
        %v4598 = vunpack.c.l.b16 %v4190
        %v4599 = vunpack.c.h.b16 %v4190
        %v4600 = vunpack.c.l.b16 %v4191
        %v4601 = vunpack.c.h.b16 %v4191
        %v4602 = vunpack.c.l.b16 %v4192
        %v4603 = vunpack.c.h.b16 %v4192
        %v4604 = vunpack.c.l.b16 %v4193
        %v4605 = vunpack.c.h.b16 %v4193
        %v4606 = vunpack.c.l.b16 %v4194
        %v4607 = vunpack.c.h.b16 %v4194
        %v4608 = vunpack.c.l.b16 %v4195
        %v4609 = vunpack.c.h.b16 %v4195
        %v4610 = vunpack.c.l.b16 %v4196
        %v4611 = vunpack.c.h.b16 %v4196
        %v4612 = vunpack.c.l.b16 %v4197
        %v4613 = vunpack.c.h.b16 %v4197
        %v4614 = vunpack.c.l.b16 %v4198
        %v4615 = vunpack.c.h.b16 %v4198
        %v4616 = vunpack.c.l.b16 %v4199
        %v4617 = vunpack.c.h.b16 %v4199
        %v4618 = vunpack.c.l.b16 %v4200
        %v4619 = vunpack.c.h.b16 %v4200
        %v4620 = vunpack.c.l.b16 %v4201
        %v4621 = vunpack.c.h.b16 %v4201
        %v4622 = vunpack.c.l.b16 %v4202
        %v4623 = vunpack.c.h.b16 %v4202
        %v4624 = vunpack.c.l.b16 %v4203
        %v4625 = vunpack.c.h.b16 %v4203
        %v4626 = vunpack.c.l.b16 %v4204
        %v4627 = vunpack.c.h.b16 %v4204
        %v4628 = vunpack.c.l.b16 %v4205
        %v4629 = vunpack.c.h.b16 %v4205
        %v4630 = vunpack.c.l.b16 %v4206
        %v4631 = vunpack.c.h.b16 %v4206
        %v4632 = vunpack.c.l.b16 %v4207
        %v4633 = vunpack.c.h.b16 %v4207
        %v4634 = vunpack.c.l.b16 %v4208
        %v4635 = vunpack.c.h.b16 %v4208
        %v4636 = vunpack.c.l.b16 %v4209
        %v4637 = vunpack.c.h.b16 %v4209
        %v4638 = vunpack.c.l.b16 %v4210
        %v4639 = vunpack.c.h.b16 %v4210
        %v4640 = vunpack.c.l.b16 %v4211
        %v4641 = vunpack.c.h.b16 %v4211
        %v4642 = vunpack.c.l.b16 %v4212
        %v4643 = vunpack.c.h.b16 %v4212
        %v4644 = vunpack.c.l.b16 %v4213
        %v4645 = vunpack.c.h.b16 %v4213
        %v4646 = vunpack.c.l.b16 %v4214
        %v4647 = vunpack.c.h.b16 %v4214
        %v4648 = vunpack.c.l.b16 %v4215
        %v4649 = vunpack.c.h.b16 %v4215
        %v4650 = vunpack.c.l.b16 %v4216
        %v4651 = vunpack.c.h.b16 %v4216
        %v4652 = vunpack.c.l.b16 %v4217
        %v4653 = vunpack.c.h.b16 %v4217
        %v4654 = vunpack.c.l.b16 %v4218
        %v4655 = vunpack.c.h.b16 %v4218
        %v4656 = vunpack.c.l.b16 %v4219
        %v4657 = vunpack.c.h.b16 %v4219
        %v4658 = vunpack.c.l.b16 %v4220
        %v4659 = vunpack.c.h.b16 %v4220
        %v4660 = vunpack.c.l.b16 %v4221
        %v4661 = vunpack.c.h.b16 %v4221
        %v4662 = vunpack.c.l.b16 %v4222
        %v4663 = vunpack.c.h.b16 %v4222
        %v4664 = vunpack.c.l.b16 %v4223
        %v4665 = vunpack.c.h.b16 %v4223
        %v4666 = vunpack.c.l.b16 %v4224
        %v4667 = vunpack.c.h.b16 %v4224
        %v4668 = vunpack.c.l.b16 %v4225
        %v4669 = vunpack.c.h.b16 %v4225
        %v4670 = vunpack.c.l.b16 %v4226
        %v4671 = vunpack.c.h.b16 %v4226
        %v4672 = vunpack.c.l.b16 %v4227
        %v4673 = vunpack.c.h.b16 %v4227
        %v4674 = vunpack.c.l.b16 %v4228
        %v4675 = vunpack.c.h.b16 %v4228
        %v4676 = vunpack.c.l.b16 %v4229
        %v4677 = vunpack.c.h.b16 %v4229
        %v4678 = vunpack.c.l.b16 %v4230
        %v4679 = vunpack.c.h.b16 %v4230
        %v4680 = vunpack.c.l.b16 %v4231
        %v4681 = vunpack.c.h.b16 %v4231
        %v4682 = vunpack.c.l.b16 %v4232
        %v4683 = vunpack.c.h.b16 %v4232
        %v4684 = vunpack.c.l.b16 %v4233
        %v4685 = vunpack.c.h.b16 %v4233
        %v4686 = vunpack.c.l.b16 %v4234
        %v4687 = vunpack.c.h.b16 %v4234
        %v4688 = vunpack.c.l.b16 %v4235
        %v4689 = vunpack.c.h.b16 %v4235
        %v4690 = vunpack.c.l.b16 %v4236
        %v4691 = vunpack.c.h.b16 %v4236
        %v4692 = vunpack.c.l.b16 %v4237
        %v4693 = vunpack.c.h.b16 %v4237
        %v4694 = vunpack.c.l.b16 %v4238
        %v4695 = vunpack.c.h.b16 %v4238
        %v4696 = vunpack.c.l.b16 %v4239
        %v4697 = vunpack.c.h.b16 %v4239
        %v4698 = vunpack.c.l.b16 %v4240
        %v4699 = vunpack.c.h.b16 %v4240
        %v4700 = vunpack.c.l.b16 %v4241
        %v4701 = vunpack.c.h.b16 %v4241
        %v4702 = vunpack.c.l.b16 %v4242
        %v4703 = vunpack.c.h.b16 %v4242
        %v4704 = vunpack.c.l.b16 %v4243
        %v4705 = vunpack.c.h.b16 %v4243
        %v4706 = vunpack.c.l.b16 %v4244
        %v4707 = vunpack.c.h.b16 %v4244
        %v4708 = vunpack.c.l.b16 %v4245
        %v4709 = vunpack.c.h.b16 %v4245
        %v4710 = vunpack.c.l.b16 %v4246
        %v4711 = vunpack.c.h.b16 %v4246
        %v4712 = vunpack.c.l.b16 %v4247
        %v4713 = vunpack.c.h.b16 %v4247
        %v4714 = vunpack.c.l.b16 %v4248
        %v4715 = vunpack.c.h.b16 %v4248
        %v4716 = vunpack.c.l.b16 %v4249
        %v4717 = vunpack.c.h.b16 %v4249
        %v4718 = vunpack.c.l.b16 %v4250
        %v4719 = vunpack.c.h.b16 %v4250
        %v4720 = vunpack.c.l.b16 %v4251
        %v4721 = vunpack.c.h.b16 %v4251
        %v4722 = vunpack.c.l.b16 %v4252
        %v4723 = vunpack.c.h.b16 %v4252
        %v4724 = vunpack.c.l.b16 %v4253
        %v4725 = vunpack.c.h.b16 %v4253
        %v4726 = vunpack.c.l.b16 %v4254
        %v4727 = vunpack.c.h.b16 %v4254
        %v4728 = vunpack.c.l.b16 %v4255
        %v4729 = vunpack.c.h.b16 %v4255
        %v4730 = vunpack.c.l.b16 %v4256
        %v4731 = vunpack.c.h.b16 %v4256
        %v4732 = vunpack.c.l.b16 %v4257
        %v4733 = vunpack.c.h.b16 %v4257
        %v4734 = vunpack.c.l.b16 %v4258
        %v4735 = vunpack.c.h.b16 %v4258
        %v4736 = vunpack.c.l.b16 %v4259
        %v4737 = vunpack.c.h.b16 %v4259
        %v4738 = vunpack.c.l.b16 %v4260
        %v4739 = vunpack.c.h.b16 %v4260
        %v4740 = vunpack.c.l.b16 %v4261
        %v4741 = vunpack.c.h.b16 %v4261
        %v4742 = vunpack.c.l.b16 %v4262
        %v4743 = vunpack.c.h.b16 %v4262
        %v4744 = vunpack.c.l.b16 %v4263
        %v4745 = vunpack.c.h.b16 %v4263
        %v4746 = vunpack.c.l.b16 %v4264
        %v4747 = vunpack.c.h.b16 %v4264
        %v4748 = vunpack.c.l.b16 %v4265
        %v4749 = vunpack.c.h.b16 %v4265
        %v4750 = vunpack.c.l.b16 %v4266
        %v4751 = vunpack.c.h.b16 %v4266
        %v4752 = vunpack.c.l.b16 %v4267
        %v4753 = vunpack.c.h.b16 %v4267
        %v4754 = vunpack.c.l.b16 %v4268
        %v4755 = vunpack.c.h.b16 %v4268
        %v4756 = vunpack.c.l.b16 %v4269
        %v4757 = vunpack.c.h.b16 %v4269
        %v4758 = vunpack.c.l.b16 %v4270
        %v4759 = vunpack.c.h.b16 %v4270
        %v4760 = vunpack.c.l.b16 %v4271
        %v4761 = vunpack.c.h.b16 %v4271
        %v4762 = vunpack.c.l.b16 %v4272
        %v4763 = vunpack.c.h.b16 %v4272
        %v4764 = vunpack.c.l.b16 %v4273
        %v4765 = vunpack.c.h.b16 %v4273
        %v4766 = vunpack.c.l.b16 %v4274
        %v4767 = vunpack.c.h.b16 %v4274
        %v4768 = vunpack.c.l.b16 %v4275
        %v4769 = vunpack.c.h.b16 %v4275
        %v4770 = vunpack.c.l.b16 %v4276
        %v4771 = vunpack.c.h.b16 %v4276
        %v4772 = vunpack.c.l.b16 %v4277
        %v4773 = vunpack.c.h.b16 %v4277
        %v4774 = vunpack.c.l.b16 %v4278
        %v4775 = vunpack.c.h.b16 %v4278
        %v4776 = vunpack.c.l.b16 %v4279
        %v4777 = vunpack.c.h.b16 %v4279
        %v4778 = vunpack.c.l.b16 %v4280
        %v4779 = vunpack.c.h.b16 %v4280
        %v4780 = vunpack.c.l.b16 %v4281
        %v4781 = vunpack.c.h.b16 %v4281
        %v4782 = vunpack.c.l.b16 %v4282
        %v4783 = vunpack.c.h.b16 %v4282
        %v4784 = vunpack.c.l.b16 %v4283
        %v4785 = vunpack.c.h.b16 %v4283
        %v4786 = vunpack.c.l.b16 %v4284
        %v4787 = vunpack.c.h.b16 %v4284
        %v4788 = vunpack.c.l.b16 %v4285
        %v4789 = vunpack.c.h.b16 %v4285
        %v4790 = vunpack.c.l.b16 %v4286
        %v4791 = vunpack.c.h.b16 %v4286
        %v4792 = vunpack.c.l.b16 %v4287
        %v4793 = vunpack.c.h.b16 %v4287
        %v4794 = vunpack.c.l.b16 %v4288
        %v4795 = vunpack.c.h.b16 %v4288
        %v4796 = vunpack.c.l.b16 %v4289
        %v4797 = vunpack.c.h.b16 %v4289
        %v4798 = vunpack.c.l.b16 %v4290
        %v4799 = vunpack.c.h.b16 %v4290
        %v4800 = vunpack.c.l.b16 %v4291
        %v4801 = vunpack.c.h.b16 %v4291
        %v4802 = vunpack.c.l.b16 %v4292
        %v4803 = vunpack.c.h.b16 %v4292
        %v4804 = vunpack.c.l.b16 %v4293
        %v4805 = vunpack.c.h.b16 %v4293
        %v4806 = vunpack.c.l.b16 %v4294
        %v4807 = vunpack.c.h.b16 %v4294
        %v4808 = vunpack.c.l.b16 %v4295
        %v4809 = vunpack.c.h.b16 %v4295
        %v4810 = vunpack.c.l.b16 %v4296
        %v4811 = vunpack.c.h.b16 %v4296
        %v4812 = vunpack.c.l.b16 %v4297
        %v4813 = vunpack.c.h.b16 %v4297
        %v4814 = vunpack.c.l.b16 %v4298
        %v4815 = vunpack.c.h.b16 %v4298
        %v4816 = vunpack.c.l.b16 %v4299
        %v4817 = vunpack.c.h.b16 %v4299
        %v4818 = vunpack.c.l.b16 %v4300
        %v4819 = vunpack.c.h.b16 %v4300
        %v4820 = vunpack.c.l.b16 %v4301
        %v4821 = vunpack.c.h.b16 %v4301
        %v4822 = vunpack.c.l.b16 %v4302
        %v4823 = vunpack.c.h.b16 %v4302
        %v4824 = vunpack.c.l.b16 %v4303
        %v4825 = vunpack.c.h.b16 %v4303
        %v4826 = vunpack.c.l.b16 %v4304
        %v4827 = vunpack.c.h.b16 %v4304
        %v4828 = vunpack.c.l.b16 %v4305
        %v4829 = vunpack.c.h.b16 %v4305
        %v4830 = vunpack.c.l.b16 %v4306
        %v4831 = vunpack.c.h.b16 %v4306
        %v4832 = vunpack.c.l.b16 %v4307
        %v4833 = vunpack.c.h.b16 %v4307
        %v4834 = vunpack.c.l.b16 %v4308
        %v4835 = vunpack.c.h.b16 %v4308
        %v4836 = vunpack.c.l.b16 %v4309
        %v4837 = vunpack.c.h.b16 %v4309
        %v4838 = vunpack.c.l.b16 %v4310
        %v4839 = vunpack.c.h.b16 %v4310
        %v4840 = vunpack.c.l.b16 %v4311
        %v4841 = vunpack.c.h.b16 %v4311
        %v4842 = vunpack.c.l.b16 %v4312
        %v4843 = vunpack.c.h.b16 %v4312
        %v4844 = vunpack.c.l.b16 %v4313
        %v4845 = vunpack.c.h.b16 %v4313
        %v4846 = vunpack.c.l.b16 %v4314
        %v4847 = vunpack.c.h.b16 %v4314
        %v4848 = vunpack.c.l.b16 %v4315
        %v4849 = vunpack.c.h.b16 %v4315
        %v4850 = vunpack.c.l.b16 %v4316
        %v4851 = vunpack.c.h.b16 %v4316
        %v4852 = vunpack.c.l.b16 %v4317
        %v4853 = vunpack.c.h.b16 %v4317
        %v4854 = vunpack.c.l.b16 %v4318
        %v4855 = vunpack.c.h.b16 %v4318
        %v4856 = vunpack.c.l.b16 %v4319
        %v4857 = vunpack.c.h.b16 %v4319
        %v4858 = vunpack.c.l.b16 %v4320
        %v4859 = vunpack.c.h.b16 %v4320
        %v4860 = vunpack.c.l.b16 %v4321
        %v4861 = vunpack.c.h.b16 %v4321
        %v4862 = vunpack.c.l.b16 %v4322
        %v4863 = vunpack.c.h.b16 %v4322
        %v4864 = vunpack.c.l.b16 %v4323
        %v4865 = vunpack.c.h.b16 %v4323
        %v4866 = vunpack.c.l.b16 %v4324
        %v4867 = vunpack.c.h.b16 %v4324
        %v4868 = vunpack.c.l.b16 %v4325
        %v4869 = vunpack.c.h.b16 %v4325
        %v4870 = vunpack.c.l.b16 %v4326
        %v4871 = vunpack.c.h.b16 %v4326
        %v4872 = vunpack.c.l.b16 %v4327
        %v4873 = vunpack.c.h.b16 %v4327
        %v4874 = vunpack.c.l.b16 %v4328
        %v4875 = vunpack.c.h.b16 %v4328
        %v4876 = vunpack.c.l.b16 %v4329
        %v4877 = vunpack.c.h.b16 %v4329
        %v4878 = vunpack.c.l.b16 %v4330
        %v4879 = vunpack.c.h.b16 %v4330
        %v4880 = vunpack.c.l.b16 %v4331
        %v4881 = vunpack.c.h.b16 %v4331
        %v4882 = vunpack.c.l.b16 %v4332
        %v4883 = vunpack.c.h.b16 %v4332
        %v4884 = vunpack.c.l.b16 %v4333
        %v4885 = vunpack.c.h.b16 %v4333
        %v4886 = vunpack.c.l.b16 %v4334
        %v4887 = vunpack.c.h.b16 %v4334
        %v4888 = vunpack.c.l.b16 %v4335
        %v4889 = vunpack.c.h.b16 %v4335
        %v4890 = vunpack.c.l.b16 %v4336
        %v4891 = vunpack.c.h.b16 %v4336
        %v4892 = vunpack.c.l.b16 %v4337
        %v4893 = vunpack.c.h.b16 %v4337
        %v4894 = vunpack.c.l.b16 %v4338
        %v4895 = vunpack.c.h.b16 %v4338
        %v4896 = vunpack.c.l.b16 %v4339
        %v4897 = vunpack.c.h.b16 %v4339
        %v4898 = vunpack.c.l.b16 %v4340
        %v4899 = vunpack.c.h.b16 %v4340
        %v4900 = vunpack.c.l.b16 %v4341
        %v4901 = vunpack.c.h.b16 %v4341
        %v4902 = vunpack.c.l.b16 %v4342
        %v4903 = vunpack.c.h.b16 %v4342
        %v4904 = vunpack.c.l.b16 %v4343
        %v4905 = vunpack.c.h.b16 %v4343
        %v4906 = vunpack.c.l.b16 %v4344
        %v4907 = vunpack.c.h.b16 %v4344
        %v4908 = vunpack.c.l.b16 %v4345
        %v4909 = vunpack.c.h.b16 %v4345
        %v4910 = vunpack.c.l.b16 %v4346
        %v4911 = vunpack.c.h.b16 %v4346
        %v4912 = vunpack.c.l.b16 %v4347
        %v4913 = vunpack.c.h.b16 %v4347
        %v4914 = vunpack.c.l.b16 %v4348
        %v4915 = vunpack.c.h.b16 %v4348
        %v4916 = vpack.c.b16 %v4540, %v4538
        %v4917 = vpack.c.b16 %v4541, %v4539
        %v4918 = vpack.c.b16 %v4544, %v4542
        %v4919 = vpack.c.b16 %v4545, %v4543
        %v4920 = vpack.c.b16 %v4548, %v4546
        %v4921 = vpack.c.b16 %v4549, %v4547
        %v4922 = vpack.c.b16 %v4552, %v4550
        %v4923 = vpack.c.b16 %v4553, %v4551
        %v4924 = vpack.c.b16 %v4556, %v4554
        %v4925 = vpack.c.b16 %v4557, %v4555
        %v4926 = vpack.c.b16 %v4560, %v4558
        %v4927 = vpack.c.b16 %v4561, %v4559
        %v4928 = vpack.c.b16 %v4564, %v4562
        %v4929 = vpack.c.b16 %v4565, %v4563
        %v4930 = vpack.c.b16 %v4568, %v4566
        %v4931 = vpack.c.b16 %v4569, %v4567
        %v4932 = vpack.c.b16 %v4572, %v4570
        %v4933 = vpack.c.b16 %v4573, %v4571
        %v4934 = vpack.c.b16 %v4576, %v4574
        %v4935 = vpack.c.b16 %v4577, %v4575
        %v4936 = vpack.c.b16 %v4580, %v4578
        %v4937 = vpack.c.b16 %v4581, %v4579
        %v4938 = vpack.c.b16 %v4584, %v4582
        %v4939 = vpack.c.b16 %v4585, %v4583
        %v4940 = vpack.c.b16 %v4588, %v4586
        %v4941 = vpack.c.b16 %v4589, %v4587
        %v4942 = vpack.c.b16 %v4592, %v4590
        %v4943 = vpack.c.b16 %v4593, %v4591
        %v4944 = vpack.c.b16 %v4596, %v4594
        %v4945 = vpack.c.b16 %v4597, %v4595
        %v4946 = vpack.c.b16 %v4600, %v4598
        %v4947 = vpack.c.b16 %v4601, %v4599
        %v4948 = vpack.c.b16 %v4604, %v4602
        %v4949 = vpack.c.b16 %v4605, %v4603
        %v4950 = vpack.c.b16 %v4608, %v4606
        %v4951 = vpack.c.b16 %v4609, %v4607
        %v4952 = vpack.c.b16 %v4612, %v4610
        %v4953 = vpack.c.b16 %v4613, %v4611
        %v4954 = vpack.c.b16 %v4616, %v4614
        %v4955 = vpack.c.b16 %v4617, %v4615
        %v4956 = vpack.c.b16 %v4620, %v4618
        %v4957 = vpack.c.b16 %v4621, %v4619
        %v4958 = vpack.c.b16 %v4624, %v4622
        %v4959 = vpack.c.b16 %v4625, %v4623
        %v4960 = vpack.c.b16 %v4628, %v4626
        %v4961 = vpack.c.b16 %v4629, %v4627
        %v4962 = vpack.c.b16 %v4632, %v4630
        %v4963 = vpack.c.b16 %v4633, %v4631
        %v4964 = vpack.c.b16 %v4636, %v4634
        %v4965 = vpack.c.b16 %v4637, %v4635
        %v4966 = vpack.c.b16 %v4640, %v4638
        %v4967 = vpack.c.b16 %v4641, %v4639
        %v4968 = vpack.c.b16 %v4644, %v4642
        %v4969 = vpack.c.b16 %v4645, %v4643
        %v4970 = vpack.c.b16 %v4648, %v4646
        %v4971 = vpack.c.b16 %v4649, %v4647
        %v4972 = vpack.c.b16 %v4652, %v4650
        %v4973 = vpack.c.b16 %v4653, %v4651
        %v4974 = vpack.c.b16 %v4656, %v4654
        %v4975 = vpack.c.b16 %v4657, %v4655
        %v4976 = vpack.c.b16 %v4660, %v4658
        %v4977 = vpack.c.b16 %v4661, %v4659
        %v4978 = vpack.c.b16 %v4664, %v4662
        %v4979 = vpack.c.b16 %v4665, %v4663
        %v4980 = vpack.c.b16 %v4668, %v4666
        %v4981 = vpack.c.b16 %v4669, %v4667
        %v4982 = vpack.c.b16 %v4672, %v4670
        %v4983 = vpack.c.b16 %v4673, %v4671
        %v4984 = vpack.c.b16 %v4676, %v4674
        %v4985 = vpack.c.b16 %v4677, %v4675
        %v4986 = vpack.c.b16 %v4680, %v4678
        %v4987 = vpack.c.b16 %v4681, %v4679
        %v4988 = vpack.c.b16 %v4684, %v4682
        %v4989 = vpack.c.b16 %v4685, %v4683
        %v4990 = vpack.c.b16 %v4688, %v4686
        %v4991 = vpack.c.b16 %v4689, %v4687
        %v4992 = vpack.c.b16 %v4692, %v4690
        %v4993 = vpack.c.b16 %v4693, %v4691
        %v4994 = vpack.c.b16 %v4696, %v4694
        %v4995 = vpack.c.b16 %v4697, %v4695
        %v4996 = vpack.c.b16 %v4700, %v4698
        %v4997 = vpack.c.b16 %v4701, %v4699
        %v4998 = vpack.c.b16 %v4704, %v4702
        %v4999 = vpack.c.b16 %v4705, %v4703
        %v5000 = vpack.c.b16 %v4708, %v4706
        %v5001 = vpack.c.b16 %v4709, %v4707
        %v5002 = vpack.c.b16 %v4712, %v4710
        %v5003 = vpack.c.b16 %v4713, %v4711
        %v5004 = vpack.c.b16 %v4716, %v4714
        %v5005 = vpack.c.b16 %v4717, %v4715
        %v5006 = vpack.c.b16 %v4720, %v4718
        %v5007 = vpack.c.b16 %v4721, %v4719
        %v5008 = vpack.c.b16 %v4724, %v4722
        %v5009 = vpack.c.b16 %v4725, %v4723
        %v5010 = vpack.c.b16 %v4728, %v4726
        %v5011 = vpack.c.b16 %v4729, %v4727
        %v5012 = vpack.c.b16 %v4732, %v4730
        %v5013 = vpack.c.b16 %v4733, %v4731
        %v5014 = vpack.c.b16 %v4736, %v4734
        %v5015 = vpack.c.b16 %v4737, %v4735
        %v5016 = vpack.c.b16 %v4740, %v4738
        %v5017 = vpack.c.b16 %v4741, %v4739
        %v5018 = vpack.c.b16 %v4744, %v4742
        %v5019 = vpack.c.b16 %v4745, %v4743
        %v5020 = vpack.c.b16 %v4748, %v4746
        %v5021 = vpack.c.b16 %v4749, %v4747
        %v5022 = vpack.c.b16 %v4752, %v4750
        %v5023 = vpack.c.b16 %v4753, %v4751
        %v5024 = vpack.c.b16 %v4756, %v4754
        %v5025 = vpack.c.b16 %v4757, %v4755
        %v5026 = vpack.c.b16 %v4760, %v4758
        %v5027 = vpack.c.b16 %v4761, %v4759
        %v5028 = vpack.c.b16 %v4764, %v4762
        %v5029 = vpack.c.b16 %v4765, %v4763
        %v5030 = vpack.c.b16 %v4768, %v4766
        %v5031 = vpack.c.b16 %v4769, %v4767
        %v5032 = vpack.c.b16 %v4772, %v4770
        %v5033 = vpack.c.b16 %v4773, %v4771
        %v5034 = vpack.c.b16 %v4776, %v4774
        %v5035 = vpack.c.b16 %v4777, %v4775
        %v5036 = vpack.c.b16 %v4780, %v4778
        %v5037 = vpack.c.b16 %v4781, %v4779
        %v5038 = vpack.c.b16 %v4784, %v4782
        %v5039 = vpack.c.b16 %v4785, %v4783
        %v5040 = vpack.c.b16 %v4788, %v4786
        %v5041 = vpack.c.b16 %v4789, %v4787
        %v5042 = vpack.c.b16 %v4792, %v4790
        %v5043 = vpack.c.b16 %v4793, %v4791
        %v5044 = vpack.c.b16 %v4796, %v4794
        %v5045 = vpack.c.b16 %v4797, %v4795
        %v5046 = vpack.c.b16 %v4800, %v4798
        %v5047 = vpack.c.b16 %v4801, %v4799
        %v5048 = vpack.c.b16 %v4804, %v4802
        %v5049 = vpack.c.b16 %v4805, %v4803
        %v5050 = vpack.c.b16 %v4808, %v4806
        %v5051 = vpack.c.b16 %v4809, %v4807
        %v5052 = vpack.c.b16 %v4812, %v4810
        %v5053 = vpack.c.b16 %v4813, %v4811
        %v5054 = vpack.c.b16 %v4816, %v4814
        %v5055 = vpack.c.b16 %v4817, %v4815
        %v5056 = vpack.c.b16 %v4820, %v4818
        %v5057 = vpack.c.b16 %v4821, %v4819
        %v5058 = vpack.c.b16 %v4824, %v4822
        %v5059 = vpack.c.b16 %v4825, %v4823
        %v5060 = vpack.c.b16 %v4828, %v4826
        %v5061 = vpack.c.b16 %v4829, %v4827
        %v5062 = vpack.c.b16 %v4832, %v4830
        %v5063 = vpack.c.b16 %v4833, %v4831
        %v5064 = vpack.c.b16 %v4836, %v4834
        %v5065 = vpack.c.b16 %v4837, %v4835
        %v5066 = vpack.c.b16 %v4840, %v4838
        %v5067 = vpack.c.b16 %v4841, %v4839
        %v5068 = vpack.c.b16 %v4844, %v4842
        %v5069 = vpack.c.b16 %v4845, %v4843
        %v5070 = vpack.c.b16 %v4848, %v4846
        %v5071 = vpack.c.b16 %v4849, %v4847
        %v5072 = vpack.c.b16 %v4852, %v4850
        %v5073 = vpack.c.b16 %v4853, %v4851
        %v5074 = vpack.c.b16 %v4856, %v4854
        %v5075 = vpack.c.b16 %v4857, %v4855
        %v5076 = vpack.c.b16 %v4860, %v4858
        %v5077 = vpack.c.b16 %v4861, %v4859
        %v5078 = vpack.c.b16 %v4864, %v4862
        %v5079 = vpack.c.b16 %v4865, %v4863
        %v5080 = vpack.c.b16 %v4868, %v4866
        %v5081 = vpack.c.b16 %v4869, %v4867
        %v5082 = vpack.c.b16 %v4872, %v4870
        %v5083 = vpack.c.b16 %v4873, %v4871
        %v5084 = vpack.c.b16 %v4876, %v4874
        %v5085 = vpack.c.b16 %v4877, %v4875
        %v5086 = vpack.c.b16 %v4880, %v4878
        %v5087 = vpack.c.b16 %v4881, %v4879
        %v5088 = vpack.c.b16 %v4884, %v4882
        %v5089 = vpack.c.b16 %v4885, %v4883
        %v5090 = vpack.c.b16 %v4888, %v4886
        %v5091 = vpack.c.b16 %v4889, %v4887
        %v5092 = vpack.c.b16 %v4892, %v4890
        %v5093 = vpack.c.b16 %v4893, %v4891
        %v5094 = vpack.c.b16 %v4896, %v4894
        %v5095 = vpack.c.b16 %v4897, %v4895
        %v5096 = vpack.c.b16 %v4900, %v4898
        %v5097 = vpack.c.b16 %v4901, %v4899
        %v5098 = vpack.c.b16 %v4904, %v4902
        %v5099 = vpack.c.b16 %v4905, %v4903
        %v5100 = vpack.c.b16 %v4908, %v4906
        %v5101 = vpack.c.b16 %v4909, %v4907
        %v5102 = vpack.c.b16 %v4912, %v4910
        %v5103 = vpack.c.b16 %v4913, %v4911
        %v5104 = vpack.c.b16 %v4914, %v4914
        %v5105 = vpack.c.b16 %v4915, %v4915
        %v5295 = vsel %vm1665, %v4147, 0
        %v5298 = vsel %vm1665, %v4159, 0
        %v5301 = vsel %vm816, %v5104, 0
        %v5304 = vsel %vm816, %v5105, 0
        %5306 = vmatprep.subr.bf16.mxu0 %v4931
        %5307 = vmatpush1.bf16.msra.mxu0 %v4930
        %5308 = vmatprep.subr.bf16.mxu0 %v4929
        %5309 = vmatpush1.bf16.msra.mxu0 %v4928
        %5310 = vmatprep.subr.bf16.mxu0 %v4927
        %5311 = vmatpush1.bf16.msra.mxu0 %v4926
        %5312 = vmatprep.subr.bf16.mxu0 %v4925
        %5313 = vmatpush1.bf16.msra.mxu0 %v4924
        %5314 = vmatprep.subr.bf16.mxu0 %v4923
        %5315 = vmatpush1.bf16.msra.mxu0 %v4922
        %5316 = vmatprep.subr.bf16.mxu0 %v4921
        %5317 = vmatpush1.bf16.msra.mxu0 %v4920
        %5318 = vmatprep.subr.bf16.mxu0 %v4919
        %5319 = vmatpush1.bf16.msra.mxu0 %v4918
        %5320 = vmatprep.subr.bf16.mxu0 %v4917
        %5321 = vmatpush1.bf16.msra.mxu0 %v4916
        %5322 = vmatprep.subr.bf16.mxu0 %v4947
        %5323 = vmatpush2.bf16.msra.mxu0 %v4946
        %5324 = vmatprep.subr.bf16.mxu0 %v4945
        %5325 = vmatpush2.bf16.msra.mxu0 %v4944
        %5326 = vmatprep.subr.bf16.mxu0 %v4943
        %5327 = vmatpush2.bf16.msra.mxu0 %v4942
        %5328 = vmatprep.subr.bf16.mxu0 %v4941
        %5329 = vmatpush2.bf16.msra.mxu0 %v4940
        %5330 = vmatprep.subr.bf16.mxu0 %v4939
        %5331 = vmatpush2.bf16.msra.mxu0 %v4938
        %5332 = vmatprep.subr.bf16.mxu0 %v4937
        %5333 = vmatpush2.bf16.msra.mxu0 %v4936
        %5334 = vmatprep.subr.bf16.mxu0 %v4935
        %5335 = vmatpush2.bf16.msra.mxu0 %v4934
        %5336 = vmatprep.subr.bf16.mxu0 %v4933
        %5337 = vmatpush2.bf16.msra.mxu0 %v4932
        %5338 = vmatprep.mubr.bf16.mxu0 %v4137
        %5339 = vmatmul.mubr.bf16.gmra.mxu0 %v4136
        %v5340 = vpop.f32.mrf.mxu0
        %v5341 = vadd.f32 0.0, %v5340
        %v5342 = vpop.f32.mrf.mxu0
        %v5343 = vadd.f32 0.0, %v5342
        %v5344 = vpop.f32.mrf.mxu0
        %v5345 = vadd.f32 0.0, %v5344
        %v5346 = vpop.f32.mrf.mxu0
        %v5347 = vadd.f32 0.0, %v5346
        %5348 = vmatprep.mubr.bf16.mxu0 %v4149
        %5349 = vmatmul.mubr.bf16.gmra.mxu0 %v4148
        %v5350 = vpop.f32.mrf.mxu0
        %v5351 = vadd.f32 0.0, %v5350
        %v5352 = vpop.f32.mrf.mxu0
        %v5353 = vadd.f32 0.0, %v5352
        %v5354 = vpop.f32.mrf.mxu0
        %v5355 = vadd.f32 0.0, %v5354
        %v5356 = vpop.f32.mrf.mxu0
        %v5357 = vadd.f32 0.0, %v5356
        %5358 = vdwg.mxu0
        %5359 = vmatprep.subr.bf16.mxu0 %v4963
        %5360 = vmatpush1.bf16.msra.mxu0 %v4962
        %5361 = vmatprep.subr.bf16.mxu0 %v4961
        %5362 = vmatpush1.bf16.msra.mxu0 %v4960
        %5363 = vmatprep.subr.bf16.mxu0 %v4959
        %5364 = vmatpush1.bf16.msra.mxu0 %v4958
        %5365 = vmatprep.subr.bf16.mxu0 %v4957
        %5366 = vmatpush1.bf16.msra.mxu0 %v4956
        %5367 = vmatprep.subr.bf16.mxu0 %v4955
        %5368 = vmatpush1.bf16.msra.mxu0 %v4954
        %5369 = vmatprep.subr.bf16.mxu0 %v4953
        %5370 = vmatpush1.bf16.msra.mxu0 %v4952
        %5371 = vmatprep.subr.bf16.mxu0 %v4951
        %5372 = vmatpush1.bf16.msra.mxu0 %v4950
        %5373 = vmatprep.subr.bf16.mxu0 %v4949
        %5374 = vmatpush1.bf16.msra.mxu0 %v4948
        %5375 = vmatprep.subr.bf16.mxu0 %v4979
        %5376 = vmatpush2.bf16.msra.mxu0 %v4978
        %5377 = vmatprep.subr.bf16.mxu0 %v4977
        %5378 = vmatpush2.bf16.msra.mxu0 %v4976
        %5379 = vmatprep.subr.bf16.mxu0 %v4975
        %5380 = vmatpush2.bf16.msra.mxu0 %v4974
        %5381 = vmatprep.subr.bf16.mxu0 %v4973
        %5382 = vmatpush2.bf16.msra.mxu0 %v4972
        %5383 = vmatprep.subr.bf16.mxu0 %v4971
        %5384 = vmatpush2.bf16.msra.mxu0 %v4970
        %5385 = vmatprep.subr.bf16.mxu0 %v4969
        %5386 = vmatpush2.bf16.msra.mxu0 %v4968
        %5387 = vmatprep.subr.bf16.mxu0 %v4967
        %5388 = vmatpush2.bf16.msra.mxu0 %v4966
        %5389 = vmatprep.subr.bf16.mxu0 %v4965
        %5390 = vmatpush2.bf16.msra.mxu0 %v4964
        %5391 = vmatprep.mubr.bf16.mxu0 %v4139
        %5392 = vmatmul.mubr.bf16.gmra.mxu0 %v4138
        %v5393 = vpop.f32.mrf.mxu0
        %v5394 = vadd.f32 %v5341, %v5393
        %v5395 = vpop.f32.mrf.mxu0
        %v5396 = vadd.f32 %v5343, %v5395
        %v5397 = vpop.f32.mrf.mxu0
        %v5398 = vadd.f32 %v5345, %v5397
        %v5399 = vpop.f32.mrf.mxu0
        %v5400 = vadd.f32 %v5347, %v5399
        %5401 = vmatprep.mubr.bf16.mxu0 %v4151
        %5402 = vmatmul.mubr.bf16.gmra.mxu0 %v4150
        %v5403 = vpop.f32.mrf.mxu0
        %v5404 = vadd.f32 %v5351, %v5403
        %v5405 = vpop.f32.mrf.mxu0
        %v5406 = vadd.f32 %v5353, %v5405
        %v5407 = vpop.f32.mrf.mxu0
        %v5408 = vadd.f32 %v5355, %v5407
        %v5409 = vpop.f32.mrf.mxu0
        %v5410 = vadd.f32 %v5357, %v5409
        %5411 = vdwg.mxu0
        %5412 = vmatprep.subr.bf16.mxu0 %v4995
        %5413 = vmatpush1.bf16.msra.mxu0 %v4994
        %5414 = vmatprep.subr.bf16.mxu0 %v4993
        %5415 = vmatpush1.bf16.msra.mxu0 %v4992
        %5416 = vmatprep.subr.bf16.mxu0 %v4991
        %5417 = vmatpush1.bf16.msra.mxu0 %v4990
        %5418 = vmatprep.subr.bf16.mxu0 %v4989
        %5419 = vmatpush1.bf16.msra.mxu0 %v4988
        %5420 = vmatprep.subr.bf16.mxu0 %v4987
        %5421 = vmatpush1.bf16.msra.mxu0 %v4986
        %5422 = vmatprep.subr.bf16.mxu0 %v4985
        %5423 = vmatpush1.bf16.msra.mxu0 %v4984
        %5424 = vmatprep.subr.bf16.mxu0 %v4983
        %5425 = vmatpush1.bf16.msra.mxu0 %v4982
        %5426 = vmatprep.subr.bf16.mxu0 %v4981
        %5427 = vmatpush1.bf16.msra.mxu0 %v4980
        %5428 = vmatprep.subr.bf16.mxu0 %v5011
        %5429 = vmatpush2.bf16.msra.mxu0 %v5010
        %5430 = vmatprep.subr.bf16.mxu0 %v5009
        %5431 = vmatpush2.bf16.msra.mxu0 %v5008
        %5432 = vmatprep.subr.bf16.mxu0 %v5007
        %5433 = vmatpush2.bf16.msra.mxu0 %v5006
        %5434 = vmatprep.subr.bf16.mxu0 %v5005
        %5435 = vmatpush2.bf16.msra.mxu0 %v5004
        %5436 = vmatprep.subr.bf16.mxu0 %v5003
        %5437 = vmatpush2.bf16.msra.mxu0 %v5002
        %5438 = vmatprep.subr.bf16.mxu0 %v5001
        %5439 = vmatpush2.bf16.msra.mxu0 %v5000
        %5440 = vmatprep.subr.bf16.mxu0 %v4999
        %5441 = vmatpush2.bf16.msra.mxu0 %v4998
        %5442 = vmatprep.subr.bf16.mxu0 %v4997
        %5443 = vmatpush2.bf16.msra.mxu0 %v4996
        %5444 = vmatprep.mubr.bf16.mxu0 %v4141
        %5445 = vmatmul.mubr.bf16.gmra.mxu0 %v4140
        %v5446 = vpop.f32.mrf.mxu0
        %v5447 = vadd.f32 %v5394, %v5446
        %v5448 = vpop.f32.mrf.mxu0
        %v5449 = vadd.f32 %v5396, %v5448
        %v5450 = vpop.f32.mrf.mxu0
        %v5451 = vadd.f32 %v5398, %v5450
        %v5452 = vpop.f32.mrf.mxu0
        %v5453 = vadd.f32 %v5400, %v5452
        %5454 = vmatprep.mubr.bf16.mxu0 %v4153
        %5455 = vmatmul.mubr.bf16.gmra.mxu0 %v4152
        %v5456 = vpop.f32.mrf.mxu0
        %v5457 = vadd.f32 %v5404, %v5456
        %v5458 = vpop.f32.mrf.mxu0
        %v5459 = vadd.f32 %v5406, %v5458
        %v5460 = vpop.f32.mrf.mxu0
        %v5461 = vadd.f32 %v5408, %v5460
        %v5462 = vpop.f32.mrf.mxu0
        %v5463 = vadd.f32 %v5410, %v5462
        %5464 = vdwg.mxu0
        %5465 = vmatprep.subr.bf16.mxu0 %v5027
        %5466 = vmatpush1.bf16.msra.mxu0 %v5026
        %5467 = vmatprep.subr.bf16.mxu0 %v5025
        %5468 = vmatpush1.bf16.msra.mxu0 %v5024
        %5469 = vmatprep.subr.bf16.mxu0 %v5023
        %5470 = vmatpush1.bf16.msra.mxu0 %v5022
        %5471 = vmatprep.subr.bf16.mxu0 %v5021
        %5472 = vmatpush1.bf16.msra.mxu0 %v5020
        %5473 = vmatprep.subr.bf16.mxu0 %v5019
        %5474 = vmatpush1.bf16.msra.mxu0 %v5018
        %5475 = vmatprep.subr.bf16.mxu0 %v5017
        %5476 = vmatpush1.bf16.msra.mxu0 %v5016
        %5477 = vmatprep.subr.bf16.mxu0 %v5015
        %5478 = vmatpush1.bf16.msra.mxu0 %v5014
        %5479 = vmatprep.subr.bf16.mxu0 %v5013
        %5480 = vmatpush1.bf16.msra.mxu0 %v5012
        %5481 = vmatprep.subr.bf16.mxu0 %v5043
        %5482 = vmatpush2.bf16.msra.mxu0 %v5042
        %5483 = vmatprep.subr.bf16.mxu0 %v5041
        %5484 = vmatpush2.bf16.msra.mxu0 %v5040
        %5485 = vmatprep.subr.bf16.mxu0 %v5039
        %5486 = vmatpush2.bf16.msra.mxu0 %v5038
        %5487 = vmatprep.subr.bf16.mxu0 %v5037
        %5488 = vmatpush2.bf16.msra.mxu0 %v5036
        %5489 = vmatprep.subr.bf16.mxu0 %v5035
        %5490 = vmatpush2.bf16.msra.mxu0 %v5034
        %5491 = vmatprep.subr.bf16.mxu0 %v5033
        %5492 = vmatpush2.bf16.msra.mxu0 %v5032
        %5493 = vmatprep.subr.bf16.mxu0 %v5031
        %5494 = vmatpush2.bf16.msra.mxu0 %v5030
        %5495 = vmatprep.subr.bf16.mxu0 %v5029
        %5496 = vmatpush2.bf16.msra.mxu0 %v5028
        %5497 = vmatprep.mubr.bf16.mxu0 %v4143
        %5498 = vmatmul.mubr.bf16.gmra.mxu0 %v4142
        %v5499 = vpop.f32.mrf.mxu0
        %v5500 = vadd.f32 %v5447, %v5499
        %v5501 = vpop.f32.mrf.mxu0
        %v5502 = vadd.f32 %v5449, %v5501
        %v5503 = vpop.f32.mrf.mxu0
        %v5504 = vadd.f32 %v5451, %v5503
        %v5505 = vpop.f32.mrf.mxu0
        %v5506 = vadd.f32 %v5453, %v5505
        %5507 = vmatprep.mubr.bf16.mxu0 %v4155
        %5508 = vmatmul.mubr.bf16.gmra.mxu0 %v4154
        %v5509 = vpop.f32.mrf.mxu0
        %v5510 = vadd.f32 %v5457, %v5509
        %v5511 = vpop.f32.mrf.mxu0
        %v5512 = vadd.f32 %v5459, %v5511
        %v5513 = vpop.f32.mrf.mxu0
        %v5514 = vadd.f32 %v5461, %v5513
        %v5515 = vpop.f32.mrf.mxu0
        %v5516 = vadd.f32 %v5463, %v5515
        %5517 = vdwg.mxu0
        %5518 = vmatprep.subr.bf16.mxu0 %v5059
        %5519 = vmatpush1.bf16.msra.mxu0 %v5058
        %5520 = vmatprep.subr.bf16.mxu0 %v5057
        %5521 = vmatpush1.bf16.msra.mxu0 %v5056
        %5522 = vmatprep.subr.bf16.mxu0 %v5055
        %5523 = vmatpush1.bf16.msra.mxu0 %v5054
        %5524 = vmatprep.subr.bf16.mxu0 %v5053
        %5525 = vmatpush1.bf16.msra.mxu0 %v5052
        %5526 = vmatprep.subr.bf16.mxu0 %v5051
        %5527 = vmatpush1.bf16.msra.mxu0 %v5050
        %5528 = vmatprep.subr.bf16.mxu0 %v5049
        %5529 = vmatpush1.bf16.msra.mxu0 %v5048
        %5530 = vmatprep.subr.bf16.mxu0 %v5047
        %5531 = vmatpush1.bf16.msra.mxu0 %v5046
        %5532 = vmatprep.subr.bf16.mxu0 %v5045
        %5533 = vmatpush1.bf16.msra.mxu0 %v5044
        %5534 = vmatprep.subr.bf16.mxu0 %v5075
        %5535 = vmatpush2.bf16.msra.mxu0 %v5074
        %5536 = vmatprep.subr.bf16.mxu0 %v5073
        %5537 = vmatpush2.bf16.msra.mxu0 %v5072
        %5538 = vmatprep.subr.bf16.mxu0 %v5071
        %5539 = vmatpush2.bf16.msra.mxu0 %v5070
        %5540 = vmatprep.subr.bf16.mxu0 %v5069
        %5541 = vmatpush2.bf16.msra.mxu0 %v5068
        %5542 = vmatprep.subr.bf16.mxu0 %v5067
        %5543 = vmatpush2.bf16.msra.mxu0 %v5066
        %5544 = vmatprep.subr.bf16.mxu0 %v5065
        %5545 = vmatpush2.bf16.msra.mxu0 %v5064
        %5546 = vmatprep.subr.bf16.mxu0 %v5063
        %5547 = vmatpush2.bf16.msra.mxu0 %v5062
        %5548 = vmatprep.subr.bf16.mxu0 %v5061
        %5549 = vmatpush2.bf16.msra.mxu0 %v5060
        %5550 = vmatprep.mubr.bf16.mxu0 %v4145
        %5551 = vmatmul.mubr.bf16.gmra.mxu0 %v4144
        %v5552 = vpop.f32.mrf.mxu0
        %v5553 = vadd.f32 %v5500, %v5552
        %v5554 = vpop.f32.mrf.mxu0
        %v5555 = vadd.f32 %v5502, %v5554
        %v5556 = vpop.f32.mrf.mxu0
        %v5557 = vadd.f32 %v5504, %v5556
        %v5558 = vpop.f32.mrf.mxu0
        %v5559 = vadd.f32 %v5506, %v5558
        %5560 = vmatprep.mubr.bf16.mxu0 %v4157
        %5561 = vmatmul.mubr.bf16.gmra.mxu0 %v4156
        %v5562 = vpop.f32.mrf.mxu0
        %v5563 = vadd.f32 %v5510, %v5562
        %v5564 = vpop.f32.mrf.mxu0
        %v5565 = vadd.f32 %v5512, %v5564
        %v5566 = vpop.f32.mrf.mxu0
        %v5567 = vadd.f32 %v5514, %v5566
        %v5568 = vpop.f32.mrf.mxu0
        %v5569 = vadd.f32 %v5516, %v5568
        %5570 = vdwg.mxu0
        %5571 = vmatprep.subr.bf16.mxu0 %v5091
        %5572 = vmatpush1.bf16.msra.mxu0 %v5090
        %5573 = vmatprep.subr.bf16.mxu0 %v5089
        %5574 = vmatpush1.bf16.msra.mxu0 %v5088
        %5575 = vmatprep.subr.bf16.mxu0 %v5087
        %5576 = vmatpush1.bf16.msra.mxu0 %v5086
        %5577 = vmatprep.subr.bf16.mxu0 %v5085
        %5578 = vmatpush1.bf16.msra.mxu0 %v5084
        %5579 = vmatprep.subr.bf16.mxu0 %v5083
        %5580 = vmatpush1.bf16.msra.mxu0 %v5082
        %5581 = vmatprep.subr.bf16.mxu0 %v5081
        %5582 = vmatpush1.bf16.msra.mxu0 %v5080
        %5583 = vmatprep.subr.bf16.mxu0 %v5079
        %5584 = vmatpush1.bf16.msra.mxu0 %v5078
        %5585 = vmatprep.subr.bf16.mxu0 %v5077
        %5586 = vmatpush1.bf16.msra.mxu0 %v5076
        %5587 = vmatprep.subr.bf16.mxu0 0
        %5588 = vmatpush2.bf16.msra.mxu0 0
        %5589 = vmatprep.subr.bf16.mxu0 %v5304
        %5590 = vmatpush2.bf16.msra.mxu0 %v5301
        %5591 = vmatprep.subr.bf16.mxu0 %v5103
        %5592 = vmatpush2.bf16.msra.mxu0 %v5102
        %5593 = vmatprep.subr.bf16.mxu0 %v5101
        %5594 = vmatpush2.bf16.msra.mxu0 %v5100
        %5595 = vmatprep.subr.bf16.mxu0 %v5099
        %5596 = vmatpush2.bf16.msra.mxu0 %v5098
        %5597 = vmatprep.subr.bf16.mxu0 %v5097
        %5598 = vmatpush2.bf16.msra.mxu0 %v5096
        %5599 = vmatprep.subr.bf16.mxu0 %v5095
        %5600 = vmatpush2.bf16.msra.mxu0 %v5094
        %5601 = vmatprep.subr.bf16.mxu0 %v5093
        %5602 = vmatpush2.bf16.msra.mxu0 %v5092
        %5603 = vmatprep.mubr.bf16.mxu0 %v5295
        %5604 = vmatmul.mubr.bf16.gmra.mxu0 %v4146
        %v5605 = vpop.f32.mrf.mxu0
        %v5606 = vadd.f32 %v5553, %v5605
        %v5607 = vpop.f32.mrf.mxu0
        %v5608 = vadd.f32 %v5555, %v5607
        %v5609 = vpop.f32.mrf.mxu0
        %v5610 = vadd.f32 %v5557, %v5609
        %v5611 = vpop.f32.mrf.mxu0
        %v5612 = vadd.f32 %v5559, %v5611
        %5613 = vmatprep.mubr.bf16.mxu0 %v5298
        %5614 = vmatmul.mubr.bf16.gmra.mxu0 %v4158
        %v5615 = vpop.f32.mrf.mxu0
        %v5616 = vadd.f32 %v5563, %v5615
        %v5617 = vpop.f32.mrf.mxu0
        %v5618 = vadd.f32 %v5565, %v5617
        %v5619 = vpop.f32.mrf.mxu0
        %v5620 = vadd.f32 %v5567, %v5619
        %v5621 = vpop.f32.mrf.mxu0
        %v5622 = vadd.f32 %v5569, %v5621
        %5623 = vdwg.mxu0
        %v5624 = vmax.f32 %v5606, 0.0
        %v5625 = vmax.f32 %v5608, 0.0
        %v5626 = vmax.f32 %v5610, 0.0
        %v5627 = vmax.f32 %v5612, 0.0
        %v5628 = vmax.f32 %v5616, 0.0
        %v5629 = vmax.f32 %v5618, 0.0
        %v5630 = vmax.f32 %v5620, 0.0
        %v5631 = vmax.f32 %v5622, 0.0
        %v5632 = vld [vmem:[%s6] sm:$0xf]
        %v5633 = vld [vmem:[%s6 + $0x4] sm:$0x7]
        %v5634 = vpack.c.bf16 %v5626, %v5624
        %v5635 = vpack.c.bf16 %v5627, %v5625
        %v5636 = vpack.c.bf16 %v5630, %v5628
        %v5637 = vpack.c.bf16 %v5631, %v5629
        %v5638 = vld [vmem:[%s7] sm:$0xf]
        %v5639 = vld [vmem:[%s7 + $0x4] sm:$0xf]
        %v5640 = vld [vmem:[%s7 + $0x8] sm:$0xf]
        %v5641 = vld [vmem:[%s7 + $0xc] sm:$0xf]
        %v5642 = vld [vmem:[%s7 + $0x10] sm:$0xf]
        %v5643 = vld [vmem:[%s7 + $0x14] sm:$0xf]
        %v5644 = vld [vmem:[%s7 + $0x18] sm:$0xf]
        %v5645 = vld [vmem:[%s7 + $0x1c] sm:$0xf]
        %v5646 = vld [vmem:[%s7 + $0x20] sm:$0xf]
        %v5647 = vld [vmem:[%s7 + $0x24] sm:$0xf]
        %v5648 = vld [vmem:[%s7 + $0x28] sm:$0xf]
        %v5649 = vld [vmem:[%s7 + $0x2c] sm:$0xf]
        %v5650 = vld [vmem:[%s7 + $0x30] sm:$0xf]
        %v5651 = vld [vmem:[%s7 + $0x34] sm:$0xf]
        %v5652 = vld [vmem:[%s7 + $0x38] sm:$0xf]
        %v5653 = vld [vmem:[%s7 + $0x3c] sm:$0xf]
        %v5654 = vld [vmem:[%s7 + $0x40] sm:$0xf]
        %v5655 = vld [vmem:[%s7 + $0x44] sm:$0xf]
        %v5656 = vld [vmem:[%s7 + $0x48] sm:$0xf]
        %v5657 = vld [vmem:[%s7 + $0x4c] sm:$0xf]
        %v5658 = vld [vmem:[%s7 + $0x50] sm:$0xf]
        %v5680 = vunpack.c.l.b16 %v5638
        %v5681 = vunpack.c.l.b16 %v5639
        %v5682 = vunpack.c.l.b16 %v5640
        %v5683 = vunpack.c.l.b16 %v5641
        %v5684 = vunpack.c.l.b16 %v5642
        %v5685 = vunpack.c.l.b16 %v5643
        %v5686 = vunpack.c.l.b16 %v5644
        %v5687 = vunpack.c.l.b16 %v5645
        %v5688 = vunpack.c.l.b16 %v5646
        %v5689 = vunpack.c.l.b16 %v5647
        %v5690 = vunpack.c.l.b16 %v5648
        %v5691 = vunpack.c.l.b16 %v5649
        %v5692 = vunpack.c.l.b16 %v5650
        %v5693 = vunpack.c.l.b16 %v5651
        %v5694 = vunpack.c.l.b16 %v5652
        %v5695 = vunpack.c.l.b16 %v5653
        %v5696 = vunpack.c.l.b16 %v5654
        %v5697 = vunpack.c.l.b16 %v5655
        %v5698 = vunpack.c.l.b16 %v5656
        %v5699 = vunpack.c.l.b16 %v5657
        %v5700 = vunpack.c.l.b16 %v5658
        %v5701 = vpack.c.b16 %v5681, %v5680
        %v5702 = vpack.c.b16 %v5683, %v5682
        %v5703 = vpack.c.b16 %v5685, %v5684
        %v5704 = vpack.c.b16 %v5687, %v5686
        %v5705 = vpack.c.b16 %v5689, %v5688
        %v5706 = vpack.c.b16 %v5691, %v5690
        %v5707 = vpack.c.b16 %v5693, %v5692
        %v5708 = vpack.c.b16 %v5695, %v5694
        %v5709 = vpack.c.b16 %v5697, %v5696
        %v5710 = vpack.c.b16 %v5699, %v5698
        %v5711 = vpack.c.b16 %v5700, %v5700
        %v5723 = vsel %vm1762, %v5635, 0
        %v5726 = vsel %vm1762, %v5637, 0
        %v5729 = vsel %vm816, %v5711, 0
        %5731 = vmatprep.subr.bf16.mxu0 0
        %5732 = vmatpush1.bf16.msra.mxu0 %v5708
        %5733 = vmatprep.subr.bf16.mxu0 0
        %5734 = vmatpush1.bf16.msra.mxu0 %v5707
        %5735 = vmatprep.subr.bf16.mxu0 0
        %5736 = vmatpush1.bf16.msra.mxu0 %v5706
        %5737 = vmatprep.subr.bf16.mxu0 0
        %5738 = vmatpush1.bf16.msra.mxu0 %v5705
        %5739 = vmatprep.subr.bf16.mxu0 0
        %5740 = vmatpush1.bf16.msra.mxu0 %v5704
        %5741 = vmatprep.subr.bf16.mxu0 0
        %5742 = vmatpush1.bf16.msra.mxu0 %v5703
        %5743 = vmatprep.subr.bf16.mxu0 0
        %5744 = vmatpush1.bf16.msra.mxu0 %v5702
        %5745 = vmatprep.subr.bf16.mxu0 0
        %5746 = vmatpush1.bf16.msra.mxu0 %v5701
        %5747 = vmatprep.subr.bf16.mxu0 0
        %5748 = vmatpush2.bf16.msra.mxu0 0
        %5749 = vmatprep.subr.bf16.mxu0 0
        %5750 = vmatpush2.bf16.msra.mxu0 0
        %5751 = vmatprep.subr.bf16.mxu0 0
        %5752 = vmatpush2.bf16.msra.mxu0 0
        %5753 = vmatprep.subr.bf16.mxu0 0
        %5754 = vmatpush2.bf16.msra.mxu0 0
        %5755 = vmatprep.subr.bf16.mxu0 0
        %5756 = vmatpush2.bf16.msra.mxu0 0
        %5757 = vmatprep.subr.bf16.mxu0 0
        %5758 = vmatpush2.bf16.msra.mxu0 %v5729
        %5759 = vmatprep.subr.bf16.mxu0 0
        %5760 = vmatpush2.bf16.msra.mxu0 %v5710
        %5761 = vmatprep.subr.bf16.mxu0 0
        %5762 = vmatpush2.bf16.msra.mxu0 %v5709
        %5763 = vmatprep.mubr.bf16.mxu0 %v5723
        %5764 = vmatmul.mubr.bf16.gmra.mxu0 %v5634
        %v5765 = vpop.f32.mrf.mxu0
        %v5766 = vadd.f32 0.0, %v5765
        %v5767 = vpop.f32.mrf.mxu0
        %v5768 = vpop.f32.mrf.mxu0
        %v5769 = vadd.f32 0.0, %v5768
        %v5770 = vpop.f32.mrf.mxu0
        %5771 = vmatprep.mubr.bf16.mxu0 %v5726
        %5772 = vmatmul.mubr.bf16.gmra.mxu0 %v5636
        %v5773 = vpop.f32.mrf.mxu0
        %v5774 = vadd.f32 0.0, %v5773
        %v5775 = vpop.f32.mrf.mxu0
        %v5776 = vpop.f32.mrf.mxu0
        %v5777 = vadd.f32 0.0, %v5776
        %v5778 = vpop.f32.mrf.mxu0
        %5779 = vdwg.mxu0
        %v5780 = vpack.c.bf16 %v5769, %v5766
        %v5781 = vpack.c.bf16 %v5777, %v5774
        %v5784 = vunpack.c.l.b16 %v5632
        %v5785 = vunpack.c.l.b16 %v5633
        %v5786 = vpack.c.b16 %v5785, %v5784
        %v5788 = vsel %vm416, %v5786, 0
        %v5791 = vsel %vm608, %v5781, 0
        %5793 = vmatprep.subr.bf16.mxu0 0
        %5794 = vmatpush1.bf16.msra.mxu0 0
        %5795 = vmatprep.subr.bf16.mxu0 0
        %5796 = vmatpush1.bf16.msra.mxu0 0
        %5797 = vmatprep.subr.bf16.mxu0 0
        %5798 = vmatpush1.bf16.msra.mxu0 0
        %5799 = vmatprep.subr.bf16.mxu0 0
        %5800 = vmatpush1.bf16.msra.mxu0 0
        %5801 = vmatprep.subr.bf16.mxu0 0
        %5802 = vmatpush1.bf16.msra.mxu0 0
        %5803 = vmatprep.subr.bf16.mxu0 0
        %5804 = vmatpush1.bf16.msra.mxu0 0
        %5805 = vmatprep.subr.bf16.mxu0 0
        %5806 = vmatpush1.bf16.msra.mxu0 %v5791
        %5807 = vmatprep.subr.bf16.mxu0 0
        %5808 = vmatpush1.bf16.msra.mxu0 %v5780
        %5809 = vmatprep.subr.bf16.mxu0 0
        %5810 = vmatpush2.bf16.msra.mxu0 0
        %5811 = vmatprep.subr.bf16.mxu0 0
        %5812 = vmatpush2.bf16.msra.mxu0 0
        %5813 = vmatprep.subr.bf16.mxu0 0
        %5814 = vmatpush2.bf16.msra.mxu0 0
        %5815 = vmatprep.subr.bf16.mxu0 0
        %5816 = vmatpush2.bf16.msra.mxu0 0
        %5817 = vmatprep.subr.bf16.mxu0 0
        %5818 = vmatpush2.bf16.msra.mxu0 0
        %5819 = vmatprep.subr.bf16.mxu0 0
        %5820 = vmatpush2.bf16.msra.mxu0 0
        %5821 = vmatprep.subr.bf16.mxu0 0
        %5822 = vmatpush2.bf16.msra.mxu0 0
        %5823 = vmatprep.subr.bf16.mxu0 0
        %5824 = vmatpush2.bf16.msra.mxu0 0
        %5825 = vmatprep.mubr.bf16.mxu0 0
        %5826 = vmatmul.mubr.bf16.gmra.mxu0 %v5788
        %v5827 = vpop.f32.mrf.mxu0
        %v5828 = vadd.f32 0.0, %v5827
        %v5829 = vpop.f32.mrf.mxu0
        %v5830 = vpop.f32.mrf.mxu0
        %v5831 = vadd.f32 0.0, %v5830
        %v5832 = vpop.f32.mrf.mxu0
        %5833 = vdwg.mxu0
        %5834 = vst.msk [vmem:[#allocation4] sm:$0xff] %vm1482, %v5828
        %vm5835 = vcmask 484352
        %5836 = vst.msk [vmem:[#allocation4 + $0x60] sm:$0x3] %vm5835, %v5831
        %5839 = vrot.lane.b32.xlu0 %v5828, 54
        %v5840 = vpop.permute.xlu0 %5839
        %5841 = vrot.lane.b32.xlu0 %v5831, 54
        %v5842 = vpop.permute.xlu0 %5841
        %vm5845 = vcmask 982496
        %5846 = vst.msk [vmem:[#allocation4] sm:$0xff] %vm5845, %v5840
        %vm5847 = vcmask 976352
        %5848 = vst.msk [vmem:[#allocation4 + $0x60] sm:$0x3] %vm5847, %v5842
        %5849 = vrot.lane.b32.xlu0 %v5828, 108
        %v5850 = vpop.permute.xlu0 %5849
        %5851 = vrot.lane.b32.xlu0 %v5831, 108
        %v5852 = vpop.permute.xlu0 %5851
        %5855 = vst.msk [vmem:[#allocation4] sm:$0xff] %vm786, %v5850
        %vm5856 = vcmask 424960
        %5857 = vst.msk [vmem:[#allocation4 + $0x8] sm:$0xff] %vm5856, %v5850
        %vm5858 = vcmask 1042368
        %5859 = vst.msk [vmem:[#allocation4 + $0x60] sm:$0x3] %vm5858, %v5852
        %vm5860 = vcmask 418816
        %5861 = vst.msk [vmem:[#allocation4 + $0x68] sm:$0x3] %vm5860, %v5852
        %5862 = vrot.lane.b32.xlu0 %v5828, 34
        %v5863 = vpop.permute.xlu0 %5862
        %5864 = vrot.lane.b32.xlu0 %v5831, 34
        %v5865 = vpop.permute.xlu0 %5864
        %vm5868 = vcmask 916896
        %5869 = vst.msk [vmem:[#allocation4 + $0x8] sm:$0xff] %vm5868, %v5863
        %vm5870 = vcmask 910752
        %5871 = vst.msk [vmem:[#allocation4 + $0x68] sm:$0x3] %vm5870, %v5865
        %5872 = vrot.lane.b32.xlu0 %v5828, 88
        %v5873 = vpop.permute.xlu0 %5872
        %5874 = vrot.lane.b32.xlu0 %v5831, 88
        %v5875 = vpop.permute.xlu0 %5874
        %5878 = vst.msk [vmem:[#allocation4 + $0x8] sm:$0xff] %vm492, %v5873
        %vm5879 = vcmask 359424
        %5880 = vst.msk [vmem:[#allocation4 + $0x10] sm:$0xff] %vm5879, %v5873
        %vm5881 = vcmask 1042304
        %5882 = vst.msk [vmem:[#allocation4 + $0x68] sm:$0x3] %vm5881, %v5875
        %vm5883 = vcmask 353280
        %5884 = vst.msk [vmem:[#allocation4 + $0x70] sm:$0x3] %vm5883, %v5875
        %v5885 = vrot.slane %v5828, 1
        %v5886 = vrot.slane %v5831, 1
        %v5887 = vsel %vm504, %v5885, %v5886
        %5888 = vrot.lane.b32.xlu0 %v5887, 44
        %v5889 = vpop.permute.xlu0 %5888
        %5890 = vrot.lane.b32.xlu0 %v5886, 44
        %v5891 = vpop.permute.xlu0 %5890
        %vm5894 = vcmask 851296
        %5895 = vst.msk [vmem:[#allocation4 + $0x10] sm:$0xff] %vm5894, %v5889
        %vm5896 = vcmask 845152
        %5897 = vst.msk [vmem:[#allocation4 + $0x70] sm:$0x3] %vm5896, %v5891
        %5898 = vrot.lane.b32.xlu0 %v5887, 98
        %v5899 = vpop.permute.xlu0 %5898
        %5900 = vrot.lane.b32.xlu0 %v5886, 98
        %v5901 = vpop.permute.xlu0 %5900
        %5904 = vst.msk [vmem:[#allocation4 + $0x10] sm:$0xff] %vm872, %v5899
        %vm5905 = vcmask 293888
        %5906 = vst.msk [vmem:[#allocation4 + $0x18] sm:$0xff] %vm5905, %v5899
        %vm5907 = vcmask 1042240
        %5908 = vst.msk [vmem:[#allocation4 + $0x70] sm:$0x3] %vm5907, %v5901
        %vm5909 = vcmask 287744
        %5910 = vst.msk [vmem:[#allocation4 + $0x78] sm:$0x3] %vm5909, %v5901
        %5911 = vrot.lane.b32.xlu0 %v5887, 24
        %v5912 = vpop.permute.xlu0 %5911
        %5913 = vrot.lane.b32.xlu0 %v5886, 24
        %v5914 = vpop.permute.xlu0 %5913
        %vm5917 = vcmask 785696
        %5918 = vst.msk [vmem:[#allocation4 + $0x18] sm:$0xff] %vm5917, %v5912
        %vm5919 = vcmask 779552
        %5920 = vst.msk [vmem:[#allocation4 + $0x78] sm:$0x3] %vm5919, %v5914
        %5921 = vrot.lane.b32.xlu0 %v5887, 78
        %v5922 = vpop.permute.xlu0 %5921
        %5923 = vrot.lane.b32.xlu0 %v5886, 78
        %v5924 = vpop.permute.xlu0 %5923
        %vm5927 = vcmask 1048320
        %5928 = vst.msk [vmem:[#allocation4 + $0x18] sm:$0xff] %vm5927, %v5922
        %5929 = vst.msk [vmem:[#allocation4 + $0x20] sm:$0xff] %vm416, %v5922
        %vm5930 = vcmask 1042176
        %5931 = vst.msk [vmem:[#allocation4 + $0x78] sm:$0x3] %vm5930, %v5924
        %vm5932 = vcmask 222208
        %5933 = vst.msk [vmem:[#allocation4 + $0x80] sm:$0x3] %vm5932, %v5924
        %5934 = vrot.lane.b32.xlu0 %v5887, 4
        %v5935 = vpop.permute.xlu0 %5934
        %5936 = vrot.lane.b32.xlu0 %v5886, 4
        %v5937 = vpop.permute.xlu0 %5936
        %vm5940 = vcmask 720096
        %5941 = vst.msk [vmem:[#allocation4 + $0x20] sm:$0xff] %vm5940, %v5935
        %vm5942 = vcmask 713952
        %5943 = vst.msk [vmem:[#allocation4 + $0x80] sm:$0x3] %vm5942, %v5937
        %v5944 = vrot.slane %v5828, 2
        %v5945 = vrot.slane %v5831, 2
        %v5946 = vsel %vm608, %v5944, %v5945
        %5947 = vrot.lane.b32.xlu0 %v5946, 88
        %v5948 = vpop.permute.xlu0 %5947
        %5949 = vrot.lane.b32.xlu0 %v5945, 88
        %v5950 = vpop.permute.xlu0 %5949
        %vm5953 = vcmask 1048256
        %5954 = vst.msk [vmem:[#allocation4 + $0x20] sm:$0xff] %vm5953, %v5948
        %5955 = vst.msk [vmem:[#allocation4 + $0x28] sm:$0xff] %vm788, %v5948
        %vm5956 = vcmask 1042112
        %5957 = vst.msk [vmem:[#allocation4 + $0x80] sm:$0x3] %vm5956, %v5950
        %vm5958 = vcmask 156672
        %5959 = vst.msk [vmem:[#allocation4 + $0x88] sm:$0x3] %vm5958, %v5950
        %5960 = vrot.lane.b32.xlu0 %v5946, 14
        %v5961 = vpop.permute.xlu0 %5960
        %5962 = vrot.lane.b32.xlu0 %v5945, 14
        %v5963 = vpop.permute.xlu0 %5962
        %vm5966 = vcmask 654496
        %5967 = vst.msk [vmem:[#allocation4 + $0x28] sm:$0xff] %vm5966, %v5961
        %vm5968 = vcmask 648352
        %5969 = vst.msk [vmem:[#allocation4 + $0x88] sm:$0x3] %vm5968, %v5963
        %5970 = vrot.lane.b32.xlu0 %v5946, 68
        %v5971 = vpop.permute.xlu0 %5970
        %5972 = vrot.lane.b32.xlu0 %v5945, 68
        %v5973 = vpop.permute.xlu0 %5972
        %5976 = vst.msk [vmem:[#allocation4 + $0x28] sm:$0xff] %vm1845, %v5971
        %5977 = vst.msk [vmem:[#allocation4 + $0x30] sm:$0xff] %vm494, %v5971
        %vm5978 = vcmask 1042048
        %5979 = vst.msk [vmem:[#allocation4 + $0x88] sm:$0x3] %vm5978, %v5973
        %vm5980 = vcmask 91136
        %5981 = vst.msk [vmem:[#allocation4 + $0x90] sm:$0x3] %vm5980, %v5973
        %5982 = vrot.lane.b32.xlu0 %v5946, 122
        %v5983 = vpop.permute.xlu0 %5982
        %5984 = vrot.lane.b32.xlu0 %v5945, 122
        %v5985 = vpop.permute.xlu0 %5984
        %vm5988 = vcmask 588896
        %5989 = vst.msk [vmem:[#allocation4 + $0x30] sm:$0xff] %vm5988, %v5983
        %vm5990 = vcmask 582752
        %5991 = vst.msk [vmem:[#allocation4 + $0x90] sm:$0x3] %vm5990, %v5985
        %5992 = vrot.lane.b32.xlu0 %v5946, 48
        %v5993 = vpop.permute.xlu0 %5992
        %5994 = vrot.lane.b32.xlu0 %v5945, 48
        %v5995 = vpop.permute.xlu0 %5994
        %5998 = vst.msk [vmem:[#allocation4 + $0x30] sm:$0xff] %vm1973, %v5993
        %5999 = vst.msk [vmem:[#allocation4 + $0x38] sm:$0xff] %vm874, %v5993
        %vm6000 = vcmask 1041984
        %6001 = vst.msk [vmem:[#allocation4 + $0x90] sm:$0x3] %vm6000, %v5995
        %vm6002 = vcmask 25600
        %6003 = vst.msk [vmem:[#allocation4 + $0x98] sm:$0x3] %vm6002, %v5995
        %v6004 = vrot.slane %v5828, 3
        %v6005 = vrot.slane %v5831, 3
        %v6006 = vsel %vm712, %v6004, %v6005
        %6007 = vrot.lane.b32.xlu0 %v6006, 4
        %v6008 = vpop.permute.xlu0 %6007
        %6009 = vrot.lane.b32.xlu0 %v6005, 4
        %v6010 = vpop.permute.xlu0 %6009
        %vm6013 = vcmask 523296
        %6014 = vst.msk [vmem:[#allocation4 + $0x38] sm:$0xff] %vm6013, %v6008
        %vm6015 = vcmask 517152
        %6016 = vst.msk [vmem:[#allocation4 + $0x98] sm:$0x3] %vm6015, %v6010
        %6017 = vrot.lane.b32.xlu0 %v6006, 58
        %v6018 = vpop.permute.xlu0 %6017
        %6019 = vrot.lane.b32.xlu0 %v6005, 58
        %v6020 = vpop.permute.xlu0 %6019
        %vm6023 = vcmask 1015296
        %6024 = vst.msk [vmem:[#allocation4 + $0x38] sm:$0xff] %vm6023, %v6018
        %vm6025 = vcmask 1009152
        %6026 = vst.msk [vmem:[#allocation4 + $0x98] sm:$0x3] %vm6025, %v6020
        %6027 = vrot.lane.b32.xlu0 %v6006, 112
        %v6028 = vpop.permute.xlu0 %6027
        %6029 = vrot.lane.b32.xlu0 %v6005, 112
        %v6030 = vpop.permute.xlu0 %6029
        %6033 = vst.msk [vmem:[#allocation4 + $0x38] sm:$0xff] %vm596, %v6028
        %vm6034 = vcmask 457728
        %6035 = vst.msk [vmem:[#allocation4 + $0x40] sm:$0xff] %vm6034, %v6028
        %vm6036 = vcmask 1042400
        %6037 = vst.msk [vmem:[#allocation4 + $0x98] sm:$0x3] %vm6036, %v6030
        %vm6038 = vcmask 451584
        %6039 = vst.msk [vmem:[#allocation4 + $0xa0] sm:$0x3] %vm6038, %v6030
        %6040 = vrot.lane.b32.xlu0 %v6006, 38
        %v6041 = vpop.permute.xlu0 %6040
        %6042 = vrot.lane.b32.xlu0 %v6005, 38
        %v6043 = vpop.permute.xlu0 %6042
        %vm6046 = vcmask 949696
        %6047 = vst.msk [vmem:[#allocation4 + $0x40] sm:$0xff] %vm6046, %v6041
        %vm6048 = vcmask 943552
        %6049 = vst.msk [vmem:[#allocation4 + $0xa0] sm:$0x3] %vm6048, %v6043
        %6050 = vrot.lane.b32.xlu0 %v6006, 92
        %v6051 = vpop.permute.xlu0 %6050
        %6052 = vrot.lane.b32.xlu0 %v6005, 92
        %v6053 = vpop.permute.xlu0 %6052
        %vm6056 = vcmask 1048480
        %6057 = vst.msk [vmem:[#allocation4 + $0x40] sm:$0xff] %vm6056, %v6051
        %vm6058 = vcmask 392192
        %6059 = vst.msk [vmem:[#allocation4 + $0x48] sm:$0xff] %vm6058, %v6051
        %vm6060 = vcmask 1042336
        %6061 = vst.msk [vmem:[#allocation4 + $0xa0] sm:$0x3] %vm6060, %v6053
        %vm6062 = vcmask 386048
        %6063 = vst.msk [vmem:[#allocation4 + $0xa8] sm:$0x3] %vm6062, %v6053
        %v6064 = vrot.slane %v5828, 4
        %v6065 = vrot.slane %v5831, 4
        %v6066 = vsel %vm816, %v6064, %v6065
        %6067 = vrot.lane.b32.xlu0 %v6066, 48
        %v6068 = vpop.permute.xlu0 %6067
        %6069 = vrot.lane.b32.xlu0 %v6065, 48
        %v6070 = vpop.permute.xlu0 %6069
        %vm6073 = vcmask 884096
        %6074 = vst.msk [vmem:[#allocation4 + $0x48] sm:$0xff] %vm6073, %v6068
        %vm6075 = vcmask 877952
        %6076 = vst.msk [vmem:[#allocation4 + $0xa8] sm:$0x3] %vm6075, %v6070
        %6077 = vrot.lane.b32.xlu0 %v6066, 102
        %v6078 = vpop.permute.xlu0 %6077
        %6079 = vrot.lane.b32.xlu0 %v6065, 102
        %v6080 = vpop.permute.xlu0 %6079
        %6083 = vst.msk [vmem:[#allocation4 + $0x48] sm:$0xff] %vm682, %v6078
        %6084 = vst.msk [vmem:[#allocation4 + $0x50] sm:$0xff] %vm1762, %v6078
        %vm6085 = vcmask 1042272
        %6086 = vst.msk [vmem:[#allocation4 + $0xa8] sm:$0x3] %vm6085, %v6080
        %vm6087 = vcmask 320512
        %6088 = vst.msk [vmem:[#allocation4 + $0xb0] sm:$0x3] %vm6087, %v6080
        %6089 = vrot.lane.b32.xlu0 %v6066, 28
        %v6090 = vpop.permute.xlu0 %6089
        %6091 = vrot.lane.b32.xlu0 %v6065, 28
        %v6092 = vpop.permute.xlu0 %6091
        %vm6095 = vcmask 818496
        %6096 = vst.msk [vmem:[#allocation4 + $0x50] sm:$0xff] %vm6095, %v6090
        %vm6097 = vcmask 812352
        %6098 = vst.msk [vmem:[#allocation4 + $0xb0] sm:$0x3] %vm6097, %v6092
        %6099 = vrot.lane.b32.xlu0 %v6066, 82
        %v6100 = vpop.permute.xlu0 %6099
        %6101 = vrot.lane.b32.xlu0 %v6065, 82
        %v6102 = vpop.permute.xlu0 %6101
        %vm6105 = vcmask 1048352
        %6106 = vst.msk [vmem:[#allocation4 + $0x50] sm:$0xff] %vm6105, %v6100
        %6107 = vst.msk [vmem:[#allocation4 + $0x58] sm:$0xff] %vm1891, %v6100
        %vm6108 = vcmask 1042208
        %6109 = vst.msk [vmem:[#allocation4 + $0xb0] sm:$0x3] %vm6108, %v6102
        %vm6110 = vcmask 254976
        %6111 = vst.msk [vmem:[#allocation4 + $0xb8] sm:$0x3] %vm6110, %v6102
        %6112 = vrot.lane.b32.xlu0 %v6066, 8
        %v6113 = vpop.permute.xlu0 %6112
        %6114 = vrot.lane.b32.xlu0 %v6065, 8
        %v6115 = vpop.permute.xlu0 %6114
        %vm6118 = vcmask 752896
        %6119 = vst.msk [vmem:[#allocation4 + $0x58] sm:$0xff] %vm6118, %v6113
        %vm6120 = vcmask 746752
        %6121 = vst.msk [vmem:[#allocation4 + $0xb8] sm:$0x3] %vm6120, %v6115
        %v6122 = vld [vmem:[#allocation4] sm:$0xff]
        %v6123 = vld [vmem:[#allocation4 + $0x8] sm:$0xff]
        %v6124 = vld [vmem:[#allocation4 + $0x10] sm:$0xff]
        %v6125 = vld [vmem:[#allocation4 + $0x18] sm:$0xff]
        %v6126 = vld [vmem:[#allocation4 + $0x20] sm:$0xff]
        %v6127 = vld [vmem:[#allocation4 + $0x28] sm:$0xff]
        %v6128 = vld [vmem:[#allocation4 + $0x30] sm:$0xff]
        %v6129 = vld [vmem:[#allocation4 + $0x38] sm:$0xff]
        %v6130 = vld [vmem:[#allocation4 + $0x40] sm:$0xff]
        %v6131 = vld [vmem:[#allocation4 + $0x48] sm:$0xff]
        %v6132 = vld [vmem:[#allocation4 + $0x50] sm:$0xff]
        %v6133 = vld [vmem:[#allocation4 + $0x58] sm:$0xff]
        %v6134 = vld [vmem:[#allocation4 + $0x60] sm:$0x3]
        %v6135 = vld [vmem:[#allocation4 + $0x68] sm:$0x3]
        %v6136 = vld [vmem:[#allocation4 + $0x70] sm:$0x3]
        %v6137 = vld [vmem:[#allocation4 + $0x78] sm:$0x3]
        %v6138 = vld [vmem:[#allocation4 + $0x80] sm:$0x3]
        %v6139 = vld [vmem:[#allocation4 + $0x88] sm:$0x3]
        %v6140 = vld [vmem:[#allocation4 + $0x90] sm:$0x3]
        %v6141 = vld [vmem:[#allocation4 + $0x98] sm:$0x3]
        %v6142 = vld [vmem:[#allocation4 + $0xa0] sm:$0x3]
        %v6143 = vld [vmem:[#allocation4 + $0xa8] sm:$0x3]
        %v6144 = vld [vmem:[#allocation4 + $0xb0] sm:$0x3]
        %v6145 = vld [vmem:[#allocation4 + $0xb8] sm:$0x3]
        %v6146 = vpack.c.bf16 %v6134, %v6122
        %v6147 = vpack.c.bf16 %v6135, %v6123
        %v6148 = vpack.c.bf16 %v6136, %v6124
        %v6149 = vpack.c.bf16 %v6137, %v6125
        %v6150 = vpack.c.bf16 %v6138, %v6126
        %v6151 = vpack.c.bf16 %v6139, %v6127
        %v6152 = vpack.c.bf16 %v6140, %v6128
        %v6153 = vpack.c.bf16 %v6141, %v6129
        %v6154 = vpack.c.bf16 %v6142, %v6130
        %v6155 = vpack.c.bf16 %v6143, %v6131
        %v6156 = vpack.c.bf16 %v6144, %v6132
        %v6157 = vpack.c.bf16 %v6145, %v6133
        %v6158 = vld [vmem:[%s4] sm:$0xff]
        %v6159 = vld [vmem:[%s4 + $0x8] sm:$0xff]
        %v6160 = vld [vmem:[%s4 + $0x10] sm:$0xff]
        %v6161 = vld [vmem:[%s4 + $0x18] sm:$0xff]
        %v6162 = vld [vmem:[%s4 + $0x20] sm:$0xff]
        %v6163 = vld [vmem:[%s4 + $0x28] sm:$0xff]
        %v6164 = vld [vmem:[%s4 + $0x30] sm:$0xff]
        %v6165 = vld [vmem:[%s4 + $0x38] sm:$0xff]
        %v6166 = vld [vmem:[%s4 + $0x40] sm:$0xff]
        %v6167 = vld [vmem:[%s4 + $0x48] sm:$0xff]
        %v6168 = vld [vmem:[%s4 + $0x50] sm:$0xff]
        %v6169 = vld [vmem:[%s4 + $0x58] sm:$0xff]
        %v6170 = vld [vmem:[%s4 + $0x60] sm:$0xff]
        %v6171 = vld [vmem:[%s4 + $0x68] sm:$0xff]
        %v6172 = vld [vmem:[%s4 + $0x70] sm:$0xff]
        %v6173 = vld [vmem:[%s4 + $0x78] sm:$0xff]
        %v6174 = vld [vmem:[%s4 + $0x80] sm:$0xff]
        %v6175 = vld [vmem:[%s4 + $0x88] sm:$0xff]
        %v6176 = vld [vmem:[%s4 + $0x90] sm:$0xff]
        %v6177 = vld [vmem:[%s4 + $0x98] sm:$0xff]
        %v6178 = vld [vmem:[%s4 + $0xa0] sm:$0xff]
        %v6179 = vld [vmem:[%s4 + $0xa8] sm:$0xff]
        %v6180 = vld [vmem:[%s4 + $0xb0] sm:$0xff]
        %v6181 = vld [vmem:[%s4 + $0xb8] sm:$0xff]
        %v6182 = vld [vmem:[%s4 + $0xc0] sm:$0xff]
        %v6183 = vld [vmem:[%s4 + $0xc8] sm:$0xff]
        %v6184 = vld [vmem:[%s4 + $0xd0] sm:$0xff]
        %v6185 = vld [vmem:[%s4 + $0xd8] sm:$0xff]
        %v6186 = vld [vmem:[%s4 + $0xe0] sm:$0xff]
        %v6187 = vld [vmem:[%s4 + $0xe8] sm:$0xff]
        %v6188 = vld [vmem:[%s4 + $0xf0] sm:$0xff]
        %v6189 = vld [vmem:[%s4 + $0xf8] sm:$0xff]
        %v6190 = vld [vmem:[%s4 + $0x100] sm:$0xff]
        %v6191 = vld [vmem:[%s4 + $0x108] sm:$0xff]
        %v6192 = vld [vmem:[%s4 + $0x110] sm:$0xff]
        %v6193 = vld [vmem:[%s4 + $0x118] sm:$0xff]
        %v6194 = vld [vmem:[%s4 + $0x120] sm:$0xff]
        %v6195 = vld [vmem:[%s4 + $0x128] sm:$0xff]
        %v6196 = vld [vmem:[%s4 + $0x130] sm:$0xff]
        %v6197 = vld [vmem:[%s4 + $0x138] sm:$0xff]
        %v6198 = vld [vmem:[%s4 + $0x140] sm:$0xff]
        %v6199 = vld [vmem:[%s4 + $0x148] sm:$0xff]
        %v6200 = vld [vmem:[%s4 + $0x150] sm:$0xff]
        %v6201 = vld [vmem:[%s4 + $0x158] sm:$0xff]
        %v6202 = vld [vmem:[%s4 + $0x160] sm:$0xff]
        %v6203 = vld [vmem:[%s4 + $0x168] sm:$0xff]
        %v6204 = vld [vmem:[%s4 + $0x170] sm:$0xff]
        %v6205 = vld [vmem:[%s4 + $0x178] sm:$0xff]
        %v6206 = vld [vmem:[%s4 + $0x180] sm:$0xff]
        %v6207 = vld [vmem:[%s4 + $0x188] sm:$0xff]
        %v6208 = vld [vmem:[%s4 + $0x190] sm:$0xff]
        %v6209 = vld [vmem:[%s4 + $0x198] sm:$0xff]
        %v6210 = vld [vmem:[%s4 + $0x1a0] sm:$0xff]
        %v6211 = vld [vmem:[%s4 + $0x1a8] sm:$0xff]
        %v6212 = vld [vmem:[%s4 + $0x1b0] sm:$0xff]
        %v6213 = vld [vmem:[%s4 + $0x1b8] sm:$0xff]
        %v6214 = vld [vmem:[%s4 + $0x1c0] sm:$0xff]
        %v6215 = vld [vmem:[%s4 + $0x1c8] sm:$0xff]
        %v6216 = vld [vmem:[%s4 + $0x1d0] sm:$0xff]
        %v6217 = vld [vmem:[%s4 + $0x1d8] sm:$0xff]
        %v6218 = vld [vmem:[%s4 + $0x1e0] sm:$0xff]
        %v6219 = vld [vmem:[%s4 + $0x1e8] sm:$0xff]
        %v6220 = vld [vmem:[%s4 + $0x1f0] sm:$0xff]
        %v6221 = vld [vmem:[%s4 + $0x1f8] sm:$0xff]
        %v6222 = vld [vmem:[%s4 + $0x200] sm:$0xff]
        %v6223 = vld [vmem:[%s4 + $0x208] sm:$0xff]
        %v6224 = vld [vmem:[%s4 + $0x210] sm:$0xff]
        %v6225 = vld [vmem:[%s4 + $0x218] sm:$0xff]
        %v6226 = vld [vmem:[%s4 + $0x220] sm:$0xff]
        %v6227 = vld [vmem:[%s4 + $0x228] sm:$0xff]
        %v6228 = vld [vmem:[%s4 + $0x230] sm:$0xff]
        %v6229 = vld [vmem:[%s4 + $0x238] sm:$0xff]
        %v6230 = vld [vmem:[%s4 + $0x240] sm:$0xff]
        %v6231 = vld [vmem:[%s4 + $0x248] sm:$0xff]
        %v6232 = vld [vmem:[%s4 + $0x250] sm:$0xff]
        %v6233 = vld [vmem:[%s4 + $0x258] sm:$0xff]
        %v6234 = vld [vmem:[%s4 + $0x260] sm:$0xff]
        %v6235 = vld [vmem:[%s4 + $0x268] sm:$0xff]
        %v6236 = vld [vmem:[%s4 + $0x270] sm:$0xff]
        %v6237 = vld [vmem:[%s4 + $0x278] sm:$0xff]
        %v6238 = vld [vmem:[%s4 + $0x280] sm:$0xff]
        %v6239 = vld [vmem:[%s4 + $0x288] sm:$0xff]
        %v6240 = vld [vmem:[%s4 + $0x290] sm:$0xff]
        %v6241 = vld [vmem:[%s4 + $0x298] sm:$0xff]
        %v6242 = vld [vmem:[%s4 + $0x2a0] sm:$0xff]
        %v6243 = vld [vmem:[%s4 + $0x2a8] sm:$0xff]
        %v6244 = vld [vmem:[%s4 + $0x2b0] sm:$0xff]
        %v6245 = vld [vmem:[%s4 + $0x2b8] sm:$0xff]
        %v6246 = vld [vmem:[%s4 + $0x2c0] sm:$0xff]
        %v6247 = vld [vmem:[%s4 + $0x2c8] sm:$0xff]
        %v6248 = vld [vmem:[%s4 + $0x2d0] sm:$0xff]
        %v6249 = vld [vmem:[%s4 + $0x2d8] sm:$0xff]
        %v6250 = vld [vmem:[%s4 + $0x2e0] sm:$0xff]
        %v6251 = vld [vmem:[%s4 + $0x2e8] sm:$0xff]
        %v6252 = vld [vmem:[%s4 + $0x2f0] sm:$0xff]
        %v6253 = vld [vmem:[%s4 + $0x2f8] sm:$0xff]
        %v6254 = vld [vmem:[%s4 + $0x300] sm:$0xff]
        %v6255 = vld [vmem:[%s4 + $0x308] sm:$0xff]
        %v6256 = vld [vmem:[%s4 + $0x310] sm:$0xff]
        %v6257 = vld [vmem:[%s4 + $0x318] sm:$0xff]
        %v6258 = vld [vmem:[%s4 + $0x320] sm:$0xff]
        %v6259 = vld [vmem:[%s4 + $0x328] sm:$0xff]
        %v6260 = vld [vmem:[%s4 + $0x330] sm:$0xff]
        %v6261 = vld [vmem:[%s4 + $0x338] sm:$0xff]
        %v6262 = vld [vmem:[%s4 + $0x340] sm:$0xff]
        %v6263 = vld [vmem:[%s4 + $0x348] sm:$0xff]
        %v6264 = vld [vmem:[%s4 + $0x350] sm:$0xff]
        %v6265 = vld [vmem:[%s4 + $0x358] sm:$0xff]
        %v6266 = vld [vmem:[%s4 + $0x360] sm:$0xff]
        %v6267 = vld [vmem:[%s4 + $0x368] sm:$0xff]
        %v6268 = vld [vmem:[%s4 + $0x370] sm:$0xff]
        %v6269 = vld [vmem:[%s4 + $0x378] sm:$0xff]
        %v6270 = vld [vmem:[%s4 + $0x380] sm:$0xff]
        %v6271 = vld [vmem:[%s4 + $0x388] sm:$0xff]
        %v6272 = vld [vmem:[%s4 + $0x390] sm:$0xff]
        %v6273 = vld [vmem:[%s4 + $0x398] sm:$0xff]
        %v6274 = vld [vmem:[%s4 + $0x3a0] sm:$0xff]
        %v6275 = vld [vmem:[%s4 + $0x3a8] sm:$0xff]
        %v6276 = vld [vmem:[%s4 + $0x3b0] sm:$0xff]
        %v6277 = vld [vmem:[%s4 + $0x3b8] sm:$0xff]
        %v6278 = vld [vmem:[%s4 + $0x3c0] sm:$0xff]
        %v6279 = vld [vmem:[%s4 + $0x3c8] sm:$0xff]
        %v6280 = vld [vmem:[%s4 + $0x3d0] sm:$0xff]
        %v6281 = vld [vmem:[%s4 + $0x3d8] sm:$0xff]
        %v6282 = vld [vmem:[%s4 + $0x3e0] sm:$0xff]
        %v6283 = vld [vmem:[%s4 + $0x3e8] sm:$0xff]
        %v6284 = vld [vmem:[%s4 + $0x3f0] sm:$0xff]
        %v6285 = vld [vmem:[%s4 + $0x3f8] sm:$0xff]
        %v6286 = vld [vmem:[%s4 + $0x400] sm:$0xff]
        %v6287 = vld [vmem:[%s4 + $0x408] sm:$0xff]
        %v6288 = vld [vmem:[%s4 + $0x410] sm:$0xff]
        %v6289 = vld [vmem:[%s4 + $0x418] sm:$0xff]
        %v6290 = vld [vmem:[%s4 + $0x420] sm:$0xff]
        %v6291 = vld [vmem:[%s4 + $0x428] sm:$0xff]
        %v6292 = vld [vmem:[%s4 + $0x430] sm:$0xff]
        %v6293 = vld [vmem:[%s4 + $0x438] sm:$0xff]
        %v6294 = vld [vmem:[%s4 + $0x440] sm:$0xff]
        %v6295 = vld [vmem:[%s4 + $0x448] sm:$0xff]
        %v6296 = vld [vmem:[%s4 + $0x450] sm:$0xff]
        %v6297 = vld [vmem:[%s4 + $0x458] sm:$0xff]
        %v6298 = vld [vmem:[%s4 + $0x460] sm:$0xff]
        %v6299 = vld [vmem:[%s4 + $0x468] sm:$0xff]
        %v6300 = vld [vmem:[%s4 + $0x470] sm:$0xff]
        %v6301 = vld [vmem:[%s4 + $0x478] sm:$0xff]
        %v6302 = vld [vmem:[%s4 + $0x480] sm:$0xff]
        %v6303 = vld [vmem:[%s4 + $0x488] sm:$0xff]
        %v6304 = vld [vmem:[%s4 + $0x490] sm:$0xff]
        %v6305 = vld [vmem:[%s4 + $0x498] sm:$0xff]
        %v6306 = vld [vmem:[%s4 + $0x4a0] sm:$0xff]
        %v6307 = vld [vmem:[%s4 + $0x4a8] sm:$0xff]
        %v6308 = vld [vmem:[%s4 + $0x4b0] sm:$0xff]
        %v6309 = vld [vmem:[%s4 + $0x4b8] sm:$0xff]
        %v6310 = vld [vmem:[%s4 + $0x4c0] sm:$0xff]
        %v6311 = vld [vmem:[%s4 + $0x4c8] sm:$0xff]
        %v6312 = vld [vmem:[%s4 + $0x4d0] sm:$0xff]
        %v6313 = vld [vmem:[%s4 + $0x4d8] sm:$0xff]
        %v6314 = vld [vmem:[%s4 + $0x4e0] sm:$0xff]
        %v6315 = vld [vmem:[%s4 + $0x4e8] sm:$0xff]
        %v6316 = vld [vmem:[%s4 + $0x4f0] sm:$0xff]
        %v6317 = vld [vmem:[%s4 + $0x4f8] sm:$0xff]
        %v6318 = vld [vmem:[%s4 + $0x500] sm:$0xff]
        %v6319 = vld [vmem:[%s4 + $0x508] sm:$0xff]
        %v6320 = vld [vmem:[%s4 + $0x510] sm:$0xff]
        %v6321 = vld [vmem:[%s4 + $0x518] sm:$0xff]
        %v6322 = vld [vmem:[%s4 + $0x520] sm:$0xff]
        %v6323 = vld [vmem:[%s4 + $0x528] sm:$0xff]
        %v6324 = vld [vmem:[%s4 + $0x530] sm:$0xff]
        %v6325 = vld [vmem:[%s4 + $0x538] sm:$0xff]
        %v6326 = vld [vmem:[%s4 + $0x540] sm:$0xff]
        %v6327 = vld [vmem:[%s4 + $0x548] sm:$0xff]
        %v6328 = vld [vmem:[%s4 + $0x550] sm:$0xff]
        %v6329 = vld [vmem:[%s4 + $0x558] sm:$0xff]
        %v6330 = vld [vmem:[%s4 + $0x560] sm:$0xff]
        %v6331 = vld [vmem:[%s4 + $0x568] sm:$0xff]
        %v6332 = vld [vmem:[%s4 + $0x570] sm:$0xff]
        %v6333 = vld [vmem:[%s4 + $0x578] sm:$0xff]
        %v6334 = vld [vmem:[%s4 + $0x580] sm:$0xff]
        %v6335 = vld [vmem:[%s4 + $0x588] sm:$0xff]
        %v6336 = vld [vmem:[%s4 + $0x590] sm:$0xff]
        %v6337 = vld [vmem:[%s4 + $0x598] sm:$0xff]
        %v6338 = vld [vmem:[%s4 + $0x5a0] sm:$0xff]
        %v6339 = vld [vmem:[%s4 + $0x5a8] sm:$0xff]
        %v6340 = vld [vmem:[%s4 + $0x5b0] sm:$0xff]
        %v6341 = vld [vmem:[%s4 + $0x5b8] sm:$0xff]
        %v6342 = vld [vmem:[%s4 + $0x5c0] sm:$0xff]
        %v6343 = vld [vmem:[%s4 + $0x5c8] sm:$0xff]
        %v6344 = vld [vmem:[%s4 + $0x5d0] sm:$0xff]
        %v6345 = vld [vmem:[%s4 + $0x5d8] sm:$0x33]
        %v6534 = vunpack.c.l.b16 %v6158
        %v6535 = vunpack.c.h.b16 %v6158
        %v6536 = vunpack.c.l.b16 %v6159
        %v6537 = vunpack.c.h.b16 %v6159
        %v6538 = vunpack.c.l.b16 %v6160
        %v6539 = vunpack.c.h.b16 %v6160
        %v6540 = vunpack.c.l.b16 %v6161
        %v6541 = vunpack.c.h.b16 %v6161
        %v6542 = vunpack.c.l.b16 %v6162
        %v6543 = vunpack.c.h.b16 %v6162
        %v6544 = vunpack.c.l.b16 %v6163
        %v6545 = vunpack.c.h.b16 %v6163
        %v6546 = vunpack.c.l.b16 %v6164
        %v6547 = vunpack.c.h.b16 %v6164
        %v6548 = vunpack.c.l.b16 %v6165
        %v6549 = vunpack.c.h.b16 %v6165
        %v6550 = vunpack.c.l.b16 %v6166
        %v6551 = vunpack.c.h.b16 %v6166
        %v6552 = vunpack.c.l.b16 %v6167
        %v6553 = vunpack.c.h.b16 %v6167
        %v6554 = vunpack.c.l.b16 %v6168
        %v6555 = vunpack.c.h.b16 %v6168
        %v6556 = vunpack.c.l.b16 %v6169
        %v6557 = vunpack.c.h.b16 %v6169
        %v6558 = vunpack.c.l.b16 %v6170
        %v6559 = vunpack.c.h.b16 %v6170
        %v6560 = vunpack.c.l.b16 %v6171
        %v6561 = vunpack.c.h.b16 %v6171
        %v6562 = vunpack.c.l.b16 %v6172
        %v6563 = vunpack.c.h.b16 %v6172
        %v6564 = vunpack.c.l.b16 %v6173
        %v6565 = vunpack.c.h.b16 %v6173
        %v6566 = vunpack.c.l.b16 %v6174
        %v6567 = vunpack.c.h.b16 %v6174
        %v6568 = vunpack.c.l.b16 %v6175
        %v6569 = vunpack.c.h.b16 %v6175
        %v6570 = vunpack.c.l.b16 %v6176
        %v6571 = vunpack.c.h.b16 %v6176
        %v6572 = vunpack.c.l.b16 %v6177
        %v6573 = vunpack.c.h.b16 %v6177
        %v6574 = vunpack.c.l.b16 %v6178
        %v6575 = vunpack.c.h.b16 %v6178
        %v6576 = vunpack.c.l.b16 %v6179
        %v6577 = vunpack.c.h.b16 %v6179
        %v6578 = vunpack.c.l.b16 %v6180
        %v6579 = vunpack.c.h.b16 %v6180
        %v6580 = vunpack.c.l.b16 %v6181
        %v6581 = vunpack.c.h.b16 %v6181
        %v6582 = vunpack.c.l.b16 %v6182
        %v6583 = vunpack.c.h.b16 %v6182
        %v6584 = vunpack.c.l.b16 %v6183
        %v6585 = vunpack.c.h.b16 %v6183
        %v6586 = vunpack.c.l.b16 %v6184
        %v6587 = vunpack.c.h.b16 %v6184
        %v6588 = vunpack.c.l.b16 %v6185
        %v6589 = vunpack.c.h.b16 %v6185
        %v6590 = vunpack.c.l.b16 %v6186
        %v6591 = vunpack.c.h.b16 %v6186
        %v6592 = vunpack.c.l.b16 %v6187
        %v6593 = vunpack.c.h.b16 %v6187
        %v6594 = vunpack.c.l.b16 %v6188
        %v6595 = vunpack.c.h.b16 %v6188
        %v6596 = vunpack.c.l.b16 %v6189
        %v6597 = vunpack.c.h.b16 %v6189
        %v6598 = vunpack.c.l.b16 %v6190
        %v6599 = vunpack.c.h.b16 %v6190
        %v6600 = vunpack.c.l.b16 %v6191
        %v6601 = vunpack.c.h.b16 %v6191
        %v6602 = vunpack.c.l.b16 %v6192
        %v6603 = vunpack.c.h.b16 %v6192
        %v6604 = vunpack.c.l.b16 %v6193
        %v6605 = vunpack.c.h.b16 %v6193
        %v6606 = vunpack.c.l.b16 %v6194
        %v6607 = vunpack.c.h.b16 %v6194
        %v6608 = vunpack.c.l.b16 %v6195
        %v6609 = vunpack.c.h.b16 %v6195
        %v6610 = vunpack.c.l.b16 %v6196
        %v6611 = vunpack.c.h.b16 %v6196
        %v6612 = vunpack.c.l.b16 %v6197
        %v6613 = vunpack.c.h.b16 %v6197
        %v6614 = vunpack.c.l.b16 %v6198
        %v6615 = vunpack.c.h.b16 %v6198
        %v6616 = vunpack.c.l.b16 %v6199
        %v6617 = vunpack.c.h.b16 %v6199
        %v6618 = vunpack.c.l.b16 %v6200
        %v6619 = vunpack.c.h.b16 %v6200
        %v6620 = vunpack.c.l.b16 %v6201
        %v6621 = vunpack.c.h.b16 %v6201
        %v6622 = vunpack.c.l.b16 %v6202
        %v6623 = vunpack.c.h.b16 %v6202
        %v6624 = vunpack.c.l.b16 %v6203
        %v6625 = vunpack.c.h.b16 %v6203
        %v6626 = vunpack.c.l.b16 %v6204
        %v6627 = vunpack.c.h.b16 %v6204
        %v6628 = vunpack.c.l.b16 %v6205
        %v6629 = vunpack.c.h.b16 %v6205
        %v6630 = vunpack.c.l.b16 %v6206
        %v6631 = vunpack.c.h.b16 %v6206
        %v6632 = vunpack.c.l.b16 %v6207
        %v6633 = vunpack.c.h.b16 %v6207
        %v6634 = vunpack.c.l.b16 %v6208
        %v6635 = vunpack.c.h.b16 %v6208
        %v6636 = vunpack.c.l.b16 %v6209
        %v6637 = vunpack.c.h.b16 %v6209
        %v6638 = vunpack.c.l.b16 %v6210
        %v6639 = vunpack.c.h.b16 %v6210
        %v6640 = vunpack.c.l.b16 %v6211
        %v6641 = vunpack.c.h.b16 %v6211
        %v6642 = vunpack.c.l.b16 %v6212
        %v6643 = vunpack.c.h.b16 %v6212
        %v6644 = vunpack.c.l.b16 %v6213
        %v6645 = vunpack.c.h.b16 %v6213
        %v6646 = vunpack.c.l.b16 %v6214
        %v6647 = vunpack.c.h.b16 %v6214
        %v6648 = vunpack.c.l.b16 %v6215
        %v6649 = vunpack.c.h.b16 %v6215
        %v6650 = vunpack.c.l.b16 %v6216
        %v6651 = vunpack.c.h.b16 %v6216
        %v6652 = vunpack.c.l.b16 %v6217
        %v6653 = vunpack.c.h.b16 %v6217
        %v6654 = vunpack.c.l.b16 %v6218
        %v6655 = vunpack.c.h.b16 %v6218
        %v6656 = vunpack.c.l.b16 %v6219
        %v6657 = vunpack.c.h.b16 %v6219
        %v6658 = vunpack.c.l.b16 %v6220
        %v6659 = vunpack.c.h.b16 %v6220
        %v6660 = vunpack.c.l.b16 %v6221
        %v6661 = vunpack.c.h.b16 %v6221
        %v6662 = vunpack.c.l.b16 %v6222
        %v6663 = vunpack.c.h.b16 %v6222
        %v6664 = vunpack.c.l.b16 %v6223
        %v6665 = vunpack.c.h.b16 %v6223
        %v6666 = vunpack.c.l.b16 %v6224
        %v6667 = vunpack.c.h.b16 %v6224
        %v6668 = vunpack.c.l.b16 %v6225
        %v6669 = vunpack.c.h.b16 %v6225
        %v6670 = vunpack.c.l.b16 %v6226
        %v6671 = vunpack.c.h.b16 %v6226
        %v6672 = vunpack.c.l.b16 %v6227
        %v6673 = vunpack.c.h.b16 %v6227
        %v6674 = vunpack.c.l.b16 %v6228
        %v6675 = vunpack.c.h.b16 %v6228
        %v6676 = vunpack.c.l.b16 %v6229
        %v6677 = vunpack.c.h.b16 %v6229
        %v6678 = vunpack.c.l.b16 %v6230
        %v6679 = vunpack.c.h.b16 %v6230
        %v6680 = vunpack.c.l.b16 %v6231
        %v6681 = vunpack.c.h.b16 %v6231
        %v6682 = vunpack.c.l.b16 %v6232
        %v6683 = vunpack.c.h.b16 %v6232
        %v6684 = vunpack.c.l.b16 %v6233
        %v6685 = vunpack.c.h.b16 %v6233
        %v6686 = vunpack.c.l.b16 %v6234
        %v6687 = vunpack.c.h.b16 %v6234
        %v6688 = vunpack.c.l.b16 %v6235
        %v6689 = vunpack.c.h.b16 %v6235
        %v6690 = vunpack.c.l.b16 %v6236
        %v6691 = vunpack.c.h.b16 %v6236
        %v6692 = vunpack.c.l.b16 %v6237
        %v6693 = vunpack.c.h.b16 %v6237
        %v6694 = vunpack.c.l.b16 %v6238
        %v6695 = vunpack.c.h.b16 %v6238
        %v6696 = vunpack.c.l.b16 %v6239
        %v6697 = vunpack.c.h.b16 %v6239
        %v6698 = vunpack.c.l.b16 %v6240
        %v6699 = vunpack.c.h.b16 %v6240
        %v6700 = vunpack.c.l.b16 %v6241
        %v6701 = vunpack.c.h.b16 %v6241
        %v6702 = vunpack.c.l.b16 %v6242
        %v6703 = vunpack.c.h.b16 %v6242
        %v6704 = vunpack.c.l.b16 %v6243
        %v6705 = vunpack.c.h.b16 %v6243
        %v6706 = vunpack.c.l.b16 %v6244
        %v6707 = vunpack.c.h.b16 %v6244
        %v6708 = vunpack.c.l.b16 %v6245
        %v6709 = vunpack.c.h.b16 %v6245
        %v6710 = vunpack.c.l.b16 %v6246
        %v6711 = vunpack.c.h.b16 %v6246
        %v6712 = vunpack.c.l.b16 %v6247
        %v6713 = vunpack.c.h.b16 %v6247
        %v6714 = vunpack.c.l.b16 %v6248
        %v6715 = vunpack.c.h.b16 %v6248
        %v6716 = vunpack.c.l.b16 %v6249
        %v6717 = vunpack.c.h.b16 %v6249
        %v6718 = vunpack.c.l.b16 %v6250
        %v6719 = vunpack.c.h.b16 %v6250
        %v6720 = vunpack.c.l.b16 %v6251
        %v6721 = vunpack.c.h.b16 %v6251
        %v6722 = vunpack.c.l.b16 %v6252
        %v6723 = vunpack.c.h.b16 %v6252
        %v6724 = vunpack.c.l.b16 %v6253
        %v6725 = vunpack.c.h.b16 %v6253
        %v6726 = vunpack.c.l.b16 %v6254
        %v6727 = vunpack.c.h.b16 %v6254
        %v6728 = vunpack.c.l.b16 %v6255
        %v6729 = vunpack.c.h.b16 %v6255
        %v6730 = vunpack.c.l.b16 %v6256
        %v6731 = vunpack.c.h.b16 %v6256
        %v6732 = vunpack.c.l.b16 %v6257
        %v6733 = vunpack.c.h.b16 %v6257
        %v6734 = vunpack.c.l.b16 %v6258
        %v6735 = vunpack.c.h.b16 %v6258
        %v6736 = vunpack.c.l.b16 %v6259
        %v6737 = vunpack.c.h.b16 %v6259
        %v6738 = vunpack.c.l.b16 %v6260
        %v6739 = vunpack.c.h.b16 %v6260
        %v6740 = vunpack.c.l.b16 %v6261
        %v6741 = vunpack.c.h.b16 %v6261
        %v6742 = vunpack.c.l.b16 %v6262
        %v6743 = vunpack.c.h.b16 %v6262
        %v6744 = vunpack.c.l.b16 %v6263
        %v6745 = vunpack.c.h.b16 %v6263
        %v6746 = vunpack.c.l.b16 %v6264
        %v6747 = vunpack.c.h.b16 %v6264
        %v6748 = vunpack.c.l.b16 %v6265
        %v6749 = vunpack.c.h.b16 %v6265
        %v6750 = vunpack.c.l.b16 %v6266
        %v6751 = vunpack.c.h.b16 %v6266
        %v6752 = vunpack.c.l.b16 %v6267
        %v6753 = vunpack.c.h.b16 %v6267
        %v6754 = vunpack.c.l.b16 %v6268
        %v6755 = vunpack.c.h.b16 %v6268
        %v6756 = vunpack.c.l.b16 %v6269
        %v6757 = vunpack.c.h.b16 %v6269
        %v6758 = vunpack.c.l.b16 %v6270
        %v6759 = vunpack.c.h.b16 %v6270
        %v6760 = vunpack.c.l.b16 %v6271
        %v6761 = vunpack.c.h.b16 %v6271
        %v6762 = vunpack.c.l.b16 %v6272
        %v6763 = vunpack.c.h.b16 %v6272
        %v6764 = vunpack.c.l.b16 %v6273
        %v6765 = vunpack.c.h.b16 %v6273
        %v6766 = vunpack.c.l.b16 %v6274
        %v6767 = vunpack.c.h.b16 %v6274
        %v6768 = vunpack.c.l.b16 %v6275
        %v6769 = vunpack.c.h.b16 %v6275
        %v6770 = vunpack.c.l.b16 %v6276
        %v6771 = vunpack.c.h.b16 %v6276
        %v6772 = vunpack.c.l.b16 %v6277
        %v6773 = vunpack.c.h.b16 %v6277
        %v6774 = vunpack.c.l.b16 %v6278
        %v6775 = vunpack.c.h.b16 %v6278
        %v6776 = vunpack.c.l.b16 %v6279
        %v6777 = vunpack.c.h.b16 %v6279
        %v6778 = vunpack.c.l.b16 %v6280
        %v6779 = vunpack.c.h.b16 %v6280
        %v6780 = vunpack.c.l.b16 %v6281
        %v6781 = vunpack.c.h.b16 %v6281
        %v6782 = vunpack.c.l.b16 %v6282
        %v6783 = vunpack.c.h.b16 %v6282
        %v6784 = vunpack.c.l.b16 %v6283
        %v6785 = vunpack.c.h.b16 %v6283
        %v6786 = vunpack.c.l.b16 %v6284
        %v6787 = vunpack.c.h.b16 %v6284
        %v6788 = vunpack.c.l.b16 %v6285
        %v6789 = vunpack.c.h.b16 %v6285
        %v6790 = vunpack.c.l.b16 %v6286
        %v6791 = vunpack.c.h.b16 %v6286
        %v6792 = vunpack.c.l.b16 %v6287
        %v6793 = vunpack.c.h.b16 %v6287
        %v6794 = vunpack.c.l.b16 %v6288
        %v6795 = vunpack.c.h.b16 %v6288
        %v6796 = vunpack.c.l.b16 %v6289
        %v6797 = vunpack.c.h.b16 %v6289
        %v6798 = vunpack.c.l.b16 %v6290
        %v6799 = vunpack.c.h.b16 %v6290
        %v6800 = vunpack.c.l.b16 %v6291
        %v6801 = vunpack.c.h.b16 %v6291
        %v6802 = vunpack.c.l.b16 %v6292
        %v6803 = vunpack.c.h.b16 %v6292
        %v6804 = vunpack.c.l.b16 %v6293
        %v6805 = vunpack.c.h.b16 %v6293
        %v6806 = vunpack.c.l.b16 %v6294
        %v6807 = vunpack.c.h.b16 %v6294
        %v6808 = vunpack.c.l.b16 %v6295
        %v6809 = vunpack.c.h.b16 %v6295
        %v6810 = vunpack.c.l.b16 %v6296
        %v6811 = vunpack.c.h.b16 %v6296
        %v6812 = vunpack.c.l.b16 %v6297
        %v6813 = vunpack.c.h.b16 %v6297
        %v6814 = vunpack.c.l.b16 %v6298
        %v6815 = vunpack.c.h.b16 %v6298
        %v6816 = vunpack.c.l.b16 %v6299
        %v6817 = vunpack.c.h.b16 %v6299
        %v6818 = vunpack.c.l.b16 %v6300
        %v6819 = vunpack.c.h.b16 %v6300
        %v6820 = vunpack.c.l.b16 %v6301
        %v6821 = vunpack.c.h.b16 %v6301
        %v6822 = vunpack.c.l.b16 %v6302
        %v6823 = vunpack.c.h.b16 %v6302
        %v6824 = vunpack.c.l.b16 %v6303
        %v6825 = vunpack.c.h.b16 %v6303
        %v6826 = vunpack.c.l.b16 %v6304
        %v6827 = vunpack.c.h.b16 %v6304
        %v6828 = vunpack.c.l.b16 %v6305
        %v6829 = vunpack.c.h.b16 %v6305
        %v6830 = vunpack.c.l.b16 %v6306
        %v6831 = vunpack.c.h.b16 %v6306
        %v6832 = vunpack.c.l.b16 %v6307
        %v6833 = vunpack.c.h.b16 %v6307
        %v6834 = vunpack.c.l.b16 %v6308
        %v6835 = vunpack.c.h.b16 %v6308
        %v6836 = vunpack.c.l.b16 %v6309
        %v6837 = vunpack.c.h.b16 %v6309
        %v6838 = vunpack.c.l.b16 %v6310
        %v6839 = vunpack.c.h.b16 %v6310
        %v6840 = vunpack.c.l.b16 %v6311
        %v6841 = vunpack.c.h.b16 %v6311
        %v6842 = vunpack.c.l.b16 %v6312
        %v6843 = vunpack.c.h.b16 %v6312
        %v6844 = vunpack.c.l.b16 %v6313
        %v6845 = vunpack.c.h.b16 %v6313
        %v6846 = vunpack.c.l.b16 %v6314
        %v6847 = vunpack.c.h.b16 %v6314
        %v6848 = vunpack.c.l.b16 %v6315
        %v6849 = vunpack.c.h.b16 %v6315
        %v6850 = vunpack.c.l.b16 %v6316
        %v6851 = vunpack.c.h.b16 %v6316
        %v6852 = vunpack.c.l.b16 %v6317
        %v6853 = vunpack.c.h.b16 %v6317
        %v6854 = vunpack.c.l.b16 %v6318
        %v6855 = vunpack.c.h.b16 %v6318
        %v6856 = vunpack.c.l.b16 %v6319
        %v6857 = vunpack.c.h.b16 %v6319
        %v6858 = vunpack.c.l.b16 %v6320
        %v6859 = vunpack.c.h.b16 %v6320
        %v6860 = vunpack.c.l.b16 %v6321
        %v6861 = vunpack.c.h.b16 %v6321
        %v6862 = vunpack.c.l.b16 %v6322
        %v6863 = vunpack.c.h.b16 %v6322
        %v6864 = vunpack.c.l.b16 %v6323
        %v6865 = vunpack.c.h.b16 %v6323
        %v6866 = vunpack.c.l.b16 %v6324
        %v6867 = vunpack.c.h.b16 %v6324
        %v6868 = vunpack.c.l.b16 %v6325
        %v6869 = vunpack.c.h.b16 %v6325
        %v6870 = vunpack.c.l.b16 %v6326
        %v6871 = vunpack.c.h.b16 %v6326
        %v6872 = vunpack.c.l.b16 %v6327
        %v6873 = vunpack.c.h.b16 %v6327
        %v6874 = vunpack.c.l.b16 %v6328
        %v6875 = vunpack.c.h.b16 %v6328
        %v6876 = vunpack.c.l.b16 %v6329
        %v6877 = vunpack.c.h.b16 %v6329
        %v6878 = vunpack.c.l.b16 %v6330
        %v6879 = vunpack.c.h.b16 %v6330
        %v6880 = vunpack.c.l.b16 %v6331
        %v6881 = vunpack.c.h.b16 %v6331
        %v6882 = vunpack.c.l.b16 %v6332
        %v6883 = vunpack.c.h.b16 %v6332
        %v6884 = vunpack.c.l.b16 %v6333
        %v6885 = vunpack.c.h.b16 %v6333
        %v6886 = vunpack.c.l.b16 %v6334
        %v6887 = vunpack.c.h.b16 %v6334
        %v6888 = vunpack.c.l.b16 %v6335
        %v6889 = vunpack.c.h.b16 %v6335
        %v6890 = vunpack.c.l.b16 %v6336
        %v6891 = vunpack.c.h.b16 %v6336
        %v6892 = vunpack.c.l.b16 %v6337
        %v6893 = vunpack.c.h.b16 %v6337
        %v6894 = vunpack.c.l.b16 %v6338
        %v6895 = vunpack.c.h.b16 %v6338
        %v6896 = vunpack.c.l.b16 %v6339
        %v6897 = vunpack.c.h.b16 %v6339
        %v6898 = vunpack.c.l.b16 %v6340
        %v6899 = vunpack.c.h.b16 %v6340
        %v6900 = vunpack.c.l.b16 %v6341
        %v6901 = vunpack.c.h.b16 %v6341
        %v6902 = vunpack.c.l.b16 %v6342
        %v6903 = vunpack.c.h.b16 %v6342
        %v6904 = vunpack.c.l.b16 %v6343
        %v6905 = vunpack.c.h.b16 %v6343
        %v6906 = vunpack.c.l.b16 %v6344
        %v6907 = vunpack.c.h.b16 %v6344
        %v6908 = vunpack.c.l.b16 %v6345
        %v6909 = vunpack.c.h.b16 %v6345
        %v6910 = vpack.c.b16 %v6536, %v6534
        %v6911 = vpack.c.b16 %v6537, %v6535
        %v6912 = vpack.c.b16 %v6540, %v6538
        %v6913 = vpack.c.b16 %v6541, %v6539
        %v6914 = vpack.c.b16 %v6544, %v6542
        %v6915 = vpack.c.b16 %v6545, %v6543
        %v6916 = vpack.c.b16 %v6548, %v6546
        %v6917 = vpack.c.b16 %v6549, %v6547
        %v6918 = vpack.c.b16 %v6552, %v6550
        %v6919 = vpack.c.b16 %v6553, %v6551
        %v6920 = vpack.c.b16 %v6556, %v6554
        %v6921 = vpack.c.b16 %v6557, %v6555
        %v6922 = vpack.c.b16 %v6560, %v6558
        %v6923 = vpack.c.b16 %v6561, %v6559
        %v6924 = vpack.c.b16 %v6564, %v6562
        %v6925 = vpack.c.b16 %v6565, %v6563
        %v6926 = vpack.c.b16 %v6568, %v6566
        %v6927 = vpack.c.b16 %v6569, %v6567
        %v6928 = vpack.c.b16 %v6572, %v6570
        %v6929 = vpack.c.b16 %v6573, %v6571
        %v6930 = vpack.c.b16 %v6576, %v6574
        %v6931 = vpack.c.b16 %v6577, %v6575
        %v6932 = vpack.c.b16 %v6580, %v6578
        %v6933 = vpack.c.b16 %v6581, %v6579
        %v6934 = vpack.c.b16 %v6584, %v6582
        %v6935 = vpack.c.b16 %v6585, %v6583
        %v6936 = vpack.c.b16 %v6588, %v6586
        %v6937 = vpack.c.b16 %v6589, %v6587
        %v6938 = vpack.c.b16 %v6592, %v6590
        %v6939 = vpack.c.b16 %v6593, %v6591
        %v6940 = vpack.c.b16 %v6596, %v6594
        %v6941 = vpack.c.b16 %v6597, %v6595
        %v6942 = vpack.c.b16 %v6600, %v6598
        %v6943 = vpack.c.b16 %v6601, %v6599
        %v6944 = vpack.c.b16 %v6604, %v6602
        %v6945 = vpack.c.b16 %v6605, %v6603
        %v6946 = vpack.c.b16 %v6608, %v6606
        %v6947 = vpack.c.b16 %v6609, %v6607
        %v6948 = vpack.c.b16 %v6612, %v6610
        %v6949 = vpack.c.b16 %v6613, %v6611
        %v6950 = vpack.c.b16 %v6616, %v6614
        %v6951 = vpack.c.b16 %v6617, %v6615
        %v6952 = vpack.c.b16 %v6620, %v6618
        %v6953 = vpack.c.b16 %v6621, %v6619
        %v6954 = vpack.c.b16 %v6624, %v6622
        %v6955 = vpack.c.b16 %v6625, %v6623
        %v6956 = vpack.c.b16 %v6628, %v6626
        %v6957 = vpack.c.b16 %v6629, %v6627
        %v6958 = vpack.c.b16 %v6632, %v6630
        %v6959 = vpack.c.b16 %v6633, %v6631
        %v6960 = vpack.c.b16 %v6636, %v6634
        %v6961 = vpack.c.b16 %v6637, %v6635
        %v6962 = vpack.c.b16 %v6640, %v6638
        %v6963 = vpack.c.b16 %v6641, %v6639
        %v6964 = vpack.c.b16 %v6644, %v6642
        %v6965 = vpack.c.b16 %v6645, %v6643
        %v6966 = vpack.c.b16 %v6648, %v6646
        %v6967 = vpack.c.b16 %v6649, %v6647
        %v6968 = vpack.c.b16 %v6652, %v6650
        %v6969 = vpack.c.b16 %v6653, %v6651
        %v6970 = vpack.c.b16 %v6656, %v6654
        %v6971 = vpack.c.b16 %v6657, %v6655
        %v6972 = vpack.c.b16 %v6660, %v6658
        %v6973 = vpack.c.b16 %v6661, %v6659
        %v6974 = vpack.c.b16 %v6664, %v6662
        %v6975 = vpack.c.b16 %v6665, %v6663
        %v6976 = vpack.c.b16 %v6668, %v6666
        %v6977 = vpack.c.b16 %v6669, %v6667
        %v6978 = vpack.c.b16 %v6672, %v6670
        %v6979 = vpack.c.b16 %v6673, %v6671
        %v6980 = vpack.c.b16 %v6676, %v6674
        %v6981 = vpack.c.b16 %v6677, %v6675
        %v6982 = vpack.c.b16 %v6680, %v6678
        %v6983 = vpack.c.b16 %v6681, %v6679
        %v6984 = vpack.c.b16 %v6684, %v6682
        %v6985 = vpack.c.b16 %v6685, %v6683
        %v6986 = vpack.c.b16 %v6688, %v6686
        %v6987 = vpack.c.b16 %v6689, %v6687
        %v6988 = vpack.c.b16 %v6692, %v6690
        %v6989 = vpack.c.b16 %v6693, %v6691
        %v6990 = vpack.c.b16 %v6696, %v6694
        %v6991 = vpack.c.b16 %v6697, %v6695
        %v6992 = vpack.c.b16 %v6700, %v6698
        %v6993 = vpack.c.b16 %v6701, %v6699
        %v6994 = vpack.c.b16 %v6704, %v6702
        %v6995 = vpack.c.b16 %v6705, %v6703
        %v6996 = vpack.c.b16 %v6708, %v6706
        %v6997 = vpack.c.b16 %v6709, %v6707
        %v6998 = vpack.c.b16 %v6712, %v6710
        %v6999 = vpack.c.b16 %v6713, %v6711
        %v7000 = vpack.c.b16 %v6716, %v6714
        %v7001 = vpack.c.b16 %v6717, %v6715
        %v7002 = vpack.c.b16 %v6720, %v6718
        %v7003 = vpack.c.b16 %v6721, %v6719
        %v7004 = vpack.c.b16 %v6724, %v6722
        %v7005 = vpack.c.b16 %v6725, %v6723
        %v7006 = vpack.c.b16 %v6728, %v6726
        %v7007 = vpack.c.b16 %v6729, %v6727
        %v7008 = vpack.c.b16 %v6732, %v6730
        %v7009 = vpack.c.b16 %v6733, %v6731
        %v7010 = vpack.c.b16 %v6736, %v6734
        %v7011 = vpack.c.b16 %v6737, %v6735
        %v7012 = vpack.c.b16 %v6740, %v6738
        %v7013 = vpack.c.b16 %v6741, %v6739
        %v7014 = vpack.c.b16 %v6744, %v6742
        %v7015 = vpack.c.b16 %v6745, %v6743
        %v7016 = vpack.c.b16 %v6748, %v6746
        %v7017 = vpack.c.b16 %v6749, %v6747
        %v7018 = vpack.c.b16 %v6752, %v6750
        %v7019 = vpack.c.b16 %v6753, %v6751
        %v7020 = vpack.c.b16 %v6756, %v6754
        %v7021 = vpack.c.b16 %v6757, %v6755
        %v7022 = vpack.c.b16 %v6760, %v6758
        %v7023 = vpack.c.b16 %v6761, %v6759
        %v7024 = vpack.c.b16 %v6764, %v6762
        %v7025 = vpack.c.b16 %v6765, %v6763
        %v7026 = vpack.c.b16 %v6768, %v6766
        %v7027 = vpack.c.b16 %v6769, %v6767
        %v7028 = vpack.c.b16 %v6772, %v6770
        %v7029 = vpack.c.b16 %v6773, %v6771
        %v7030 = vpack.c.b16 %v6776, %v6774
        %v7031 = vpack.c.b16 %v6777, %v6775
        %v7032 = vpack.c.b16 %v6780, %v6778
        %v7033 = vpack.c.b16 %v6781, %v6779
        %v7034 = vpack.c.b16 %v6784, %v6782
        %v7035 = vpack.c.b16 %v6785, %v6783
        %v7036 = vpack.c.b16 %v6788, %v6786
        %v7037 = vpack.c.b16 %v6789, %v6787
        %v7038 = vpack.c.b16 %v6792, %v6790
        %v7039 = vpack.c.b16 %v6793, %v6791
        %v7040 = vpack.c.b16 %v6796, %v6794
        %v7041 = vpack.c.b16 %v6797, %v6795
        %v7042 = vpack.c.b16 %v6800, %v6798
        %v7043 = vpack.c.b16 %v6801, %v6799
        %v7044 = vpack.c.b16 %v6804, %v6802
        %v7045 = vpack.c.b16 %v6805, %v6803
        %v7046 = vpack.c.b16 %v6808, %v6806
        %v7047 = vpack.c.b16 %v6809, %v6807
        %v7048 = vpack.c.b16 %v6812, %v6810
        %v7049 = vpack.c.b16 %v6813, %v6811
        %v7050 = vpack.c.b16 %v6816, %v6814
        %v7051 = vpack.c.b16 %v6817, %v6815
        %v7052 = vpack.c.b16 %v6820, %v6818
        %v7053 = vpack.c.b16 %v6821, %v6819
        %v7054 = vpack.c.b16 %v6824, %v6822
        %v7055 = vpack.c.b16 %v6825, %v6823
        %v7056 = vpack.c.b16 %v6828, %v6826
        %v7057 = vpack.c.b16 %v6829, %v6827
        %v7058 = vpack.c.b16 %v6832, %v6830
        %v7059 = vpack.c.b16 %v6833, %v6831
        %v7060 = vpack.c.b16 %v6836, %v6834
        %v7061 = vpack.c.b16 %v6837, %v6835
        %v7062 = vpack.c.b16 %v6840, %v6838
        %v7063 = vpack.c.b16 %v6841, %v6839
        %v7064 = vpack.c.b16 %v6844, %v6842
        %v7065 = vpack.c.b16 %v6845, %v6843
        %v7066 = vpack.c.b16 %v6848, %v6846
        %v7067 = vpack.c.b16 %v6849, %v6847
        %v7068 = vpack.c.b16 %v6852, %v6850
        %v7069 = vpack.c.b16 %v6853, %v6851
        %v7070 = vpack.c.b16 %v6856, %v6854
        %v7071 = vpack.c.b16 %v6857, %v6855
        %v7072 = vpack.c.b16 %v6860, %v6858
        %v7073 = vpack.c.b16 %v6861, %v6859
        %v7074 = vpack.c.b16 %v6864, %v6862
        %v7075 = vpack.c.b16 %v6865, %v6863
        %v7076 = vpack.c.b16 %v6868, %v6866
        %v7077 = vpack.c.b16 %v6869, %v6867
        %v7078 = vpack.c.b16 %v6872, %v6870
        %v7079 = vpack.c.b16 %v6873, %v6871
        %v7080 = vpack.c.b16 %v6876, %v6874
        %v7081 = vpack.c.b16 %v6877, %v6875
        %v7082 = vpack.c.b16 %v6880, %v6878
        %v7083 = vpack.c.b16 %v6881, %v6879
        %v7084 = vpack.c.b16 %v6884, %v6882
        %v7085 = vpack.c.b16 %v6885, %v6883
        %v7086 = vpack.c.b16 %v6888, %v6886
        %v7087 = vpack.c.b16 %v6889, %v6887
        %v7088 = vpack.c.b16 %v6892, %v6890
        %v7089 = vpack.c.b16 %v6893, %v6891
        %v7090 = vpack.c.b16 %v6896, %v6894
        %v7091 = vpack.c.b16 %v6897, %v6895
        %v7092 = vpack.c.b16 %v6900, %v6898
        %v7093 = vpack.c.b16 %v6901, %v6899
        %v7094 = vpack.c.b16 %v6904, %v6902
        %v7095 = vpack.c.b16 %v6905, %v6903
        %v7096 = vpack.c.b16 %v6908, %v6906
        %v7097 = vpack.c.b16 %v6909, %v6907
        %vm7284 = vcmask 752640
        %v7286 = vsel %vm7284, %v6157, 0
        %v7289 = vsel %vm608, %v7096, 0
        %v7292 = vsel %vm608, %v7097, 0
        %7294 = vmatprep.subr.bf16.mxu0 %v6925
        %7295 = vmatpush1.bf16.msra.mxu0 %v6924
        %7296 = vmatprep.subr.bf16.mxu0 %v6923
        %7297 = vmatpush1.bf16.msra.mxu0 %v6922
        %7298 = vmatprep.subr.bf16.mxu0 %v6921
        %7299 = vmatpush1.bf16.msra.mxu0 %v6920
        %7300 = vmatprep.subr.bf16.mxu0 %v6919
        %7301 = vmatpush1.bf16.msra.mxu0 %v6918
        %7302 = vmatprep.subr.bf16.mxu0 %v6917
        %7303 = vmatpush1.bf16.msra.mxu0 %v6916
        %7304 = vmatprep.subr.bf16.mxu0 %v6915
        %7305 = vmatpush1.bf16.msra.mxu0 %v6914
        %7306 = vmatprep.subr.bf16.mxu0 %v6913
        %7307 = vmatpush1.bf16.msra.mxu0 %v6912
        %7308 = vmatprep.subr.bf16.mxu0 %v6911
        %7309 = vmatpush1.bf16.msra.mxu0 %v6910
        %7310 = vmatprep.subr.bf16.mxu0 %v6941
        %7311 = vmatpush2.bf16.msra.mxu0 %v6940
        %7312 = vmatprep.subr.bf16.mxu0 %v6939
        %7313 = vmatpush2.bf16.msra.mxu0 %v6938
        %7314 = vmatprep.subr.bf16.mxu0 %v6937
        %7315 = vmatpush2.bf16.msra.mxu0 %v6936
        %7316 = vmatprep.subr.bf16.mxu0 %v6935
        %7317 = vmatpush2.bf16.msra.mxu0 %v6934
        %7318 = vmatprep.subr.bf16.mxu0 %v6933
        %7319 = vmatpush2.bf16.msra.mxu0 %v6932
        %7320 = vmatprep.subr.bf16.mxu0 %v6931
        %7321 = vmatpush2.bf16.msra.mxu0 %v6930
        %7322 = vmatprep.subr.bf16.mxu0 %v6929
        %7323 = vmatpush2.bf16.msra.mxu0 %v6928
        %7324 = vmatprep.subr.bf16.mxu0 %v6927
        %7325 = vmatpush2.bf16.msra.mxu0 %v6926
        %7326 = vmatprep.mubr.bf16.mxu0 %v6147
        %7327 = vmatmul.mubr.bf16.gmra.mxu0 %v6146
        %v7328 = vpop.f32.mrf.mxu0
        %v7329 = vadd.f32 0.0, %v7328
        %v7330 = vpop.f32.mrf.mxu0
        %v7331 = vadd.f32 0.0, %v7330
        %v7332 = vpop.f32.mrf.mxu0
        %v7333 = vadd.f32 0.0, %v7332
        %v7334 = vpop.f32.mrf.mxu0
        %v7335 = vadd.f32 0.0, %v7334
        %7336 = vdwg.mxu0
        %7337 = vmatprep.subr.bf16.mxu0 %v6957
        %7338 = vmatpush1.bf16.msra.mxu0 %v6956
        %7339 = vmatprep.subr.bf16.mxu0 %v6955
        %7340 = vmatpush1.bf16.msra.mxu0 %v6954
        %7341 = vmatprep.subr.bf16.mxu0 %v6953
        %7342 = vmatpush1.bf16.msra.mxu0 %v6952
        %7343 = vmatprep.subr.bf16.mxu0 %v6951
        %7344 = vmatpush1.bf16.msra.mxu0 %v6950
        %7345 = vmatprep.subr.bf16.mxu0 %v6949
        %7346 = vmatpush1.bf16.msra.mxu0 %v6948
        %7347 = vmatprep.subr.bf16.mxu0 %v6947
        %7348 = vmatpush1.bf16.msra.mxu0 %v6946
        %7349 = vmatprep.subr.bf16.mxu0 %v6945
        %7350 = vmatpush1.bf16.msra.mxu0 %v6944
        %7351 = vmatprep.subr.bf16.mxu0 %v6943
        %7352 = vmatpush1.bf16.msra.mxu0 %v6942
        %7353 = vmatprep.subr.bf16.mxu0 %v6973
        %7354 = vmatpush2.bf16.msra.mxu0 %v6972
        %7355 = vmatprep.subr.bf16.mxu0 %v6971
        %7356 = vmatpush2.bf16.msra.mxu0 %v6970
        %7357 = vmatprep.subr.bf16.mxu0 %v6969
        %7358 = vmatpush2.bf16.msra.mxu0 %v6968
        %7359 = vmatprep.subr.bf16.mxu0 %v6967
        %7360 = vmatpush2.bf16.msra.mxu0 %v6966
        %7361 = vmatprep.subr.bf16.mxu0 %v6965
        %7362 = vmatpush2.bf16.msra.mxu0 %v6964
        %7363 = vmatprep.subr.bf16.mxu0 %v6963
        %7364 = vmatpush2.bf16.msra.mxu0 %v6962
        %7365 = vmatprep.subr.bf16.mxu0 %v6961
        %7366 = vmatpush2.bf16.msra.mxu0 %v6960
        %7367 = vmatprep.subr.bf16.mxu0 %v6959
        %7368 = vmatpush2.bf16.msra.mxu0 %v6958
        %7369 = vmatprep.mubr.bf16.mxu0 %v6149
        %7370 = vmatmul.mubr.bf16.gmra.mxu0 %v6148
        %v7371 = vpop.f32.mrf.mxu0
        %v7372 = vadd.f32 %v7329, %v7371
        %v7373 = vpop.f32.mrf.mxu0
        %v7374 = vadd.f32 %v7331, %v7373
        %v7375 = vpop.f32.mrf.mxu0
        %v7376 = vadd.f32 %v7333, %v7375
        %v7377 = vpop.f32.mrf.mxu0
        %v7378 = vadd.f32 %v7335, %v7377
        %7379 = vdwg.mxu0
        %7380 = vmatprep.subr.bf16.mxu0 %v6989
        %7381 = vmatpush1.bf16.msra.mxu0 %v6988
        %7382 = vmatprep.subr.bf16.mxu0 %v6987
        %7383 = vmatpush1.bf16.msra.mxu0 %v6986
        %7384 = vmatprep.subr.bf16.mxu0 %v6985
        %7385 = vmatpush1.bf16.msra.mxu0 %v6984
        %7386 = vmatprep.subr.bf16.mxu0 %v6983
        %7387 = vmatpush1.bf16.msra.mxu0 %v6982
        %7388 = vmatprep.subr.bf16.mxu0 %v6981
        %7389 = vmatpush1.bf16.msra.mxu0 %v6980
        %7390 = vmatprep.subr.bf16.mxu0 %v6979
        %7391 = vmatpush1.bf16.msra.mxu0 %v6978
        %7392 = vmatprep.subr.bf16.mxu0 %v6977
        %7393 = vmatpush1.bf16.msra.mxu0 %v6976
        %7394 = vmatprep.subr.bf16.mxu0 %v6975
        %7395 = vmatpush1.bf16.msra.mxu0 %v6974
        %7396 = vmatprep.subr.bf16.mxu0 %v7005
        %7397 = vmatpush2.bf16.msra.mxu0 %v7004
        %7398 = vmatprep.subr.bf16.mxu0 %v7003
        %7399 = vmatpush2.bf16.msra.mxu0 %v7002
        %7400 = vmatprep.subr.bf16.mxu0 %v7001
        %7401 = vmatpush2.bf16.msra.mxu0 %v7000
        %7402 = vmatprep.subr.bf16.mxu0 %v6999
        %7403 = vmatpush2.bf16.msra.mxu0 %v6998
        %7404 = vmatprep.subr.bf16.mxu0 %v6997
        %7405 = vmatpush2.bf16.msra.mxu0 %v6996
        %7406 = vmatprep.subr.bf16.mxu0 %v6995
        %7407 = vmatpush2.bf16.msra.mxu0 %v6994
        %7408 = vmatprep.subr.bf16.mxu0 %v6993
        %7409 = vmatpush2.bf16.msra.mxu0 %v6992
        %7410 = vmatprep.subr.bf16.mxu0 %v6991
        %7411 = vmatpush2.bf16.msra.mxu0 %v6990
        %7412 = vmatprep.mubr.bf16.mxu0 %v6151
        %7413 = vmatmul.mubr.bf16.gmra.mxu0 %v6150
        %v7414 = vpop.f32.mrf.mxu0
        %v7415 = vadd.f32 %v7372, %v7414
        %v7416 = vpop.f32.mrf.mxu0
        %v7417 = vadd.f32 %v7374, %v7416
        %v7418 = vpop.f32.mrf.mxu0
        %v7419 = vadd.f32 %v7376, %v7418
        %v7420 = vpop.f32.mrf.mxu0
        %v7421 = vadd.f32 %v7378, %v7420
        %7422 = vdwg.mxu0
        %7423 = vmatprep.subr.bf16.mxu0 %v7021
        %7424 = vmatpush1.bf16.msra.mxu0 %v7020
        %7425 = vmatprep.subr.bf16.mxu0 %v7019
        %7426 = vmatpush1.bf16.msra.mxu0 %v7018
        %7427 = vmatprep.subr.bf16.mxu0 %v7017
        %7428 = vmatpush1.bf16.msra.mxu0 %v7016
        %7429 = vmatprep.subr.bf16.mxu0 %v7015
        %7430 = vmatpush1.bf16.msra.mxu0 %v7014
        %7431 = vmatprep.subr.bf16.mxu0 %v7013
        %7432 = vmatpush1.bf16.msra.mxu0 %v7012
        %7433 = vmatprep.subr.bf16.mxu0 %v7011
        %7434 = vmatpush1.bf16.msra.mxu0 %v7010
        %7435 = vmatprep.subr.bf16.mxu0 %v7009
        %7436 = vmatpush1.bf16.msra.mxu0 %v7008
        %7437 = vmatprep.subr.bf16.mxu0 %v7007
        %7438 = vmatpush1.bf16.msra.mxu0 %v7006
        %7439 = vmatprep.subr.bf16.mxu0 %v7037
        %7440 = vmatpush2.bf16.msra.mxu0 %v7036
        %7441 = vmatprep.subr.bf16.mxu0 %v7035
        %7442 = vmatpush2.bf16.msra.mxu0 %v7034
        %7443 = vmatprep.subr.bf16.mxu0 %v7033
        %7444 = vmatpush2.bf16.msra.mxu0 %v7032
        %7445 = vmatprep.subr.bf16.mxu0 %v7031
        %7446 = vmatpush2.bf16.msra.mxu0 %v7030
        %7447 = vmatprep.subr.bf16.mxu0 %v7029
        %7448 = vmatpush2.bf16.msra.mxu0 %v7028
        %7449 = vmatprep.subr.bf16.mxu0 %v7027
        %7450 = vmatpush2.bf16.msra.mxu0 %v7026
        %7451 = vmatprep.subr.bf16.mxu0 %v7025
        %7452 = vmatpush2.bf16.msra.mxu0 %v7024
        %7453 = vmatprep.subr.bf16.mxu0 %v7023
        %7454 = vmatpush2.bf16.msra.mxu0 %v7022
        %7455 = vmatprep.mubr.bf16.mxu0 %v6153
        %7456 = vmatmul.mubr.bf16.gmra.mxu0 %v6152
        %v7457 = vpop.f32.mrf.mxu0
        %v7458 = vadd.f32 %v7415, %v7457
        %v7459 = vpop.f32.mrf.mxu0
        %v7460 = vadd.f32 %v7417, %v7459
        %v7461 = vpop.f32.mrf.mxu0
        %v7462 = vadd.f32 %v7419, %v7461
        %v7463 = vpop.f32.mrf.mxu0
        %v7464 = vadd.f32 %v7421, %v7463
        %7465 = vdwg.mxu0
        %7466 = vmatprep.subr.bf16.mxu0 %v7053
        %7467 = vmatpush1.bf16.msra.mxu0 %v7052
        %7468 = vmatprep.subr.bf16.mxu0 %v7051
        %7469 = vmatpush1.bf16.msra.mxu0 %v7050
        %7470 = vmatprep.subr.bf16.mxu0 %v7049
        %7471 = vmatpush1.bf16.msra.mxu0 %v7048
        %7472 = vmatprep.subr.bf16.mxu0 %v7047
        %7473 = vmatpush1.bf16.msra.mxu0 %v7046
        %7474 = vmatprep.subr.bf16.mxu0 %v7045
        %7475 = vmatpush1.bf16.msra.mxu0 %v7044
        %7476 = vmatprep.subr.bf16.mxu0 %v7043
        %7477 = vmatpush1.bf16.msra.mxu0 %v7042
        %7478 = vmatprep.subr.bf16.mxu0 %v7041
        %7479 = vmatpush1.bf16.msra.mxu0 %v7040
        %7480 = vmatprep.subr.bf16.mxu0 %v7039
        %7481 = vmatpush1.bf16.msra.mxu0 %v7038
        %7482 = vmatprep.subr.bf16.mxu0 %v7069
        %7483 = vmatpush2.bf16.msra.mxu0 %v7068
        %7484 = vmatprep.subr.bf16.mxu0 %v7067
        %7485 = vmatpush2.bf16.msra.mxu0 %v7066
        %7486 = vmatprep.subr.bf16.mxu0 %v7065
        %7487 = vmatpush2.bf16.msra.mxu0 %v7064
        %7488 = vmatprep.subr.bf16.mxu0 %v7063
        %7489 = vmatpush2.bf16.msra.mxu0 %v7062
        %7490 = vmatprep.subr.bf16.mxu0 %v7061
        %7491 = vmatpush2.bf16.msra.mxu0 %v7060
        %7492 = vmatprep.subr.bf16.mxu0 %v7059
        %7493 = vmatpush2.bf16.msra.mxu0 %v7058
        %7494 = vmatprep.subr.bf16.mxu0 %v7057
        %7495 = vmatpush2.bf16.msra.mxu0 %v7056
        %7496 = vmatprep.subr.bf16.mxu0 %v7055
        %7497 = vmatpush2.bf16.msra.mxu0 %v7054
        %7498 = vmatprep.mubr.bf16.mxu0 %v6155
        %7499 = vmatmul.mubr.bf16.gmra.mxu0 %v6154
        %v7500 = vpop.f32.mrf.mxu0
        %v7501 = vadd.f32 %v7458, %v7500
        %v7502 = vpop.f32.mrf.mxu0
        %v7503 = vadd.f32 %v7460, %v7502
        %v7504 = vpop.f32.mrf.mxu0
        %v7505 = vadd.f32 %v7462, %v7504
        %v7506 = vpop.f32.mrf.mxu0
        %v7507 = vadd.f32 %v7464, %v7506
        %7508 = vdwg.mxu0
        %7509 = vmatprep.subr.bf16.mxu0 %v7085
        %7510 = vmatpush1.bf16.msra.mxu0 %v7084
        %7511 = vmatprep.subr.bf16.mxu0 %v7083
        %7512 = vmatpush1.bf16.msra.mxu0 %v7082
        %7513 = vmatprep.subr.bf16.mxu0 %v7081
        %7514 = vmatpush1.bf16.msra.mxu0 %v7080
        %7515 = vmatprep.subr.bf16.mxu0 %v7079
        %7516 = vmatpush1.bf16.msra.mxu0 %v7078
        %7517 = vmatprep.subr.bf16.mxu0 %v7077
        %7518 = vmatpush1.bf16.msra.mxu0 %v7076
        %7519 = vmatprep.subr.bf16.mxu0 %v7075
        %7520 = vmatpush1.bf16.msra.mxu0 %v7074
        %7521 = vmatprep.subr.bf16.mxu0 %v7073
        %7522 = vmatpush1.bf16.msra.mxu0 %v7072
        %7523 = vmatprep.subr.bf16.mxu0 %v7071
        %7524 = vmatpush1.bf16.msra.mxu0 %v7070
        %7525 = vmatprep.subr.bf16.mxu0 0
        %7526 = vmatpush2.bf16.msra.mxu0 0
        %7527 = vmatprep.subr.bf16.mxu0 0
        %7528 = vmatpush2.bf16.msra.mxu0 0
        %7529 = vmatprep.subr.bf16.mxu0 %v7292
        %7530 = vmatpush2.bf16.msra.mxu0 %v7289
        %7531 = vmatprep.subr.bf16.mxu0 %v7095
        %7532 = vmatpush2.bf16.msra.mxu0 %v7094
        %7533 = vmatprep.subr.bf16.mxu0 %v7093
        %7534 = vmatpush2.bf16.msra.mxu0 %v7092
        %7535 = vmatprep.subr.bf16.mxu0 %v7091
        %7536 = vmatpush2.bf16.msra.mxu0 %v7090
        %7537 = vmatprep.subr.bf16.mxu0 %v7089
        %7538 = vmatpush2.bf16.msra.mxu0 %v7088
        %7539 = vmatprep.subr.bf16.mxu0 %v7087
        %7540 = vmatpush2.bf16.msra.mxu0 %v7086
        %7541 = vmatprep.mubr.bf16.mxu0 %v7286
        %7542 = vmatmul.mubr.bf16.gmra.mxu0 %v6156
        %v7543 = vpop.f32.mrf.mxu0
        %v7544 = vadd.f32 %v7501, %v7543
        %v7545 = vpop.f32.mrf.mxu0
        %v7546 = vadd.f32 %v7503, %v7545
        %v7547 = vpop.f32.mrf.mxu0
        %v7548 = vadd.f32 %v7505, %v7547
        %v7549 = vpop.f32.mrf.mxu0
        %v7550 = vadd.f32 %v7507, %v7549
        %7551 = vdwg.mxu0
        %v7552 = vmax.f32 %v7544, 0.0
        %v7553 = vmax.f32 %v7546, 0.0
        %v7554 = vmax.f32 %v7548, 0.0
        %v7555 = vmax.f32 %v7550, 0.0
        %v7556 = vld [vmem:[%s8] sm:$0x7]
        %v7557 = vpack.c.bf16 %v7554, %v7552
        %v7558 = vpack.c.bf16 %v7555, %v7553
        %v7559 = vld [vmem:[%s9] sm:$0xf]
        %v7560 = vld [vmem:[%s9 + $0x4] sm:$0xf]
        %v7561 = vld [vmem:[%s9 + $0x8] sm:$0xf]
        %v7562 = vld [vmem:[%s9 + $0xc] sm:$0xf]
        %v7563 = vld [vmem:[%s9 + $0x10] sm:$0xf]
        %v7564 = vld [vmem:[%s9 + $0x14] sm:$0xf]
        %v7565 = vld [vmem:[%s9 + $0x18] sm:$0xf]
        %v7566 = vld [vmem:[%s9 + $0x1c] sm:$0xf]
        %v7567 = vld [vmem:[%s9 + $0x20] sm:$0xf]
        %v7568 = vld [vmem:[%s9 + $0x24] sm:$0xf]
        %v7569 = vld [vmem:[%s9 + $0x28] sm:$0xf]
        %v7570 = vld [vmem:[%s9 + $0x2c] sm:$0xf]
        %v7571 = vld [vmem:[%s9 + $0x30] sm:$0xf]
        %v7572 = vld [vmem:[%s9 + $0x34] sm:$0xf]
        %v7573 = vld [vmem:[%s9 + $0x38] sm:$0xf]
        %v7574 = vld [vmem:[%s9 + $0x3c] sm:$0xf]
        %v7575 = vld [vmem:[%s9 + $0x40] sm:$0xf]
        %v7576 = vld [vmem:[%s9 + $0x44] sm:$0xf]
        %v7577 = vld [vmem:[%s9 + $0x48] sm:$0xf]
        %v7578 = vld [vmem:[%s9 + $0x4c] sm:$0xf]
        %v7599 = vunpack.c.l.b16 %v7559
        %v7600 = vunpack.c.l.b16 %v7560
        %v7601 = vunpack.c.l.b16 %v7561
        %v7602 = vunpack.c.l.b16 %v7562
        %v7603 = vunpack.c.l.b16 %v7563
        %v7604 = vunpack.c.l.b16 %v7564
        %v7605 = vunpack.c.l.b16 %v7565
        %v7606 = vunpack.c.l.b16 %v7566
        %v7607 = vunpack.c.l.b16 %v7567
        %v7608 = vunpack.c.l.b16 %v7568
        %v7609 = vunpack.c.l.b16 %v7569
        %v7610 = vunpack.c.l.b16 %v7570
        %v7611 = vunpack.c.l.b16 %v7571
        %v7612 = vunpack.c.l.b16 %v7572
        %v7613 = vunpack.c.l.b16 %v7573
        %v7614 = vunpack.c.l.b16 %v7574
        %v7615 = vunpack.c.l.b16 %v7575
        %v7616 = vunpack.c.l.b16 %v7576
        %v7617 = vunpack.c.l.b16 %v7577
        %v7618 = vunpack.c.l.b16 %v7578
        %v7619 = vpack.c.b16 %v7600, %v7599
        %v7620 = vpack.c.b16 %v7602, %v7601
        %v7621 = vpack.c.b16 %v7604, %v7603
        %v7622 = vpack.c.b16 %v7606, %v7605
        %v7623 = vpack.c.b16 %v7608, %v7607
        %v7624 = vpack.c.b16 %v7610, %v7609
        %v7625 = vpack.c.b16 %v7612, %v7611
        %v7626 = vpack.c.b16 %v7614, %v7613
        %v7627 = vpack.c.b16 %v7616, %v7615
        %v7628 = vpack.c.b16 %v7618, %v7617
        %v7640 = vsel %vm1891, %v7558, 0
        %7642 = vmatprep.subr.bf16.mxu0 0
        %7643 = vmatpush1.bf16.msra.mxu0 %v7626
        %7644 = vmatprep.subr.bf16.mxu0 0
        %7645 = vmatpush1.bf16.msra.mxu0 %v7625
        %7646 = vmatprep.subr.bf16.mxu0 0
        %7647 = vmatpush1.bf16.msra.mxu0 %v7624
        %7648 = vmatprep.subr.bf16.mxu0 0
        %7649 = vmatpush1.bf16.msra.mxu0 %v7623
        %7650 = vmatprep.subr.bf16.mxu0 0
        %7651 = vmatpush1.bf16.msra.mxu0 %v7622
        %7652 = vmatprep.subr.bf16.mxu0 0
        %7653 = vmatpush1.bf16.msra.mxu0 %v7621
        %7654 = vmatprep.subr.bf16.mxu0 0
        %7655 = vmatpush1.bf16.msra.mxu0 %v7620
        %7656 = vmatprep.subr.bf16.mxu0 0
        %7657 = vmatpush1.bf16.msra.mxu0 %v7619
        %7658 = vmatprep.subr.bf16.mxu0 0
        %7659 = vmatpush2.bf16.msra.mxu0 0
        %7660 = vmatprep.subr.bf16.mxu0 0
        %7661 = vmatpush2.bf16.msra.mxu0 0
        %7662 = vmatprep.subr.bf16.mxu0 0
        %7663 = vmatpush2.bf16.msra.mxu0 0
        %7664 = vmatprep.subr.bf16.mxu0 0
        %7665 = vmatpush2.bf16.msra.mxu0 0
        %7666 = vmatprep.subr.bf16.mxu0 0
        %7667 = vmatpush2.bf16.msra.mxu0 0
        %7668 = vmatprep.subr.bf16.mxu0 0
        %7669 = vmatpush2.bf16.msra.mxu0 0
        %7670 = vmatprep.subr.bf16.mxu0 0
        %7671 = vmatpush2.bf16.msra.mxu0 %v7628
        %7672 = vmatprep.subr.bf16.mxu0 0
        %7673 = vmatpush2.bf16.msra.mxu0 %v7627
        %7674 = vmatprep.mubr.bf16.mxu0 %v7640
        %7675 = vmatmul.mubr.bf16.gmra.mxu0 %v7557
        %v7676 = vpop.f32.mrf.mxu0
        %v7677 = vadd.f32 0.0, %v7676
        %v7678 = vpop.f32.mrf.mxu0
        %v7679 = vpop.f32.mrf.mxu0
        %v7680 = vadd.f32 0.0, %v7679
        %v7681 = vpop.f32.mrf.mxu0
        %7682 = vdwg.mxu0
        %v7683 = vpack.c.bf16 %v7680, %v7677
        %vm7684 = vcmask 80896
        %v7686 = vsel %vm7684, %v7556, 0
        %v7689 = vsel %vm712, %v7683, 0
        %7691 = vmatprep.subr.bf16.mxu0 0
        %7692 = vmatpush1.bf16.msra.mxu0 0
        %7693 = vmatprep.subr.bf16.mxu0 0
        %7694 = vmatpush1.bf16.msra.mxu0 0
        %7695 = vmatprep.subr.bf16.mxu0 0
        %7696 = vmatpush1.bf16.msra.mxu0 0
        %7697 = vmatprep.subr.bf16.mxu0 0
        %7698 = vmatpush1.bf16.msra.mxu0 0
        %7699 = vmatprep.subr.bf16.mxu0 0
        %7700 = vmatpush1.bf16.msra.mxu0 0
        %7701 = vmatprep.subr.bf16.mxu0 0
        %7702 = vmatpush1.bf16.msra.mxu0 0
        %7703 = vmatprep.subr.bf16.mxu0 0
        %7704 = vmatpush1.bf16.msra.mxu0 0
        %7705 = vmatprep.subr.bf16.mxu0 0
        %7706 = vmatpush1.bf16.msra.mxu0 %v7689
        %7707 = vmatprep.subr.bf16.mxu0 0
        %7708 = vmatpush2.bf16.msra.mxu0 0
        %7709 = vmatprep.subr.bf16.mxu0 0
        %7710 = vmatpush2.bf16.msra.mxu0 0
        %7711 = vmatprep.subr.bf16.mxu0 0
        %7712 = vmatpush2.bf16.msra.mxu0 0
        %7713 = vmatprep.subr.bf16.mxu0 0
        %7714 = vmatpush2.bf16.msra.mxu0 0
        %7715 = vmatprep.subr.bf16.mxu0 0
        %7716 = vmatpush2.bf16.msra.mxu0 0
        %7717 = vmatprep.subr.bf16.mxu0 0
        %7718 = vmatpush2.bf16.msra.mxu0 0
        %7719 = vmatprep.subr.bf16.mxu0 0
        %7720 = vmatpush2.bf16.msra.mxu0 0
        %7721 = vmatprep.subr.bf16.mxu0 0
        %7722 = vmatpush2.bf16.msra.mxu0 0
        %7723 = vmatprep.mubr.bf16.mxu0 0
        %7724 = vmatmul.mubr.bf16.gmra.mxu0 %v7686
        %v7725 = vpop.f32.mrf.mxu0
        %v7726 = vadd.f32 0.0, %v7725
        %v7727 = vpop.f32.mrf.mxu0
        %v7728 = vpop.f32.mrf.mxu0
        %v7729 = vpop.f32.mrf.mxu0
        %7730 = vdwg.mxu0
        %v7731 = vlaneseq
        %vm7732 = vcmp.ge.s32.totalorder %v7731, 0
        %vm7733 = vcmp.lt.s32.totalorder %v7731, 80
        %vm7734 = vmand %vm7732, %vm7733
        %7735 = vst.msk [vmem:[#allocation5] sm:$0x1] %vm7734, %v7726
        %v7738 = vunpack.c.l.s4 1966171168
        %v7739 = vunpack.c.0.s8 %v7738
        %v7740 = vlaneseq
        %v7741 = vshrl.u32 %v7740, 7
        %v7742 = vsub.s32 %v7739, %v7741
        %v7743 = vrot.slane %v7726, %v7742
        %v7744 = vcombine.high %v7743, %v7743
        %v7746 = vunpack.c.l.s4 1966171168
        %v7747 = vunpack.c.0.s8 %v7746
        %v7748 = vlaneseq
        %v7749 = vshrl.u32 %v7748, 7
        %v7750 = vsub.s32 %v7747, %v7749
        %v7751 = vrot.slane %v7743, %v7750
        %v7753 = vunpack.c.l.s4 1966171168
        %v7754 = vunpack.c.0.s8 %v7753
        %v7755 = vlaneseq
        %v7756 = vshrl.u32 %v7755, 7
        %v7757 = vsub.s32 %v7754, %v7756
        %v7758 = vrot.slane %v7744, %v7757
        %7759 = vrot.lane.b32.xlu0 %v7758, 80
        %v7760 = vpop.permute.xlu0 %7759
        %v7761 = vrot.slane %v7760, 7
        %v7762 = vsel %vm1804, %v7761, %v7760
        %vm7764 = vcmp.ge.s32.totalorder %v7731, 80
        %vm7765 = vcmp.lt.s32.totalorder %v7731, 160
        %vm7766 = vmand %vm7764, %vm7765
        %7767 = vst.msk [vmem:[#allocation5] sm:$0x3] %vm7766, %v7762
        %v7768 = vcombine.high %v7751, %v7751
        %7769 = vrot.lane.b32.xlu0 %v7768, 32
        %v7770 = vpop.permute.xlu0 %7769
        %vm7772 = vcmp.ge.s32.totalorder %v7731, 32
        %vm7773 = vcmp.lt.s32.totalorder %v7731, 112
        %vm7774 = vmand %vm7772, %vm7773
        %7775 = vst.msk [vmem:[#allocation5 + $0x1] sm:$0x1] %vm7774, %v7770
        %v7776 = vcombine.high %v7758, %v7758
        %7777 = vrot.lane.b32.xlu0 %v7776, 112
        %v7778 = vpop.permute.xlu0 %7777
        %v7779 = vrot.slane %v7778, 7
        %vm7780 = vcmask 916480
        %v7781 = vsel %vm7780, %v7779, %v7778
        %vm7783 = vcmp.ge.s32.totalorder %v7731, 112
        %vm7784 = vcmp.lt.s32.totalorder %v7731, 192
        %vm7785 = vmand %vm7783, %vm7784
        %7786 = vst.msk [vmem:[#allocation5 + $0x1] sm:$0x3] %vm7785, %v7781
        %v7787 = vcombine.high %v7726, %v7726
        %v7789 = vunpack.c.l.s4 1966171168
        %v7790 = vunpack.c.0.s8 %v7789
        %v7791 = vlaneseq
        %v7792 = vshrl.u32 %v7791, 7
        %v7793 = vsub.s32 %v7790, %v7792
        %v7794 = vrot.slane %v7787, %v7793
        %v7796 = vunpack.c.l.s4 1966171168
        %v7797 = vunpack.c.0.s8 %v7796
        %v7798 = vlaneseq
        %v7799 = vshrl.u32 %v7798, 7
        %v7800 = vsub.s32 %v7797, %v7799
        %v7801 = vrot.slane %v7794, %v7800
        %7802 = vrot.lane.b32.xlu0 %v7801, 64
        %v7803 = vpop.permute.xlu0 %7802
        %v7804 = vrot.slane %v7803, 7
        %v7805 = vsel %vm2077, %v7804, %v7803
        %vm7807 = vcmp.ge.s32.totalorder %v7731, 64
        %vm7808 = vcmp.lt.s32.totalorder %v7731, 144
        %vm7809 = vmand %vm7807, %vm7808
        %7810 = vst.msk [vmem:[#allocation5 + $0x2] sm:$0x3] %vm7809, %v7805
        %v7811 = vld [vmem:[#allocation5] sm:$0xf]
        %v7813 = vlaneseq
        %v7814 = vshrl.u32 %v7813, 7
        %v7815 = vsub.s32 0, %v7814
        %v7816 = vrot.slane %v7811, %v7815
        %v7817 = vlaneseq
        %v7818 = vshrl.u32 %v7817, 7
        %v7819 = vsub.s32 1, %v7818
        %v7820 = vrot.slane %v7811, %v7819
        %v7821 = vlaneseq
        %v7822 = vshrl.u32 %v7821, 7
        %v7823 = vsub.s32 2, %v7822
        %v7824 = vrot.slane %v7811, %v7823
        %v7825 = vlaneseq
        %v7826 = vshrl.u32 %v7825, 7
        %v7827 = vsub.s32 3, %v7826
        %v7828 = vrot.slane %v7811, %v7827
        %v7833 = vpack.c.bf16 %v7816, %v7816
        %v7834 = vpack.c.bf16 %v7820, %v7820
        %v7835 = vpack.c.bf16 %v7824, %v7824
        %v7836 = vpack.c.bf16 %v7828, %v7828
        %v7837 = vld [vmem:[%s5] sm:$0xf]
        %v7838 = vld [vmem:[%s5 + $0x4] sm:$0xf]
        %v7839 = vld [vmem:[%s5 + $0x8] sm:$0xf]
        %v7840 = vld [vmem:[%s5 + $0xc] sm:$0xf]
        %v7841 = vld [vmem:[%s5 + $0x10] sm:$0xf]
        %v7842 = vld [vmem:[%s5 + $0x14] sm:$0xf]
        %v7843 = vld [vmem:[%s5 + $0x18] sm:$0xf]
        %v7844 = vld [vmem:[%s5 + $0x1c] sm:$0xf]
        %v7845 = vld [vmem:[%s5 + $0x20] sm:$0xf]
        %v7846 = vld [vmem:[%s5 + $0x24] sm:$0xf]
        %v7847 = vld [vmem:[%s5 + $0x28] sm:$0xf]
        %v7848 = vld [vmem:[%s5 + $0x2c] sm:$0xf]
        %v7849 = vld [vmem:[%s5 + $0x30] sm:$0xf]
        %v7850 = vld [vmem:[%s5 + $0x34] sm:$0xf]
        %v7851 = vld [vmem:[%s5 + $0x38] sm:$0xf]
        %v7852 = vld [vmem:[%s5 + $0x3c] sm:$0xf]
        %v7853 = vld [vmem:[%s5 + $0x40] sm:$0xf]
        %v7854 = vld [vmem:[%s5 + $0x44] sm:$0xf]
        %v7855 = vld [vmem:[%s5 + $0x48] sm:$0xf]
        %v7856 = vld [vmem:[%s5 + $0x4c] sm:$0xf]
        %v7857 = vld [vmem:[%s5 + $0x50] sm:$0xf]
        %v7858 = vld [vmem:[%s5 + $0x54] sm:$0xf]
        %v7859 = vld [vmem:[%s5 + $0x58] sm:$0xf]
        %v7860 = vld [vmem:[%s5 + $0x5c] sm:$0xf]
        %v7861 = vld [vmem:[%s5 + $0x60] sm:$0xf]
        %v7862 = vld [vmem:[%s5 + $0x64] sm:$0xf]
        %v7863 = vld [vmem:[%s5 + $0x68] sm:$0xf]
        %v7864 = vld [vmem:[%s5 + $0x6c] sm:$0xf]
        %v7865 = vld [vmem:[%s5 + $0x70] sm:$0xf]
        %v7866 = vld [vmem:[%s5 + $0x74] sm:$0xf]
        %v7867 = vld [vmem:[%s5 + $0x78] sm:$0xf]
        %v7868 = vld [vmem:[%s5 + $0x7c] sm:$0xf]
        %v7869 = vld [vmem:[%s5 + $0x80] sm:$0xf]
        %v7870 = vld [vmem:[%s5 + $0x84] sm:$0xf]
        %v7871 = vld [vmem:[%s5 + $0x88] sm:$0xf]
        %v7872 = vld [vmem:[%s5 + $0x8c] sm:$0xf]
        %v7873 = vld [vmem:[%s5 + $0x90] sm:$0xf]
        %v7874 = vld [vmem:[%s5 + $0x94] sm:$0xf]
        %v7875 = vld [vmem:[%s5 + $0x98] sm:$0xf]
        %v7876 = vld [vmem:[%s5 + $0x9c] sm:$0xf]
        %v7877 = vld [vmem:[%s5 + $0xa0] sm:$0xf]
        %v7878 = vld [vmem:[%s5 + $0xa4] sm:$0xf]
        %v7879 = vld [vmem:[%s5 + $0xa8] sm:$0xf]
        %v7880 = vld [vmem:[%s5 + $0xac] sm:$0xf]
        %v7881 = vld [vmem:[%s5 + $0xb0] sm:$0xf]
        %v7882 = vld [vmem:[%s5 + $0xb4] sm:$0xf]
        %v7883 = vld [vmem:[%s5 + $0xb8] sm:$0xf]
        %v7884 = vld [vmem:[%s5 + $0xbc] sm:$0xf]
        %v7885 = vld [vmem:[%s5 + $0xc0] sm:$0xf]
        %v7886 = vld [vmem:[%s5 + $0xc4] sm:$0xf]
        %v7937 = vunpack.c.l.b16 %v7837
        %v7938 = vunpack.c.l.b16 %v7838
        %v7939 = vunpack.c.l.b16 %v7839
        %v7940 = vunpack.c.l.b16 %v7840
        %v7941 = vunpack.c.l.b16 %v7841
        %v7942 = vunpack.c.l.b16 %v7842
        %v7943 = vunpack.c.l.b16 %v7843
        %v7944 = vunpack.c.l.b16 %v7844
        %v7945 = vunpack.c.l.b16 %v7845
        %v7946 = vunpack.c.l.b16 %v7846
        %v7947 = vunpack.c.l.b16 %v7847
        %v7948 = vunpack.c.l.b16 %v7848
        %v7949 = vunpack.c.l.b16 %v7849
        %v7950 = vunpack.c.l.b16 %v7850
        %v7951 = vunpack.c.l.b16 %v7851
        %v7952 = vunpack.c.l.b16 %v7852
        %v7953 = vunpack.c.l.b16 %v7853
        %v7954 = vunpack.c.l.b16 %v7854
        %v7955 = vunpack.c.l.b16 %v7855
        %v7956 = vunpack.c.l.b16 %v7856
        %v7957 = vunpack.c.l.b16 %v7857
        %v7958 = vunpack.c.l.b16 %v7858
        %v7959 = vunpack.c.l.b16 %v7859
        %v7960 = vunpack.c.l.b16 %v7860
        %v7961 = vunpack.c.l.b16 %v7861
        %v7962 = vunpack.c.l.b16 %v7862
        %v7963 = vunpack.c.l.b16 %v7863
        %v7964 = vunpack.c.l.b16 %v7864
        %v7965 = vunpack.c.l.b16 %v7865
        %v7966 = vunpack.c.l.b16 %v7866
        %v7967 = vunpack.c.l.b16 %v7867
        %v7968 = vunpack.c.l.b16 %v7868
        %v7969 = vunpack.c.l.b16 %v7869
        %v7970 = vunpack.c.l.b16 %v7870
        %v7971 = vunpack.c.l.b16 %v7871
        %v7972 = vunpack.c.l.b16 %v7872
        %v7973 = vunpack.c.l.b16 %v7873
        %v7974 = vunpack.c.l.b16 %v7874
        %v7975 = vunpack.c.l.b16 %v7875
        %v7976 = vunpack.c.l.b16 %v7876
        %v7977 = vunpack.c.l.b16 %v7877
        %v7978 = vunpack.c.l.b16 %v7878
        %v7979 = vunpack.c.l.b16 %v7879
        %v7980 = vunpack.c.l.b16 %v7880
        %v7981 = vunpack.c.l.b16 %v7881
        %v7982 = vunpack.c.l.b16 %v7882
        %v7983 = vunpack.c.l.b16 %v7883
        %v7984 = vunpack.c.l.b16 %v7884
        %v7985 = vunpack.c.l.b16 %v7885
        %v7986 = vunpack.c.l.b16 %v7886
        %v7987 = vpack.c.b16 %v7938, %v7937
        %v7988 = vpack.c.b16 %v7940, %v7939
        %v7989 = vpack.c.b16 %v7942, %v7941
        %v7990 = vpack.c.b16 %v7944, %v7943
        %v7991 = vpack.c.b16 %v7946, %v7945
        %v7992 = vpack.c.b16 %v7948, %v7947
        %v7993 = vpack.c.b16 %v7950, %v7949
        %v7994 = vpack.c.b16 %v7952, %v7951
        %v7995 = vpack.c.b16 %v7954, %v7953
        %v7996 = vpack.c.b16 %v7956, %v7955
        %v7997 = vpack.c.b16 %v7958, %v7957
        %v7998 = vpack.c.b16 %v7960, %v7959
        %v7999 = vpack.c.b16 %v7962, %v7961
        %v8000 = vpack.c.b16 %v7964, %v7963
        %v8001 = vpack.c.b16 %v7966, %v7965
        %v8002 = vpack.c.b16 %v7968, %v7967
        %v8003 = vpack.c.b16 %v7970, %v7969
        %v8004 = vpack.c.b16 %v7972, %v7971
        %v8005 = vpack.c.b16 %v7974, %v7973
        %v8006 = vpack.c.b16 %v7976, %v7975
        %v8007 = vpack.c.b16 %v7978, %v7977
        %v8008 = vpack.c.b16 %v7980, %v7979
        %v8009 = vpack.c.b16 %v7982, %v7981
        %v8010 = vpack.c.b16 %v7984, %v7983
        %v8011 = vpack.c.b16 %v7986, %v7985
        %vm8037 = vcmask 130048
        %v8039 = vsel %vm8037, %v7836, 0
        %8041 = vmatprep.subr.bf16.mxu0 0
        %8042 = vmatpush1.bf16.msra.mxu0 %v7994
        %8043 = vmatprep.subr.bf16.mxu0 0
        %8044 = vmatpush1.bf16.msra.mxu0 %v7993
        %8045 = vmatprep.subr.bf16.mxu0 0
        %8046 = vmatpush1.bf16.msra.mxu0 %v7992
        %8047 = vmatprep.subr.bf16.mxu0 0
        %8048 = vmatpush1.bf16.msra.mxu0 %v7991
        %8049 = vmatprep.subr.bf16.mxu0 0
        %8050 = vmatpush1.bf16.msra.mxu0 %v7990
        %8051 = vmatprep.subr.bf16.mxu0 0
        %8052 = vmatpush1.bf16.msra.mxu0 %v7989
        %8053 = vmatprep.subr.bf16.mxu0 0
        %8054 = vmatpush1.bf16.msra.mxu0 %v7988
        %8055 = vmatprep.subr.bf16.mxu0 0
        %8056 = vmatpush1.bf16.msra.mxu0 %v7987
        %8057 = vmatprep.subr.bf16.mxu0 0
        %8058 = vmatpush2.bf16.msra.mxu0 %v8002
        %8059 = vmatprep.subr.bf16.mxu0 0
        %8060 = vmatpush2.bf16.msra.mxu0 %v8001
        %8061 = vmatprep.subr.bf16.mxu0 0
        %8062 = vmatpush2.bf16.msra.mxu0 %v8000
        %8063 = vmatprep.subr.bf16.mxu0 0
        %8064 = vmatpush2.bf16.msra.mxu0 %v7999
        %8065 = vmatprep.subr.bf16.mxu0 0
        %8066 = vmatpush2.bf16.msra.mxu0 %v7998
        %8067 = vmatprep.subr.bf16.mxu0 0
        %8068 = vmatpush2.bf16.msra.mxu0 %v7997
        %8069 = vmatprep.subr.bf16.mxu0 0
        %8070 = vmatpush2.bf16.msra.mxu0 %v7996
        %8071 = vmatprep.subr.bf16.mxu0 0
        %8072 = vmatpush2.bf16.msra.mxu0 %v7995
        %8073 = vmatprep.mubr.bf16.mxu0 %v7834
        %8074 = vmatmul.mubr.bf16.gmra.mxu0 %v7833
        %v8075 = vpop.f32.mrf.mxu0
        %v8076 = vadd.f32 0.0, %v8075
        %v8077 = vpop.f32.mrf.mxu0
        %v8078 = vpop.f32.mrf.mxu0
        %v8079 = vpop.f32.mrf.mxu0
        %8080 = vdwg.mxu0
        %8081 = vmatprep.subr.bf16.mxu0 0
        %8082 = vmatpush1.bf16.msra.mxu0 %v8010
        %8083 = vmatprep.subr.bf16.mxu0 0
        %8084 = vmatpush1.bf16.msra.mxu0 %v8009
        %8085 = vmatprep.subr.bf16.mxu0 0
        %8086 = vmatpush1.bf16.msra.mxu0 %v8008
        %8087 = vmatprep.subr.bf16.mxu0 0
        %8088 = vmatpush1.bf16.msra.mxu0 %v8007
        %8089 = vmatprep.subr.bf16.mxu0 0
        %8090 = vmatpush1.bf16.msra.mxu0 %v8006
        %8091 = vmatprep.subr.bf16.mxu0 0
        %8092 = vmatpush1.bf16.msra.mxu0 %v8005
        %8093 = vmatprep.subr.bf16.mxu0 0
        %8094 = vmatpush1.bf16.msra.mxu0 %v8004
        %8095 = vmatprep.subr.bf16.mxu0 0
        %8096 = vmatpush1.bf16.msra.mxu0 %v8003
        %8097 = vmatprep.subr.bf16.mxu0 0
        %8098 = vmatpush2.bf16.msra.mxu0 0
        %8099 = vmatprep.subr.bf16.mxu0 0
        %8100 = vmatpush2.bf16.msra.mxu0 0
        %8101 = vmatprep.subr.bf16.mxu0 0
        %8102 = vmatpush2.bf16.msra.mxu0 0
        %8103 = vmatprep.subr.bf16.mxu0 0
        %8104 = vmatpush2.bf16.msra.mxu0 0
        %8105 = vmatprep.subr.bf16.mxu0 0
        %8106 = vmatpush2.bf16.msra.mxu0 0
        %8107 = vmatprep.subr.bf16.mxu0 0
        %8108 = vmatpush2.bf16.msra.mxu0 0
        %8109 = vmatprep.subr.bf16.mxu0 0
        %8110 = vmatpush2.bf16.msra.mxu0 0
        %8111 = vmatprep.subr.bf16.mxu0 0
        %8112 = vmatpush2.bf16.msra.mxu0 %v8011
        %8113 = vmatprep.mubr.bf16.mxu0 %v8039
        %8114 = vmatmul.mubr.bf16.gmra.mxu0 %v7835
        %v8115 = vpop.f32.mrf.mxu0
        %v8116 = vadd.f32 %v8076, %v8115
        %v8117 = vpop.f32.mrf.mxu0
        %v8118 = vpop.f32.mrf.mxu0
        %v8119 = vpop.f32.mrf.mxu0
        %8120 = vdwg.mxu0
        %v8121 = vmax.f32 %v8116, 0.0
        %v8122 = vpack.c.bf16 %v8121, %v8121
        %v8123 = vld [vmem:[%s10] sm:$0xf]
        %v8124 = vld [vmem:[%s10 + $0x4] sm:$0xf]
        %v8125 = vld [vmem:[%s10 + $0x8] sm:$0xf]
        %v8126 = vld [vmem:[%s10 + $0xc] sm:$0xf]
        %v8127 = vld [vmem:[%s10 + $0x10] sm:$0xf]
        %v8128 = vld [vmem:[%s10 + $0x14] sm:$0xf]
        %v8129 = vld [vmem:[%s10 + $0x18] sm:$0xf]
        %v8130 = vld [vmem:[%s10 + $0x1c] sm:$0xf]
        %v8131 = vld [vmem:[%s10 + $0x20] sm:$0xf]
        %v8132 = vld [vmem:[%s10 + $0x24] sm:$0xf]
        %v8133 = vld [vmem:[%s10 + $0x28] sm:$0xf]
        %v8134 = vld [vmem:[%s10 + $0x2c] sm:$0xf]
        %v8135 = vld [vmem:[%s10 + $0x30] sm:$0xf]
        %v8136 = vld [vmem:[%s10 + $0x34] sm:$0xf]
        %v8137 = vld [vmem:[%s10 + $0x38] sm:$0xf]
        %v8153 = vunpack.c.l.b16 %v8123
        %v8154 = vunpack.c.l.b16 %v8124
        %v8155 = vunpack.c.l.b16 %v8125
        %v8156 = vunpack.c.l.b16 %v8126
        %v8157 = vunpack.c.l.b16 %v8127
        %v8158 = vunpack.c.l.b16 %v8128
        %v8159 = vunpack.c.l.b16 %v8129
        %v8160 = vunpack.c.l.b16 %v8130
        %v8161 = vunpack.c.l.b16 %v8131
        %v8162 = vunpack.c.l.b16 %v8132
        %v8163 = vunpack.c.l.b16 %v8133
        %v8164 = vunpack.c.l.b16 %v8134
        %v8165 = vunpack.c.l.b16 %v8135
        %v8166 = vunpack.c.l.b16 %v8136
        %v8167 = vunpack.c.l.b16 %v8137
        %v8168 = vpack.c.b16 %v8154, %v8153
        %v8169 = vpack.c.b16 %v8156, %v8155
        %v8170 = vpack.c.b16 %v8158, %v8157
        %v8171 = vpack.c.b16 %v8160, %v8159
        %v8172 = vpack.c.b16 %v8162, %v8161
        %v8173 = vpack.c.b16 %v8164, %v8163
        %v8174 = vpack.c.b16 %v8166, %v8165
        %v8175 = vpack.c.b16 %v8167, %v8167
        %vm8183 = vcmask 982016
        %v8185 = vsel %vm8183, %v8122, 0
        %v8188 = vsel %vm816, %v8175, 0
        %8190 = vmatprep.subr.bf16.mxu0 0
        %8191 = vmatpush1.bf16.msra.mxu0 %v8188
        %8192 = vmatprep.subr.bf16.mxu0 0
        %8193 = vmatpush1.bf16.msra.mxu0 %v8174
        %8194 = vmatprep.subr.bf16.mxu0 0
        %8195 = vmatpush1.bf16.msra.mxu0 %v8173
        %8196 = vmatprep.subr.bf16.mxu0 0
        %8197 = vmatpush1.bf16.msra.mxu0 %v8172
        %8198 = vmatprep.subr.bf16.mxu0 0
        %8199 = vmatpush1.bf16.msra.mxu0 %v8171
        %8200 = vmatprep.subr.bf16.mxu0 0
        %8201 = vmatpush1.bf16.msra.mxu0 %v8170
        %8202 = vmatprep.subr.bf16.mxu0 0
        %8203 = vmatpush1.bf16.msra.mxu0 %v8169
        %8204 = vmatprep.subr.bf16.mxu0 0
        %8205 = vmatpush1.bf16.msra.mxu0 %v8168
        %8206 = vmatprep.subr.bf16.mxu0 0
        %8207 = vmatpush2.bf16.msra.mxu0 0
        %8208 = vmatprep.subr.bf16.mxu0 0
        %8209 = vmatpush2.bf16.msra.mxu0 0
        %8210 = vmatprep.subr.bf16.mxu0 0
        %8211 = vmatpush2.bf16.msra.mxu0 0
        %8212 = vmatprep.subr.bf16.mxu0 0
        %8213 = vmatpush2.bf16.msra.mxu0 0
        %8214 = vmatprep.subr.bf16.mxu0 0
        %8215 = vmatpush2.bf16.msra.mxu0 0
        %8216 = vmatprep.subr.bf16.mxu0 0
        %8217 = vmatpush2.bf16.msra.mxu0 0
        %8218 = vmatprep.subr.bf16.mxu0 0
        %8219 = vmatpush2.bf16.msra.mxu0 0
        %8220 = vmatprep.subr.bf16.mxu0 0
        %8221 = vmatpush2.bf16.msra.mxu0 0
        %8222 = vmatprep.mubr.bf16.mxu0 0
        %8223 = vmatmul.mubr.bf16.gmra.mxu0 %v8185
        %v8224 = vpop.f32.mrf.mxu0
        %v8225 = vadd.f32 0.0, %v8224
        %v8226 = vpop.f32.mrf.mxu0
        %v8227 = vpop.f32.mrf.mxu0
        %v8228 = vpop.f32.mrf.mxu0
        %8229 = vdwg.mxu0
        %v8230 = vmax.f32 %v8225, 0.0
        %v8231 = vpack.c.bf16 %v8230, %v8230
        %v8232 = vld [vmem:[%s11] sm:$0xf]
        %v8233 = vld [vmem:[%s11 + $0x4] sm:$0xf]
        %v8234 = vld [vmem:[%s11 + $0x8] sm:$0xf]
        %v8235 = vld [vmem:[%s11 + $0xc] sm:$0xf]
        %v8236 = vld [vmem:[%s11 + $0x10] sm:$0xf]
        %v8237 = vld [vmem:[%s11 + $0x14] sm:$0xf]
        %v8238 = vld [vmem:[%s11 + $0x18] sm:$0xf]
        %v8239 = vld [vmem:[%s11 + $0x1c] sm:$0xf]
        %v8240 = vld [vmem:[%s11 + $0x20] sm:$0xf]
        %v8241 = vld [vmem:[%s11 + $0x24] sm:$0xf]
        %v8242 = vld [vmem:[%s11 + $0x28] sm:$0x3]
        %v8254 = vunpack.c.l.b16 %v8232
        %v8255 = vunpack.c.l.b16 %v8233
        %v8256 = vunpack.c.l.b16 %v8234
        %v8257 = vunpack.c.l.b16 %v8235
        %v8258 = vunpack.c.l.b16 %v8236
        %v8259 = vunpack.c.l.b16 %v8237
        %v8260 = vunpack.c.l.b16 %v8238
        %v8261 = vunpack.c.l.b16 %v8239
        %v8262 = vunpack.c.l.b16 %v8240
        %v8263 = vunpack.c.l.b16 %v8241
        %v8264 = vunpack.c.l.b16 %v8242
        %v8265 = vpack.c.b16 %v8255, %v8254
        %v8266 = vpack.c.b16 %v8257, %v8256
        %v8267 = vpack.c.b16 %v8259, %v8258
        %v8268 = vpack.c.b16 %v8261, %v8260
        %v8269 = vpack.c.b16 %v8263, %v8262
        %v8270 = vpack.c.b16 %v8264, %v8264
        %vm8276 = vcmask 687104
        %v8278 = vsel %vm8276, %v8231, 0
        %vm8280 = vcmask 1041408
        %v8282 = vsel %vm8280, %v8270, 0
        %8284 = vmatprep.subr.bf16.mxu0 0
        %8285 = vmatpush1.bf16.msra.mxu0 0
        %8286 = vmatprep.subr.bf16.mxu0 0
        %8287 = vmatpush1.bf16.msra.mxu0 0
        %8288 = vmatprep.subr.bf16.mxu0 0
        %8289 = vmatpush1.bf16.msra.mxu0 %v8282
        %8290 = vmatprep.subr.bf16.mxu0 0
        %8291 = vmatpush1.bf16.msra.mxu0 %v8269
        %8292 = vmatprep.subr.bf16.mxu0 0
        %8293 = vmatpush1.bf16.msra.mxu0 %v8268
        %8294 = vmatprep.subr.bf16.mxu0 0
        %8295 = vmatpush1.bf16.msra.mxu0 %v8267
        %8296 = vmatprep.subr.bf16.mxu0 0
        %8297 = vmatpush1.bf16.msra.mxu0 %v8266
        %8298 = vmatprep.subr.bf16.mxu0 0
        %8299 = vmatpush1.bf16.msra.mxu0 %v8265
        %8300 = vmatprep.subr.bf16.mxu0 0
        %8301 = vmatpush2.bf16.msra.mxu0 0
        %8302 = vmatprep.subr.bf16.mxu0 0
        %8303 = vmatpush2.bf16.msra.mxu0 0
        %8304 = vmatprep.subr.bf16.mxu0 0
        %8305 = vmatpush2.bf16.msra.mxu0 0
        %8306 = vmatprep.subr.bf16.mxu0 0
        %8307 = vmatpush2.bf16.msra.mxu0 0
        %8308 = vmatprep.subr.bf16.mxu0 0
        %8309 = vmatpush2.bf16.msra.mxu0 0
        %8310 = vmatprep.subr.bf16.mxu0 0
        %8311 = vmatpush2.bf16.msra.mxu0 0
        %8312 = vmatprep.subr.bf16.mxu0 0
        %8313 = vmatpush2.bf16.msra.mxu0 0
        %8314 = vmatprep.subr.bf16.mxu0 0
        %8315 = vmatpush2.bf16.msra.mxu0 0
        %8316 = vmatprep.mubr.bf16.mxu0 0
        %8317 = vmatmul.mubr.bf16.gmra.mxu0 %v8278
        %v8318 = vpop.f32.mrf.mxu0
        %v8319 = vadd.f32 0.0, %v8318
        %v8320 = vpop.f32.mrf.mxu0
        %v8321 = vpop.f32.mrf.mxu0
        %v8322 = vpop.f32.mrf.mxu0
        %8323 = vdwg.mxu0
        %vm8324 = vcmask 73728
        %8325 = vst.msk [vmem:[%s405] sm:$0x1] %vm8324, %v8319
        %s8326 = sand.u32 %s291, 1
        %s8327 = scalar_lea.sflag [#allocation7], %s8326
        %s8328 = sand.u32 %s291, 1
        %s8329 = scalar_lea.vmem [#allocation6], %s8328
        // Predicated region
        $region69: #{lenet5_repeat_forward.1} parent=67 // pred_check
          %p8330 = pneg %p301
        $region70: #{lenet5_repeat_forward.1} parent=67 // pred_check_branch
          %8332 = sbr.rel (%p8330) target = $region72
        $region71: #{lenet5_repeat_forward.1} parent=67 // pred_region
          %s8334 = ssub.s32 16, 16
          %8335 = vsyncadd %s8327, %s8334
          %s8336 = smul.addr %s26, 16
          %s8337 = scalar_lea.hbm %s12, %s8336
          %s8339 = sshll.u32 %s8329, 4
          %s8340 = int_to_ptr.vmem [resolvable:$true] %s8339
          %8342 = dma.vmem_to_hbm [thread:$0]  %s8340, 16, %s8337, %s8327
        $region72: #{lenet5_repeat_forward.1} parent=67 // pred_fallthru
          _
      $region68: #{lenet5_repeat_forward.1} parent=5 // pred_fallthru
        _
      %p8343 = scmp.le.s32.totalorder 2, %s21
      // Predicated region
      $region73: #{lenet5_repeat_forward.1} parent=5 // pred_check
        %p8344 = pneg %p8343
      $region74: #{lenet5_repeat_forward.1} parent=5 // pred_check_branch
        %8346 = sbr.rel (%p8344) target = $region76
      $region75: #{lenet5_repeat_forward.1} parent=5 // pred_region
        %s8347 = ssub.s32 %s21, 2
        // Predicated region
        $region77: #{lenet5_repeat_forward.1} parent=75 // pred_check
          %p8348 = pneg %p307
        $region78: #{lenet5_repeat_forward.1} parent=75 // pred_check_branch
          %8350 = sbr.rel (%p8348) target = $region80
        $region79: #{lenet5_repeat_forward.1} parent=75 // pred_region
          %s8351 = sand.u32 %s292, 1
          %s8352 = scalar_lea.sflag [#allocation7], %s8351
          %s8353 = sand.u32 %s292, 1
          %s8354 = scalar_lea.vmem [#allocation6], %s8353
          %8355 = dma.done %s8352, 16
        $region80: #{lenet5_repeat_forward.1} parent=75 // pred_fallthru
          _
      $region76: #{lenet5_repeat_forward.1} parent=5 // pred_fallthru
        _
    $region6: #{lenet5_repeat_forward.1} parent=1 // loop_footer
      %s25 = sadd.s32 1, %s21
    $region7: #{lenet5_repeat_forward.1} parent=1 // loop_footer_branch
      %20 = sbr.rel target = $region3
    $region8: #{lenet5_repeat_forward.1} parent=1 // loop_exit
      _
    %8356 = vsyncpa [#allocation7], 1
    %s8357 = scalar_lea.sflag [#allocation7], 1
    %8358 = vsyncpa %s8357, 1

</llo_original>
